<compile_context>
chip_gen: v6e
topology: v6e:2x2x1
jax: 0.10.0
libtpu: 0.0.40
codegen_flags: <defaults>
</compile_context>

<pallas_src>
import functools

import jax
import jax.numpy as jnp
from jax import lax
from jax.experimental import pallas as pl
from jax.experimental.pallas import tpu as pltpu

EMBED_DIM = 300
HIDDEN_DIM = 256
N_LAYER = 1  # bidirectional, 1 layer (LSTM dropout is inter-layer only -> inactive)


def _bilstm_kernel(x_ref, wi_ref, wh_ref, b_ref, out_ref, gx_ref,
                   *, seq_len, batch, hidden, unroll):
    """Single invocation: both LSTM directions, interleaved.

    x_ref:  (S*B, E_pad)  bf16  zero-padded input, time-major rows of B
    wi_ref: (E_pad, 8H)   bf16  [wi_fwd.T | wi_bwd.T]
    wh_ref: (2, H, 4H)    bf16  recurrent weights per direction (pre-transposed)
    b_ref:  (1, 8H)       f32   combined biases [b_ih+b_hh fwd | bwd]
    out_ref:(B, 2H)       f32   final hidden states [h_fwd | h_bwd]
    gx_ref: (S*B, 8H)     f32   scratch: hoisted input projection (bias folded in)
    """
    S, B, H = seq_len, batch, hidden

    # ---- Hoisted input projection for BOTH directions: one MXU dispatch, N = 8H.
    gx_ref[...] = (
        jnp.dot(x_ref[...], wi_ref[...], preferred_element_type=jnp.float32)
        + b_ref[...])

    # Loop-invariant recurrent weights (bf16), loaded once.
    wh_f = wh_ref[0]                             # (H, 4H)
    wh_b = wh_ref[1]                             # (H, 4H)

    def gates_to_hc(gates, c):
        i_g = jax.nn.sigmoid(gates[:, 0 * H:1 * H])
        f_g = jax.nn.sigmoid(gates[:, 1 * H:2 * H])
        g_g = jnp.tanh(gates[:, 2 * H:3 * H])
        o_g = jax.nn.sigmoid(gates[:, 3 * H:4 * H])
        c_new = f_g * c + i_g * g_g
        h_new = o_g * jnp.tanh(c_new)
        return h_new, c_new

    def step(t, carry):
        hf, cf, hb, cb = carry
        # Forward consumes timestep t; backward consumes S-1-t.
        row_f = pl.multiple_of(t * B, B)
        row_b = pl.multiple_of((S - 1 - t) * B, B)
        gx_f = gx_ref[pl.ds(row_f, B), 0 * H:4 * H]      # (B, 4H) f32, bias included
        gx_b = gx_ref[pl.ds(row_b, B), 4 * H:8 * H]
        # Two independent small matmuls per step -> cross-direction ILP on one TC.
        gates_f = gx_f + jnp.dot(hf.astype(jnp.bfloat16), wh_f,
                                 preferred_element_type=jnp.float32)
        gates_b = gx_b + jnp.dot(hb.astype(jnp.bfloat16), wh_b,
                                 preferred_element_type=jnp.float32)
        hf, cf = gates_to_hc(gates_f, cf)
        hb, cb = gates_to_hc(gates_b, cb)
        return hf, cf, hb, cb

    z = jnp.zeros((B, H), jnp.float32)
    hf, _, hb, _ = lax.fori_loop(0, S, step, (z, z, z, z), unroll=unroll)

    out_ref[:, 0 * H:1 * H] = hf
    out_ref[:, 1 * H:2 * H] = hb


def my_rnn_forward(x, params):
    """Pallas implementation of My_RNN.forward.

    x: (S, B, E) float32
    returns: (B, 2*HIDDEN_DIM) float32
    """
    S, B, E = x.shape
    H = HIDDEN_DIM

    # Pad batch to a sublane multiple and embed dim to a lane multiple (zero-pad: exact).
    B_pad = max(8, ((B + 7) // 8) * 8)
    E_pad = ((E + 127) // 128) * 128             # 300 -> 384

    xp = jnp.pad(x, ((0, 0), (0, B_pad - B), (0, E_pad - E)))
    x2 = xp.reshape(S * B_pad, E_pad).astype(jnp.bfloat16)     # time-major rows of B_pad

    def prep_wi(w):                              # (4H, E) -> (E_pad, 4H), zero-pad K
        return jnp.pad(w.T, ((0, E_pad - E), (0, 0)))

    wi = jnp.concatenate(
        [prep_wi(params["weight_ih_l0"]),
         prep_wi(params["weight_ih_l0_reverse"])], axis=1
    ).astype(jnp.bfloat16)                                      # (E_pad, 8H)
    wh = jnp.stack(
        [params["weight_hh_l0"].T,
         params["weight_hh_l0_reverse"].T]
    ).astype(jnp.bfloat16)                                      # (2, H, 4H)
    b = jnp.concatenate(
        [params["bias_ih_l0"] + params["bias_hh_l0"],
         params["bias_ih_l0_reverse"] + params["bias_hh_l0_reverse"]]
    ).reshape(1, 8 * H).astype(jnp.float32)                     # (1, 8H)

    # Fully unroll the short recurrence; cap the unroll window for long sequences.
    unroll = True if S <= 16 else 4
    kernel = functools.partial(_bilstm_kernel, seq_len=S, batch=B_pad,
                               hidden=H, unroll=unroll)

    # TODO(synk): for long S, tile the hoisted projection over sequence chunks
    # (emit_pipeline over S-chunks writing gx chunk-wise) so the (S*B_pad, 8H)
    # scratch stays bounded independent of S.
    out = pl.pallas_call(
        kernel,
        out_shape=jax.ShapeDtypeStruct((B_pad, 2 * H), jnp.float32),
        grid=(1,),
        in_specs=[
            pl.BlockSpec((S * B_pad, E_pad), lambda i: (0, 0)),
            pl.BlockSpec((E_pad, 8 * H), lambda i: (0, 0)),
            pl.BlockSpec((2, H, 4 * H), lambda i: (0, 0, 0)),
            pl.BlockSpec((1, 8 * H), lambda i: (0, 0)),
        ],
        out_specs=pl.BlockSpec((B_pad, 2 * H), lambda i: (0, 0)),
        scratch_shapes=[
            pltpu.VMEM((S * B_pad, 8 * H), jnp.float32),        # hoisted x-projection
        ],
        compiler_params=pltpu.CompilerParams(
            dimension_semantics=("arbitrary",)),
    )(x2, wi, wh, b)

    return out[:B]


def _lstm_ref(x, params):
    """Pure-JAX f32 reference of the same forward pass (correctness check)."""
    S, B, E = x.shape
    H = HIDDEN_DIM

    def run_dir(xs, wi, wh, bi, bh):
        h = jnp.zeros((B, H), jnp.float32)
        c = jnp.zeros((B, H), jnp.float32)
        for t in range(xs.shape[0]):
            gates = xs[t] @ wi.T + h @ wh.T + bi + bh
            i_g = jax.nn.sigmoid(gates[:, 0 * H:1 * H])
            f_g = jax.nn.sigmoid(gates[:, 1 * H:2 * H])
            g_g = jnp.tanh(gates[:, 2 * H:3 * H])
            o_g = jax.nn.sigmoid(gates[:, 3 * H:4 * H])
            c = f_g * c + i_g * g_g
            h = o_g * jnp.tanh(c)
        return h

    h_fwd = run_dir(x, params["weight_ih_l0"], params["weight_hh_l0"],
                    params["bias_ih_l0"], params["bias_hh_l0"])
    h_bwd = run_dir(x[::-1], params["weight_ih_l0_reverse"], params["weight_hh_l0_reverse"],
                    params["bias_ih_l0_reverse"], params["bias_hh_l0_reverse"])
    return jnp.concatenate([h_fwd, h_bwd], axis=-1)


def init_params(key, embed_dim=EMBED_DIM, hidden_dim=HIDDEN_DIM):
    """Deterministic init mirroring nn.LSTM parameter shapes (uniform(-k, k), k=1/sqrt(H))."""
    k = 1.0 / jnp.sqrt(jnp.float32(hidden_dim))
    names_shapes = [
        ("weight_ih_l0", (4 * hidden_dim, embed_dim)),
        ("weight_hh_l0", (4 * hidden_dim, hidden_dim)),
        ("bias_ih_l0", (4 * hidden_dim,)),
        ("bias_hh_l0", (4 * hidden_dim,)),
        ("weight_ih_l0_reverse", (4 * hidden_dim, embed_dim)),
        ("weight_hh_l0_reverse", (4 * hidden_dim, hidden_dim)),
        ("bias_ih_l0_reverse", (4 * hidden_dim,)),
        ("bias_hh_l0_reverse", (4 * hidden_dim,)),
    ]
    keys = jax.random.split(key, len(names_shapes))
    params = {}
    for (name, shape), kk in zip(names_shapes, keys):
        params[name] = jax.random.uniform(kk, shape, jnp.float32, minval=-k, maxval=k)
    return params


if __name__ == "__main__":
    seq_len, batch = 8, 2
    key = jax.random.PRNGKey(0)
    pkey, xkey = jax.random.split(key)

    params = init_params(pkey)
    x = jax.random.normal(xkey, (seq_len, batch, EMBED_DIM), jnp.float32)

    out = my_rnn_forward(x, params)
    out = jax.block_until_ready(out)

    ref = _lstm_ref(x, params)
    assert out.shape == (batch, 2 * HIDDEN_DIM), out.shape
    # bf16 matmul operands (f32 accumulation / gate math) -> relaxed tolerance.
    assert jnp.allclose(out, ref, rtol=2e-2, atol=2e-2), float(jnp.max(jnp.abs(out - ref)))

    print("KERNEL_OK")
</pallas_src>

<mosaic_0001>
module attributes {stable_mosaic.version = 11 : i64} {
  func.func @_bilstm_kernel(%arg0: i32, %arg1: memref<64x384xbf16, #tpu.memory_space<vmem>>, %arg2: memref<384x2048xbf16, #tpu.memory_space<vmem>>, %arg3: memref<2x256x1024xbf16, #tpu.memory_space<vmem>>, %arg4: memref<1x2048xf32, #tpu.memory_space<vmem>>, %arg5: memref<8x512xf32, #tpu.memory_space<vmem>>, %arg6: memref<64x2048xf32, #tpu.memory_space<vmem>>) attributes {dimension_semantics = [#tpu.dimension_semantics<arbitrary>], iteration_bounds = array<i64: 1>, scalar_prefetch = 0 : i64, scratch_operands = 1 : i64, tpu.core_type = #tpu.core_type<tc>, window_params = [{pipeline_mode = #tpu.pipeline_mode<synchronous>, transform_indices = @transform_0, window_bounds = array<i64: 64, 384>}, {pipeline_mode = #tpu.pipeline_mode<synchronous>, transform_indices = @transform_1, window_bounds = array<i64: 384, 2048>}, {pipeline_mode = #tpu.pipeline_mode<synchronous>, transform_indices = @transform_2, window_bounds = array<i64: 2, 256, 1024>}, {pipeline_mode = #tpu.pipeline_mode<synchronous>, transform_indices = @transform_3, window_bounds = array<i64: 1, 2048>}, {pipeline_mode = #tpu.pipeline_mode<synchronous>, transform_indices = @transform_4, window_bounds = array<i64: 8, 512>}]} {
    %c0 = arith.constant 0 : index
    %c0_0 = arith.constant 0 : index
    %0 = vector.load %arg1[%c0, %c0_0] : memref<64x384xbf16, #tpu.memory_space<vmem>>, vector<64x384xbf16>
    %c0_1 = arith.constant 0 : index
    %c0_2 = arith.constant 0 : index
    %1 = vector.load %arg2[%c0_1, %c0_2] : memref<384x2048xbf16, #tpu.memory_space<vmem>>, vector<384x2048xbf16>
    %cst = arith.constant dense<0.000000e+00> : vector<64x2048xf32>
    %2 = tpu.matmul %0, %1, %cst {dimension_numbers = #tpu.dot_dimension_numbers<[1], [0], [0], [1], [0, 0, 1, 1], [], []>} : vector<64x384xbf16>, vector<384x2048xbf16>, vector<64x2048xf32> -> vector<64x2048xf32>
    %c0_3 = arith.constant 0 : index
    %c0_4 = arith.constant 0 : index
    %3 = vector.load %arg4[%c0_3, %c0_4] : memref<1x2048xf32, #tpu.memory_space<vmem>>, vector<1x2048xf32>
    %4 = vector.broadcast %3 : vector<1x2048xf32> to vector<64x2048xf32>
    %5 = arith.addf %2, %4 : vector<64x2048xf32>
    %c0_5 = arith.constant 0 : index
    %c0_6 = arith.constant 0 : index
    %6 = vector.load %arg6[%c0_5, %c0_6] : memref<64x2048xf32, #tpu.memory_space<vmem>>, vector<64x2048xf32>
    tpu.vector_store %arg6[%c0_5, %c0_6], %5 {strides = array<i32>} : memref<64x2048xf32, #tpu.memory_space<vmem>>, vector<64x2048xf32>,
    %c0_7 = arith.constant 0 : index
    %c0_8 = arith.constant 0 : index
    %c0_9 = arith.constant 0 : index
    %7 = vector.load %arg3[%c0_7, %c0_8, %c0_9] : memref<2x256x1024xbf16, #tpu.memory_space<vmem>>, vector<1x256x1024xbf16>
    %8 = vector.shape_cast %7 : vector<1x256x1024xbf16> to vector<256x1024xbf16>
    %c1 = arith.constant 1 : index
    %c0_10 = arith.constant 0 : index
    %c0_11 = arith.constant 0 : index
    %9 = vector.load %arg3[%c1, %c0_10, %c0_11] : memref<2x256x1024xbf16, #tpu.memory_space<vmem>>, vector<1x256x1024xbf16>
    %10 = vector.shape_cast %9 : vector<1x256x1024xbf16> to vector<256x1024xbf16>
    %cst_12 = arith.constant 0.000000e+00 : f32
    %11 = vector.broadcast %cst_12 : f32 to vector<8x256xf32>
    %c0_i32 = arith.constant 0 : i32
    %c8_i32 = arith.constant 8 : i32
    %12 = arith.muli %c0_i32, %c8_i32 : i32
    %13 = tpu.assume_multiple %12, 8 : i32
    %c7_i32 = arith.constant 7 : i32
    %14 = arith.subi %c7_i32, %c0_i32 : i32
    %c8_i32_13 = arith.constant 8 : i32
    %15 = arith.muli %14, %c8_i32_13 : i32
    %16 = tpu.assume_multiple %15, 8 : i32
    %17 = arith.index_cast %13 : i32 to index
    %c0_14 = arith.constant 0 : index
    %18 = vector.load %arg6[%17, %c0_14] : memref<64x2048xf32, #tpu.memory_space<vmem>>, vector<8x1024xf32>
    %19 = arith.index_cast %16 : i32 to index
    %c1024 = arith.constant 1024 : index
    %20 = vector.load %arg6[%19, %c1024] : memref<64x2048xf32, #tpu.memory_space<vmem>>, vector<8x1024xf32>
    %21 = arith.truncf %11 : vector<8x256xf32> to vector<8x256xbf16>
    %cst_15 = arith.constant dense<0.000000e+00> : vector<8x1024xf32>
    %22 = tpu.matmul %21, %8, %cst_15 {dimension_numbers = #tpu.dot_dimension_numbers<[1], [0], [0], [1], [0, 0, 1, 1], [], []>} : vector<8x256xbf16>, vector<256x1024xbf16>, vector<8x1024xf32> -> vector<8x1024xf32>
    %23 = arith.addf %18, %22 : vector<8x1024xf32>
    %24 = arith.truncf %11 : vector<8x256xf32> to vector<8x256xbf16>
    %cst_16 = arith.constant dense<0.000000e+00> : vector<8x1024xf32>
    %25 = tpu.matmul %24, %10, %cst_16 {dimension_numbers = #tpu.dot_dimension_numbers<[1], [0], [0], [1], [0, 0, 1, 1], [], []>} : vector<8x256xbf16>, vector<256x1024xbf16>, vector<8x1024xf32> -> vector<8x1024xf32>
    %26 = arith.addf %20, %25 : vector<8x1024xf32>
    %27 = vector.extract_strided_slice %23 {offsets = [0, 0], sizes = [8, 256], strides = [1, 1]} : vector<8x1024xf32> to vector<8x256xf32>
    %28 = arith.negf %27 : vector<8x256xf32>
    %29 = math.exp %28 : vector<8x256xf32>
    %cst_17 = arith.constant 1.000000e+00 : f32
    %30 = vector.broadcast %cst_17 : f32 to vector<8x256xf32>
    %31 = arith.addf %30, %29 : vector<8x256xf32>
    %32 = arith.divf %30, %31 : vector<8x256xf32>
    %33 = vector.extract_strided_slice %23 {offsets = [0, 256], sizes = [8, 256], strides = [1, 1]} : vector<8x1024xf32> to vector<8x256xf32>
    %34 = arith.negf %33 : vector<8x256xf32>
    %35 = math.exp %34 : vector<8x256xf32>
    %cst_18 = arith.constant 1.000000e+00 : f32
    %36 = vector.broadcast %cst_18 : f32 to vector<8x256xf32>
    %37 = arith.addf %36, %35 : vector<8x256xf32>
    %38 = arith.divf %36, %37 : vector<8x256xf32>
    %39 = vector.extract_strided_slice %23 {offsets = [0, 512], sizes = [8, 256], strides = [1, 1]} : vector<8x1024xf32> to vector<8x256xf32>
    %40 = math.tanh %39 : vector<8x256xf32>
    %41 = vector.extract_strided_slice %23 {offsets = [0, 768], sizes = [8, 256], strides = [1, 1]} : vector<8x1024xf32> to vector<8x256xf32>
    %42 = arith.negf %41 : vector<8x256xf32>
    %43 = math.exp %42 : vector<8x256xf32>
    %cst_19 = arith.constant 1.000000e+00 : f32
    %44 = vector.broadcast %cst_19 : f32 to vector<8x256xf32>
    %45 = arith.addf %44, %43 : vector<8x256xf32>
    %46 = arith.divf %44, %45 : vector<8x256xf32>
    %47 = arith.mulf %38, %11 : vector<8x256xf32>
    %48 = arith.mulf %32, %40 : vector<8x256xf32>
    %49 = arith.addf %47, %48 : vector<8x256xf32>
    %50 = math.tanh %49 : vector<8x256xf32>
    %51 = arith.mulf %46, %50 : vector<8x256xf32>
    %52 = vector.extract_strided_slice %26 {offsets = [0, 0], sizes = [8, 256], strides = [1, 1]} : vector<8x1024xf32> to vector<8x256xf32>
    %53 = arith.negf %52 : vector<8x256xf32>
    %54 = math.exp %53 : vector<8x256xf32>
    %cst_20 = arith.constant 1.000000e+00 : f32
    %55 = vector.broadcast %cst_20 : f32 to vector<8x256xf32>
    %56 = arith.addf %55, %54 : vector<8x256xf32>
    %57 = arith.divf %55, %56 : vector<8x256xf32>
    %58 = vector.extract_strided_slice %26 {offsets = [0, 256], sizes = [8, 256], strides = [1, 1]} : vector<8x1024xf32> to vector<8x256xf32>
    %59 = arith.negf %58 : vector<8x256xf32>
    %60 = math.exp %59 : vector<8x256xf32>
    %cst_21 = arith.constant 1.000000e+00 : f32
    %61 = vector.broadcast %cst_21 : f32 to vector<8x256xf32>
    %62 = arith.addf %61, %60 : vector<8x256xf32>
    %63 = arith.divf %61, %62 : vector<8x256xf32>
    %64 = vector.extract_strided_slice %26 {offsets = [0, 512], sizes = [8, 256], strides = [1, 1]} : vector<8x1024xf32> to vector<8x256xf32>
    %65 = math.tanh %64 : vector<8x256xf32>
    %66 = vector.extract_strided_slice %26 {offsets = [0, 768], sizes = [8, 256], strides = [1, 1]} : vector<8x1024xf32> to vector<8x256xf32>
    %67 = arith.negf %66 : vector<8x256xf32>
    %68 = math.exp %67 : vector<8x256xf32>
    %cst_22 = arith.constant 1.000000e+00 : f32
    %69 = vector.broadcast %cst_22 : f32 to vector<8x256xf32>
    %70 = arith.addf %69, %68 : vector<8x256xf32>
    %71 = arith.divf %69, %70 : vector<8x256xf32>
    %72 = arith.mulf %63, %11 : vector<8x256xf32>
    %73 = arith.mulf %57, %65 : vector<8x256xf32>
    %74 = arith.addf %72, %73 : vector<8x256xf32>
    %75 = math.tanh %74 : vector<8x256xf32>
    %76 = arith.mulf %71, %75 : vector<8x256xf32>
    %c1_i32 = arith.constant 1 : i32
    %c8_i32_23 = arith.constant 8 : i32
    %77 = arith.muli %c1_i32, %c8_i32_23 : i32
    %78 = tpu.assume_multiple %77, 8 : i32
    %c7_i32_24 = arith.constant 7 : i32
    %79 = arith.subi %c7_i32_24, %c1_i32 : i32
    %c8_i32_25 = arith.constant 8 : i32
    %80 = arith.muli %79, %c8_i32_25 : i32
    %81 = tpu.assume_multiple %80, 8 : i32
    %82 = arith.index_cast %78 : i32 to index
    %c0_26 = arith.constant 0 : index
    %83 = vector.load %arg6[%82, %c0_26] : memref<64x2048xf32, #tpu.memory_space<vmem>>, vector<8x1024xf32>
    %84 = arith.index_cast %81 : i32 to index
    %c1024_27 = arith.constant 1024 : index
    %85 = vector.load %arg6[%84, %c1024_27] : memref<64x2048xf32, #tpu.memory_space<vmem>>, vector<8x1024xf32>
    %86 = arith.truncf %51 : vector<8x256xf32> to vector<8x256xbf16>
    %cst_28 = arith.constant dense<0.000000e+00> : vector<8x1024xf32>
    %87 = tpu.matmul %86, %8, %cst_28 {dimension_numbers = #tpu.dot_dimension_numbers<[1], [0], [0], [1], [0, 0, 1, 1], [], []>} : vector<8x256xbf16>, vector<256x1024xbf16>, vector<8x1024xf32> -> vector<8x1024xf32>
    %88 = arith.addf %83, %87 : vector<8x1024xf32>
    %89 = arith.truncf %76 : vector<8x256xf32> to vector<8x256xbf16>
    %cst_29 = arith.constant dense<0.000000e+00> : vector<8x1024xf32>
    %90 = tpu.matmul %89, %10, %cst_29 {dimension_numbers = #tpu.dot_dimension_numbers<[1], [0], [0], [1], [0, 0, 1, 1], [], []>} : vector<8x256xbf16>, vector<256x1024xbf16>, vector<8x1024xf32> -> vector<8x1024xf32>
    %91 = arith.addf %85, %90 : vector<8x1024xf32>
    %92 = vector.extract_strided_slice %88 {offsets = [0, 0], sizes = [8, 256], strides = [1, 1]} : vector<8x1024xf32> to vector<8x256xf32>
    %93 = arith.negf %92 : vector<8x256xf32>
    %94 = math.exp %93 : vector<8x256xf32>
    %cst_30 = arith.constant 1.000000e+00 : f32
    %95 = vector.broadcast %cst_30 : f32 to vector<8x256xf32>
    %96 = arith.addf %95, %94 : vector<8x256xf32>
    %97 = arith.divf %95, %96 : vector<8x256xf32>
    %98 = vector.extract_strided_slice %88 {offsets = [0, 256], sizes = [8, 256], strides = [1, 1]} : vector<8x1024xf32> to vector<8x256xf32>
    %99 = arith.negf %98 : vector<8x256xf32>
    %100 = math.exp %99 : vector<8x256xf32>
    %cst_31 = arith.constant 1.000000e+00 : f32
    %101 = vector.broadcast %cst_31 : f32 to vector<8x256xf32>
    %102 = arith.addf %101, %100 : vector<8x256xf32>
    %103 = arith.divf %101, %102 : vector<8x256xf32>
    %104 = vector.extract_strided_slice %88 {offsets = [0, 512], sizes = [8, 256], strides = [1, 1]} : vector<8x1024xf32> to vector<8x256xf32>
    %105 = math.tanh %104 : vector<8x256xf32>
    %106 = vector.extract_strided_slice %88 {offsets = [0, 768], sizes = [8, 256], strides = [1, 1]} : vector<8x1024xf32> to vector<8x256xf32>
    %107 = arith.negf %106 : vector<8x256xf32>
    %108 = math.exp %107 : vector<8x256xf32>
    %cst_32 = arith.constant 1.000000e+00 : f32
    %109 = vector.broadcast %cst_32 : f32 to vector<8x256xf32>
    %110 = arith.addf %109, %108 : vector<8x256xf32>
    %111 = arith.divf %109, %110 : vector<8x256xf32>
    %112 = arith.mulf %103, %49 : vector<8x256xf32>
    %113 = arith.mulf %97, %105 : vector<8x256xf32>
    %114 = arith.addf %112, %113 : vector<8x256xf32>
    %115 = math.tanh %114 : vector<8x256xf32>
    %116 = arith.mulf %111, %115 : vector<8x256xf32>
    %117 = vector.extract_strided_slice %91 {offsets = [0, 0], sizes = [8, 256], strides = [1, 1]} : vector<8x1024xf32> to vector<8x256xf32>
    %118 = arith.negf %117 : vector<8x256xf32>
    %119 = math.exp %118 : vector<8x256xf32>
    %cst_33 = arith.constant 1.000000e+00 : f32
    %120 = vector.broadcast %cst_33 : f32 to vector<8x256xf32>
    %121 = arith.addf %120, %119 : vector<8x256xf32>
    %122 = arith.divf %120, %121 : vector<8x256xf32>
    %123 = vector.extract_strided_slice %91 {offsets = [0, 256], sizes = [8, 256], strides = [1, 1]} : vector<8x1024xf32> to vector<8x256xf32>
    %124 = arith.negf %123 : vector<8x256xf32>
    %125 = math.exp %124 : vector<8x256xf32>
    %cst_34 = arith.constant 1.000000e+00 : f32
    %126 = vector.broadcast %cst_34 : f32 to vector<8x256xf32>
    %127 = arith.addf %126, %125 : vector<8x256xf32>
    %128 = arith.divf %126, %127 : vector<8x256xf32>
    %129 = vector.extract_strided_slice %91 {offsets = [0, 512], sizes = [8, 256], strides = [1, 1]} : vector<8x1024xf32> to vector<8x256xf32>
    %130 = math.tanh %129 : vector<8x256xf32>
    %131 = vector.extract_strided_slice %91 {offsets = [0, 768], sizes = [8, 256], strides = [1, 1]} : vector<8x1024xf32> to vector<8x256xf32>
    %132 = arith.negf %131 : vector<8x256xf32>
    %133 = math.exp %132 : vector<8x256xf32>
    %cst_35 = arith.constant 1.000000e+00 : f32
    %134 = vector.broadcast %cst_35 : f32 to vector<8x256xf32>
    %135 = arith.addf %134, %133 : vector<8x256xf32>
    %136 = arith.divf %134, %135 : vector<8x256xf32>
    %137 = arith.mulf %128, %74 : vector<8x256xf32>
    %138 = arith.mulf %122, %130 : vector<8x256xf32>
    %139 = arith.addf %137, %138 : vector<8x256xf32>
    %140 = math.tanh %139 : vector<8x256xf32>
    %141 = arith.mulf %136, %140 : vector<8x256xf32>
    %c2_i32 = arith.constant 2 : i32
    %c8_i32_36 = arith.constant 8 : i32
    %142 = arith.muli %c2_i32, %c8_i32_36 : i32
    %143 = tpu.assume_multiple %142, 8 : i32
    %c7_i32_37 = arith.constant 7 : i32
    %144 = arith.subi %c7_i32_37, %c2_i32 : i32
    %c8_i32_38 = arith.constant 8 : i32
    %145 = arith.muli %144, %c8_i32_38 : i32
    %146 = tpu.assume_multiple %145, 8 : i32
    %147 = arith.index_cast %143 : i32 to index
    %c0_39 = arith.constant 0 : index
    %148 = vector.load %arg6[%147, %c0_39] : memref<64x2048xf32, #tpu.memory_space<vmem>>, vector<8x1024xf32>
    %149 = arith.index_cast %146 : i32 to index
    %c1024_40 = arith.constant 1024 : index
    %150 = vector.load %arg6[%149, %c1024_40] : memref<64x2048xf32, #tpu.memory_space<vmem>>, vector<8x1024xf32>
    %151 = arith.truncf %116 : vector<8x256xf32> to vector<8x256xbf16>
    %cst_41 = arith.constant dense<0.000000e+00> : vector<8x1024xf32>
    %152 = tpu.matmul %151, %8, %cst_41 {dimension_numbers = #tpu.dot_dimension_numbers<[1], [0], [0], [1], [0, 0, 1, 1], [], []>} : vector<8x256xbf16>, vector<256x1024xbf16>, vector<8x1024xf32> -> vector<8x1024xf32>
    %153 = arith.addf %148, %152 : vector<8x1024xf32>
    %154 = arith.truncf %141 : vector<8x256xf32> to vector<8x256xbf16>
    %cst_42 = arith.constant dense<0.000000e+00> : vector<8x1024xf32>
    %155 = tpu.matmul %154, %10, %cst_42 {dimension_numbers = #tpu.dot_dimension_numbers<[1], [0], [0], [1], [0, 0, 1, 1], [], []>} : vector<8x256xbf16>, vector<256x1024xbf16>, vector<8x1024xf32> -> vector<8x1024xf32>
    %156 = arith.addf %150, %155 : vector<8x1024xf32>
    %157 = vector.extract_strided_slice %153 {offsets = [0, 0], sizes = [8, 256], strides = [1, 1]} : vector<8x1024xf32> to vector<8x256xf32>
    %158 = arith.negf %157 : vector<8x256xf32>
    %159 = math.exp %158 : vector<8x256xf32>
    %cst_43 = arith.constant 1.000000e+00 : f32
    %160 = vector.broadcast %cst_43 : f32 to vector<8x256xf32>
    %161 = arith.addf %160, %159 : vector<8x256xf32>
    %162 = arith.divf %160, %161 : vector<8x256xf32>
    %163 = vector.extract_strided_slice %153 {offsets = [0, 256], sizes = [8, 256], strides = [1, 1]} : vector<8x1024xf32> to vector<8x256xf32>
    %164 = arith.negf %163 : vector<8x256xf32>
    %165 = math.exp %164 : vector<8x256xf32>
    %cst_44 = arith.constant 1.000000e+00 : f32
    %166 = vector.broadcast %cst_44 : f32 to vector<8x256xf32>
    %167 = arith.addf %166, %165 : vector<8x256xf32>
    %168 = arith.divf %166, %167 : vector<8x256xf32>
    %169 = vector.extract_strided_slice %153 {offsets = [0, 512], sizes = [8, 256], strides = [1, 1]} : vector<8x1024xf32> to vector<8x256xf32>
    %170 = math.tanh %169 : vector<8x256xf32>
    %171 = vector.extract_strided_slice %153 {offsets = [0, 768], sizes = [8, 256], strides = [1, 1]} : vector<8x1024xf32> to vector<8x256xf32>
    %172 = arith.negf %171 : vector<8x256xf32>
    %173 = math.exp %172 : vector<8x256xf32>
    %cst_45 = arith.constant 1.000000e+00 : f32
    %174 = vector.broadcast %cst_45 : f32 to vector<8x256xf32>
    %175 = arith.addf %174, %173 : vector<8x256xf32>
    %176 = arith.divf %174, %175 : vector<8x256xf32>
    %177 = arith.mulf %168, %114 : vector<8x256xf32>
    %178 = arith.mulf %162, %170 : vector<8x256xf32>
    %179 = arith.addf %177, %178 : vector<8x256xf32>
    %180 = math.tanh %179 : vector<8x256xf32>
    %181 = arith.mulf %176, %180 : vector<8x256xf32>
    %182 = vector.extract_strided_slice %156 {offsets = [0, 0], sizes = [8, 256], strides = [1, 1]} : vector<8x1024xf32> to vector<8x256xf32>
    %183 = arith.negf %182 : vector<8x256xf32>
    %184 = math.exp %183 : vector<8x256xf32>
    %cst_46 = arith.constant 1.000000e+00 : f32
    %185 = vector.broadcast %cst_46 : f32 to vector<8x256xf32>
    %186 = arith.addf %185, %184 : vector<8x256xf32>
    %187 = arith.divf %185, %186 : vector<8x256xf32>
    %188 = vector.extract_strided_slice %156 {offsets = [0, 256], sizes = [8, 256], strides = [1, 1]} : vector<8x1024xf32> to vector<8x256xf32>
    %189 = arith.negf %188 : vector<8x256xf32>
    %190 = math.exp %189 : vector<8x256xf32>
    %cst_47 = arith.constant 1.000000e+00 : f32
    %191 = vector.broadcast %cst_47 : f32 to vector<8x256xf32>
    %192 = arith.addf %191, %190 : vector<8x256xf32>
    %193 = arith.divf %191, %192 : vector<8x256xf32>
    %194 = vector.extract_strided_slice %156 {offsets = [0, 512], sizes = [8, 256], strides = [1, 1]} : vector<8x1024xf32> to vector<8x256xf32>
    %195 = math.tanh %194 : vector<8x256xf32>
    %196 = vector.extract_strided_slice %156 {offsets = [0, 768], sizes = [8, 256], strides = [1, 1]} : vector<8x1024xf32> to vector<8x256xf32>
    %197 = arith.negf %196 : vector<8x256xf32>
    %198 = math.exp %197 : vector<8x256xf32>
    %cst_48 = arith.constant 1.000000e+00 : f32
    %199 = vector.broadcast %cst_48 : f32 to vector<8x256xf32>
    %200 = arith.addf %199, %198 : vector<8x256xf32>
    %201 = arith.divf %199, %200 : vector<8x256xf32>
    %202 = arith.mulf %193, %139 : vector<8x256xf32>
    %203 = arith.mulf %187, %195 : vector<8x256xf32>
    %204 = arith.addf %202, %203 : vector<8x256xf32>
    %205 = math.tanh %204 : vector<8x256xf32>
    %206 = arith.mulf %201, %205 : vector<8x256xf32>
    %c3_i32 = arith.constant 3 : i32
    %c8_i32_49 = arith.constant 8 : i32
    %207 = arith.muli %c3_i32, %c8_i32_49 : i32
    %208 = tpu.assume_multiple %207, 8 : i32
    %c7_i32_50 = arith.constant 7 : i32
    %209 = arith.subi %c7_i32_50, %c3_i32 : i32
    %c8_i32_51 = arith.constant 8 : i32
    %210 = arith.muli %209, %c8_i32_51 : i32
    %211 = tpu.assume_multiple %210, 8 : i32
    %212 = arith.index_cast %208 : i32 to index
    %c0_52 = arith.constant 0 : index
    %213 = vector.load %arg6[%212, %c0_52] : memref<64x2048xf32, #tpu.memory_space<vmem>>, vector<8x1024xf32>
    %214 = arith.index_cast %211 : i32 to index
    %c1024_53 = arith.constant 1024 : index
    %215 = vector.load %arg6[%214, %c1024_53] : memref<64x2048xf32, #tpu.memory_space<vmem>>, vector<8x1024xf32>
    %216 = arith.truncf %181 : vector<8x256xf32> to vector<8x256xbf16>
    %cst_54 = arith.constant dense<0.000000e+00> : vector<8x1024xf32>
    %217 = tpu.matmul %216, %8, %cst_54 {dimension_numbers = #tpu.dot_dimension_numbers<[1], [0], [0], [1], [0, 0, 1, 1], [], []>} : vector<8x256xbf16>, vector<256x1024xbf16>, vector<8x1024xf32> -> vector<8x1024xf32>
    %218 = arith.addf %213, %217 : vector<8x1024xf32>
    %219 = arith.truncf %206 : vector<8x256xf32> to vector<8x256xbf16>
    %cst_55 = arith.constant dense<0.000000e+00> : vector<8x1024xf32>
    %220 = tpu.matmul %219, %10, %cst_55 {dimension_numbers = #tpu.dot_dimension_numbers<[1], [0], [0], [1], [0, 0, 1, 1], [], []>} : vector<8x256xbf16>, vector<256x1024xbf16>, vector<8x1024xf32> -> vector<8x1024xf32>
    %221 = arith.addf %215, %220 : vector<8x1024xf32>
    %222 = vector.extract_strided_slice %218 {offsets = [0, 0], sizes = [8, 256], strides = [1, 1]} : vector<8x1024xf32> to vector<8x256xf32>
    %223 = arith.negf %222 : vector<8x256xf32>
    %224 = math.exp %223 : vector<8x256xf32>
    %cst_56 = arith.constant 1.000000e+00 : f32
    %225 = vector.broadcast %cst_56 : f32 to vector<8x256xf32>
    %226 = arith.addf %225, %224 : vector<8x256xf32>
    %227 = arith.divf %225, %226 : vector<8x256xf32>
    %228 = vector.extract_strided_slice %218 {offsets = [0, 256], sizes = [8, 256], strides = [1, 1]} : vector<8x1024xf32> to vector<8x256xf32>
    %229 = arith.negf %228 : vector<8x256xf32>
    %230 = math.exp %229 : vector<8x256xf32>
    %cst_57 = arith.constant 1.000000e+00 : f32
    %231 = vector.broadcast %cst_57 : f32 to vector<8x256xf32>
    %232 = arith.addf %231, %230 : vector<8x256xf32>
    %233 = arith.divf %231, %232 : vector<8x256xf32>
    %234 = vector.extract_strided_slice %218 {offsets = [0, 512], sizes = [8, 256], strides = [1, 1]} : vector<8x1024xf32> to vector<8x256xf32>
    %235 = math.tanh %234 : vector<8x256xf32>
    %236 = vector.extract_strided_slice %218 {offsets = [0, 768], sizes = [8, 256], strides = [1, 1]} : vector<8x1024xf32> to vector<8x256xf32>
    %237 = arith.negf %236 : vector<8x256xf32>
    %238 = math.exp %237 : vector<8x256xf32>
    %cst_58 = arith.constant 1.000000e+00 : f32
    %239 = vector.broadcast %cst_58 : f32 to vector<8x256xf32>
    %240 = arith.addf %239, %238 : vector<8x256xf32>
    %241 = arith.divf %239, %240 : vector<8x256xf32>
    %242 = arith.mulf %233, %179 : vector<8x256xf32>
    %243 = arith.mulf %227, %235 : vector<8x256xf32>
    %244 = arith.addf %242, %243 : vector<8x256xf32>
    %245 = math.tanh %244 : vector<8x256xf32>
    %246 = arith.mulf %241, %245 : vector<8x256xf32>
    %247 = vector.extract_strided_slice %221 {offsets = [0, 0], sizes = [8, 256], strides = [1, 1]} : vector<8x1024xf32> to vector<8x256xf32>
    %248 = arith.negf %247 : vector<8x256xf32>
    %249 = math.exp %248 : vector<8x256xf32>
    %cst_59 = arith.constant 1.000000e+00 : f32
    %250 = vector.broadcast %cst_59 : f32 to vector<8x256xf32>
    %251 = arith.addf %250, %249 : vector<8x256xf32>
    %252 = arith.divf %250, %251 : vector<8x256xf32>
    %253 = vector.extract_strided_slice %221 {offsets = [0, 256], sizes = [8, 256], strides = [1, 1]} : vector<8x1024xf32> to vector<8x256xf32>
    %254 = arith.negf %253 : vector<8x256xf32>
    %255 = math.exp %254 : vector<8x256xf32>
    %cst_60 = arith.constant 1.000000e+00 : f32
    %256 = vector.broadcast %cst_60 : f32 to vector<8x256xf32>
    %257 = arith.addf %256, %255 : vector<8x256xf32>
    %258 = arith.divf %256, %257 : vector<8x256xf32>
    %259 = vector.extract_strided_slice %221 {offsets = [0, 512], sizes = [8, 256], strides = [1, 1]} : vector<8x1024xf32> to vector<8x256xf32>
    %260 = math.tanh %259 : vector<8x256xf32>
    %261 = vector.extract_strided_slice %221 {offsets = [0, 768], sizes = [8, 256], strides = [1, 1]} : vector<8x1024xf32> to vector<8x256xf32>
    %262 = arith.negf %261 : vector<8x256xf32>
    %263 = math.exp %262 : vector<8x256xf32>
    %cst_61 = arith.constant 1.000000e+00 : f32
    %264 = vector.broadcast %cst_61 : f32 to vector<8x256xf32>
    %265 = arith.addf %264, %263 : vector<8x256xf32>
    %266 = arith.divf %264, %265 : vector<8x256xf32>
    %267 = arith.mulf %258, %204 : vector<8x256xf32>
    %268 = arith.mulf %252, %260 : vector<8x256xf32>
    %269 = arith.addf %267, %268 : vector<8x256xf32>
    %270 = math.tanh %269 : vector<8x256xf32>
    %271 = arith.mulf %266, %270 : vector<8x256xf32>
    %c4_i32 = arith.constant 4 : i32
    %c8_i32_62 = arith.constant 8 : i32
    %272 = arith.muli %c4_i32, %c8_i32_62 : i32
    %273 = tpu.assume_multiple %272, 8 : i32
    %c7_i32_63 = arith.constant 7 : i32
    %274 = arith.subi %c7_i32_63, %c4_i32 : i32
    %c8_i32_64 = arith.constant 8 : i32
    %275 = arith.muli %274, %c8_i32_64 : i32
    %276 = tpu.assume_multiple %275, 8 : i32
    %277 = arith.index_cast %273 : i32 to index
    %c0_65 = arith.constant 0 : index
    %278 = vector.load %arg6[%277, %c0_65] : memref<64x2048xf32, #tpu.memory_space<vmem>>, vector<8x1024xf32>
    %279 = arith.index_cast %276 : i32 to index
    %c1024_66 = arith.constant 1024 : index
    %280 = vector.load %arg6[%279, %c1024_66] : memref<64x2048xf32, #tpu.memory_space<vmem>>, vector<8x1024xf32>
    %281 = arith.truncf %246 : vector<8x256xf32> to vector<8x256xbf16>
    %cst_67 = arith.constant dense<0.000000e+00> : vector<8x1024xf32>
    %282 = tpu.matmul %281, %8, %cst_67 {dimension_numbers = #tpu.dot_dimension_numbers<[1], [0], [0], [1], [0, 0, 1, 1], [], []>} : vector<8x256xbf16>, vector<256x1024xbf16>, vector<8x1024xf32> -> vector<8x1024xf32>
    %283 = arith.addf %278, %282 : vector<8x1024xf32>
    %284 = arith.truncf %271 : vector<8x256xf32> to vector<8x256xbf16>
    %cst_68 = arith.constant dense<0.000000e+00> : vector<8x1024xf32>
    %285 = tpu.matmul %284, %10, %cst_68 {dimension_numbers = #tpu.dot_dimension_numbers<[1], [0], [0], [1], [0, 0, 1, 1], [], []>} : vector<8x256xbf16>, vector<256x1024xbf16>, vector<8x1024xf32> -> vector<8x1024xf32>
    %286 = arith.addf %280, %285 : vector<8x1024xf32>
    %287 = vector.extract_strided_slice %283 {offsets = [0, 0], sizes = [8, 256], strides = [1, 1]} : vector<8x1024xf32> to vector<8x256xf32>
    %288 = arith.negf %287 : vector<8x256xf32>
    %289 = math.exp %288 : vector<8x256xf32>
    %cst_69 = arith.constant 1.000000e+00 : f32
    %290 = vector.broadcast %cst_69 : f32 to vector<8x256xf32>
    %291 = arith.addf %290, %289 : vector<8x256xf32>
    %292 = arith.divf %290, %291 : vector<8x256xf32>
    %293 = vector.extract_strided_slice %283 {offsets = [0, 256], sizes = [8, 256], strides = [1, 1]} : vector<8x1024xf32> to vector<8x256xf32>
    %294 = arith.negf %293 : vector<8x256xf32>
    %295 = math.exp %294 : vector<8x256xf32>
    %cst_70 = arith.constant 1.000000e+00 : f32
    %296 = vector.broadcast %cst_70 : f32 to vector<8x256xf32>
    %297 = arith.addf %296, %295 : vector<8x256xf32>
    %298 = arith.divf %296, %297 : vector<8x256xf32>
    %299 = vector.extract_strided_slice %283 {offsets = [0, 512], sizes = [8, 256], strides = [1, 1]} : vector<8x1024xf32> to vector<8x256xf32>
    %300 = math.tanh %299 : vector<8x256xf32>
    %301 = vector.extract_strided_slice %283 {offsets = [0, 768], sizes = [8, 256], strides = [1, 1]} : vector<8x1024xf32> to vector<8x256xf32>
    %302 = arith.negf %301 : vector<8x256xf32>
    %303 = math.exp %302 : vector<8x256xf32>
    %cst_71 = arith.constant 1.000000e+00 : f32
    %304 = vector.broadcast %cst_71 : f32 to vector<8x256xf32>
    %305 = arith.addf %304, %303 : vector<8x256xf32>
    %306 = arith.divf %304, %305 : vector<8x256xf32>
    %307 = arith.mulf %298, %244 : vector<8x256xf32>
    %308 = arith.mulf %292, %300 : vector<8x256xf32>
    %309 = arith.addf %307, %308 : vector<8x256xf32>
    %310 = math.tanh %309 : vector<8x256xf32>
    %311 = arith.mulf %306, %310 : vector<8x256xf32>
    %312 = vector.extract_strided_slice %286 {offsets = [0, 0], sizes = [8, 256], strides = [1, 1]} : vector<8x1024xf32> to vector<8x256xf32>
    %313 = arith.negf %312 : vector<8x256xf32>
    %314 = math.exp %313 : vector<8x256xf32>
    %cst_72 = arith.constant 1.000000e+00 : f32
    %315 = vector.broadcast %cst_72 : f32 to vector<8x256xf32>
    %316 = arith.addf %315, %314 : vector<8x256xf32>
    %317 = arith.divf %315, %316 : vector<8x256xf32>
    %318 = vector.extract_strided_slice %286 {offsets = [0, 256], sizes = [8, 256], strides = [1, 1]} : vector<8x1024xf32> to vector<8x256xf32>
    %319 = arith.negf %318 : vector<8x256xf32>
    %320 = math.exp %319 : vector<8x256xf32>
    %cst_73 = arith.constant 1.000000e+00 : f32
    %321 = vector.broadcast %cst_73 : f32 to vector<8x256xf32>
    %322 = arith.addf %321, %320 : vector<8x256xf32>
    %323 = arith.divf %321, %322 : vector<8x256xf32>
    %324 = vector.extract_strided_slice %286 {offsets = [0, 512], sizes = [8, 256], strides = [1, 1]} : vector<8x1024xf32> to vector<8x256xf32>
    %325 = math.tanh %324 : vector<8x256xf32>
    %326 = vector.extract_strided_slice %286 {offsets = [0, 768], sizes = [8, 256], strides = [1, 1]} : vector<8x1024xf32> to vector<8x256xf32>
    %327 = arith.negf %326 : vector<8x256xf32>
    %328 = math.exp %327 : vector<8x256xf32>
    %cst_74 = arith.constant 1.000000e+00 : f32
    %329 = vector.broadcast %cst_74 : f32 to vector<8x256xf32>
    %330 = arith.addf %329, %328 : vector<8x256xf32>
    %331 = arith.divf %329, %330 : vector<8x256xf32>
    %332 = arith.mulf %323, %269 : vector<8x256xf32>
    %333 = arith.mulf %317, %325 : vector<8x256xf32>
    %334 = arith.addf %332, %333 : vector<8x256xf32>
    %335 = math.tanh %334 : vector<8x256xf32>
    %336 = arith.mulf %331, %335 : vector<8x256xf32>
    %c5_i32 = arith.constant 5 : i32
    %c8_i32_75 = arith.constant 8 : i32
    %337 = arith.muli %c5_i32, %c8_i32_75 : i32
    %338 = tpu.assume_multiple %337, 8 : i32
    %c7_i32_76 = arith.constant 7 : i32
    %339 = arith.subi %c7_i32_76, %c5_i32 : i32
    %c8_i32_77 = arith.constant 8 : i32
    %340 = arith.muli %339, %c8_i32_77 : i32
    %341 = tpu.assume_multiple %340, 8 : i32
    %342 = arith.index_cast %338 : i32 to index
    %c0_78 = arith.constant 0 : index
    %343 = vector.load %arg6[%342, %c0_78] : memref<64x2048xf32, #tpu.memory_space<vmem>>, vector<8x1024xf32>
    %344 = arith.index_cast %341 : i32 to index
    %c1024_79 = arith.constant 1024 : index
    %345 = vector.load %arg6[%344, %c1024_79] : memref<64x2048xf32, #tpu.memory_space<vmem>>, vector<8x1024xf32>
    %346 = arith.truncf %311 : vector<8x256xf32> to vector<8x256xbf16>
    %cst_80 = arith.constant dense<0.000000e+00> : vector<8x1024xf32>
    %347 = tpu.matmul %346, %8, %cst_80 {dimension_numbers = #tpu.dot_dimension_numbers<[1], [0], [0], [1], [0, 0, 1, 1], [], []>} : vector<8x256xbf16>, vector<256x1024xbf16>, vector<8x1024xf32> -> vector<8x1024xf32>
    %348 = arith.addf %343, %347 : vector<8x1024xf32>
    %349 = arith.truncf %336 : vector<8x256xf32> to vector<8x256xbf16>
    %cst_81 = arith.constant dense<0.000000e+00> : vector<8x1024xf32>
    %350 = tpu.matmul %349, %10, %cst_81 {dimension_numbers = #tpu.dot_dimension_numbers<[1], [0], [0], [1], [0, 0, 1, 1], [], []>} : vector<8x256xbf16>, vector<256x1024xbf16>, vector<8x1024xf32> -> vector<8x1024xf32>
    %351 = arith.addf %345, %350 : vector<8x1024xf32>
    %352 = vector.extract_strided_slice %348 {offsets = [0, 0], sizes = [8, 256], strides = [1, 1]} : vector<8x1024xf32> to vector<8x256xf32>
    %353 = arith.negf %352 : vector<8x256xf32>
    %354 = math.exp %353 : vector<8x256xf32>
    %cst_82 = arith.constant 1.000000e+00 : f32
    %355 = vector.broadcast %cst_82 : f32 to vector<8x256xf32>
    %356 = arith.addf %355, %354 : vector<8x256xf32>
    %357 = arith.divf %355, %356 : vector<8x256xf32>
    %358 = vector.extract_strided_slice %348 {offsets = [0, 256], sizes = [8, 256], strides = [1, 1]} : vector<8x1024xf32> to vector<8x256xf32>
    %359 = arith.negf %358 : vector<8x256xf32>
    %360 = math.exp %359 : vector<8x256xf32>
    %cst_83 = arith.constant 1.000000e+00 : f32
    %361 = vector.broadcast %cst_83 : f32 to vector<8x256xf32>
    %362 = arith.addf %361, %360 : vector<8x256xf32>
    %363 = arith.divf %361, %362 : vector<8x256xf32>
    %364 = vector.extract_strided_slice %348 {offsets = [0, 512], sizes = [8, 256], strides = [1, 1]} : vector<8x1024xf32> to vector<8x256xf32>
    %365 = math.tanh %364 : vector<8x256xf32>
    %366 = vector.extract_strided_slice %348 {offsets = [0, 768], sizes = [8, 256], strides = [1, 1]} : vector<8x1024xf32> to vector<8x256xf32>
    %367 = arith.negf %366 : vector<8x256xf32>
    %368 = math.exp %367 : vector<8x256xf32>
    %cst_84 = arith.constant 1.000000e+00 : f32
    %369 = vector.broadcast %cst_84 : f32 to vector<8x256xf32>
    %370 = arith.addf %369, %368 : vector<8x256xf32>
    %371 = arith.divf %369, %370 : vector<8x256xf32>
    %372 = arith.mulf %363, %309 : vector<8x256xf32>
    %373 = arith.mulf %357, %365 : vector<8x256xf32>
    %374 = arith.addf %372, %373 : vector<8x256xf32>
    %375 = math.tanh %374 : vector<8x256xf32>
    %376 = arith.mulf %371, %375 : vector<8x256xf32>
    %377 = vector.extract_strided_slice %351 {offsets = [0, 0], sizes = [8, 256], strides = [1, 1]} : vector<8x1024xf32> to vector<8x256xf32>
    %378 = arith.negf %377 : vector<8x256xf32>
    %379 = math.exp %378 : vector<8x256xf32>
    %cst_85 = arith.constant 1.000000e+00 : f32
    %380 = vector.broadcast %cst_85 : f32 to vector<8x256xf32>
    %381 = arith.addf %380, %379 : vector<8x256xf32>
    %382 = arith.divf %380, %381 : vector<8x256xf32>
    %383 = vector.extract_strided_slice %351 {offsets = [0, 256], sizes = [8, 256], strides = [1, 1]} : vector<8x1024xf32> to vector<8x256xf32>
    %384 = arith.negf %383 : vector<8x256xf32>
    %385 = math.exp %384 : vector<8x256xf32>
    %cst_86 = arith.constant 1.000000e+00 : f32
    %386 = vector.broadcast %cst_86 : f32 to vector<8x256xf32>
    %387 = arith.addf %386, %385 : vector<8x256xf32>
    %388 = arith.divf %386, %387 : vector<8x256xf32>
    %389 = vector.extract_strided_slice %351 {offsets = [0, 512], sizes = [8, 256], strides = [1, 1]} : vector<8x1024xf32> to vector<8x256xf32>
    %390 = math.tanh %389 : vector<8x256xf32>
    %391 = vector.extract_strided_slice %351 {offsets = [0, 768], sizes = [8, 256], strides = [1, 1]} : vector<8x1024xf32> to vector<8x256xf32>
    %392 = arith.negf %391 : vector<8x256xf32>
    %393 = math.exp %392 : vector<8x256xf32>
    %cst_87 = arith.constant 1.000000e+00 : f32
    %394 = vector.broadcast %cst_87 : f32 to vector<8x256xf32>
    %395 = arith.addf %394, %393 : vector<8x256xf32>
    %396 = arith.divf %394, %395 : vector<8x256xf32>
    %397 = arith.mulf %388, %334 : vector<8x256xf32>
    %398 = arith.mulf %382, %390 : vector<8x256xf32>
    %399 = arith.addf %397, %398 : vector<8x256xf32>
    %400 = math.tanh %399 : vector<8x256xf32>
    %401 = arith.mulf %396, %400 : vector<8x256xf32>
    %c6_i32 = arith.constant 6 : i32
    %c8_i32_88 = arith.constant 8 : i32
    %402 = arith.muli %c6_i32, %c8_i32_88 : i32
    %403 = tpu.assume_multiple %402, 8 : i32
    %c7_i32_89 = arith.constant 7 : i32
    %404 = arith.subi %c7_i32_89, %c6_i32 : i32
    %c8_i32_90 = arith.constant 8 : i32
    %405 = arith.muli %404, %c8_i32_90 : i32
    %406 = tpu.assume_multiple %405, 8 : i32
    %407 = arith.index_cast %403 : i32 to index
    %c0_91 = arith.constant 0 : index
    %408 = vector.load %arg6[%407, %c0_91] : memref<64x2048xf32, #tpu.memory_space<vmem>>, vector<8x1024xf32>
    %409 = arith.index_cast %406 : i32 to index
    %c1024_92 = arith.constant 1024 : index
    %410 = vector.load %arg6[%409, %c1024_92] : memref<64x2048xf32, #tpu.memory_space<vmem>>, vector<8x1024xf32>
    %411 = arith.truncf %376 : vector<8x256xf32> to vector<8x256xbf16>
    %cst_93 = arith.constant dense<0.000000e+00> : vector<8x1024xf32>
    %412 = tpu.matmul %411, %8, %cst_93 {dimension_numbers = #tpu.dot_dimension_numbers<[1], [0], [0], [1], [0, 0, 1, 1], [], []>} : vector<8x256xbf16>, vector<256x1024xbf16>, vector<8x1024xf32> -> vector<8x1024xf32>
    %413 = arith.addf %408, %412 : vector<8x1024xf32>
    %414 = arith.truncf %401 : vector<8x256xf32> to vector<8x256xbf16>
    %cst_94 = arith.constant dense<0.000000e+00> : vector<8x1024xf32>
    %415 = tpu.matmul %414, %10, %cst_94 {dimension_numbers = #tpu.dot_dimension_numbers<[1], [0], [0], [1], [0, 0, 1, 1], [], []>} : vector<8x256xbf16>, vector<256x1024xbf16>, vector<8x1024xf32> -> vector<8x1024xf32>
    %416 = arith.addf %410, %415 : vector<8x1024xf32>
    %417 = vector.extract_strided_slice %413 {offsets = [0, 0], sizes = [8, 256], strides = [1, 1]} : vector<8x1024xf32> to vector<8x256xf32>
    %418 = arith.negf %417 : vector<8x256xf32>
    %419 = math.exp %418 : vector<8x256xf32>
    %cst_95 = arith.constant 1.000000e+00 : f32
    %420 = vector.broadcast %cst_95 : f32 to vector<8x256xf32>
    %421 = arith.addf %420, %419 : vector<8x256xf32>
    %422 = arith.divf %420, %421 : vector<8x256xf32>
    %423 = vector.extract_strided_slice %413 {offsets = [0, 256], sizes = [8, 256], strides = [1, 1]} : vector<8x1024xf32> to vector<8x256xf32>
    %424 = arith.negf %423 : vector<8x256xf32>
    %425 = math.exp %424 : vector<8x256xf32>
    %cst_96 = arith.constant 1.000000e+00 : f32
    %426 = vector.broadcast %cst_96 : f32 to vector<8x256xf32>
    %427 = arith.addf %426, %425 : vector<8x256xf32>
    %428 = arith.divf %426, %427 : vector<8x256xf32>
    %429 = vector.extract_strided_slice %413 {offsets = [0, 512], sizes = [8, 256], strides = [1, 1]} : vector<8x1024xf32> to vector<8x256xf32>
    %430 = math.tanh %429 : vector<8x256xf32>
    %431 = vector.extract_strided_slice %413 {offsets = [0, 768], sizes = [8, 256], strides = [1, 1]} : vector<8x1024xf32> to vector<8x256xf32>
    %432 = arith.negf %431 : vector<8x256xf32>
    %433 = math.exp %432 : vector<8x256xf32>
    %cst_97 = arith.constant 1.000000e+00 : f32
    %434 = vector.broadcast %cst_97 : f32 to vector<8x256xf32>
    %435 = arith.addf %434, %433 : vector<8x256xf32>
    %436 = arith.divf %434, %435 : vector<8x256xf32>
    %437 = arith.mulf %428, %374 : vector<8x256xf32>
    %438 = arith.mulf %422, %430 : vector<8x256xf32>
    %439 = arith.addf %437, %438 : vector<8x256xf32>
    %440 = math.tanh %439 : vector<8x256xf32>
    %441 = arith.mulf %436, %440 : vector<8x256xf32>
    %442 = vector.extract_strided_slice %416 {offsets = [0, 0], sizes = [8, 256], strides = [1, 1]} : vector<8x1024xf32> to vector<8x256xf32>
    %443 = arith.negf %442 : vector<8x256xf32>
    %444 = math.exp %443 : vector<8x256xf32>
    %cst_98 = arith.constant 1.000000e+00 : f32
    %445 = vector.broadcast %cst_98 : f32 to vector<8x256xf32>
    %446 = arith.addf %445, %444 : vector<8x256xf32>
    %447 = arith.divf %445, %446 : vector<8x256xf32>
    %448 = vector.extract_strided_slice %416 {offsets = [0, 256], sizes = [8, 256], strides = [1, 1]} : vector<8x1024xf32> to vector<8x256xf32>
    %449 = arith.negf %448 : vector<8x256xf32>
    %450 = math.exp %449 : vector<8x256xf32>
    %cst_99 = arith.constant 1.000000e+00 : f32
    %451 = vector.broadcast %cst_99 : f32 to vector<8x256xf32>
    %452 = arith.addf %451, %450 : vector<8x256xf32>
    %453 = arith.divf %451, %452 : vector<8x256xf32>
    %454 = vector.extract_strided_slice %416 {offsets = [0, 512], sizes = [8, 256], strides = [1, 1]} : vector<8x1024xf32> to vector<8x256xf32>
    %455 = math.tanh %454 : vector<8x256xf32>
    %456 = vector.extract_strided_slice %416 {offsets = [0, 768], sizes = [8, 256], strides = [1, 1]} : vector<8x1024xf32> to vector<8x256xf32>
    %457 = arith.negf %456 : vector<8x256xf32>
    %458 = math.exp %457 : vector<8x256xf32>
    %cst_100 = arith.constant 1.000000e+00 : f32
    %459 = vector.broadcast %cst_100 : f32 to vector<8x256xf32>
    %460 = arith.addf %459, %458 : vector<8x256xf32>
    %461 = arith.divf %459, %460 : vector<8x256xf32>
    %462 = arith.mulf %453, %399 : vector<8x256xf32>
    %463 = arith.mulf %447, %455 : vector<8x256xf32>
    %464 = arith.addf %462, %463 : vector<8x256xf32>
    %465 = math.tanh %464 : vector<8x256xf32>
    %466 = arith.mulf %461, %465 : vector<8x256xf32>
    %c7_i32_101 = arith.constant 7 : i32
    %c8_i32_102 = arith.constant 8 : i32
    %467 = arith.muli %c7_i32_101, %c8_i32_102 : i32
    %468 = tpu.assume_multiple %467, 8 : i32
    %c7_i32_103 = arith.constant 7 : i32
    %469 = arith.subi %c7_i32_103, %c7_i32_101 : i32
    %c8_i32_104 = arith.constant 8 : i32
    %470 = arith.muli %469, %c8_i32_104 : i32
    %471 = tpu.assume_multiple %470, 8 : i32
    %472 = arith.index_cast %468 : i32 to index
    %c0_105 = arith.constant 0 : index
    %473 = vector.load %arg6[%472, %c0_105] : memref<64x2048xf32, #tpu.memory_space<vmem>>, vector<8x1024xf32>
    %474 = arith.index_cast %471 : i32 to index
    %c1024_106 = arith.constant 1024 : index
    %475 = vector.load %arg6[%474, %c1024_106] : memref<64x2048xf32, #tpu.memory_space<vmem>>, vector<8x1024xf32>
    %476 = arith.truncf %441 : vector<8x256xf32> to vector<8x256xbf16>
    %cst_107 = arith.constant dense<0.000000e+00> : vector<8x1024xf32>
    %477 = tpu.matmul %476, %8, %cst_107 {dimension_numbers = #tpu.dot_dimension_numbers<[1], [0], [0], [1], [0, 0, 1, 1], [], []>} : vector<8x256xbf16>, vector<256x1024xbf16>, vector<8x1024xf32> -> vector<8x1024xf32>
    %478 = arith.addf %473, %477 : vector<8x1024xf32>
    %479 = arith.truncf %466 : vector<8x256xf32> to vector<8x256xbf16>
    %cst_108 = arith.constant dense<0.000000e+00> : vector<8x1024xf32>
    %480 = tpu.matmul %479, %10, %cst_108 {dimension_numbers = #tpu.dot_dimension_numbers<[1], [0], [0], [1], [0, 0, 1, 1], [], []>} : vector<8x256xbf16>, vector<256x1024xbf16>, vector<8x1024xf32> -> vector<8x1024xf32>
    %481 = arith.addf %475, %480 : vector<8x1024xf32>
    %482 = vector.extract_strided_slice %478 {offsets = [0, 0], sizes = [8, 256], strides = [1, 1]} : vector<8x1024xf32> to vector<8x256xf32>
    %483 = arith.negf %482 : vector<8x256xf32>
    %484 = math.exp %483 : vector<8x256xf32>
    %cst_109 = arith.constant 1.000000e+00 : f32
    %485 = vector.broadcast %cst_109 : f32 to vector<8x256xf32>
    %486 = arith.addf %485, %484 : vector<8x256xf32>
    %487 = arith.divf %485, %486 : vector<8x256xf32>
    %488 = vector.extract_strided_slice %478 {offsets = [0, 256], sizes = [8, 256], strides = [1, 1]} : vector<8x1024xf32> to vector<8x256xf32>
    %489 = arith.negf %488 : vector<8x256xf32>
    %490 = math.exp %489 : vector<8x256xf32>
    %cst_110 = arith.constant 1.000000e+00 : f32
    %491 = vector.broadcast %cst_110 : f32 to vector<8x256xf32>
    %492 = arith.addf %491, %490 : vector<8x256xf32>
    %493 = arith.divf %491, %492 : vector<8x256xf32>
    %494 = vector.extract_strided_slice %478 {offsets = [0, 512], sizes = [8, 256], strides = [1, 1]} : vector<8x1024xf32> to vector<8x256xf32>
    %495 = math.tanh %494 : vector<8x256xf32>
    %496 = vector.extract_strided_slice %478 {offsets = [0, 768], sizes = [8, 256], strides = [1, 1]} : vector<8x1024xf32> to vector<8x256xf32>
    %497 = arith.negf %496 : vector<8x256xf32>
    %498 = math.exp %497 : vector<8x256xf32>
    %cst_111 = arith.constant 1.000000e+00 : f32
    %499 = vector.broadcast %cst_111 : f32 to vector<8x256xf32>
    %500 = arith.addf %499, %498 : vector<8x256xf32>
    %501 = arith.divf %499, %500 : vector<8x256xf32>
    %502 = arith.mulf %493, %439 : vector<8x256xf32>
    %503 = arith.mulf %487, %495 : vector<8x256xf32>
    %504 = arith.addf %502, %503 : vector<8x256xf32>
    %505 = math.tanh %504 : vector<8x256xf32>
    %506 = arith.mulf %501, %505 : vector<8x256xf32>
    %507 = vector.extract_strided_slice %481 {offsets = [0, 0], sizes = [8, 256], strides = [1, 1]} : vector<8x1024xf32> to vector<8x256xf32>
    %508 = arith.negf %507 : vector<8x256xf32>
    %509 = math.exp %508 : vector<8x256xf32>
    %cst_112 = arith.constant 1.000000e+00 : f32
    %510 = vector.broadcast %cst_112 : f32 to vector<8x256xf32>
    %511 = arith.addf %510, %509 : vector<8x256xf32>
    %512 = arith.divf %510, %511 : vector<8x256xf32>
    %513 = vector.extract_strided_slice %481 {offsets = [0, 256], sizes = [8, 256], strides = [1, 1]} : vector<8x1024xf32> to vector<8x256xf32>
    %514 = arith.negf %513 : vector<8x256xf32>
    %515 = math.exp %514 : vector<8x256xf32>
    %cst_113 = arith.constant 1.000000e+00 : f32
    %516 = vector.broadcast %cst_113 : f32 to vector<8x256xf32>
    %517 = arith.addf %516, %515 : vector<8x256xf32>
    %518 = arith.divf %516, %517 : vector<8x256xf32>
    %519 = vector.extract_strided_slice %481 {offsets = [0, 512], sizes = [8, 256], strides = [1, 1]} : vector<8x1024xf32> to vector<8x256xf32>
    %520 = math.tanh %519 : vector<8x256xf32>
    %521 = vector.extract_strided_slice %481 {offsets = [0, 768], sizes = [8, 256], strides = [1, 1]} : vector<8x1024xf32> to vector<8x256xf32>
    %522 = arith.negf %521 : vector<8x256xf32>
    %523 = math.exp %522 : vector<8x256xf32>
    %cst_114 = arith.constant 1.000000e+00 : f32
    %524 = vector.broadcast %cst_114 : f32 to vector<8x256xf32>
    %525 = arith.addf %524, %523 : vector<8x256xf32>
    %526 = arith.divf %524, %525 : vector<8x256xf32>
    %527 = arith.mulf %518, %464 : vector<8x256xf32>
    %528 = arith.mulf %512, %520 : vector<8x256xf32>
    %529 = arith.addf %527, %528 : vector<8x256xf32>
    %530 = math.tanh %529 : vector<8x256xf32>
    %531 = arith.mulf %526, %530 : vector<8x256xf32>
    %c8_i32_115 = arith.constant 8 : i32
    %c0_116 = arith.constant 0 : index
    %c0_117 = arith.constant 0 : index
    %532 = vector.load %arg5[%c0_116, %c0_117] : memref<8x512xf32, #tpu.memory_space<vmem>>, vector<8x256xf32>
    tpu.vector_store %arg5[%c0_116, %c0_117], %506 {strides = array<i32>} : memref<8x512xf32, #tpu.memory_space<vmem>>, vector<8x256xf32>,
    %c0_118 = arith.constant 0 : index
    %c256 = arith.constant 256 : index
    %533 = vector.load %arg5[%c0_118, %c256] : memref<8x512xf32, #tpu.memory_space<vmem>>, vector<8x256xf32>
    tpu.vector_store %arg5[%c0_118, %c256], %531 {strides = array<i32>} : memref<8x512xf32, #tpu.memory_space<vmem>>, vector<8x256xf32>,
    return
  }
  func.func @transform_0(%arg0: i32) -> (i32, i32) {
    %c0_i32 = arith.constant 0 : i32
    %c0_i32_0 = arith.constant 0 : i32
    %c0_i32_1 = arith.constant 0 : i32
    return %c0_i32, %c0_i32_0 : i32, i32
  }
  func.func @transform_1(%arg0: i32) -> (i32, i32) {
    %c0_i32 = arith.constant 0 : i32
    %c0_i32_0 = arith.constant 0 : i32
    %c0_i32_1 = arith.constant 0 : i32
    return %c0_i32, %c0_i32_0 : i32, i32
  }
  func.func @transform_2(%arg0: i32) -> (i32, i32, i32) {
    %c0_i32 = arith.constant 0 : i32
    %c0_i32_0 = arith.constant 0 : i32
    %c0_i32_1 = arith.constant 0 : i32
    %c0_i32_2 = arith.constant 0 : i32
    return %c0_i32, %c0_i32_0, %c0_i32_1 : i32, i32, i32
  }
  func.func @transform_3(%arg0: i32) -> (i32, i32) {
    %c0_i32 = arith.constant 0 : i32
    %c0_i32_0 = arith.constant 0 : i32
    %c0_i32_1 = arith.constant 0 : i32
    return %c0_i32, %c0_i32_0 : i32, i32
  }
  func.func @transform_4(%arg0: i32) -> (i32, i32) {
    %c0_i32 = arith.constant 0 : i32
    %c0_i32_0 = arith.constant 0 : i32
    %c0_i32_1 = arith.constant 0 : i32
    return %c0_i32, %c0_i32_0 : i32, i32
  }
}

</mosaic_0001>

<llo_original>
// kernel: tpu_custom_call.1
$region0: #{tpu_custom_call.1}
  #allocation0 [shape = 'u32[]', space=smem, size = 0x4, offset = 0x4, fixed_abs, tag = 'smem constant byte address 0x4 - core index']
  #allocation1 [shape = 'u32[144,128]{1,0:T(1,128)}', space=vmem, size = 0x12000, scoped, tag = 'internal scratch']
  #allocation2 [shape = 'f32[64,2048]{1,0:T(8,128)}', space=vmem, size = 0x80000, scoped, tag = 'scratch operand']
  %s0 = inlined_call_operand.hbm [shape: bf16[64,384], index: 0, kind: input, shape index: {}]
  %s1 = inlined_call_operand.hbm [shape: bf16[384,2048], index: 1, kind: input, shape index: {}]
  %s2 = inlined_call_operand.hbm [shape: bf16[2,256,1024], index: 2, kind: input, shape index: {}]
  %s3 = inlined_call_operand.hbm [shape: f32[1,2048], index: 3, kind: input, shape index: {}]
  %s4 = inlined_call_operand.hbm [shape: f32[8,512], index: 4, kind: output, shape index: {}]
  %s5 = sld [smem:[#allocation0]]
  $region42: #{tpu_custom_call.1} parent=0
    _
  %s7 = ssub.s32 1, %s5
  %s8 = scalar_select 0, %s7, %s5
  $region1: #{tpu_custom_call.1} parent=0
    #allocation3 [shape = 'u8[49152]{0}', space=vmem, size = 0xc000, scoped, tag = 'input window, operand 0, single buffered']
    #allocation4 [shape = 's32[1]{0}', space=sflag, size = 0x4, scoped, tag = 'scoped memory for tpu_custom_call.1']
    #allocation5 [shape = 's32[1]{0}', space=sflag, size = 0x4, scoped, tag = 'scoped memory for tpu_custom_call.1']
    #allocation6 [shape = 'u8[1572864]{0}', space=vmem, size = 0x180000, scoped, tag = 'input window, operand 1, single buffered']
    #allocation7 [shape = 's32[1]{0}', space=sflag, size = 0x4, scoped, tag = 'scoped memory for tpu_custom_call.1']
    #allocation8 [shape = 'u8[1048576]{0}', space=vmem, size = 0x100000, scoped, tag = 'input window, operand 2, single buffered']
    #allocation9 [shape = 'u8[8192]{0}', space=vmem, size = 0x2000, scoped, tag = 'input window, operand 3, single buffered']
    #allocation10 [shape = 's32[1]{0}', space=sflag, size = 0x4, scoped, tag = 'scoped memory for tpu_custom_call.1']
    #allocation11 [shape = 'u8[16384]{0}', space=vmem, size = 0x4000, scoped, tag = 'output window, operand 0, single buffered']
    %9 = vsyncpa [#allocation4], 0
    %10 = vsyncpa [#allocation7], 0
    %11 = vsyncpa [#allocation10], 0
    %12 = vsyncpa [#allocation5], 0
    // Predicated region
    $region2: #{tpu_custom_call.1} parent=1 // pred_check
      _
    $region3: #{tpu_custom_call.1} parent=1 // pred_check_branch
      %14 = sbr.rel (0) target = $region5
    $region4: #{tpu_custom_call.1} parent=1 // pred_region
      %s16 = ssub.s32 1536, 1536
      %17 = vsyncadd [#allocation4], %s16
      %s18 = sshll.u32 [#allocation3], 4
      %s19 = int_to_ptr.vmem [resolvable:$true] %s18
      %24 = dma.hbm_to_vmem [thread:$0]  %s0, 1536, %s19, [#allocation4], 192, 192, 12
    $region5: #{tpu_custom_call.1} parent=1 // pred_fallthru
      _
    // Predicated region
    $region6: #{tpu_custom_call.1} parent=1 // pred_check
      _
    $region7: #{tpu_custom_call.1} parent=1 // pred_check_branch
      %26 = sbr.rel (0) target = $region9
    $region8: #{tpu_custom_call.1} parent=1 // pred_region
      %s28 = ssub.s32 49152, 49152
      %29 = vsyncadd [#allocation7], %s28
      %s30 = sshll.u32 [#allocation6], 4
      %s31 = int_to_ptr.vmem [resolvable:$true] %s30
      %36 = dma.hbm_to_vmem [thread:$0]  %s1, 49152, %s31, [#allocation7], 1024, 1024, 64
    $region9: #{tpu_custom_call.1} parent=1 // pred_fallthru
      _
    // Predicated region
    $region10: #{tpu_custom_call.1} parent=1 // pred_check
      _
    $region11: #{tpu_custom_call.1} parent=1 // pred_check_branch
      %38 = sbr.rel (0) target = $region13
    $region12: #{tpu_custom_call.1} parent=1 // pred_region
      %s40 = ssub.s32 32768, 32768
      %41 = vsyncadd [#allocation7], %s40
      %s42 = sshll.u32 [#allocation8], 4
      %s43 = int_to_ptr.vmem [resolvable:$true] %s42
      %48 = dma.hbm_to_vmem [thread:$0]  %s2, 32768, %s43, [#allocation7], 512, 512, 32
    $region13: #{tpu_custom_call.1} parent=1 // pred_fallthru
      _
    // Predicated region
    $region14: #{tpu_custom_call.1} parent=1 // pred_check
      _
    $region15: #{tpu_custom_call.1} parent=1 // pred_check_branch
      %50 = sbr.rel (0) target = $region17
    $region16: #{tpu_custom_call.1} parent=1 // pred_region
      %s52 = ssub.s32 256, 256
      %53 = vsyncadd [#allocation10], %s52
      %s55 = sshll.u32 [#allocation9], 4
      %s56 = int_to_ptr.vmem [resolvable:$true] %s55
      %58 = dma.hbm_to_vmem [thread:$0]  %s3, 256, %s56, [#allocation10]
    $region17: #{tpu_custom_call.1} parent=1 // pred_fallthru
      _
    // Predicated region
    $region18: #{tpu_custom_call.1} parent=1 // pred_check
      _
    $region19: #{tpu_custom_call.1} parent=1 // pred_check_branch
      %60 = sbr.rel (0) target = $region21
    $region20: #{tpu_custom_call.1} parent=1 // pred_region
      %61 = dma.done [#allocation4], 1536
    $region21: #{tpu_custom_call.1} parent=1 // pred_fallthru
      _
    // Predicated region
    $region22: #{tpu_custom_call.1} parent=1 // pred_check
      _
    $region23: #{tpu_custom_call.1} parent=1 // pred_check_branch
      %63 = sbr.rel (0) target = $region25
    $region24: #{tpu_custom_call.1} parent=1 // pred_region
      %64 = dma.done [#allocation7], 49152
    $region25: #{tpu_custom_call.1} parent=1 // pred_fallthru
      _
    // Predicated region
    $region26: #{tpu_custom_call.1} parent=1 // pred_check
      _
    $region27: #{tpu_custom_call.1} parent=1 // pred_check_branch
      %66 = sbr.rel (0) target = $region29
    $region28: #{tpu_custom_call.1} parent=1 // pred_region
      %67 = dma.done [#allocation7], 32768
    $region29: #{tpu_custom_call.1} parent=1 // pred_fallthru
      _
    // Predicated region
    $region30: #{tpu_custom_call.1} parent=1 // pred_check
      _
    $region31: #{tpu_custom_call.1} parent=1 // pred_check_branch
      %69 = sbr.rel (0) target = $region33
    $region32: #{tpu_custom_call.1} parent=1 // pred_region
      %70 = dma.done [#allocation10], 256
    $region33: #{tpu_custom_call.1} parent=1 // pred_fallthru
      _
    %v72 = vld [vmem:[#allocation3] sm:$0xff]
    %v73 = vld [vmem:[#allocation3 + $0x8] sm:$0xf]
    %v74 = vld [vmem:[#allocation3 + $0xc] sm:$0xff]
    %v75 = vld [vmem:[#allocation3 + $0x14] sm:$0xf]
    %v76 = vld [vmem:[#allocation3 + $0x18] sm:$0xff]
    %v77 = vld [vmem:[#allocation3 + $0x20] sm:$0xf]
    %v78 = vld [vmem:[#allocation3 + $0x24] sm:$0xff]
    %v79 = vld [vmem:[#allocation3 + $0x2c] sm:$0xf]
    %v80 = vld [vmem:[#allocation3 + $0x30] sm:$0xff]
    %v81 = vld [vmem:[#allocation3 + $0x38] sm:$0xf]
    %v82 = vld [vmem:[#allocation3 + $0x3c] sm:$0xff]
    %v83 = vld [vmem:[#allocation3 + $0x44] sm:$0xf]
    %v84 = vld [vmem:[#allocation3 + $0x48] sm:$0xff]
    %v85 = vld [vmem:[#allocation3 + $0x50] sm:$0xf]
    %v86 = vld [vmem:[#allocation3 + $0x54] sm:$0xff]
    %v87 = vld [vmem:[#allocation3 + $0x5c] sm:$0xf]
    %v88 = vld [vmem:[#allocation6] sm:$0xff]
    %v89 = vld [vmem:[#allocation6 + $0x8] sm:$0xff]
    %v90 = vld [vmem:[#allocation6 + $0x10] sm:$0xff]
    %v91 = vld [vmem:[#allocation6 + $0x18] sm:$0xff]
    %v92 = vld [vmem:[#allocation6 + $0x20] sm:$0xff]
    %v93 = vld [vmem:[#allocation6 + $0x28] sm:$0xff]
    %v94 = vld [vmem:[#allocation6 + $0x30] sm:$0xff]
    %v95 = vld [vmem:[#allocation6 + $0x38] sm:$0xff]
    %v96 = vld [vmem:[#allocation6 + $0x40] sm:$0xff]
    %v97 = vld [vmem:[#allocation6 + $0x48] sm:$0xff]
    %v98 = vld [vmem:[#allocation6 + $0x50] sm:$0xff]
    %v99 = vld [vmem:[#allocation6 + $0x58] sm:$0xff]
    %v100 = vld [vmem:[#allocation6 + $0x60] sm:$0xff]
    %v101 = vld [vmem:[#allocation6 + $0x68] sm:$0xff]
    %v102 = vld [vmem:[#allocation6 + $0x70] sm:$0xff]
    %v103 = vld [vmem:[#allocation6 + $0x78] sm:$0xff]
    %v104 = vld [vmem:[#allocation6 + $0x80] sm:$0xff]
    %v105 = vld [vmem:[#allocation6 + $0x88] sm:$0xff]
    %v106 = vld [vmem:[#allocation6 + $0x90] sm:$0xff]
    %v107 = vld [vmem:[#allocation6 + $0x98] sm:$0xff]
    %v108 = vld [vmem:[#allocation6 + $0xa0] sm:$0xff]
    %v109 = vld [vmem:[#allocation6 + $0xa8] sm:$0xff]
    %v110 = vld [vmem:[#allocation6 + $0xb0] sm:$0xff]
    %v111 = vld [vmem:[#allocation6 + $0xb8] sm:$0xff]
    %v112 = vld [vmem:[#allocation6 + $0xc0] sm:$0xff]
    %v113 = vld [vmem:[#allocation6 + $0xc8] sm:$0xff]
    %v114 = vld [vmem:[#allocation6 + $0xd0] sm:$0xff]
    %v115 = vld [vmem:[#allocation6 + $0xd8] sm:$0xff]
    %v116 = vld [vmem:[#allocation6 + $0xe0] sm:$0xff]
    %v117 = vld [vmem:[#allocation6 + $0xe8] sm:$0xff]
    %v118 = vld [vmem:[#allocation6 + $0xf0] sm:$0xff]
    %v119 = vld [vmem:[#allocation6 + $0xf8] sm:$0xff]
    %v120 = vld [vmem:[#allocation6 + $0x100] sm:$0xff]
    %v121 = vld [vmem:[#allocation6 + $0x108] sm:$0xff]
    %v122 = vld [vmem:[#allocation6 + $0x110] sm:$0xff]
    %v123 = vld [vmem:[#allocation6 + $0x118] sm:$0xff]
    %v124 = vld [vmem:[#allocation6 + $0x120] sm:$0xff]
    %v125 = vld [vmem:[#allocation6 + $0x128] sm:$0xff]
    %v126 = vld [vmem:[#allocation6 + $0x130] sm:$0xff]
    %v127 = vld [vmem:[#allocation6 + $0x138] sm:$0xff]
    %v128 = vld [vmem:[#allocation6 + $0x140] sm:$0xff]
    %v129 = vld [vmem:[#allocation6 + $0x148] sm:$0xff]
    %v130 = vld [vmem:[#allocation6 + $0x150] sm:$0xff]
    %v131 = vld [vmem:[#allocation6 + $0x158] sm:$0xff]
    %v132 = vld [vmem:[#allocation6 + $0x160] sm:$0xff]
    %v133 = vld [vmem:[#allocation6 + $0x168] sm:$0xff]
    %v134 = vld [vmem:[#allocation6 + $0x170] sm:$0xff]
    %v135 = vld [vmem:[#allocation6 + $0x178] sm:$0xff]
    %v136 = vld [vmem:[#allocation6 + $0x180] sm:$0xff]
    %v137 = vld [vmem:[#allocation6 + $0x188] sm:$0xff]
    %v138 = vld [vmem:[#allocation6 + $0x190] sm:$0xff]
    %v139 = vld [vmem:[#allocation6 + $0x198] sm:$0xff]
    %v140 = vld [vmem:[#allocation6 + $0x1a0] sm:$0xff]
    %v141 = vld [vmem:[#allocation6 + $0x1a8] sm:$0xff]
    %v142 = vld [vmem:[#allocation6 + $0x1b0] sm:$0xff]
    %v143 = vld [vmem:[#allocation6 + $0x1b8] sm:$0xff]
    %v144 = vld [vmem:[#allocation6 + $0x1c0] sm:$0xff]
    %v145 = vld [vmem:[#allocation6 + $0x1c8] sm:$0xff]
    %v146 = vld [vmem:[#allocation6 + $0x1d0] sm:$0xff]
    %v147 = vld [vmem:[#allocation6 + $0x1d8] sm:$0xff]
    %v148 = vld [vmem:[#allocation6 + $0x1e0] sm:$0xff]
    %v149 = vld [vmem:[#allocation6 + $0x1e8] sm:$0xff]
    %v150 = vld [vmem:[#allocation6 + $0x1f0] sm:$0xff]
    %v151 = vld [vmem:[#allocation6 + $0x1f8] sm:$0xff]
    %v152 = vld [vmem:[#allocation6 + $0x200] sm:$0xff]
    %v153 = vld [vmem:[#allocation6 + $0x208] sm:$0xff]
    %v154 = vld [vmem:[#allocation6 + $0x210] sm:$0xff]
    %v155 = vld [vmem:[#allocation6 + $0x218] sm:$0xff]
    %v156 = vld [vmem:[#allocation6 + $0x220] sm:$0xff]
    %v157 = vld [vmem:[#allocation6 + $0x228] sm:$0xff]
    %v158 = vld [vmem:[#allocation6 + $0x230] sm:$0xff]
    %v159 = vld [vmem:[#allocation6 + $0x238] sm:$0xff]
    %v160 = vld [vmem:[#allocation6 + $0x240] sm:$0xff]
    %v161 = vld [vmem:[#allocation6 + $0x248] sm:$0xff]
    %v162 = vld [vmem:[#allocation6 + $0x250] sm:$0xff]
    %v163 = vld [vmem:[#allocation6 + $0x258] sm:$0xff]
    %v164 = vld [vmem:[#allocation6 + $0x260] sm:$0xff]
    %v165 = vld [vmem:[#allocation6 + $0x268] sm:$0xff]
    %v166 = vld [vmem:[#allocation6 + $0x270] sm:$0xff]
    %v167 = vld [vmem:[#allocation6 + $0x278] sm:$0xff]
    %v168 = vld [vmem:[#allocation6 + $0x280] sm:$0xff]
    %v169 = vld [vmem:[#allocation6 + $0x288] sm:$0xff]
    %v170 = vld [vmem:[#allocation6 + $0x290] sm:$0xff]
    %v171 = vld [vmem:[#allocation6 + $0x298] sm:$0xff]
    %v172 = vld [vmem:[#allocation6 + $0x2a0] sm:$0xff]
    %v173 = vld [vmem:[#allocation6 + $0x2a8] sm:$0xff]
    %v174 = vld [vmem:[#allocation6 + $0x2b0] sm:$0xff]
    %v175 = vld [vmem:[#allocation6 + $0x2b8] sm:$0xff]
    %v176 = vld [vmem:[#allocation6 + $0x2c0] sm:$0xff]
    %v177 = vld [vmem:[#allocation6 + $0x2c8] sm:$0xff]
    %v178 = vld [vmem:[#allocation6 + $0x2d0] sm:$0xff]
    %v179 = vld [vmem:[#allocation6 + $0x2d8] sm:$0xff]
    %v180 = vld [vmem:[#allocation6 + $0x2e0] sm:$0xff]
    %v181 = vld [vmem:[#allocation6 + $0x2e8] sm:$0xff]
    %v182 = vld [vmem:[#allocation6 + $0x2f0] sm:$0xff]
    %v183 = vld [vmem:[#allocation6 + $0x2f8] sm:$0xff]
    %v184 = vld [vmem:[#allocation6 + $0x300] sm:$0xff]
    %v185 = vld [vmem:[#allocation6 + $0x308] sm:$0xff]
    %v186 = vld [vmem:[#allocation6 + $0x310] sm:$0xff]
    %v187 = vld [vmem:[#allocation6 + $0x318] sm:$0xff]
    %v188 = vld [vmem:[#allocation6 + $0x320] sm:$0xff]
    %v189 = vld [vmem:[#allocation6 + $0x328] sm:$0xff]
    %v190 = vld [vmem:[#allocation6 + $0x330] sm:$0xff]
    %v191 = vld [vmem:[#allocation6 + $0x338] sm:$0xff]
    %v192 = vld [vmem:[#allocation6 + $0x340] sm:$0xff]
    %v193 = vld [vmem:[#allocation6 + $0x348] sm:$0xff]
    %v194 = vld [vmem:[#allocation6 + $0x350] sm:$0xff]
    %v195 = vld [vmem:[#allocation6 + $0x358] sm:$0xff]
    %v196 = vld [vmem:[#allocation6 + $0x360] sm:$0xff]
    %v197 = vld [vmem:[#allocation6 + $0x368] sm:$0xff]
    %v198 = vld [vmem:[#allocation6 + $0x370] sm:$0xff]
    %v199 = vld [vmem:[#allocation6 + $0x378] sm:$0xff]
    %v200 = vld [vmem:[#allocation6 + $0x380] sm:$0xff]
    %v201 = vld [vmem:[#allocation6 + $0x388] sm:$0xff]
    %v202 = vld [vmem:[#allocation6 + $0x390] sm:$0xff]
    %v203 = vld [vmem:[#allocation6 + $0x398] sm:$0xff]
    %v204 = vld [vmem:[#allocation6 + $0x3a0] sm:$0xff]
    %v205 = vld [vmem:[#allocation6 + $0x3a8] sm:$0xff]
    %v206 = vld [vmem:[#allocation6 + $0x3b0] sm:$0xff]
    %v207 = vld [vmem:[#allocation6 + $0x3b8] sm:$0xff]
    %v208 = vld [vmem:[#allocation6 + $0x3c0] sm:$0xff]
    %v209 = vld [vmem:[#allocation6 + $0x3c8] sm:$0xff]
    %v210 = vld [vmem:[#allocation6 + $0x3d0] sm:$0xff]
    %v211 = vld [vmem:[#allocation6 + $0x3d8] sm:$0xff]
    %v212 = vld [vmem:[#allocation6 + $0x3e0] sm:$0xff]
    %v213 = vld [vmem:[#allocation6 + $0x3e8] sm:$0xff]
    %v214 = vld [vmem:[#allocation6 + $0x3f0] sm:$0xff]
    %v215 = vld [vmem:[#allocation6 + $0x3f8] sm:$0xff]
    %v216 = vld [vmem:[#allocation6 + $0x400] sm:$0xff]
    %v217 = vld [vmem:[#allocation6 + $0x408] sm:$0xff]
    %v218 = vld [vmem:[#allocation6 + $0x410] sm:$0xff]
    %v219 = vld [vmem:[#allocation6 + $0x418] sm:$0xff]
    %v220 = vld [vmem:[#allocation6 + $0x420] sm:$0xff]
    %v221 = vld [vmem:[#allocation6 + $0x428] sm:$0xff]
    %v222 = vld [vmem:[#allocation6 + $0x430] sm:$0xff]
    %v223 = vld [vmem:[#allocation6 + $0x438] sm:$0xff]
    %v224 = vld [vmem:[#allocation6 + $0x440] sm:$0xff]
    %v225 = vld [vmem:[#allocation6 + $0x448] sm:$0xff]
    %v226 = vld [vmem:[#allocation6 + $0x450] sm:$0xff]
    %v227 = vld [vmem:[#allocation6 + $0x458] sm:$0xff]
    %v228 = vld [vmem:[#allocation6 + $0x460] sm:$0xff]
    %v229 = vld [vmem:[#allocation6 + $0x468] sm:$0xff]
    %v230 = vld [vmem:[#allocation6 + $0x470] sm:$0xff]
    %v231 = vld [vmem:[#allocation6 + $0x478] sm:$0xff]
    %v232 = vld [vmem:[#allocation6 + $0x480] sm:$0xff]
    %v233 = vld [vmem:[#allocation6 + $0x488] sm:$0xff]
    %v234 = vld [vmem:[#allocation6 + $0x490] sm:$0xff]
    %v235 = vld [vmem:[#allocation6 + $0x498] sm:$0xff]
    %v236 = vld [vmem:[#allocation6 + $0x4a0] sm:$0xff]
    %v237 = vld [vmem:[#allocation6 + $0x4a8] sm:$0xff]
    %v238 = vld [vmem:[#allocation6 + $0x4b0] sm:$0xff]
    %v239 = vld [vmem:[#allocation6 + $0x4b8] sm:$0xff]
    %v240 = vld [vmem:[#allocation6 + $0x4c0] sm:$0xff]
    %v241 = vld [vmem:[#allocation6 + $0x4c8] sm:$0xff]
    %v242 = vld [vmem:[#allocation6 + $0x4d0] sm:$0xff]
    %v243 = vld [vmem:[#allocation6 + $0x4d8] sm:$0xff]
    %v244 = vld [vmem:[#allocation6 + $0x4e0] sm:$0xff]
    %v245 = vld [vmem:[#allocation6 + $0x4e8] sm:$0xff]
    %v246 = vld [vmem:[#allocation6 + $0x4f0] sm:$0xff]
    %v247 = vld [vmem:[#allocation6 + $0x4f8] sm:$0xff]
    %v248 = vld [vmem:[#allocation6 + $0x500] sm:$0xff]
    %v249 = vld [vmem:[#allocation6 + $0x508] sm:$0xff]
    %v250 = vld [vmem:[#allocation6 + $0x510] sm:$0xff]
    %v251 = vld [vmem:[#allocation6 + $0x518] sm:$0xff]
    %v252 = vld [vmem:[#allocation6 + $0x520] sm:$0xff]
    %v253 = vld [vmem:[#allocation6 + $0x528] sm:$0xff]
    %v254 = vld [vmem:[#allocation6 + $0x530] sm:$0xff]
    %v255 = vld [vmem:[#allocation6 + $0x538] sm:$0xff]
    %v256 = vld [vmem:[#allocation6 + $0x540] sm:$0xff]
    %v257 = vld [vmem:[#allocation6 + $0x548] sm:$0xff]
    %v258 = vld [vmem:[#allocation6 + $0x550] sm:$0xff]
    %v259 = vld [vmem:[#allocation6 + $0x558] sm:$0xff]
    %v260 = vld [vmem:[#allocation6 + $0x560] sm:$0xff]
    %v261 = vld [vmem:[#allocation6 + $0x568] sm:$0xff]
    %v262 = vld [vmem:[#allocation6 + $0x570] sm:$0xff]
    %v263 = vld [vmem:[#allocation6 + $0x578] sm:$0xff]
    %v264 = vld [vmem:[#allocation6 + $0x580] sm:$0xff]
    %v265 = vld [vmem:[#allocation6 + $0x588] sm:$0xff]
    %v266 = vld [vmem:[#allocation6 + $0x590] sm:$0xff]
    %v267 = vld [vmem:[#allocation6 + $0x598] sm:$0xff]
    %v268 = vld [vmem:[#allocation6 + $0x5a0] sm:$0xff]
    %v269 = vld [vmem:[#allocation6 + $0x5a8] sm:$0xff]
    %v270 = vld [vmem:[#allocation6 + $0x5b0] sm:$0xff]
    %v271 = vld [vmem:[#allocation6 + $0x5b8] sm:$0xff]
    %v272 = vld [vmem:[#allocation6 + $0x5c0] sm:$0xff]
    %v273 = vld [vmem:[#allocation6 + $0x5c8] sm:$0xff]
    %v274 = vld [vmem:[#allocation6 + $0x5d0] sm:$0xff]
    %v275 = vld [vmem:[#allocation6 + $0x5d8] sm:$0xff]
    %v276 = vld [vmem:[#allocation6 + $0x5e0] sm:$0xff]
    %v277 = vld [vmem:[#allocation6 + $0x5e8] sm:$0xff]
    %v278 = vld [vmem:[#allocation6 + $0x5f0] sm:$0xff]
    %v279 = vld [vmem:[#allocation6 + $0x5f8] sm:$0xff]
    %v280 = vld [vmem:[#allocation6 + $0x600] sm:$0xff]
    %v281 = vld [vmem:[#allocation6 + $0x608] sm:$0xff]
    %v282 = vld [vmem:[#allocation6 + $0x610] sm:$0xff]
    %v283 = vld [vmem:[#allocation6 + $0x618] sm:$0xff]
    %v284 = vld [vmem:[#allocation6 + $0x620] sm:$0xff]
    %v285 = vld [vmem:[#allocation6 + $0x628] sm:$0xff]
    %v286 = vld [vmem:[#allocation6 + $0x630] sm:$0xff]
    %v287 = vld [vmem:[#allocation6 + $0x638] sm:$0xff]
    %v288 = vld [vmem:[#allocation6 + $0x640] sm:$0xff]
    %v289 = vld [vmem:[#allocation6 + $0x648] sm:$0xff]
    %v290 = vld [vmem:[#allocation6 + $0x650] sm:$0xff]
    %v291 = vld [vmem:[#allocation6 + $0x658] sm:$0xff]
    %v292 = vld [vmem:[#allocation6 + $0x660] sm:$0xff]
    %v293 = vld [vmem:[#allocation6 + $0x668] sm:$0xff]
    %v294 = vld [vmem:[#allocation6 + $0x670] sm:$0xff]
    %v295 = vld [vmem:[#allocation6 + $0x678] sm:$0xff]
    %v296 = vld [vmem:[#allocation6 + $0x680] sm:$0xff]
    %v297 = vld [vmem:[#allocation6 + $0x688] sm:$0xff]
    %v298 = vld [vmem:[#allocation6 + $0x690] sm:$0xff]
    %v299 = vld [vmem:[#allocation6 + $0x698] sm:$0xff]
    %v300 = vld [vmem:[#allocation6 + $0x6a0] sm:$0xff]
    %v301 = vld [vmem:[#allocation6 + $0x6a8] sm:$0xff]
    %v302 = vld [vmem:[#allocation6 + $0x6b0] sm:$0xff]
    %v303 = vld [vmem:[#allocation6 + $0x6b8] sm:$0xff]
    %v304 = vld [vmem:[#allocation6 + $0x6c0] sm:$0xff]
    %v305 = vld [vmem:[#allocation6 + $0x6c8] sm:$0xff]
    %v306 = vld [vmem:[#allocation6 + $0x6d0] sm:$0xff]
    %v307 = vld [vmem:[#allocation6 + $0x6d8] sm:$0xff]
    %v308 = vld [vmem:[#allocation6 + $0x6e0] sm:$0xff]
    %v309 = vld [vmem:[#allocation6 + $0x6e8] sm:$0xff]
    %v310 = vld [vmem:[#allocation6 + $0x6f0] sm:$0xff]
    %v311 = vld [vmem:[#allocation6 + $0x6f8] sm:$0xff]
    %v312 = vld [vmem:[#allocation6 + $0x700] sm:$0xff]
    %v313 = vld [vmem:[#allocation6 + $0x708] sm:$0xff]
    %v314 = vld [vmem:[#allocation6 + $0x710] sm:$0xff]
    %v315 = vld [vmem:[#allocation6 + $0x718] sm:$0xff]
    %v316 = vld [vmem:[#allocation6 + $0x720] sm:$0xff]
    %v317 = vld [vmem:[#allocation6 + $0x728] sm:$0xff]
    %v318 = vld [vmem:[#allocation6 + $0x730] sm:$0xff]
    %v319 = vld [vmem:[#allocation6 + $0x738] sm:$0xff]
    %v320 = vld [vmem:[#allocation6 + $0x740] sm:$0xff]
    %v321 = vld [vmem:[#allocation6 + $0x748] sm:$0xff]
    %v322 = vld [vmem:[#allocation6 + $0x750] sm:$0xff]
    %v323 = vld [vmem:[#allocation6 + $0x758] sm:$0xff]
    %v324 = vld [vmem:[#allocation6 + $0x760] sm:$0xff]
    %v325 = vld [vmem:[#allocation6 + $0x768] sm:$0xff]
    %v326 = vld [vmem:[#allocation6 + $0x770] sm:$0xff]
    %v327 = vld [vmem:[#allocation6 + $0x778] sm:$0xff]
    %v328 = vld [vmem:[#allocation6 + $0x780] sm:$0xff]
    %v329 = vld [vmem:[#allocation6 + $0x788] sm:$0xff]
    %v330 = vld [vmem:[#allocation6 + $0x790] sm:$0xff]
    %v331 = vld [vmem:[#allocation6 + $0x798] sm:$0xff]
    %v332 = vld [vmem:[#allocation6 + $0x7a0] sm:$0xff]
    %v333 = vld [vmem:[#allocation6 + $0x7a8] sm:$0xff]
    %v334 = vld [vmem:[#allocation6 + $0x7b0] sm:$0xff]
    %v335 = vld [vmem:[#allocation6 + $0x7b8] sm:$0xff]
    %v336 = vld [vmem:[#allocation6 + $0x7c0] sm:$0xff]
    %v337 = vld [vmem:[#allocation6 + $0x7c8] sm:$0xff]
    %v338 = vld [vmem:[#allocation6 + $0x7d0] sm:$0xff]
    %v339 = vld [vmem:[#allocation6 + $0x7d8] sm:$0xff]
    %v340 = vld [vmem:[#allocation6 + $0x7e0] sm:$0xff]
    %v341 = vld [vmem:[#allocation6 + $0x7e8] sm:$0xff]
    %v342 = vld [vmem:[#allocation6 + $0x7f0] sm:$0xff]
    %v343 = vld [vmem:[#allocation6 + $0x7f8] sm:$0xff]
    %v344 = vld [vmem:[#allocation6 + $0x800] sm:$0xff]
    %v345 = vld [vmem:[#allocation6 + $0x808] sm:$0xff]
    %v346 = vld [vmem:[#allocation6 + $0x810] sm:$0xff]
    %v347 = vld [vmem:[#allocation6 + $0x818] sm:$0xff]
    %v348 = vld [vmem:[#allocation6 + $0x820] sm:$0xff]
    %v349 = vld [vmem:[#allocation6 + $0x828] sm:$0xff]
    %v350 = vld [vmem:[#allocation6 + $0x830] sm:$0xff]
    %v351 = vld [vmem:[#allocation6 + $0x838] sm:$0xff]
    %v352 = vld [vmem:[#allocation6 + $0x840] sm:$0xff]
    %v353 = vld [vmem:[#allocation6 + $0x848] sm:$0xff]
    %v354 = vld [vmem:[#allocation6 + $0x850] sm:$0xff]
    %v355 = vld [vmem:[#allocation6 + $0x858] sm:$0xff]
    %v356 = vld [vmem:[#allocation6 + $0x860] sm:$0xff]
    %v357 = vld [vmem:[#allocation6 + $0x868] sm:$0xff]
    %v358 = vld [vmem:[#allocation6 + $0x870] sm:$0xff]
    %v359 = vld [vmem:[#allocation6 + $0x878] sm:$0xff]
    %v360 = vld [vmem:[#allocation6 + $0x880] sm:$0xff]
    %v361 = vld [vmem:[#allocation6 + $0x888] sm:$0xff]
    %v362 = vld [vmem:[#allocation6 + $0x890] sm:$0xff]
    %v363 = vld [vmem:[#allocation6 + $0x898] sm:$0xff]
    %v364 = vld [vmem:[#allocation6 + $0x8a0] sm:$0xff]
    %v365 = vld [vmem:[#allocation6 + $0x8a8] sm:$0xff]
    %v366 = vld [vmem:[#allocation6 + $0x8b0] sm:$0xff]
    %v367 = vld [vmem:[#allocation6 + $0x8b8] sm:$0xff]
    %v368 = vld [vmem:[#allocation6 + $0x8c0] sm:$0xff]
    %v369 = vld [vmem:[#allocation6 + $0x8c8] sm:$0xff]
    %v370 = vld [vmem:[#allocation6 + $0x8d0] sm:$0xff]
    %v371 = vld [vmem:[#allocation6 + $0x8d8] sm:$0xff]
    %v372 = vld [vmem:[#allocation6 + $0x8e0] sm:$0xff]
    %v373 = vld [vmem:[#allocation6 + $0x8e8] sm:$0xff]
    %v374 = vld [vmem:[#allocation6 + $0x8f0] sm:$0xff]
    %v375 = vld [vmem:[#allocation6 + $0x8f8] sm:$0xff]
    %v376 = vld [vmem:[#allocation6 + $0x900] sm:$0xff]
    %v377 = vld [vmem:[#allocation6 + $0x908] sm:$0xff]
    %v378 = vld [vmem:[#allocation6 + $0x910] sm:$0xff]
    %v379 = vld [vmem:[#allocation6 + $0x918] sm:$0xff]
    %v380 = vld [vmem:[#allocation6 + $0x920] sm:$0xff]
    %v381 = vld [vmem:[#allocation6 + $0x928] sm:$0xff]
    %v382 = vld [vmem:[#allocation6 + $0x930] sm:$0xff]
    %v383 = vld [vmem:[#allocation6 + $0x938] sm:$0xff]
    %v384 = vld [vmem:[#allocation6 + $0x940] sm:$0xff]
    %v385 = vld [vmem:[#allocation6 + $0x948] sm:$0xff]
    %v386 = vld [vmem:[#allocation6 + $0x950] sm:$0xff]
    %v387 = vld [vmem:[#allocation6 + $0x958] sm:$0xff]
    %v388 = vld [vmem:[#allocation6 + $0x960] sm:$0xff]
    %v389 = vld [vmem:[#allocation6 + $0x968] sm:$0xff]
    %v390 = vld [vmem:[#allocation6 + $0x970] sm:$0xff]
    %v391 = vld [vmem:[#allocation6 + $0x978] sm:$0xff]
    %v392 = vld [vmem:[#allocation6 + $0x980] sm:$0xff]
    %v393 = vld [vmem:[#allocation6 + $0x988] sm:$0xff]
    %v394 = vld [vmem:[#allocation6 + $0x990] sm:$0xff]
    %v395 = vld [vmem:[#allocation6 + $0x998] sm:$0xff]
    %v396 = vld [vmem:[#allocation6 + $0x9a0] sm:$0xff]
    %v397 = vld [vmem:[#allocation6 + $0x9a8] sm:$0xff]
    %v398 = vld [vmem:[#allocation6 + $0x9b0] sm:$0xff]
    %v399 = vld [vmem:[#allocation6 + $0x9b8] sm:$0xff]
    %v400 = vld [vmem:[#allocation6 + $0x9c0] sm:$0xff]
    %v401 = vld [vmem:[#allocation6 + $0x9c8] sm:$0xff]
    %v402 = vld [vmem:[#allocation6 + $0x9d0] sm:$0xff]
    %v403 = vld [vmem:[#allocation6 + $0x9d8] sm:$0xff]
    %v404 = vld [vmem:[#allocation6 + $0x9e0] sm:$0xff]
    %v405 = vld [vmem:[#allocation6 + $0x9e8] sm:$0xff]
    %v406 = vld [vmem:[#allocation6 + $0x9f0] sm:$0xff]
    %v407 = vld [vmem:[#allocation6 + $0x9f8] sm:$0xff]
    %v408 = vld [vmem:[#allocation6 + $0xa00] sm:$0xff]
    %v409 = vld [vmem:[#allocation6 + $0xa08] sm:$0xff]
    %v410 = vld [vmem:[#allocation6 + $0xa10] sm:$0xff]
    %v411 = vld [vmem:[#allocation6 + $0xa18] sm:$0xff]
    %v412 = vld [vmem:[#allocation6 + $0xa20] sm:$0xff]
    %v413 = vld [vmem:[#allocation6 + $0xa28] sm:$0xff]
    %v414 = vld [vmem:[#allocation6 + $0xa30] sm:$0xff]
    %v415 = vld [vmem:[#allocation6 + $0xa38] sm:$0xff]
    %v416 = vld [vmem:[#allocation6 + $0xa40] sm:$0xff]
    %v417 = vld [vmem:[#allocation6 + $0xa48] sm:$0xff]
    %v418 = vld [vmem:[#allocation6 + $0xa50] sm:$0xff]
    %v419 = vld [vmem:[#allocation6 + $0xa58] sm:$0xff]
    %v420 = vld [vmem:[#allocation6 + $0xa60] sm:$0xff]
    %v421 = vld [vmem:[#allocation6 + $0xa68] sm:$0xff]
    %v422 = vld [vmem:[#allocation6 + $0xa70] sm:$0xff]
    %v423 = vld [vmem:[#allocation6 + $0xa78] sm:$0xff]
    %v424 = vld [vmem:[#allocation6 + $0xa80] sm:$0xff]
    %v425 = vld [vmem:[#allocation6 + $0xa88] sm:$0xff]
    %v426 = vld [vmem:[#allocation6 + $0xa90] sm:$0xff]
    %v427 = vld [vmem:[#allocation6 + $0xa98] sm:$0xff]
    %v428 = vld [vmem:[#allocation6 + $0xaa0] sm:$0xff]
    %v429 = vld [vmem:[#allocation6 + $0xaa8] sm:$0xff]
    %v430 = vld [vmem:[#allocation6 + $0xab0] sm:$0xff]
    %v431 = vld [vmem:[#allocation6 + $0xab8] sm:$0xff]
    %v432 = vld [vmem:[#allocation6 + $0xac0] sm:$0xff]
    %v433 = vld [vmem:[#allocation6 + $0xac8] sm:$0xff]
    %v434 = vld [vmem:[#allocation6 + $0xad0] sm:$0xff]
    %v435 = vld [vmem:[#allocation6 + $0xad8] sm:$0xff]
    %v436 = vld [vmem:[#allocation6 + $0xae0] sm:$0xff]
    %v437 = vld [vmem:[#allocation6 + $0xae8] sm:$0xff]
    %v438 = vld [vmem:[#allocation6 + $0xaf0] sm:$0xff]
    %v439 = vld [vmem:[#allocation6 + $0xaf8] sm:$0xff]
    %v440 = vld [vmem:[#allocation6 + $0xb00] sm:$0xff]
    %v441 = vld [vmem:[#allocation6 + $0xb08] sm:$0xff]
    %v442 = vld [vmem:[#allocation6 + $0xb10] sm:$0xff]
    %v443 = vld [vmem:[#allocation6 + $0xb18] sm:$0xff]
    %v444 = vld [vmem:[#allocation6 + $0xb20] sm:$0xff]
    %v445 = vld [vmem:[#allocation6 + $0xb28] sm:$0xff]
    %v446 = vld [vmem:[#allocation6 + $0xb30] sm:$0xff]
    %v447 = vld [vmem:[#allocation6 + $0xb38] sm:$0xff]
    %v448 = vld [vmem:[#allocation6 + $0xb40] sm:$0xff]
    %v449 = vld [vmem:[#allocation6 + $0xb48] sm:$0xff]
    %v450 = vld [vmem:[#allocation6 + $0xb50] sm:$0xff]
    %v451 = vld [vmem:[#allocation6 + $0xb58] sm:$0xff]
    %v452 = vld [vmem:[#allocation6 + $0xb60] sm:$0xff]
    %v453 = vld [vmem:[#allocation6 + $0xb68] sm:$0xff]
    %v454 = vld [vmem:[#allocation6 + $0xb70] sm:$0xff]
    %v455 = vld [vmem:[#allocation6 + $0xb78] sm:$0xff]
    %v456 = vld [vmem:[#allocation6 + $0xb80] sm:$0xff]
    %v457 = vld [vmem:[#allocation6 + $0xb88] sm:$0xff]
    %v458 = vld [vmem:[#allocation6 + $0xb90] sm:$0xff]
    %v459 = vld [vmem:[#allocation6 + $0xb98] sm:$0xff]
    %v460 = vld [vmem:[#allocation6 + $0xba0] sm:$0xff]
    %v461 = vld [vmem:[#allocation6 + $0xba8] sm:$0xff]
    %v462 = vld [vmem:[#allocation6 + $0xbb0] sm:$0xff]
    %v463 = vld [vmem:[#allocation6 + $0xbb8] sm:$0xff]
    %v464 = vld [vmem:[#allocation6 + $0xbc0] sm:$0xff]
    %v465 = vld [vmem:[#allocation6 + $0xbc8] sm:$0xff]
    %v466 = vld [vmem:[#allocation6 + $0xbd0] sm:$0xff]
    %v467 = vld [vmem:[#allocation6 + $0xbd8] sm:$0xff]
    %v468 = vld [vmem:[#allocation6 + $0xbe0] sm:$0xff]
    %v469 = vld [vmem:[#allocation6 + $0xbe8] sm:$0xff]
    %v470 = vld [vmem:[#allocation6 + $0xbf0] sm:$0xff]
    %v471 = vld [vmem:[#allocation6 + $0xbf8] sm:$0xff]
    %v472 = vld [vmem:[#allocation9] sm:$0xff]
    %v473 = vld [vmem:[#allocation9 + $0x8] sm:$0xff]
    %v476 = vlaneseq
    %v477 = vshrl.u32 %v476, 7
    %v478 = vsub.s32 0, %v477
    %v479 = vrot.slane %v472, %v478
    %v480 = vlaneseq
    %v481 = vshrl.u32 %v480, 7
    %v482 = vsub.s32 1, %v481
    %v483 = vrot.slane %v472, %v482
    %v484 = vlaneseq
    %v485 = vshrl.u32 %v484, 7
    %v486 = vsub.s32 2, %v485
    %v487 = vrot.slane %v472, %v486
    %v488 = vlaneseq
    %v489 = vshrl.u32 %v488, 7
    %v490 = vsub.s32 3, %v489
    %v491 = vrot.slane %v472, %v490
    %v492 = vlaneseq
    %v493 = vshrl.u32 %v492, 7
    %v494 = vsub.s32 4, %v493
    %v495 = vrot.slane %v472, %v494
    %v496 = vlaneseq
    %v497 = vshrl.u32 %v496, 7
    %v498 = vsub.s32 5, %v497
    %v499 = vrot.slane %v472, %v498
    %v500 = vlaneseq
    %v501 = vshrl.u32 %v500, 7
    %v502 = vsub.s32 6, %v501
    %v503 = vrot.slane %v472, %v502
    %v504 = vlaneseq
    %v505 = vshrl.u32 %v504, 7
    %v506 = vsub.s32 7, %v505
    %v507 = vrot.slane %v472, %v506
    %v508 = vlaneseq
    %v509 = vshrl.u32 %v508, 7
    %v510 = vsub.s32 0, %v509
    %v511 = vrot.slane %v473, %v510
    %v512 = vlaneseq
    %v513 = vshrl.u32 %v512, 7
    %v514 = vsub.s32 1, %v513
    %v515 = vrot.slane %v473, %v514
    %v516 = vlaneseq
    %v517 = vshrl.u32 %v516, 7
    %v518 = vsub.s32 2, %v517
    %v519 = vrot.slane %v473, %v518
    %v520 = vlaneseq
    %v521 = vshrl.u32 %v520, 7
    %v522 = vsub.s32 3, %v521
    %v523 = vrot.slane %v473, %v522
    %v524 = vlaneseq
    %v525 = vshrl.u32 %v524, 7
    %v526 = vsub.s32 4, %v525
    %v527 = vrot.slane %v473, %v526
    %v528 = vlaneseq
    %v529 = vshrl.u32 %v528, 7
    %v530 = vsub.s32 5, %v529
    %v531 = vrot.slane %v473, %v530
    %v532 = vlaneseq
    %v533 = vshrl.u32 %v532, 7
    %v534 = vsub.s32 6, %v533
    %v535 = vrot.slane %v473, %v534
    %v536 = vlaneseq
    %v537 = vshrl.u32 %v536, 7
    %v538 = vsub.s32 7, %v537
    %v539 = vrot.slane %v473, %v538
    %v572 = vunpack.c.l.b16 %v72
    %v573 = vunpack.c.h.b16 %v72
    %v574 = vunpack.c.l.b16 %v73
    %v575 = vunpack.c.l.b16 %v74
    %v576 = vunpack.c.h.b16 %v74
    %v577 = vunpack.c.l.b16 %v75
    %v578 = vunpack.c.l.b16 %v76
    %v579 = vunpack.c.h.b16 %v76
    %v580 = vunpack.c.l.b16 %v77
    %v581 = vunpack.c.l.b16 %v78
    %v582 = vunpack.c.h.b16 %v78
    %v583 = vunpack.c.l.b16 %v79
    %v584 = vunpack.c.l.b16 %v80
    %v585 = vunpack.c.h.b16 %v80
    %v586 = vunpack.c.l.b16 %v81
    %v587 = vunpack.c.l.b16 %v82
    %v588 = vunpack.c.h.b16 %v82
    %v589 = vunpack.c.l.b16 %v83
    %v590 = vunpack.c.l.b16 %v84
    %v591 = vunpack.c.h.b16 %v84
    %v592 = vunpack.c.l.b16 %v85
    %v593 = vunpack.c.l.b16 %v86
    %v594 = vunpack.c.h.b16 %v86
    %v595 = vunpack.c.l.b16 %v87
    %v596 = vpack.c.b16 %v575, %v572
    %v597 = vpack.c.b16 %v576, %v573
    %v598 = vpack.c.b16 %v577, %v574
    %v599 = vpack.c.b16 %v581, %v578
    %v600 = vpack.c.b16 %v582, %v579
    %v601 = vpack.c.b16 %v583, %v580
    %v602 = vpack.c.b16 %v587, %v584
    %v603 = vpack.c.b16 %v588, %v585
    %v604 = vpack.c.b16 %v589, %v586
    %v605 = vpack.c.b16 %v593, %v590
    %v606 = vpack.c.b16 %v594, %v591
    %v607 = vpack.c.b16 %v595, %v592
    %v1004 = vunpack.c.l.b16 %v88
    %v1005 = vunpack.c.h.b16 %v88
    %v1006 = vunpack.c.l.b16 %v89
    %v1007 = vunpack.c.h.b16 %v89
    %v1008 = vunpack.c.l.b16 %v90
    %v1009 = vunpack.c.h.b16 %v90
    %v1010 = vunpack.c.l.b16 %v91
    %v1011 = vunpack.c.h.b16 %v91
    %v1012 = vunpack.c.l.b16 %v92
    %v1013 = vunpack.c.h.b16 %v92
    %v1014 = vunpack.c.l.b16 %v93
    %v1015 = vunpack.c.h.b16 %v93
    %v1016 = vunpack.c.l.b16 %v94
    %v1017 = vunpack.c.h.b16 %v94
    %v1018 = vunpack.c.l.b16 %v95
    %v1019 = vunpack.c.h.b16 %v95
    %v1020 = vunpack.c.l.b16 %v96
    %v1021 = vunpack.c.h.b16 %v96
    %v1022 = vunpack.c.l.b16 %v97
    %v1023 = vunpack.c.h.b16 %v97
    %v1024 = vunpack.c.l.b16 %v98
    %v1025 = vunpack.c.h.b16 %v98
    %v1026 = vunpack.c.l.b16 %v99
    %v1027 = vunpack.c.h.b16 %v99
    %v1028 = vunpack.c.l.b16 %v100
    %v1029 = vunpack.c.h.b16 %v100
    %v1030 = vunpack.c.l.b16 %v101
    %v1031 = vunpack.c.h.b16 %v101
    %v1032 = vunpack.c.l.b16 %v102
    %v1033 = vunpack.c.h.b16 %v102
    %v1034 = vunpack.c.l.b16 %v103
    %v1035 = vunpack.c.h.b16 %v103
    %v1036 = vunpack.c.l.b16 %v104
    %v1037 = vunpack.c.h.b16 %v104
    %v1038 = vunpack.c.l.b16 %v105
    %v1039 = vunpack.c.h.b16 %v105
    %v1040 = vunpack.c.l.b16 %v106
    %v1041 = vunpack.c.h.b16 %v106
    %v1042 = vunpack.c.l.b16 %v107
    %v1043 = vunpack.c.h.b16 %v107
    %v1044 = vunpack.c.l.b16 %v108
    %v1045 = vunpack.c.h.b16 %v108
    %v1046 = vunpack.c.l.b16 %v109
    %v1047 = vunpack.c.h.b16 %v109
    %v1048 = vunpack.c.l.b16 %v110
    %v1049 = vunpack.c.h.b16 %v110
    %v1050 = vunpack.c.l.b16 %v111
    %v1051 = vunpack.c.h.b16 %v111
    %v1052 = vunpack.c.l.b16 %v112
    %v1053 = vunpack.c.h.b16 %v112
    %v1054 = vunpack.c.l.b16 %v113
    %v1055 = vunpack.c.h.b16 %v113
    %v1056 = vunpack.c.l.b16 %v114
    %v1057 = vunpack.c.h.b16 %v114
    %v1058 = vunpack.c.l.b16 %v115
    %v1059 = vunpack.c.h.b16 %v115
    %v1060 = vunpack.c.l.b16 %v116
    %v1061 = vunpack.c.h.b16 %v116
    %v1062 = vunpack.c.l.b16 %v117
    %v1063 = vunpack.c.h.b16 %v117
    %v1064 = vunpack.c.l.b16 %v118
    %v1065 = vunpack.c.h.b16 %v118
    %v1066 = vunpack.c.l.b16 %v119
    %v1067 = vunpack.c.h.b16 %v119
    %v1068 = vunpack.c.l.b16 %v120
    %v1069 = vunpack.c.h.b16 %v120
    %v1070 = vunpack.c.l.b16 %v121
    %v1071 = vunpack.c.h.b16 %v121
    %v1072 = vunpack.c.l.b16 %v122
    %v1073 = vunpack.c.h.b16 %v122
    %v1074 = vunpack.c.l.b16 %v123
    %v1075 = vunpack.c.h.b16 %v123
    %v1076 = vunpack.c.l.b16 %v124
    %v1077 = vunpack.c.h.b16 %v124
    %v1078 = vunpack.c.l.b16 %v125
    %v1079 = vunpack.c.h.b16 %v125
    %v1080 = vunpack.c.l.b16 %v126
    %v1081 = vunpack.c.h.b16 %v126
    %v1082 = vunpack.c.l.b16 %v127
    %v1083 = vunpack.c.h.b16 %v127
    %v1084 = vunpack.c.l.b16 %v128
    %v1085 = vunpack.c.h.b16 %v128
    %v1086 = vunpack.c.l.b16 %v129
    %v1087 = vunpack.c.h.b16 %v129
    %v1088 = vunpack.c.l.b16 %v130
    %v1089 = vunpack.c.h.b16 %v130
    %v1090 = vunpack.c.l.b16 %v131
    %v1091 = vunpack.c.h.b16 %v131
    %v1092 = vunpack.c.l.b16 %v132
    %v1093 = vunpack.c.h.b16 %v132
    %v1094 = vunpack.c.l.b16 %v133
    %v1095 = vunpack.c.h.b16 %v133
    %v1096 = vunpack.c.l.b16 %v134
    %v1097 = vunpack.c.h.b16 %v134
    %v1098 = vunpack.c.l.b16 %v135
    %v1099 = vunpack.c.h.b16 %v135
    %v1100 = vunpack.c.l.b16 %v136
    %v1101 = vunpack.c.h.b16 %v136
    %v1102 = vunpack.c.l.b16 %v137
    %v1103 = vunpack.c.h.b16 %v137
    %v1104 = vunpack.c.l.b16 %v138
    %v1105 = vunpack.c.h.b16 %v138
    %v1106 = vunpack.c.l.b16 %v139
    %v1107 = vunpack.c.h.b16 %v139
    %v1108 = vunpack.c.l.b16 %v140
    %v1109 = vunpack.c.h.b16 %v140
    %v1110 = vunpack.c.l.b16 %v141
    %v1111 = vunpack.c.h.b16 %v141
    %v1112 = vunpack.c.l.b16 %v142
    %v1113 = vunpack.c.h.b16 %v142
    %v1114 = vunpack.c.l.b16 %v143
    %v1115 = vunpack.c.h.b16 %v143
    %v1116 = vunpack.c.l.b16 %v144
    %v1117 = vunpack.c.h.b16 %v144
    %v1118 = vunpack.c.l.b16 %v145
    %v1119 = vunpack.c.h.b16 %v145
    %v1120 = vunpack.c.l.b16 %v146
    %v1121 = vunpack.c.h.b16 %v146
    %v1122 = vunpack.c.l.b16 %v147
    %v1123 = vunpack.c.h.b16 %v147
    %v1124 = vunpack.c.l.b16 %v148
    %v1125 = vunpack.c.h.b16 %v148
    %v1126 = vunpack.c.l.b16 %v149
    %v1127 = vunpack.c.h.b16 %v149
    %v1128 = vunpack.c.l.b16 %v150
    %v1129 = vunpack.c.h.b16 %v150
    %v1130 = vunpack.c.l.b16 %v151
    %v1131 = vunpack.c.h.b16 %v151
    %v1132 = vunpack.c.l.b16 %v152
    %v1133 = vunpack.c.h.b16 %v152
    %v1134 = vunpack.c.l.b16 %v153
    %v1135 = vunpack.c.h.b16 %v153
    %v1136 = vunpack.c.l.b16 %v154
    %v1137 = vunpack.c.h.b16 %v154
    %v1138 = vunpack.c.l.b16 %v155
    %v1139 = vunpack.c.h.b16 %v155
    %v1140 = vunpack.c.l.b16 %v156
    %v1141 = vunpack.c.h.b16 %v156
    %v1142 = vunpack.c.l.b16 %v157
    %v1143 = vunpack.c.h.b16 %v157
    %v1144 = vunpack.c.l.b16 %v158
    %v1145 = vunpack.c.h.b16 %v158
    %v1146 = vunpack.c.l.b16 %v159
    %v1147 = vunpack.c.h.b16 %v159
    %v1148 = vunpack.c.l.b16 %v160
    %v1149 = vunpack.c.h.b16 %v160
    %v1150 = vunpack.c.l.b16 %v161
    %v1151 = vunpack.c.h.b16 %v161
    %v1152 = vunpack.c.l.b16 %v162
    %v1153 = vunpack.c.h.b16 %v162
    %v1154 = vunpack.c.l.b16 %v163
    %v1155 = vunpack.c.h.b16 %v163
    %v1156 = vunpack.c.l.b16 %v164
    %v1157 = vunpack.c.h.b16 %v164
    %v1158 = vunpack.c.l.b16 %v165
    %v1159 = vunpack.c.h.b16 %v165
    %v1160 = vunpack.c.l.b16 %v166
    %v1161 = vunpack.c.h.b16 %v166
    %v1162 = vunpack.c.l.b16 %v167
    %v1163 = vunpack.c.h.b16 %v167
    %v1164 = vunpack.c.l.b16 %v168
    %v1165 = vunpack.c.h.b16 %v168
    %v1166 = vunpack.c.l.b16 %v169
    %v1167 = vunpack.c.h.b16 %v169
    %v1168 = vunpack.c.l.b16 %v170
    %v1169 = vunpack.c.h.b16 %v170
    %v1170 = vunpack.c.l.b16 %v171
    %v1171 = vunpack.c.h.b16 %v171
    %v1172 = vunpack.c.l.b16 %v172
    %v1173 = vunpack.c.h.b16 %v172
    %v1174 = vunpack.c.l.b16 %v173
    %v1175 = vunpack.c.h.b16 %v173
    %v1176 = vunpack.c.l.b16 %v174
    %v1177 = vunpack.c.h.b16 %v174
    %v1178 = vunpack.c.l.b16 %v175
    %v1179 = vunpack.c.h.b16 %v175
    %v1180 = vunpack.c.l.b16 %v176
    %v1181 = vunpack.c.h.b16 %v176
    %v1182 = vunpack.c.l.b16 %v177
    %v1183 = vunpack.c.h.b16 %v177
    %v1184 = vunpack.c.l.b16 %v178
    %v1185 = vunpack.c.h.b16 %v178
    %v1186 = vunpack.c.l.b16 %v179
    %v1187 = vunpack.c.h.b16 %v179
    %v1188 = vunpack.c.l.b16 %v180
    %v1189 = vunpack.c.h.b16 %v180
    %v1190 = vunpack.c.l.b16 %v181
    %v1191 = vunpack.c.h.b16 %v181
    %v1192 = vunpack.c.l.b16 %v182
    %v1193 = vunpack.c.h.b16 %v182
    %v1194 = vunpack.c.l.b16 %v183
    %v1195 = vunpack.c.h.b16 %v183
    %v1196 = vunpack.c.l.b16 %v184
    %v1197 = vunpack.c.h.b16 %v184
    %v1198 = vunpack.c.l.b16 %v185
    %v1199 = vunpack.c.h.b16 %v185
    %v1200 = vunpack.c.l.b16 %v186
    %v1201 = vunpack.c.h.b16 %v186
    %v1202 = vunpack.c.l.b16 %v187
    %v1203 = vunpack.c.h.b16 %v187
    %v1204 = vunpack.c.l.b16 %v188
    %v1205 = vunpack.c.h.b16 %v188
    %v1206 = vunpack.c.l.b16 %v189
    %v1207 = vunpack.c.h.b16 %v189
    %v1208 = vunpack.c.l.b16 %v190
    %v1209 = vunpack.c.h.b16 %v190
    %v1210 = vunpack.c.l.b16 %v191
    %v1211 = vunpack.c.h.b16 %v191
    %v1212 = vunpack.c.l.b16 %v192
    %v1213 = vunpack.c.h.b16 %v192
    %v1214 = vunpack.c.l.b16 %v193
    %v1215 = vunpack.c.h.b16 %v193
    %v1216 = vunpack.c.l.b16 %v194
    %v1217 = vunpack.c.h.b16 %v194
    %v1218 = vunpack.c.l.b16 %v195
    %v1219 = vunpack.c.h.b16 %v195
    %v1220 = vunpack.c.l.b16 %v196
    %v1221 = vunpack.c.h.b16 %v196
    %v1222 = vunpack.c.l.b16 %v197
    %v1223 = vunpack.c.h.b16 %v197
    %v1224 = vunpack.c.l.b16 %v198
    %v1225 = vunpack.c.h.b16 %v198
    %v1226 = vunpack.c.l.b16 %v199
    %v1227 = vunpack.c.h.b16 %v199
    %v1228 = vunpack.c.l.b16 %v200
    %v1229 = vunpack.c.h.b16 %v200
    %v1230 = vunpack.c.l.b16 %v201
    %v1231 = vunpack.c.h.b16 %v201
    %v1232 = vunpack.c.l.b16 %v202
    %v1233 = vunpack.c.h.b16 %v202
    %v1234 = vunpack.c.l.b16 %v203
    %v1235 = vunpack.c.h.b16 %v203
    %v1236 = vunpack.c.l.b16 %v204
    %v1237 = vunpack.c.h.b16 %v204
    %v1238 = vunpack.c.l.b16 %v205
    %v1239 = vunpack.c.h.b16 %v205
    %v1240 = vunpack.c.l.b16 %v206
    %v1241 = vunpack.c.h.b16 %v206
    %v1242 = vunpack.c.l.b16 %v207
    %v1243 = vunpack.c.h.b16 %v207
    %v1244 = vunpack.c.l.b16 %v208
    %v1245 = vunpack.c.h.b16 %v208
    %v1246 = vunpack.c.l.b16 %v209
    %v1247 = vunpack.c.h.b16 %v209
    %v1248 = vunpack.c.l.b16 %v210
    %v1249 = vunpack.c.h.b16 %v210
    %v1250 = vunpack.c.l.b16 %v211
    %v1251 = vunpack.c.h.b16 %v211
    %v1252 = vunpack.c.l.b16 %v212
    %v1253 = vunpack.c.h.b16 %v212
    %v1254 = vunpack.c.l.b16 %v213
    %v1255 = vunpack.c.h.b16 %v213
    %v1256 = vunpack.c.l.b16 %v214
    %v1257 = vunpack.c.h.b16 %v214
    %v1258 = vunpack.c.l.b16 %v215
    %v1259 = vunpack.c.h.b16 %v215
    %v1260 = vunpack.c.l.b16 %v216
    %v1261 = vunpack.c.h.b16 %v216
    %v1262 = vunpack.c.l.b16 %v217
    %v1263 = vunpack.c.h.b16 %v217
    %v1264 = vunpack.c.l.b16 %v218
    %v1265 = vunpack.c.h.b16 %v218
    %v1266 = vunpack.c.l.b16 %v219
    %v1267 = vunpack.c.h.b16 %v219
    %v1268 = vunpack.c.l.b16 %v220
    %v1269 = vunpack.c.h.b16 %v220
    %v1270 = vunpack.c.l.b16 %v221
    %v1271 = vunpack.c.h.b16 %v221
    %v1272 = vunpack.c.l.b16 %v222
    %v1273 = vunpack.c.h.b16 %v222
    %v1274 = vunpack.c.l.b16 %v223
    %v1275 = vunpack.c.h.b16 %v223
    %v1276 = vunpack.c.l.b16 %v224
    %v1277 = vunpack.c.h.b16 %v224
    %v1278 = vunpack.c.l.b16 %v225
    %v1279 = vunpack.c.h.b16 %v225
    %v1280 = vunpack.c.l.b16 %v226
    %v1281 = vunpack.c.h.b16 %v226
    %v1282 = vunpack.c.l.b16 %v227
    %v1283 = vunpack.c.h.b16 %v227
    %v1284 = vunpack.c.l.b16 %v228
    %v1285 = vunpack.c.h.b16 %v228
    %v1286 = vunpack.c.l.b16 %v229
    %v1287 = vunpack.c.h.b16 %v229
    %v1288 = vunpack.c.l.b16 %v230
    %v1289 = vunpack.c.h.b16 %v230
    %v1290 = vunpack.c.l.b16 %v231
    %v1291 = vunpack.c.h.b16 %v231
    %v1292 = vunpack.c.l.b16 %v232
    %v1293 = vunpack.c.h.b16 %v232
    %v1294 = vunpack.c.l.b16 %v233
    %v1295 = vunpack.c.h.b16 %v233
    %v1296 = vunpack.c.l.b16 %v234
    %v1297 = vunpack.c.h.b16 %v234
    %v1298 = vunpack.c.l.b16 %v235
    %v1299 = vunpack.c.h.b16 %v235
    %v1300 = vunpack.c.l.b16 %v236
    %v1301 = vunpack.c.h.b16 %v236
    %v1302 = vunpack.c.l.b16 %v237
    %v1303 = vunpack.c.h.b16 %v237
    %v1304 = vunpack.c.l.b16 %v238
    %v1305 = vunpack.c.h.b16 %v238
    %v1306 = vunpack.c.l.b16 %v239
    %v1307 = vunpack.c.h.b16 %v239
    %v1308 = vunpack.c.l.b16 %v240
    %v1309 = vunpack.c.h.b16 %v240
    %v1310 = vunpack.c.l.b16 %v241
    %v1311 = vunpack.c.h.b16 %v241
    %v1312 = vunpack.c.l.b16 %v242
    %v1313 = vunpack.c.h.b16 %v242
    %v1314 = vunpack.c.l.b16 %v243
    %v1315 = vunpack.c.h.b16 %v243
    %v1316 = vunpack.c.l.b16 %v244
    %v1317 = vunpack.c.h.b16 %v244
    %v1318 = vunpack.c.l.b16 %v245
    %v1319 = vunpack.c.h.b16 %v245
    %v1320 = vunpack.c.l.b16 %v246
    %v1321 = vunpack.c.h.b16 %v246
    %v1322 = vunpack.c.l.b16 %v247
    %v1323 = vunpack.c.h.b16 %v247
    %v1324 = vunpack.c.l.b16 %v248
    %v1325 = vunpack.c.h.b16 %v248
    %v1326 = vunpack.c.l.b16 %v249
    %v1327 = vunpack.c.h.b16 %v249
    %v1328 = vunpack.c.l.b16 %v250
    %v1329 = vunpack.c.h.b16 %v250
    %v1330 = vunpack.c.l.b16 %v251
    %v1331 = vunpack.c.h.b16 %v251
    %v1332 = vunpack.c.l.b16 %v252
    %v1333 = vunpack.c.h.b16 %v252
    %v1334 = vunpack.c.l.b16 %v253
    %v1335 = vunpack.c.h.b16 %v253
    %v1336 = vunpack.c.l.b16 %v254
    %v1337 = vunpack.c.h.b16 %v254
    %v1338 = vunpack.c.l.b16 %v255
    %v1339 = vunpack.c.h.b16 %v255
    %v1340 = vunpack.c.l.b16 %v256
    %v1341 = vunpack.c.h.b16 %v256
    %v1342 = vunpack.c.l.b16 %v257
    %v1343 = vunpack.c.h.b16 %v257
    %v1344 = vunpack.c.l.b16 %v258
    %v1345 = vunpack.c.h.b16 %v258
    %v1346 = vunpack.c.l.b16 %v259
    %v1347 = vunpack.c.h.b16 %v259
    %v1348 = vunpack.c.l.b16 %v260
    %v1349 = vunpack.c.h.b16 %v260
    %v1350 = vunpack.c.l.b16 %v261
    %v1351 = vunpack.c.h.b16 %v261
    %v1352 = vunpack.c.l.b16 %v262
    %v1353 = vunpack.c.h.b16 %v262
    %v1354 = vunpack.c.l.b16 %v263
    %v1355 = vunpack.c.h.b16 %v263
    %v1356 = vunpack.c.l.b16 %v264
    %v1357 = vunpack.c.h.b16 %v264
    %v1358 = vunpack.c.l.b16 %v265
    %v1359 = vunpack.c.h.b16 %v265
    %v1360 = vunpack.c.l.b16 %v266
    %v1361 = vunpack.c.h.b16 %v266
    %v1362 = vunpack.c.l.b16 %v267
    %v1363 = vunpack.c.h.b16 %v267
    %v1364 = vunpack.c.l.b16 %v268
    %v1365 = vunpack.c.h.b16 %v268
    %v1366 = vunpack.c.l.b16 %v269
    %v1367 = vunpack.c.h.b16 %v269
    %v1368 = vunpack.c.l.b16 %v270
    %v1369 = vunpack.c.h.b16 %v270
    %v1370 = vunpack.c.l.b16 %v271
    %v1371 = vunpack.c.h.b16 %v271
    %v1372 = vunpack.c.l.b16 %v272
    %v1373 = vunpack.c.h.b16 %v272
    %v1374 = vunpack.c.l.b16 %v273
    %v1375 = vunpack.c.h.b16 %v273
    %v1376 = vunpack.c.l.b16 %v274
    %v1377 = vunpack.c.h.b16 %v274
    %v1378 = vunpack.c.l.b16 %v275
    %v1379 = vunpack.c.h.b16 %v275
    %v1380 = vunpack.c.l.b16 %v276
    %v1381 = vunpack.c.h.b16 %v276
    %v1382 = vunpack.c.l.b16 %v277
    %v1383 = vunpack.c.h.b16 %v277
    %v1384 = vunpack.c.l.b16 %v278
    %v1385 = vunpack.c.h.b16 %v278
    %v1386 = vunpack.c.l.b16 %v279
    %v1387 = vunpack.c.h.b16 %v279
    %v1388 = vunpack.c.l.b16 %v280
    %v1389 = vunpack.c.h.b16 %v280
    %v1390 = vunpack.c.l.b16 %v281
    %v1391 = vunpack.c.h.b16 %v281
    %v1392 = vunpack.c.l.b16 %v282
    %v1393 = vunpack.c.h.b16 %v282
    %v1394 = vunpack.c.l.b16 %v283
    %v1395 = vunpack.c.h.b16 %v283
    %v1396 = vunpack.c.l.b16 %v284
    %v1397 = vunpack.c.h.b16 %v284
    %v1398 = vunpack.c.l.b16 %v285
    %v1399 = vunpack.c.h.b16 %v285
    %v1400 = vunpack.c.l.b16 %v286
    %v1401 = vunpack.c.h.b16 %v286
    %v1402 = vunpack.c.l.b16 %v287
    %v1403 = vunpack.c.h.b16 %v287
    %v1404 = vunpack.c.l.b16 %v288
    %v1405 = vunpack.c.h.b16 %v288
    %v1406 = vunpack.c.l.b16 %v289
    %v1407 = vunpack.c.h.b16 %v289
    %v1408 = vunpack.c.l.b16 %v290
    %v1409 = vunpack.c.h.b16 %v290
    %v1410 = vunpack.c.l.b16 %v291
    %v1411 = vunpack.c.h.b16 %v291
    %v1412 = vunpack.c.l.b16 %v292
    %v1413 = vunpack.c.h.b16 %v292
    %v1414 = vunpack.c.l.b16 %v293
    %v1415 = vunpack.c.h.b16 %v293
    %v1416 = vunpack.c.l.b16 %v294
    %v1417 = vunpack.c.h.b16 %v294
    %v1418 = vunpack.c.l.b16 %v295
    %v1419 = vunpack.c.h.b16 %v295
    %v1420 = vunpack.c.l.b16 %v296
    %v1421 = vunpack.c.h.b16 %v296
    %v1422 = vunpack.c.l.b16 %v297
    %v1423 = vunpack.c.h.b16 %v297
    %v1424 = vunpack.c.l.b16 %v298
    %v1425 = vunpack.c.h.b16 %v298
    %v1426 = vunpack.c.l.b16 %v299
    %v1427 = vunpack.c.h.b16 %v299
    %v1428 = vunpack.c.l.b16 %v300
    %v1429 = vunpack.c.h.b16 %v300
    %v1430 = vunpack.c.l.b16 %v301
    %v1431 = vunpack.c.h.b16 %v301
    %v1432 = vunpack.c.l.b16 %v302
    %v1433 = vunpack.c.h.b16 %v302
    %v1434 = vunpack.c.l.b16 %v303
    %v1435 = vunpack.c.h.b16 %v303
    %v1436 = vunpack.c.l.b16 %v304
    %v1437 = vunpack.c.h.b16 %v304
    %v1438 = vunpack.c.l.b16 %v305
    %v1439 = vunpack.c.h.b16 %v305
    %v1440 = vunpack.c.l.b16 %v306
    %v1441 = vunpack.c.h.b16 %v306
    %v1442 = vunpack.c.l.b16 %v307
    %v1443 = vunpack.c.h.b16 %v307
    %v1444 = vunpack.c.l.b16 %v308
    %v1445 = vunpack.c.h.b16 %v308
    %v1446 = vunpack.c.l.b16 %v309
    %v1447 = vunpack.c.h.b16 %v309
    %v1448 = vunpack.c.l.b16 %v310
    %v1449 = vunpack.c.h.b16 %v310
    %v1450 = vunpack.c.l.b16 %v311
    %v1451 = vunpack.c.h.b16 %v311
    %v1452 = vunpack.c.l.b16 %v312
    %v1453 = vunpack.c.h.b16 %v312
    %v1454 = vunpack.c.l.b16 %v313
    %v1455 = vunpack.c.h.b16 %v313
    %v1456 = vunpack.c.l.b16 %v314
    %v1457 = vunpack.c.h.b16 %v314
    %v1458 = vunpack.c.l.b16 %v315
    %v1459 = vunpack.c.h.b16 %v315
    %v1460 = vunpack.c.l.b16 %v316
    %v1461 = vunpack.c.h.b16 %v316
    %v1462 = vunpack.c.l.b16 %v317
    %v1463 = vunpack.c.h.b16 %v317
    %v1464 = vunpack.c.l.b16 %v318
    %v1465 = vunpack.c.h.b16 %v318
    %v1466 = vunpack.c.l.b16 %v319
    %v1467 = vunpack.c.h.b16 %v319
    %v1468 = vunpack.c.l.b16 %v320
    %v1469 = vunpack.c.h.b16 %v320
    %v1470 = vunpack.c.l.b16 %v321
    %v1471 = vunpack.c.h.b16 %v321
    %v1472 = vunpack.c.l.b16 %v322
    %v1473 = vunpack.c.h.b16 %v322
    %v1474 = vunpack.c.l.b16 %v323
    %v1475 = vunpack.c.h.b16 %v323
    %v1476 = vunpack.c.l.b16 %v324
    %v1477 = vunpack.c.h.b16 %v324
    %v1478 = vunpack.c.l.b16 %v325
    %v1479 = vunpack.c.h.b16 %v325
    %v1480 = vunpack.c.l.b16 %v326
    %v1481 = vunpack.c.h.b16 %v326
    %v1482 = vunpack.c.l.b16 %v327
    %v1483 = vunpack.c.h.b16 %v327
    %v1484 = vunpack.c.l.b16 %v328
    %v1485 = vunpack.c.h.b16 %v328
    %v1486 = vunpack.c.l.b16 %v329
    %v1487 = vunpack.c.h.b16 %v329
    %v1488 = vunpack.c.l.b16 %v330
    %v1489 = vunpack.c.h.b16 %v330
    %v1490 = vunpack.c.l.b16 %v331
    %v1491 = vunpack.c.h.b16 %v331
    %v1492 = vunpack.c.l.b16 %v332
    %v1493 = vunpack.c.h.b16 %v332
    %v1494 = vunpack.c.l.b16 %v333
    %v1495 = vunpack.c.h.b16 %v333
    %v1496 = vunpack.c.l.b16 %v334
    %v1497 = vunpack.c.h.b16 %v334
    %v1498 = vunpack.c.l.b16 %v335
    %v1499 = vunpack.c.h.b16 %v335
    %v1500 = vunpack.c.l.b16 %v336
    %v1501 = vunpack.c.h.b16 %v336
    %v1502 = vunpack.c.l.b16 %v337
    %v1503 = vunpack.c.h.b16 %v337
    %v1504 = vunpack.c.l.b16 %v338
    %v1505 = vunpack.c.h.b16 %v338
    %v1506 = vunpack.c.l.b16 %v339
    %v1507 = vunpack.c.h.b16 %v339
    %v1508 = vunpack.c.l.b16 %v340
    %v1509 = vunpack.c.h.b16 %v340
    %v1510 = vunpack.c.l.b16 %v341
    %v1511 = vunpack.c.h.b16 %v341
    %v1512 = vunpack.c.l.b16 %v342
    %v1513 = vunpack.c.h.b16 %v342
    %v1514 = vunpack.c.l.b16 %v343
    %v1515 = vunpack.c.h.b16 %v343
    %v1516 = vunpack.c.l.b16 %v344
    %v1517 = vunpack.c.h.b16 %v344
    %v1518 = vunpack.c.l.b16 %v345
    %v1519 = vunpack.c.h.b16 %v345
    %v1520 = vunpack.c.l.b16 %v346
    %v1521 = vunpack.c.h.b16 %v346
    %v1522 = vunpack.c.l.b16 %v347
    %v1523 = vunpack.c.h.b16 %v347
    %v1524 = vunpack.c.l.b16 %v348
    %v1525 = vunpack.c.h.b16 %v348
    %v1526 = vunpack.c.l.b16 %v349
    %v1527 = vunpack.c.h.b16 %v349
    %v1528 = vunpack.c.l.b16 %v350
    %v1529 = vunpack.c.h.b16 %v350
    %v1530 = vunpack.c.l.b16 %v351
    %v1531 = vunpack.c.h.b16 %v351
    %v1532 = vunpack.c.l.b16 %v352
    %v1533 = vunpack.c.h.b16 %v352
    %v1534 = vunpack.c.l.b16 %v353
    %v1535 = vunpack.c.h.b16 %v353
    %v1536 = vunpack.c.l.b16 %v354
    %v1537 = vunpack.c.h.b16 %v354
    %v1538 = vunpack.c.l.b16 %v355
    %v1539 = vunpack.c.h.b16 %v355
    %v1540 = vunpack.c.l.b16 %v356
    %v1541 = vunpack.c.h.b16 %v356
    %v1542 = vunpack.c.l.b16 %v357
    %v1543 = vunpack.c.h.b16 %v357
    %v1544 = vunpack.c.l.b16 %v358
    %v1545 = vunpack.c.h.b16 %v358
    %v1546 = vunpack.c.l.b16 %v359
    %v1547 = vunpack.c.h.b16 %v359
    %v1548 = vunpack.c.l.b16 %v360
    %v1549 = vunpack.c.h.b16 %v360
    %v1550 = vunpack.c.l.b16 %v361
    %v1551 = vunpack.c.h.b16 %v361
    %v1552 = vunpack.c.l.b16 %v362
    %v1553 = vunpack.c.h.b16 %v362
    %v1554 = vunpack.c.l.b16 %v363
    %v1555 = vunpack.c.h.b16 %v363
    %v1556 = vunpack.c.l.b16 %v364
    %v1557 = vunpack.c.h.b16 %v364
    %v1558 = vunpack.c.l.b16 %v365
    %v1559 = vunpack.c.h.b16 %v365
    %v1560 = vunpack.c.l.b16 %v366
    %v1561 = vunpack.c.h.b16 %v366
    %v1562 = vunpack.c.l.b16 %v367
    %v1563 = vunpack.c.h.b16 %v367
    %v1564 = vunpack.c.l.b16 %v368
    %v1565 = vunpack.c.h.b16 %v368
    %v1566 = vunpack.c.l.b16 %v369
    %v1567 = vunpack.c.h.b16 %v369
    %v1568 = vunpack.c.l.b16 %v370
    %v1569 = vunpack.c.h.b16 %v370
    %v1570 = vunpack.c.l.b16 %v371
    %v1571 = vunpack.c.h.b16 %v371
    %v1572 = vunpack.c.l.b16 %v372
    %v1573 = vunpack.c.h.b16 %v372
    %v1574 = vunpack.c.l.b16 %v373
    %v1575 = vunpack.c.h.b16 %v373
    %v1576 = vunpack.c.l.b16 %v374
    %v1577 = vunpack.c.h.b16 %v374
    %v1578 = vunpack.c.l.b16 %v375
    %v1579 = vunpack.c.h.b16 %v375
    %v1580 = vunpack.c.l.b16 %v376
    %v1581 = vunpack.c.h.b16 %v376
    %v1582 = vunpack.c.l.b16 %v377
    %v1583 = vunpack.c.h.b16 %v377
    %v1584 = vunpack.c.l.b16 %v378
    %v1585 = vunpack.c.h.b16 %v378
    %v1586 = vunpack.c.l.b16 %v379
    %v1587 = vunpack.c.h.b16 %v379
    %v1588 = vunpack.c.l.b16 %v380
    %v1589 = vunpack.c.h.b16 %v380
    %v1590 = vunpack.c.l.b16 %v381
    %v1591 = vunpack.c.h.b16 %v381
    %v1592 = vunpack.c.l.b16 %v382
    %v1593 = vunpack.c.h.b16 %v382
    %v1594 = vunpack.c.l.b16 %v383
    %v1595 = vunpack.c.h.b16 %v383
    %v1596 = vunpack.c.l.b16 %v384
    %v1597 = vunpack.c.h.b16 %v384
    %v1598 = vunpack.c.l.b16 %v385
    %v1599 = vunpack.c.h.b16 %v385
    %v1600 = vunpack.c.l.b16 %v386
    %v1601 = vunpack.c.h.b16 %v386
    %v1602 = vunpack.c.l.b16 %v387
    %v1603 = vunpack.c.h.b16 %v387
    %v1604 = vunpack.c.l.b16 %v388
    %v1605 = vunpack.c.h.b16 %v388
    %v1606 = vunpack.c.l.b16 %v389
    %v1607 = vunpack.c.h.b16 %v389
    %v1608 = vunpack.c.l.b16 %v390
    %v1609 = vunpack.c.h.b16 %v390
    %v1610 = vunpack.c.l.b16 %v391
    %v1611 = vunpack.c.h.b16 %v391
    %v1612 = vunpack.c.l.b16 %v392
    %v1613 = vunpack.c.h.b16 %v392
    %v1614 = vunpack.c.l.b16 %v393
    %v1615 = vunpack.c.h.b16 %v393
    %v1616 = vunpack.c.l.b16 %v394
    %v1617 = vunpack.c.h.b16 %v394
    %v1618 = vunpack.c.l.b16 %v395
    %v1619 = vunpack.c.h.b16 %v395
    %v1620 = vunpack.c.l.b16 %v396
    %v1621 = vunpack.c.h.b16 %v396
    %v1622 = vunpack.c.l.b16 %v397
    %v1623 = vunpack.c.h.b16 %v397
    %v1624 = vunpack.c.l.b16 %v398
    %v1625 = vunpack.c.h.b16 %v398
    %v1626 = vunpack.c.l.b16 %v399
    %v1627 = vunpack.c.h.b16 %v399
    %v1628 = vunpack.c.l.b16 %v400
    %v1629 = vunpack.c.h.b16 %v400
    %v1630 = vunpack.c.l.b16 %v401
    %v1631 = vunpack.c.h.b16 %v401
    %v1632 = vunpack.c.l.b16 %v402
    %v1633 = vunpack.c.h.b16 %v402
    %v1634 = vunpack.c.l.b16 %v403
    %v1635 = vunpack.c.h.b16 %v403
    %v1636 = vunpack.c.l.b16 %v404
    %v1637 = vunpack.c.h.b16 %v404
    %v1638 = vunpack.c.l.b16 %v405
    %v1639 = vunpack.c.h.b16 %v405
    %v1640 = vunpack.c.l.b16 %v406
    %v1641 = vunpack.c.h.b16 %v406
    %v1642 = vunpack.c.l.b16 %v407
    %v1643 = vunpack.c.h.b16 %v407
    %v1644 = vunpack.c.l.b16 %v408
    %v1645 = vunpack.c.h.b16 %v408
    %v1646 = vunpack.c.l.b16 %v409
    %v1647 = vunpack.c.h.b16 %v409
    %v1648 = vunpack.c.l.b16 %v410
    %v1649 = vunpack.c.h.b16 %v410
    %v1650 = vunpack.c.l.b16 %v411
    %v1651 = vunpack.c.h.b16 %v411
    %v1652 = vunpack.c.l.b16 %v412
    %v1653 = vunpack.c.h.b16 %v412
    %v1654 = vunpack.c.l.b16 %v413
    %v1655 = vunpack.c.h.b16 %v413
    %v1656 = vunpack.c.l.b16 %v414
    %v1657 = vunpack.c.h.b16 %v414
    %v1658 = vunpack.c.l.b16 %v415
    %v1659 = vunpack.c.h.b16 %v415
    %v1660 = vunpack.c.l.b16 %v416
    %v1661 = vunpack.c.h.b16 %v416
    %v1662 = vunpack.c.l.b16 %v417
    %v1663 = vunpack.c.h.b16 %v417
    %v1664 = vunpack.c.l.b16 %v418
    %v1665 = vunpack.c.h.b16 %v418
    %v1666 = vunpack.c.l.b16 %v419
    %v1667 = vunpack.c.h.b16 %v419
    %v1668 = vunpack.c.l.b16 %v420
    %v1669 = vunpack.c.h.b16 %v420
    %v1670 = vunpack.c.l.b16 %v421
    %v1671 = vunpack.c.h.b16 %v421
    %v1672 = vunpack.c.l.b16 %v422
    %v1673 = vunpack.c.h.b16 %v422
    %v1674 = vunpack.c.l.b16 %v423
    %v1675 = vunpack.c.h.b16 %v423
    %v1676 = vunpack.c.l.b16 %v424
    %v1677 = vunpack.c.h.b16 %v424
    %v1678 = vunpack.c.l.b16 %v425
    %v1679 = vunpack.c.h.b16 %v425
    %v1680 = vunpack.c.l.b16 %v426
    %v1681 = vunpack.c.h.b16 %v426
    %v1682 = vunpack.c.l.b16 %v427
    %v1683 = vunpack.c.h.b16 %v427
    %v1684 = vunpack.c.l.b16 %v428
    %v1685 = vunpack.c.h.b16 %v428
    %v1686 = vunpack.c.l.b16 %v429
    %v1687 = vunpack.c.h.b16 %v429
    %v1688 = vunpack.c.l.b16 %v430
    %v1689 = vunpack.c.h.b16 %v430
    %v1690 = vunpack.c.l.b16 %v431
    %v1691 = vunpack.c.h.b16 %v431
    %v1692 = vunpack.c.l.b16 %v432
    %v1693 = vunpack.c.h.b16 %v432
    %v1694 = vunpack.c.l.b16 %v433
    %v1695 = vunpack.c.h.b16 %v433
    %v1696 = vunpack.c.l.b16 %v434
    %v1697 = vunpack.c.h.b16 %v434
    %v1698 = vunpack.c.l.b16 %v435
    %v1699 = vunpack.c.h.b16 %v435
    %v1700 = vunpack.c.l.b16 %v436
    %v1701 = vunpack.c.h.b16 %v436
    %v1702 = vunpack.c.l.b16 %v437
    %v1703 = vunpack.c.h.b16 %v437
    %v1704 = vunpack.c.l.b16 %v438
    %v1705 = vunpack.c.h.b16 %v438
    %v1706 = vunpack.c.l.b16 %v439
    %v1707 = vunpack.c.h.b16 %v439
    %v1708 = vunpack.c.l.b16 %v440
    %v1709 = vunpack.c.h.b16 %v440
    %v1710 = vunpack.c.l.b16 %v441
    %v1711 = vunpack.c.h.b16 %v441
    %v1712 = vunpack.c.l.b16 %v442
    %v1713 = vunpack.c.h.b16 %v442
    %v1714 = vunpack.c.l.b16 %v443
    %v1715 = vunpack.c.h.b16 %v443
    %v1716 = vunpack.c.l.b16 %v444
    %v1717 = vunpack.c.h.b16 %v444
    %v1718 = vunpack.c.l.b16 %v445
    %v1719 = vunpack.c.h.b16 %v445
    %v1720 = vunpack.c.l.b16 %v446
    %v1721 = vunpack.c.h.b16 %v446
    %v1722 = vunpack.c.l.b16 %v447
    %v1723 = vunpack.c.h.b16 %v447
    %v1724 = vunpack.c.l.b16 %v448
    %v1725 = vunpack.c.h.b16 %v448
    %v1726 = vunpack.c.l.b16 %v449
    %v1727 = vunpack.c.h.b16 %v449
    %v1728 = vunpack.c.l.b16 %v450
    %v1729 = vunpack.c.h.b16 %v450
    %v1730 = vunpack.c.l.b16 %v451
    %v1731 = vunpack.c.h.b16 %v451
    %v1732 = vunpack.c.l.b16 %v452
    %v1733 = vunpack.c.h.b16 %v452
    %v1734 = vunpack.c.l.b16 %v453
    %v1735 = vunpack.c.h.b16 %v453
    %v1736 = vunpack.c.l.b16 %v454
    %v1737 = vunpack.c.h.b16 %v454
    %v1738 = vunpack.c.l.b16 %v455
    %v1739 = vunpack.c.h.b16 %v455
    %v1740 = vunpack.c.l.b16 %v456
    %v1741 = vunpack.c.h.b16 %v456
    %v1742 = vunpack.c.l.b16 %v457
    %v1743 = vunpack.c.h.b16 %v457
    %v1744 = vunpack.c.l.b16 %v458
    %v1745 = vunpack.c.h.b16 %v458
    %v1746 = vunpack.c.l.b16 %v459
    %v1747 = vunpack.c.h.b16 %v459
    %v1748 = vunpack.c.l.b16 %v460
    %v1749 = vunpack.c.h.b16 %v460
    %v1750 = vunpack.c.l.b16 %v461
    %v1751 = vunpack.c.h.b16 %v461
    %v1752 = vunpack.c.l.b16 %v462
    %v1753 = vunpack.c.h.b16 %v462
    %v1754 = vunpack.c.l.b16 %v463
    %v1755 = vunpack.c.h.b16 %v463
    %v1756 = vunpack.c.l.b16 %v464
    %v1757 = vunpack.c.h.b16 %v464
    %v1758 = vunpack.c.l.b16 %v465
    %v1759 = vunpack.c.h.b16 %v465
    %v1760 = vunpack.c.l.b16 %v466
    %v1761 = vunpack.c.h.b16 %v466
    %v1762 = vunpack.c.l.b16 %v467
    %v1763 = vunpack.c.h.b16 %v467
    %v1764 = vunpack.c.l.b16 %v468
    %v1765 = vunpack.c.h.b16 %v468
    %v1766 = vunpack.c.l.b16 %v469
    %v1767 = vunpack.c.h.b16 %v469
    %v1768 = vunpack.c.l.b16 %v470
    %v1769 = vunpack.c.h.b16 %v470
    %v1770 = vunpack.c.l.b16 %v471
    %v1771 = vunpack.c.h.b16 %v471
    %v1772 = vpack.c.b16 %v1020, %v1004
    %v1773 = vpack.c.b16 %v1021, %v1005
    %v1774 = vpack.c.b16 %v1022, %v1006
    %v1775 = vpack.c.b16 %v1023, %v1007
    %v1776 = vpack.c.b16 %v1024, %v1008
    %v1777 = vpack.c.b16 %v1025, %v1009
    %v1778 = vpack.c.b16 %v1026, %v1010
    %v1779 = vpack.c.b16 %v1027, %v1011
    %v1780 = vpack.c.b16 %v1028, %v1012
    %v1781 = vpack.c.b16 %v1029, %v1013
    %v1782 = vpack.c.b16 %v1030, %v1014
    %v1783 = vpack.c.b16 %v1031, %v1015
    %v1784 = vpack.c.b16 %v1032, %v1016
    %v1785 = vpack.c.b16 %v1033, %v1017
    %v1786 = vpack.c.b16 %v1034, %v1018
    %v1787 = vpack.c.b16 %v1035, %v1019
    %v1788 = vpack.c.b16 %v1052, %v1036
    %v1789 = vpack.c.b16 %v1053, %v1037
    %v1790 = vpack.c.b16 %v1054, %v1038
    %v1791 = vpack.c.b16 %v1055, %v1039
    %v1792 = vpack.c.b16 %v1056, %v1040
    %v1793 = vpack.c.b16 %v1057, %v1041
    %v1794 = vpack.c.b16 %v1058, %v1042
    %v1795 = vpack.c.b16 %v1059, %v1043
    %v1796 = vpack.c.b16 %v1060, %v1044
    %v1797 = vpack.c.b16 %v1061, %v1045
    %v1798 = vpack.c.b16 %v1062, %v1046
    %v1799 = vpack.c.b16 %v1063, %v1047
    %v1800 = vpack.c.b16 %v1064, %v1048
    %v1801 = vpack.c.b16 %v1065, %v1049
    %v1802 = vpack.c.b16 %v1066, %v1050
    %v1803 = vpack.c.b16 %v1067, %v1051
    %v1804 = vpack.c.b16 %v1084, %v1068
    %v1805 = vpack.c.b16 %v1085, %v1069
    %v1806 = vpack.c.b16 %v1086, %v1070
    %v1807 = vpack.c.b16 %v1087, %v1071
    %v1808 = vpack.c.b16 %v1088, %v1072
    %v1809 = vpack.c.b16 %v1089, %v1073
    %v1810 = vpack.c.b16 %v1090, %v1074
    %v1811 = vpack.c.b16 %v1091, %v1075
    %v1812 = vpack.c.b16 %v1092, %v1076
    %v1813 = vpack.c.b16 %v1093, %v1077
    %v1814 = vpack.c.b16 %v1094, %v1078
    %v1815 = vpack.c.b16 %v1095, %v1079
    %v1816 = vpack.c.b16 %v1096, %v1080
    %v1817 = vpack.c.b16 %v1097, %v1081
    %v1818 = vpack.c.b16 %v1098, %v1082
    %v1819 = vpack.c.b16 %v1099, %v1083
    %v1820 = vpack.c.b16 %v1116, %v1100
    %v1821 = vpack.c.b16 %v1117, %v1101
    %v1822 = vpack.c.b16 %v1118, %v1102
    %v1823 = vpack.c.b16 %v1119, %v1103
    %v1824 = vpack.c.b16 %v1120, %v1104
    %v1825 = vpack.c.b16 %v1121, %v1105
    %v1826 = vpack.c.b16 %v1122, %v1106
    %v1827 = vpack.c.b16 %v1123, %v1107
    %v1828 = vpack.c.b16 %v1124, %v1108
    %v1829 = vpack.c.b16 %v1125, %v1109
    %v1830 = vpack.c.b16 %v1126, %v1110
    %v1831 = vpack.c.b16 %v1127, %v1111
    %v1832 = vpack.c.b16 %v1128, %v1112
    %v1833 = vpack.c.b16 %v1129, %v1113
    %v1834 = vpack.c.b16 %v1130, %v1114
    %v1835 = vpack.c.b16 %v1131, %v1115
    %v1836 = vpack.c.b16 %v1148, %v1132
    %v1837 = vpack.c.b16 %v1149, %v1133
    %v1838 = vpack.c.b16 %v1150, %v1134
    %v1839 = vpack.c.b16 %v1151, %v1135
    %v1840 = vpack.c.b16 %v1152, %v1136
    %v1841 = vpack.c.b16 %v1153, %v1137
    %v1842 = vpack.c.b16 %v1154, %v1138
    %v1843 = vpack.c.b16 %v1155, %v1139
    %v1844 = vpack.c.b16 %v1156, %v1140
    %v1845 = vpack.c.b16 %v1157, %v1141
    %v1846 = vpack.c.b16 %v1158, %v1142
    %v1847 = vpack.c.b16 %v1159, %v1143
    %v1848 = vpack.c.b16 %v1160, %v1144
    %v1849 = vpack.c.b16 %v1161, %v1145
    %v1850 = vpack.c.b16 %v1162, %v1146
    %v1851 = vpack.c.b16 %v1163, %v1147
    %v1852 = vpack.c.b16 %v1180, %v1164
    %v1853 = vpack.c.b16 %v1181, %v1165
    %v1854 = vpack.c.b16 %v1182, %v1166
    %v1855 = vpack.c.b16 %v1183, %v1167
    %v1856 = vpack.c.b16 %v1184, %v1168
    %v1857 = vpack.c.b16 %v1185, %v1169
    %v1858 = vpack.c.b16 %v1186, %v1170
    %v1859 = vpack.c.b16 %v1187, %v1171
    %v1860 = vpack.c.b16 %v1188, %v1172
    %v1861 = vpack.c.b16 %v1189, %v1173
    %v1862 = vpack.c.b16 %v1190, %v1174
    %v1863 = vpack.c.b16 %v1191, %v1175
    %v1864 = vpack.c.b16 %v1192, %v1176
    %v1865 = vpack.c.b16 %v1193, %v1177
    %v1866 = vpack.c.b16 %v1194, %v1178
    %v1867 = vpack.c.b16 %v1195, %v1179
    %v1868 = vpack.c.b16 %v1212, %v1196
    %v1869 = vpack.c.b16 %v1213, %v1197
    %v1870 = vpack.c.b16 %v1214, %v1198
    %v1871 = vpack.c.b16 %v1215, %v1199
    %v1872 = vpack.c.b16 %v1216, %v1200
    %v1873 = vpack.c.b16 %v1217, %v1201
    %v1874 = vpack.c.b16 %v1218, %v1202
    %v1875 = vpack.c.b16 %v1219, %v1203
    %v1876 = vpack.c.b16 %v1220, %v1204
    %v1877 = vpack.c.b16 %v1221, %v1205
    %v1878 = vpack.c.b16 %v1222, %v1206
    %v1879 = vpack.c.b16 %v1223, %v1207
    %v1880 = vpack.c.b16 %v1224, %v1208
    %v1881 = vpack.c.b16 %v1225, %v1209
    %v1882 = vpack.c.b16 %v1226, %v1210
    %v1883 = vpack.c.b16 %v1227, %v1211
    %v1884 = vpack.c.b16 %v1244, %v1228
    %v1885 = vpack.c.b16 %v1245, %v1229
    %v1886 = vpack.c.b16 %v1246, %v1230
    %v1887 = vpack.c.b16 %v1247, %v1231
    %v1888 = vpack.c.b16 %v1248, %v1232
    %v1889 = vpack.c.b16 %v1249, %v1233
    %v1890 = vpack.c.b16 %v1250, %v1234
    %v1891 = vpack.c.b16 %v1251, %v1235
    %v1892 = vpack.c.b16 %v1252, %v1236
    %v1893 = vpack.c.b16 %v1253, %v1237
    %v1894 = vpack.c.b16 %v1254, %v1238
    %v1895 = vpack.c.b16 %v1255, %v1239
    %v1896 = vpack.c.b16 %v1256, %v1240
    %v1897 = vpack.c.b16 %v1257, %v1241
    %v1898 = vpack.c.b16 %v1258, %v1242
    %v1899 = vpack.c.b16 %v1259, %v1243
    %v1900 = vpack.c.b16 %v1276, %v1260
    %v1901 = vpack.c.b16 %v1277, %v1261
    %v1902 = vpack.c.b16 %v1278, %v1262
    %v1903 = vpack.c.b16 %v1279, %v1263
    %v1904 = vpack.c.b16 %v1280, %v1264
    %v1905 = vpack.c.b16 %v1281, %v1265
    %v1906 = vpack.c.b16 %v1282, %v1266
    %v1907 = vpack.c.b16 %v1283, %v1267
    %v1908 = vpack.c.b16 %v1284, %v1268
    %v1909 = vpack.c.b16 %v1285, %v1269
    %v1910 = vpack.c.b16 %v1286, %v1270
    %v1911 = vpack.c.b16 %v1287, %v1271
    %v1912 = vpack.c.b16 %v1288, %v1272
    %v1913 = vpack.c.b16 %v1289, %v1273
    %v1914 = vpack.c.b16 %v1290, %v1274
    %v1915 = vpack.c.b16 %v1291, %v1275
    %v1916 = vpack.c.b16 %v1308, %v1292
    %v1917 = vpack.c.b16 %v1309, %v1293
    %v1918 = vpack.c.b16 %v1310, %v1294
    %v1919 = vpack.c.b16 %v1311, %v1295
    %v1920 = vpack.c.b16 %v1312, %v1296
    %v1921 = vpack.c.b16 %v1313, %v1297
    %v1922 = vpack.c.b16 %v1314, %v1298
    %v1923 = vpack.c.b16 %v1315, %v1299
    %v1924 = vpack.c.b16 %v1316, %v1300
    %v1925 = vpack.c.b16 %v1317, %v1301
    %v1926 = vpack.c.b16 %v1318, %v1302
    %v1927 = vpack.c.b16 %v1319, %v1303
    %v1928 = vpack.c.b16 %v1320, %v1304
    %v1929 = vpack.c.b16 %v1321, %v1305
    %v1930 = vpack.c.b16 %v1322, %v1306
    %v1931 = vpack.c.b16 %v1323, %v1307
    %v1932 = vpack.c.b16 %v1340, %v1324
    %v1933 = vpack.c.b16 %v1341, %v1325
    %v1934 = vpack.c.b16 %v1342, %v1326
    %v1935 = vpack.c.b16 %v1343, %v1327
    %v1936 = vpack.c.b16 %v1344, %v1328
    %v1937 = vpack.c.b16 %v1345, %v1329
    %v1938 = vpack.c.b16 %v1346, %v1330
    %v1939 = vpack.c.b16 %v1347, %v1331
    %v1940 = vpack.c.b16 %v1348, %v1332
    %v1941 = vpack.c.b16 %v1349, %v1333
    %v1942 = vpack.c.b16 %v1350, %v1334
    %v1943 = vpack.c.b16 %v1351, %v1335
    %v1944 = vpack.c.b16 %v1352, %v1336
    %v1945 = vpack.c.b16 %v1353, %v1337
    %v1946 = vpack.c.b16 %v1354, %v1338
    %v1947 = vpack.c.b16 %v1355, %v1339
    %v1948 = vpack.c.b16 %v1372, %v1356
    %v1949 = vpack.c.b16 %v1373, %v1357
    %v1950 = vpack.c.b16 %v1374, %v1358
    %v1951 = vpack.c.b16 %v1375, %v1359
    %v1952 = vpack.c.b16 %v1376, %v1360
    %v1953 = vpack.c.b16 %v1377, %v1361
    %v1954 = vpack.c.b16 %v1378, %v1362
    %v1955 = vpack.c.b16 %v1379, %v1363
    %v1956 = vpack.c.b16 %v1380, %v1364
    %v1957 = vpack.c.b16 %v1381, %v1365
    %v1958 = vpack.c.b16 %v1382, %v1366
    %v1959 = vpack.c.b16 %v1383, %v1367
    %v1960 = vpack.c.b16 %v1384, %v1368
    %v1961 = vpack.c.b16 %v1385, %v1369
    %v1962 = vpack.c.b16 %v1386, %v1370
    %v1963 = vpack.c.b16 %v1387, %v1371
    %v1964 = vpack.c.b16 %v1404, %v1388
    %v1965 = vpack.c.b16 %v1405, %v1389
    %v1966 = vpack.c.b16 %v1406, %v1390
    %v1967 = vpack.c.b16 %v1407, %v1391
    %v1968 = vpack.c.b16 %v1408, %v1392
    %v1969 = vpack.c.b16 %v1409, %v1393
    %v1970 = vpack.c.b16 %v1410, %v1394
    %v1971 = vpack.c.b16 %v1411, %v1395
    %v1972 = vpack.c.b16 %v1412, %v1396
    %v1973 = vpack.c.b16 %v1413, %v1397
    %v1974 = vpack.c.b16 %v1414, %v1398
    %v1975 = vpack.c.b16 %v1415, %v1399
    %v1976 = vpack.c.b16 %v1416, %v1400
    %v1977 = vpack.c.b16 %v1417, %v1401
    %v1978 = vpack.c.b16 %v1418, %v1402
    %v1979 = vpack.c.b16 %v1419, %v1403
    %v1980 = vpack.c.b16 %v1436, %v1420
    %v1981 = vpack.c.b16 %v1437, %v1421
    %v1982 = vpack.c.b16 %v1438, %v1422
    %v1983 = vpack.c.b16 %v1439, %v1423
    %v1984 = vpack.c.b16 %v1440, %v1424
    %v1985 = vpack.c.b16 %v1441, %v1425
    %v1986 = vpack.c.b16 %v1442, %v1426
    %v1987 = vpack.c.b16 %v1443, %v1427
    %v1988 = vpack.c.b16 %v1444, %v1428
    %v1989 = vpack.c.b16 %v1445, %v1429
    %v1990 = vpack.c.b16 %v1446, %v1430
    %v1991 = vpack.c.b16 %v1447, %v1431
    %v1992 = vpack.c.b16 %v1448, %v1432
    %v1993 = vpack.c.b16 %v1449, %v1433
    %v1994 = vpack.c.b16 %v1450, %v1434
    %v1995 = vpack.c.b16 %v1451, %v1435
    %v1996 = vpack.c.b16 %v1468, %v1452
    %v1997 = vpack.c.b16 %v1469, %v1453
    %v1998 = vpack.c.b16 %v1470, %v1454
    %v1999 = vpack.c.b16 %v1471, %v1455
    %v2000 = vpack.c.b16 %v1472, %v1456
    %v2001 = vpack.c.b16 %v1473, %v1457
    %v2002 = vpack.c.b16 %v1474, %v1458
    %v2003 = vpack.c.b16 %v1475, %v1459
    %v2004 = vpack.c.b16 %v1476, %v1460
    %v2005 = vpack.c.b16 %v1477, %v1461
    %v2006 = vpack.c.b16 %v1478, %v1462
    %v2007 = vpack.c.b16 %v1479, %v1463
    %v2008 = vpack.c.b16 %v1480, %v1464
    %v2009 = vpack.c.b16 %v1481, %v1465
    %v2010 = vpack.c.b16 %v1482, %v1466
    %v2011 = vpack.c.b16 %v1483, %v1467
    %v2012 = vpack.c.b16 %v1500, %v1484
    %v2013 = vpack.c.b16 %v1501, %v1485
    %v2014 = vpack.c.b16 %v1502, %v1486
    %v2015 = vpack.c.b16 %v1503, %v1487
    %v2016 = vpack.c.b16 %v1504, %v1488
    %v2017 = vpack.c.b16 %v1505, %v1489
    %v2018 = vpack.c.b16 %v1506, %v1490
    %v2019 = vpack.c.b16 %v1507, %v1491
    %v2020 = vpack.c.b16 %v1508, %v1492
    %v2021 = vpack.c.b16 %v1509, %v1493
    %v2022 = vpack.c.b16 %v1510, %v1494
    %v2023 = vpack.c.b16 %v1511, %v1495
    %v2024 = vpack.c.b16 %v1512, %v1496
    %v2025 = vpack.c.b16 %v1513, %v1497
    %v2026 = vpack.c.b16 %v1514, %v1498
    %v2027 = vpack.c.b16 %v1515, %v1499
    %v2028 = vpack.c.b16 %v1532, %v1516
    %v2029 = vpack.c.b16 %v1533, %v1517
    %v2030 = vpack.c.b16 %v1534, %v1518
    %v2031 = vpack.c.b16 %v1535, %v1519
    %v2032 = vpack.c.b16 %v1536, %v1520
    %v2033 = vpack.c.b16 %v1537, %v1521
    %v2034 = vpack.c.b16 %v1538, %v1522
    %v2035 = vpack.c.b16 %v1539, %v1523
    %v2036 = vpack.c.b16 %v1540, %v1524
    %v2037 = vpack.c.b16 %v1541, %v1525
    %v2038 = vpack.c.b16 %v1542, %v1526
    %v2039 = vpack.c.b16 %v1543, %v1527
    %v2040 = vpack.c.b16 %v1544, %v1528
    %v2041 = vpack.c.b16 %v1545, %v1529
    %v2042 = vpack.c.b16 %v1546, %v1530
    %v2043 = vpack.c.b16 %v1547, %v1531
    %v2044 = vpack.c.b16 %v1564, %v1548
    %v2045 = vpack.c.b16 %v1565, %v1549
    %v2046 = vpack.c.b16 %v1566, %v1550
    %v2047 = vpack.c.b16 %v1567, %v1551
    %v2048 = vpack.c.b16 %v1568, %v1552
    %v2049 = vpack.c.b16 %v1569, %v1553
    %v2050 = vpack.c.b16 %v1570, %v1554
    %v2051 = vpack.c.b16 %v1571, %v1555
    %v2052 = vpack.c.b16 %v1572, %v1556
    %v2053 = vpack.c.b16 %v1573, %v1557
    %v2054 = vpack.c.b16 %v1574, %v1558
    %v2055 = vpack.c.b16 %v1575, %v1559
    %v2056 = vpack.c.b16 %v1576, %v1560
    %v2057 = vpack.c.b16 %v1577, %v1561
    %v2058 = vpack.c.b16 %v1578, %v1562
    %v2059 = vpack.c.b16 %v1579, %v1563
    %v2060 = vpack.c.b16 %v1596, %v1580
    %v2061 = vpack.c.b16 %v1597, %v1581
    %v2062 = vpack.c.b16 %v1598, %v1582
    %v2063 = vpack.c.b16 %v1599, %v1583
    %v2064 = vpack.c.b16 %v1600, %v1584
    %v2065 = vpack.c.b16 %v1601, %v1585
    %v2066 = vpack.c.b16 %v1602, %v1586
    %v2067 = vpack.c.b16 %v1603, %v1587
    %v2068 = vpack.c.b16 %v1604, %v1588
    %v2069 = vpack.c.b16 %v1605, %v1589
    %v2070 = vpack.c.b16 %v1606, %v1590
    %v2071 = vpack.c.b16 %v1607, %v1591
    %v2072 = vpack.c.b16 %v1608, %v1592
    %v2073 = vpack.c.b16 %v1609, %v1593
    %v2074 = vpack.c.b16 %v1610, %v1594
    %v2075 = vpack.c.b16 %v1611, %v1595
    %v2076 = vpack.c.b16 %v1628, %v1612
    %v2077 = vpack.c.b16 %v1629, %v1613
    %v2078 = vpack.c.b16 %v1630, %v1614
    %v2079 = vpack.c.b16 %v1631, %v1615
    %v2080 = vpack.c.b16 %v1632, %v1616
    %v2081 = vpack.c.b16 %v1633, %v1617
    %v2082 = vpack.c.b16 %v1634, %v1618
    %v2083 = vpack.c.b16 %v1635, %v1619
    %v2084 = vpack.c.b16 %v1636, %v1620
    %v2085 = vpack.c.b16 %v1637, %v1621
    %v2086 = vpack.c.b16 %v1638, %v1622
    %v2087 = vpack.c.b16 %v1639, %v1623
    %v2088 = vpack.c.b16 %v1640, %v1624
    %v2089 = vpack.c.b16 %v1641, %v1625
    %v2090 = vpack.c.b16 %v1642, %v1626
    %v2091 = vpack.c.b16 %v1643, %v1627
    %v2092 = vpack.c.b16 %v1660, %v1644
    %v2093 = vpack.c.b16 %v1661, %v1645
    %v2094 = vpack.c.b16 %v1662, %v1646
    %v2095 = vpack.c.b16 %v1663, %v1647
    %v2096 = vpack.c.b16 %v1664, %v1648
    %v2097 = vpack.c.b16 %v1665, %v1649
    %v2098 = vpack.c.b16 %v1666, %v1650
    %v2099 = vpack.c.b16 %v1667, %v1651
    %v2100 = vpack.c.b16 %v1668, %v1652
    %v2101 = vpack.c.b16 %v1669, %v1653
    %v2102 = vpack.c.b16 %v1670, %v1654
    %v2103 = vpack.c.b16 %v1671, %v1655
    %v2104 = vpack.c.b16 %v1672, %v1656
    %v2105 = vpack.c.b16 %v1673, %v1657
    %v2106 = vpack.c.b16 %v1674, %v1658
    %v2107 = vpack.c.b16 %v1675, %v1659
    %v2108 = vpack.c.b16 %v1692, %v1676
    %v2109 = vpack.c.b16 %v1693, %v1677
    %v2110 = vpack.c.b16 %v1694, %v1678
    %v2111 = vpack.c.b16 %v1695, %v1679
    %v2112 = vpack.c.b16 %v1696, %v1680
    %v2113 = vpack.c.b16 %v1697, %v1681
    %v2114 = vpack.c.b16 %v1698, %v1682
    %v2115 = vpack.c.b16 %v1699, %v1683
    %v2116 = vpack.c.b16 %v1700, %v1684
    %v2117 = vpack.c.b16 %v1701, %v1685
    %v2118 = vpack.c.b16 %v1702, %v1686
    %v2119 = vpack.c.b16 %v1703, %v1687
    %v2120 = vpack.c.b16 %v1704, %v1688
    %v2121 = vpack.c.b16 %v1705, %v1689
    %v2122 = vpack.c.b16 %v1706, %v1690
    %v2123 = vpack.c.b16 %v1707, %v1691
    %v2124 = vpack.c.b16 %v1724, %v1708
    %v2125 = vpack.c.b16 %v1725, %v1709
    %v2126 = vpack.c.b16 %v1726, %v1710
    %v2127 = vpack.c.b16 %v1727, %v1711
    %v2128 = vpack.c.b16 %v1728, %v1712
    %v2129 = vpack.c.b16 %v1729, %v1713
    %v2130 = vpack.c.b16 %v1730, %v1714
    %v2131 = vpack.c.b16 %v1731, %v1715
    %v2132 = vpack.c.b16 %v1732, %v1716
    %v2133 = vpack.c.b16 %v1733, %v1717
    %v2134 = vpack.c.b16 %v1734, %v1718
    %v2135 = vpack.c.b16 %v1735, %v1719
    %v2136 = vpack.c.b16 %v1736, %v1720
    %v2137 = vpack.c.b16 %v1737, %v1721
    %v2138 = vpack.c.b16 %v1738, %v1722
    %v2139 = vpack.c.b16 %v1739, %v1723
    %v2140 = vpack.c.b16 %v1756, %v1740
    %v2141 = vpack.c.b16 %v1757, %v1741
    %v2142 = vpack.c.b16 %v1758, %v1742
    %v2143 = vpack.c.b16 %v1759, %v1743
    %v2144 = vpack.c.b16 %v1760, %v1744
    %v2145 = vpack.c.b16 %v1761, %v1745
    %v2146 = vpack.c.b16 %v1762, %v1746
    %v2147 = vpack.c.b16 %v1763, %v1747
    %v2148 = vpack.c.b16 %v1764, %v1748
    %v2149 = vpack.c.b16 %v1765, %v1749
    %v2150 = vpack.c.b16 %v1766, %v1750
    %v2151 = vpack.c.b16 %v1767, %v1751
    %v2152 = vpack.c.b16 %v1768, %v1752
    %v2153 = vpack.c.b16 %v1769, %v1753
    %v2154 = vpack.c.b16 %v1770, %v1754
    %v2155 = vpack.c.b16 %v1771, %v1755
    %2540 = vmatprep.subr.bf16.mxu0 %v1885
    %2541 = vmatpush1.bf16.msra.mxu0 %v1884
    %2542 = vmatprep.subr.bf16.mxu0 %v1869
    %2543 = vmatpush1.bf16.msra.mxu0 %v1868
    %2544 = vmatprep.subr.bf16.mxu0 %v1853
    %2545 = vmatpush1.bf16.msra.mxu0 %v1852
    %2546 = vmatprep.subr.bf16.mxu0 %v1837
    %2547 = vmatpush1.bf16.msra.mxu0 %v1836
    %2548 = vmatprep.subr.bf16.mxu0 %v1821
    %2549 = vmatpush1.bf16.msra.mxu0 %v1820
    %2550 = vmatprep.subr.bf16.mxu0 %v1805
    %2551 = vmatpush1.bf16.msra.mxu0 %v1804
    %2552 = vmatprep.subr.bf16.mxu0 %v1789
    %2553 = vmatpush1.bf16.msra.mxu0 %v1788
    %2554 = vmatprep.subr.bf16.mxu0 %v1773
    %2555 = vmatpush1.bf16.msra.mxu0 %v1772
    %2556 = vmatprep.subr.bf16.mxu0 %v2013
    %2557 = vmatpush2.bf16.msra.mxu0 %v2012
    %2558 = vmatprep.subr.bf16.mxu0 %v1997
    %2559 = vmatpush2.bf16.msra.mxu0 %v1996
    %2560 = vmatprep.subr.bf16.mxu0 %v1981
    %2561 = vmatpush2.bf16.msra.mxu0 %v1980
    %2562 = vmatprep.subr.bf16.mxu0 %v1965
    %2563 = vmatpush2.bf16.msra.mxu0 %v1964
    %2564 = vmatprep.subr.bf16.mxu0 %v1949
    %2565 = vmatpush2.bf16.msra.mxu0 %v1948
    %2566 = vmatprep.subr.bf16.mxu0 %v1933
    %2567 = vmatpush2.bf16.msra.mxu0 %v1932
    %2568 = vmatprep.subr.bf16.mxu0 %v1917
    %2569 = vmatpush2.bf16.msra.mxu0 %v1916
    %2570 = vmatprep.subr.bf16.mxu0 %v1901
    %2571 = vmatpush2.bf16.msra.mxu0 %v1900
    %2572 = vmatprep.mubr.bf16.mxu0 %v597
    %2573 = vmatmul.mubr.bf16.gmra.mxu0 %v596
    %v2574 = vpop.f32.mrf.mxu0
    %v2575 = vadd.f32 %v479, %v2574
    %v2576 = vpop.f32.mrf.mxu0
    %v2577 = vadd.f32 %v483, %v2576
    %v2578 = vpop.f32.mrf.mxu0
    %v2579 = vadd.f32 %v479, %v2578
    %v2580 = vpop.f32.mrf.mxu0
    %v2581 = vadd.f32 %v483, %v2580
    %2582 = vmatprep.mubr.bf16.mxu0 %v600
    %2583 = vmatmul.mubr.bf16.gmra.mxu0 %v599
    %v2584 = vpop.f32.mrf.mxu0
    %v2585 = vadd.f32 %v479, %v2584
    %v2586 = vpop.f32.mrf.mxu0
    %v2587 = vadd.f32 %v483, %v2586
    %v2588 = vpop.f32.mrf.mxu0
    %v2589 = vadd.f32 %v479, %v2588
    %v2590 = vpop.f32.mrf.mxu0
    %v2591 = vadd.f32 %v483, %v2590
    %2592 = vmatprep.mubr.bf16.mxu0 %v603
    %2593 = vmatmul.mubr.bf16.gmra.mxu0 %v602
    %v2594 = vpop.f32.mrf.mxu0
    %v2595 = vadd.f32 %v479, %v2594
    %v2596 = vpop.f32.mrf.mxu0
    %v2597 = vadd.f32 %v483, %v2596
    %v2598 = vpop.f32.mrf.mxu0
    %v2599 = vadd.f32 %v479, %v2598
    %v2600 = vpop.f32.mrf.mxu0
    %v2601 = vadd.f32 %v483, %v2600
    %2602 = vmatprep.mubr.bf16.mxu0 %v606
    %2603 = vmatmul.mubr.bf16.gmra.mxu0 %v605
    %v2604 = vpop.f32.mrf.mxu0
    %v2605 = vadd.f32 %v479, %v2604
    %v2606 = vpop.f32.mrf.mxu0
    %v2607 = vadd.f32 %v483, %v2606
    %v2608 = vpop.f32.mrf.mxu0
    %v2609 = vadd.f32 %v479, %v2608
    %v2610 = vpop.f32.mrf.mxu0
    %v2611 = vadd.f32 %v483, %v2610
    %2612 = vdwg.mxu0
    %2613 = vmatprep.subr.bf16.mxu0 %v2141
    %2614 = vmatpush1.bf16.msra.mxu0 %v2140
    %2615 = vmatprep.subr.bf16.mxu0 %v2125
    %2616 = vmatpush1.bf16.msra.mxu0 %v2124
    %2617 = vmatprep.subr.bf16.mxu0 %v2109
    %2618 = vmatpush1.bf16.msra.mxu0 %v2108
    %2619 = vmatprep.subr.bf16.mxu0 %v2093
    %2620 = vmatpush1.bf16.msra.mxu0 %v2092
    %2621 = vmatprep.subr.bf16.mxu0 %v2077
    %2622 = vmatpush1.bf16.msra.mxu0 %v2076
    %2623 = vmatprep.subr.bf16.mxu0 %v2061
    %2624 = vmatpush1.bf16.msra.mxu0 %v2060
    %2625 = vmatprep.subr.bf16.mxu0 %v2045
    %2626 = vmatpush1.bf16.msra.mxu0 %v2044
    %2627 = vmatprep.subr.bf16.mxu0 %v2029
    %2628 = vmatpush1.bf16.msra.mxu0 %v2028
    %2629 = vmatprep.subr.bf16.mxu0 0
    %2630 = vmatpush2.bf16.msra.mxu0 0
    %2631 = vmatprep.subr.bf16.mxu0 0
    %2632 = vmatpush2.bf16.msra.mxu0 0
    %2633 = vmatprep.subr.bf16.mxu0 0
    %2634 = vmatpush2.bf16.msra.mxu0 0
    %2635 = vmatprep.subr.bf16.mxu0 0
    %2636 = vmatpush2.bf16.msra.mxu0 0
    %2637 = vmatprep.subr.bf16.mxu0 0
    %2638 = vmatpush2.bf16.msra.mxu0 0
    %2639 = vmatprep.subr.bf16.mxu0 0
    %2640 = vmatpush2.bf16.msra.mxu0 0
    %2641 = vmatprep.subr.bf16.mxu0 0
    %2642 = vmatpush2.bf16.msra.mxu0 0
    %2643 = vmatprep.subr.bf16.mxu0 0
    %2644 = vmatpush2.bf16.msra.mxu0 0
    %2645 = vmatprep.mubr.bf16.mxu0 0
    %2646 = vmatmul.mubr.bf16.gmra.mxu0 %v598
    %v2647 = vpop.f32.mrf.mxu0
    %v2648 = vadd.f32 %v2575, %v2647
    %v2649 = vpop.f32.mrf.mxu0
    %v2650 = vadd.f32 %v2577, %v2649
    %v2651 = vpop.f32.mrf.mxu0
    %v2652 = vadd.f32 %v2579, %v2651
    %v2653 = vpop.f32.mrf.mxu0
    %v2654 = vadd.f32 %v2581, %v2653
    %2655 = vmatprep.mubr.bf16.mxu0 0
    %2656 = vmatmul.mubr.bf16.gmra.mxu0 %v601
    %v2657 = vpop.f32.mrf.mxu0
    %v2658 = vadd.f32 %v2585, %v2657
    %v2659 = vpop.f32.mrf.mxu0
    %v2660 = vadd.f32 %v2587, %v2659
    %v2661 = vpop.f32.mrf.mxu0
    %v2662 = vadd.f32 %v2589, %v2661
    %v2663 = vpop.f32.mrf.mxu0
    %v2664 = vadd.f32 %v2591, %v2663
    %2665 = vmatprep.mubr.bf16.mxu0 0
    %2666 = vmatmul.mubr.bf16.gmra.mxu0 %v604
    %v2667 = vpop.f32.mrf.mxu0
    %v2668 = vadd.f32 %v2595, %v2667
    %v2669 = vpop.f32.mrf.mxu0
    %v2670 = vadd.f32 %v2597, %v2669
    %v2671 = vpop.f32.mrf.mxu0
    %v2672 = vadd.f32 %v2599, %v2671
    %v2673 = vpop.f32.mrf.mxu0
    %v2674 = vadd.f32 %v2601, %v2673
    %2675 = vmatprep.mubr.bf16.mxu0 0
    %2676 = vmatmul.mubr.bf16.gmra.mxu0 %v607
    %v2677 = vpop.f32.mrf.mxu0
    %v2678 = vadd.f32 %v2605, %v2677
    %v2679 = vpop.f32.mrf.mxu0
    %v2680 = vadd.f32 %v2607, %v2679
    %v2681 = vpop.f32.mrf.mxu0
    %v2682 = vadd.f32 %v2609, %v2681
    %v2683 = vpop.f32.mrf.mxu0
    %v2684 = vadd.f32 %v2611, %v2683
    %2685 = vdwg.mxu0
    %2686 = vmatprep.subr.bf16.mxu0 %v1887
    %2687 = vmatpush1.bf16.msra.mxu0 %v1886
    %2688 = vmatprep.subr.bf16.mxu0 %v1871
    %2689 = vmatpush1.bf16.msra.mxu0 %v1870
    %2690 = vmatprep.subr.bf16.mxu0 %v1855
    %2691 = vmatpush1.bf16.msra.mxu0 %v1854
    %2692 = vmatprep.subr.bf16.mxu0 %v1839
    %2693 = vmatpush1.bf16.msra.mxu0 %v1838
    %2694 = vmatprep.subr.bf16.mxu0 %v1823
    %2695 = vmatpush1.bf16.msra.mxu0 %v1822
    %2696 = vmatprep.subr.bf16.mxu0 %v1807
    %2697 = vmatpush1.bf16.msra.mxu0 %v1806
    %2698 = vmatprep.subr.bf16.mxu0 %v1791
    %2699 = vmatpush1.bf16.msra.mxu0 %v1790
    %2700 = vmatprep.subr.bf16.mxu0 %v1775
    %2701 = vmatpush1.bf16.msra.mxu0 %v1774
    %2702 = vmatprep.subr.bf16.mxu0 %v2015
    %2703 = vmatpush2.bf16.msra.mxu0 %v2014
    %2704 = vmatprep.subr.bf16.mxu0 %v1999
    %2705 = vmatpush2.bf16.msra.mxu0 %v1998
    %2706 = vmatprep.subr.bf16.mxu0 %v1983
    %2707 = vmatpush2.bf16.msra.mxu0 %v1982
    %2708 = vmatprep.subr.bf16.mxu0 %v1967
    %2709 = vmatpush2.bf16.msra.mxu0 %v1966
    %2710 = vmatprep.subr.bf16.mxu0 %v1951
    %2711 = vmatpush2.bf16.msra.mxu0 %v1950
    %2712 = vmatprep.subr.bf16.mxu0 %v1935
    %2713 = vmatpush2.bf16.msra.mxu0 %v1934
    %2714 = vmatprep.subr.bf16.mxu0 %v1919
    %2715 = vmatpush2.bf16.msra.mxu0 %v1918
    %2716 = vmatprep.subr.bf16.mxu0 %v1903
    %2717 = vmatpush2.bf16.msra.mxu0 %v1902
    %2718 = vmatprep.mubr.bf16.mxu0 %v597
    %2719 = vmatmul.mubr.bf16.gmra.mxu0 %v596
    %v2720 = vpop.f32.mrf.mxu0
    %v2721 = vadd.f32 %v487, %v2720
    %v2722 = vpop.f32.mrf.mxu0
    %v2723 = vadd.f32 %v491, %v2722
    %v2724 = vpop.f32.mrf.mxu0
    %v2725 = vadd.f32 %v487, %v2724
    %v2726 = vpop.f32.mrf.mxu0
    %v2727 = vadd.f32 %v491, %v2726
    %2728 = vmatprep.mubr.bf16.mxu0 %v600
    %2729 = vmatmul.mubr.bf16.gmra.mxu0 %v599
    %v2730 = vpop.f32.mrf.mxu0
    %v2731 = vadd.f32 %v487, %v2730
    %v2732 = vpop.f32.mrf.mxu0
    %v2733 = vadd.f32 %v491, %v2732
    %v2734 = vpop.f32.mrf.mxu0
    %v2735 = vadd.f32 %v487, %v2734
    %v2736 = vpop.f32.mrf.mxu0
    %v2737 = vadd.f32 %v491, %v2736
    %2738 = vmatprep.mubr.bf16.mxu0 %v603
    %2739 = vmatmul.mubr.bf16.gmra.mxu0 %v602
    %v2740 = vpop.f32.mrf.mxu0
    %v2741 = vadd.f32 %v487, %v2740
    %v2742 = vpop.f32.mrf.mxu0
    %v2743 = vadd.f32 %v491, %v2742
    %v2744 = vpop.f32.mrf.mxu0
    %v2745 = vadd.f32 %v487, %v2744
    %v2746 = vpop.f32.mrf.mxu0
    %v2747 = vadd.f32 %v491, %v2746
    %2748 = vmatprep.mubr.bf16.mxu0 %v606
    %2749 = vmatmul.mubr.bf16.gmra.mxu0 %v605
    %v2750 = vpop.f32.mrf.mxu0
    %v2751 = vadd.f32 %v487, %v2750
    %v2752 = vpop.f32.mrf.mxu0
    %v2753 = vadd.f32 %v491, %v2752
    %v2754 = vpop.f32.mrf.mxu0
    %v2755 = vadd.f32 %v487, %v2754
    %v2756 = vpop.f32.mrf.mxu0
    %v2757 = vadd.f32 %v491, %v2756
    %2758 = vdwg.mxu0
    %2759 = vmatprep.subr.bf16.mxu0 %v2143
    %2760 = vmatpush1.bf16.msra.mxu0 %v2142
    %2761 = vmatprep.subr.bf16.mxu0 %v2127
    %2762 = vmatpush1.bf16.msra.mxu0 %v2126
    %2763 = vmatprep.subr.bf16.mxu0 %v2111
    %2764 = vmatpush1.bf16.msra.mxu0 %v2110
    %2765 = vmatprep.subr.bf16.mxu0 %v2095
    %2766 = vmatpush1.bf16.msra.mxu0 %v2094
    %2767 = vmatprep.subr.bf16.mxu0 %v2079
    %2768 = vmatpush1.bf16.msra.mxu0 %v2078
    %2769 = vmatprep.subr.bf16.mxu0 %v2063
    %2770 = vmatpush1.bf16.msra.mxu0 %v2062
    %2771 = vmatprep.subr.bf16.mxu0 %v2047
    %2772 = vmatpush1.bf16.msra.mxu0 %v2046
    %2773 = vmatprep.subr.bf16.mxu0 %v2031
    %2774 = vmatpush1.bf16.msra.mxu0 %v2030
    %2775 = vmatprep.subr.bf16.mxu0 0
    %2776 = vmatpush2.bf16.msra.mxu0 0
    %2777 = vmatprep.subr.bf16.mxu0 0
    %2778 = vmatpush2.bf16.msra.mxu0 0
    %2779 = vmatprep.subr.bf16.mxu0 0
    %2780 = vmatpush2.bf16.msra.mxu0 0
    %2781 = vmatprep.subr.bf16.mxu0 0
    %2782 = vmatpush2.bf16.msra.mxu0 0
    %2783 = vmatprep.subr.bf16.mxu0 0
    %2784 = vmatpush2.bf16.msra.mxu0 0
    %2785 = vmatprep.subr.bf16.mxu0 0
    %2786 = vmatpush2.bf16.msra.mxu0 0
    %2787 = vmatprep.subr.bf16.mxu0 0
    %2788 = vmatpush2.bf16.msra.mxu0 0
    %2789 = vmatprep.subr.bf16.mxu0 0
    %2790 = vmatpush2.bf16.msra.mxu0 0
    %2791 = vmatprep.mubr.bf16.mxu0 0
    %2792 = vmatmul.mubr.bf16.gmra.mxu0 %v598
    %v2793 = vpop.f32.mrf.mxu0
    %v2794 = vadd.f32 %v2721, %v2793
    %v2795 = vpop.f32.mrf.mxu0
    %v2796 = vadd.f32 %v2723, %v2795
    %v2797 = vpop.f32.mrf.mxu0
    %v2798 = vadd.f32 %v2725, %v2797
    %v2799 = vpop.f32.mrf.mxu0
    %v2800 = vadd.f32 %v2727, %v2799
    %2801 = vmatprep.mubr.bf16.mxu0 0
    %2802 = vmatmul.mubr.bf16.gmra.mxu0 %v601
    %v2803 = vpop.f32.mrf.mxu0
    %v2804 = vadd.f32 %v2731, %v2803
    %v2805 = vpop.f32.mrf.mxu0
    %v2806 = vadd.f32 %v2733, %v2805
    %v2807 = vpop.f32.mrf.mxu0
    %v2808 = vadd.f32 %v2735, %v2807
    %v2809 = vpop.f32.mrf.mxu0
    %v2810 = vadd.f32 %v2737, %v2809
    %2811 = vmatprep.mubr.bf16.mxu0 0
    %2812 = vmatmul.mubr.bf16.gmra.mxu0 %v604
    %v2813 = vpop.f32.mrf.mxu0
    %v2814 = vadd.f32 %v2741, %v2813
    %v2815 = vpop.f32.mrf.mxu0
    %v2816 = vadd.f32 %v2743, %v2815
    %v2817 = vpop.f32.mrf.mxu0
    %v2818 = vadd.f32 %v2745, %v2817
    %v2819 = vpop.f32.mrf.mxu0
    %v2820 = vadd.f32 %v2747, %v2819
    %2821 = vmatprep.mubr.bf16.mxu0 0
    %2822 = vmatmul.mubr.bf16.gmra.mxu0 %v607
    %v2823 = vpop.f32.mrf.mxu0
    %v2824 = vadd.f32 %v2751, %v2823
    %v2825 = vpop.f32.mrf.mxu0
    %v2826 = vadd.f32 %v2753, %v2825
    %v2827 = vpop.f32.mrf.mxu0
    %v2828 = vadd.f32 %v2755, %v2827
    %v2829 = vpop.f32.mrf.mxu0
    %v2830 = vadd.f32 %v2757, %v2829
    %2831 = vdwg.mxu0
    %2832 = vmatprep.subr.bf16.mxu0 %v1889
    %2833 = vmatpush1.bf16.msra.mxu0 %v1888
    %2834 = vmatprep.subr.bf16.mxu0 %v1873
    %2835 = vmatpush1.bf16.msra.mxu0 %v1872
    %2836 = vmatprep.subr.bf16.mxu0 %v1857
    %2837 = vmatpush1.bf16.msra.mxu0 %v1856
    %2838 = vmatprep.subr.bf16.mxu0 %v1841
    %2839 = vmatpush1.bf16.msra.mxu0 %v1840
    %2840 = vmatprep.subr.bf16.mxu0 %v1825
    %2841 = vmatpush1.bf16.msra.mxu0 %v1824
    %2842 = vmatprep.subr.bf16.mxu0 %v1809
    %2843 = vmatpush1.bf16.msra.mxu0 %v1808
    %2844 = vmatprep.subr.bf16.mxu0 %v1793
    %2845 = vmatpush1.bf16.msra.mxu0 %v1792
    %2846 = vmatprep.subr.bf16.mxu0 %v1777
    %2847 = vmatpush1.bf16.msra.mxu0 %v1776
    %2848 = vmatprep.subr.bf16.mxu0 %v2017
    %2849 = vmatpush2.bf16.msra.mxu0 %v2016
    %2850 = vmatprep.subr.bf16.mxu0 %v2001
    %2851 = vmatpush2.bf16.msra.mxu0 %v2000
    %2852 = vmatprep.subr.bf16.mxu0 %v1985
    %2853 = vmatpush2.bf16.msra.mxu0 %v1984
    %2854 = vmatprep.subr.bf16.mxu0 %v1969
    %2855 = vmatpush2.bf16.msra.mxu0 %v1968
    %2856 = vmatprep.subr.bf16.mxu0 %v1953
    %2857 = vmatpush2.bf16.msra.mxu0 %v1952
    %2858 = vmatprep.subr.bf16.mxu0 %v1937
    %2859 = vmatpush2.bf16.msra.mxu0 %v1936
    %2860 = vmatprep.subr.bf16.mxu0 %v1921
    %2861 = vmatpush2.bf16.msra.mxu0 %v1920
    %2862 = vmatprep.subr.bf16.mxu0 %v1905
    %2863 = vmatpush2.bf16.msra.mxu0 %v1904
    %2864 = vmatprep.mubr.bf16.mxu0 %v597
    %2865 = vmatmul.mubr.bf16.gmra.mxu0 %v596
    %v2866 = vpop.f32.mrf.mxu0
    %v2867 = vadd.f32 %v495, %v2866
    %v2868 = vpop.f32.mrf.mxu0
    %v2869 = vadd.f32 %v499, %v2868
    %v2870 = vpop.f32.mrf.mxu0
    %v2871 = vadd.f32 %v495, %v2870
    %v2872 = vpop.f32.mrf.mxu0
    %v2873 = vadd.f32 %v499, %v2872
    %2874 = vmatprep.mubr.bf16.mxu0 %v600
    %2875 = vmatmul.mubr.bf16.gmra.mxu0 %v599
    %v2876 = vpop.f32.mrf.mxu0
    %v2877 = vadd.f32 %v495, %v2876
    %v2878 = vpop.f32.mrf.mxu0
    %v2879 = vadd.f32 %v499, %v2878
    %v2880 = vpop.f32.mrf.mxu0
    %v2881 = vadd.f32 %v495, %v2880
    %v2882 = vpop.f32.mrf.mxu0
    %v2883 = vadd.f32 %v499, %v2882
    %2884 = vmatprep.mubr.bf16.mxu0 %v603
    %2885 = vmatmul.mubr.bf16.gmra.mxu0 %v602
    %v2886 = vpop.f32.mrf.mxu0
    %v2887 = vadd.f32 %v495, %v2886
    %v2888 = vpop.f32.mrf.mxu0
    %v2889 = vadd.f32 %v499, %v2888
    %v2890 = vpop.f32.mrf.mxu0
    %v2891 = vadd.f32 %v495, %v2890
    %v2892 = vpop.f32.mrf.mxu0
    %v2893 = vadd.f32 %v499, %v2892
    %2894 = vmatprep.mubr.bf16.mxu0 %v606
    %2895 = vmatmul.mubr.bf16.gmra.mxu0 %v605
    %v2896 = vpop.f32.mrf.mxu0
    %v2897 = vadd.f32 %v495, %v2896
    %v2898 = vpop.f32.mrf.mxu0
    %v2899 = vadd.f32 %v499, %v2898
    %v2900 = vpop.f32.mrf.mxu0
    %v2901 = vadd.f32 %v495, %v2900
    %v2902 = vpop.f32.mrf.mxu0
    %v2903 = vadd.f32 %v499, %v2902
    %2904 = vdwg.mxu0
    %2905 = vmatprep.subr.bf16.mxu0 %v2145
    %2906 = vmatpush1.bf16.msra.mxu0 %v2144
    %2907 = vmatprep.subr.bf16.mxu0 %v2129
    %2908 = vmatpush1.bf16.msra.mxu0 %v2128
    %2909 = vmatprep.subr.bf16.mxu0 %v2113
    %2910 = vmatpush1.bf16.msra.mxu0 %v2112
    %2911 = vmatprep.subr.bf16.mxu0 %v2097
    %2912 = vmatpush1.bf16.msra.mxu0 %v2096
    %2913 = vmatprep.subr.bf16.mxu0 %v2081
    %2914 = vmatpush1.bf16.msra.mxu0 %v2080
    %2915 = vmatprep.subr.bf16.mxu0 %v2065
    %2916 = vmatpush1.bf16.msra.mxu0 %v2064
    %2917 = vmatprep.subr.bf16.mxu0 %v2049
    %2918 = vmatpush1.bf16.msra.mxu0 %v2048
    %2919 = vmatprep.subr.bf16.mxu0 %v2033
    %2920 = vmatpush1.bf16.msra.mxu0 %v2032
    %2921 = vmatprep.subr.bf16.mxu0 0
    %2922 = vmatpush2.bf16.msra.mxu0 0
    %2923 = vmatprep.subr.bf16.mxu0 0
    %2924 = vmatpush2.bf16.msra.mxu0 0
    %2925 = vmatprep.subr.bf16.mxu0 0
    %2926 = vmatpush2.bf16.msra.mxu0 0
    %2927 = vmatprep.subr.bf16.mxu0 0
    %2928 = vmatpush2.bf16.msra.mxu0 0
    %2929 = vmatprep.subr.bf16.mxu0 0
    %2930 = vmatpush2.bf16.msra.mxu0 0
    %2931 = vmatprep.subr.bf16.mxu0 0
    %2932 = vmatpush2.bf16.msra.mxu0 0
    %2933 = vmatprep.subr.bf16.mxu0 0
    %2934 = vmatpush2.bf16.msra.mxu0 0
    %2935 = vmatprep.subr.bf16.mxu0 0
    %2936 = vmatpush2.bf16.msra.mxu0 0
    %2937 = vmatprep.mubr.bf16.mxu0 0
    %2938 = vmatmul.mubr.bf16.gmra.mxu0 %v598
    %v2939 = vpop.f32.mrf.mxu0
    %v2940 = vadd.f32 %v2867, %v2939
    %v2941 = vpop.f32.mrf.mxu0
    %v2942 = vadd.f32 %v2869, %v2941
    %v2943 = vpop.f32.mrf.mxu0
    %v2944 = vadd.f32 %v2871, %v2943
    %v2945 = vpop.f32.mrf.mxu0
    %v2946 = vadd.f32 %v2873, %v2945
    %2947 = vmatprep.mubr.bf16.mxu0 0
    %2948 = vmatmul.mubr.bf16.gmra.mxu0 %v601
    %v2949 = vpop.f32.mrf.mxu0
    %v2950 = vadd.f32 %v2877, %v2949
    %v2951 = vpop.f32.mrf.mxu0
    %v2952 = vadd.f32 %v2879, %v2951
    %v2953 = vpop.f32.mrf.mxu0
    %v2954 = vadd.f32 %v2881, %v2953
    %v2955 = vpop.f32.mrf.mxu0
    %v2956 = vadd.f32 %v2883, %v2955
    %2957 = vmatprep.mubr.bf16.mxu0 0
    %2958 = vmatmul.mubr.bf16.gmra.mxu0 %v604
    %v2959 = vpop.f32.mrf.mxu0
    %v2960 = vadd.f32 %v2887, %v2959
    %v2961 = vpop.f32.mrf.mxu0
    %v2962 = vadd.f32 %v2889, %v2961
    %v2963 = vpop.f32.mrf.mxu0
    %v2964 = vadd.f32 %v2891, %v2963
    %v2965 = vpop.f32.mrf.mxu0
    %v2966 = vadd.f32 %v2893, %v2965
    %2967 = vmatprep.mubr.bf16.mxu0 0
    %2968 = vmatmul.mubr.bf16.gmra.mxu0 %v607
    %v2969 = vpop.f32.mrf.mxu0
    %v2970 = vadd.f32 %v2897, %v2969
    %v2971 = vpop.f32.mrf.mxu0
    %v2972 = vadd.f32 %v2899, %v2971
    %v2973 = vpop.f32.mrf.mxu0
    %v2974 = vadd.f32 %v2901, %v2973
    %v2975 = vpop.f32.mrf.mxu0
    %v2976 = vadd.f32 %v2903, %v2975
    %2977 = vdwg.mxu0
    %2978 = vmatprep.subr.bf16.mxu0 %v1891
    %2979 = vmatpush1.bf16.msra.mxu0 %v1890
    %2980 = vmatprep.subr.bf16.mxu0 %v1875
    %2981 = vmatpush1.bf16.msra.mxu0 %v1874
    %2982 = vmatprep.subr.bf16.mxu0 %v1859
    %2983 = vmatpush1.bf16.msra.mxu0 %v1858
    %2984 = vmatprep.subr.bf16.mxu0 %v1843
    %2985 = vmatpush1.bf16.msra.mxu0 %v1842
    %2986 = vmatprep.subr.bf16.mxu0 %v1827
    %2987 = vmatpush1.bf16.msra.mxu0 %v1826
    %2988 = vmatprep.subr.bf16.mxu0 %v1811
    %2989 = vmatpush1.bf16.msra.mxu0 %v1810
    %2990 = vmatprep.subr.bf16.mxu0 %v1795
    %2991 = vmatpush1.bf16.msra.mxu0 %v1794
    %2992 = vmatprep.subr.bf16.mxu0 %v1779
    %2993 = vmatpush1.bf16.msra.mxu0 %v1778
    %2994 = vmatprep.subr.bf16.mxu0 %v2019
    %2995 = vmatpush2.bf16.msra.mxu0 %v2018
    %2996 = vmatprep.subr.bf16.mxu0 %v2003
    %2997 = vmatpush2.bf16.msra.mxu0 %v2002
    %2998 = vmatprep.subr.bf16.mxu0 %v1987
    %2999 = vmatpush2.bf16.msra.mxu0 %v1986
    %3000 = vmatprep.subr.bf16.mxu0 %v1971
    %3001 = vmatpush2.bf16.msra.mxu0 %v1970
    %3002 = vmatprep.subr.bf16.mxu0 %v1955
    %3003 = vmatpush2.bf16.msra.mxu0 %v1954
    %3004 = vmatprep.subr.bf16.mxu0 %v1939
    %3005 = vmatpush2.bf16.msra.mxu0 %v1938
    %3006 = vmatprep.subr.bf16.mxu0 %v1923
    %3007 = vmatpush2.bf16.msra.mxu0 %v1922
    %3008 = vmatprep.subr.bf16.mxu0 %v1907
    %3009 = vmatpush2.bf16.msra.mxu0 %v1906
    %3010 = vmatprep.mubr.bf16.mxu0 %v597
    %3011 = vmatmul.mubr.bf16.gmra.mxu0 %v596
    %v3012 = vpop.f32.mrf.mxu0
    %v3013 = vadd.f32 %v503, %v3012
    %v3014 = vpop.f32.mrf.mxu0
    %v3015 = vadd.f32 %v507, %v3014
    %v3016 = vpop.f32.mrf.mxu0
    %v3017 = vadd.f32 %v503, %v3016
    %v3018 = vpop.f32.mrf.mxu0
    %v3019 = vadd.f32 %v507, %v3018
    %3020 = vmatprep.mubr.bf16.mxu0 %v600
    %3021 = vmatmul.mubr.bf16.gmra.mxu0 %v599
    %v3022 = vpop.f32.mrf.mxu0
    %v3023 = vadd.f32 %v503, %v3022
    %v3024 = vpop.f32.mrf.mxu0
    %v3025 = vadd.f32 %v507, %v3024
    %v3026 = vpop.f32.mrf.mxu0
    %v3027 = vadd.f32 %v503, %v3026
    %v3028 = vpop.f32.mrf.mxu0
    %v3029 = vadd.f32 %v507, %v3028
    %3030 = vmatprep.mubr.bf16.mxu0 %v603
    %3031 = vmatmul.mubr.bf16.gmra.mxu0 %v602
    %v3032 = vpop.f32.mrf.mxu0
    %v3033 = vadd.f32 %v503, %v3032
    %v3034 = vpop.f32.mrf.mxu0
    %v3035 = vadd.f32 %v507, %v3034
    %v3036 = vpop.f32.mrf.mxu0
    %v3037 = vadd.f32 %v503, %v3036
    %v3038 = vpop.f32.mrf.mxu0
    %v3039 = vadd.f32 %v507, %v3038
    %3040 = vmatprep.mubr.bf16.mxu0 %v606
    %3041 = vmatmul.mubr.bf16.gmra.mxu0 %v605
    %v3042 = vpop.f32.mrf.mxu0
    %v3043 = vadd.f32 %v503, %v3042
    %v3044 = vpop.f32.mrf.mxu0
    %v3045 = vadd.f32 %v507, %v3044
    %v3046 = vpop.f32.mrf.mxu0
    %v3047 = vadd.f32 %v503, %v3046
    %v3048 = vpop.f32.mrf.mxu0
    %v3049 = vadd.f32 %v507, %v3048
    %3050 = vdwg.mxu0
    %3051 = vmatprep.subr.bf16.mxu0 %v2147
    %3052 = vmatpush1.bf16.msra.mxu0 %v2146
    %3053 = vmatprep.subr.bf16.mxu0 %v2131
    %3054 = vmatpush1.bf16.msra.mxu0 %v2130
    %3055 = vmatprep.subr.bf16.mxu0 %v2115
    %3056 = vmatpush1.bf16.msra.mxu0 %v2114
    %3057 = vmatprep.subr.bf16.mxu0 %v2099
    %3058 = vmatpush1.bf16.msra.mxu0 %v2098
    %3059 = vmatprep.subr.bf16.mxu0 %v2083
    %3060 = vmatpush1.bf16.msra.mxu0 %v2082
    %3061 = vmatprep.subr.bf16.mxu0 %v2067
    %3062 = vmatpush1.bf16.msra.mxu0 %v2066
    %3063 = vmatprep.subr.bf16.mxu0 %v2051
    %3064 = vmatpush1.bf16.msra.mxu0 %v2050
    %3065 = vmatprep.subr.bf16.mxu0 %v2035
    %3066 = vmatpush1.bf16.msra.mxu0 %v2034
    %3067 = vmatprep.subr.bf16.mxu0 0
    %3068 = vmatpush2.bf16.msra.mxu0 0
    %3069 = vmatprep.subr.bf16.mxu0 0
    %3070 = vmatpush2.bf16.msra.mxu0 0
    %3071 = vmatprep.subr.bf16.mxu0 0
    %3072 = vmatpush2.bf16.msra.mxu0 0
    %3073 = vmatprep.subr.bf16.mxu0 0
    %3074 = vmatpush2.bf16.msra.mxu0 0
    %3075 = vmatprep.subr.bf16.mxu0 0
    %3076 = vmatpush2.bf16.msra.mxu0 0
    %3077 = vmatprep.subr.bf16.mxu0 0
    %3078 = vmatpush2.bf16.msra.mxu0 0
    %3079 = vmatprep.subr.bf16.mxu0 0
    %3080 = vmatpush2.bf16.msra.mxu0 0
    %3081 = vmatprep.subr.bf16.mxu0 0
    %3082 = vmatpush2.bf16.msra.mxu0 0
    %3083 = vmatprep.mubr.bf16.mxu0 0
    %3084 = vmatmul.mubr.bf16.gmra.mxu0 %v598
    %v3085 = vpop.f32.mrf.mxu0
    %v3086 = vadd.f32 %v3013, %v3085
    %v3087 = vpop.f32.mrf.mxu0
    %v3088 = vadd.f32 %v3015, %v3087
    %v3089 = vpop.f32.mrf.mxu0
    %v3090 = vadd.f32 %v3017, %v3089
    %v3091 = vpop.f32.mrf.mxu0
    %v3092 = vadd.f32 %v3019, %v3091
    %3093 = vmatprep.mubr.bf16.mxu0 0
    %3094 = vmatmul.mubr.bf16.gmra.mxu0 %v601
    %v3095 = vpop.f32.mrf.mxu0
    %v3096 = vadd.f32 %v3023, %v3095
    %v3097 = vpop.f32.mrf.mxu0
    %v3098 = vadd.f32 %v3025, %v3097
    %v3099 = vpop.f32.mrf.mxu0
    %v3100 = vadd.f32 %v3027, %v3099
    %v3101 = vpop.f32.mrf.mxu0
    %v3102 = vadd.f32 %v3029, %v3101
    %3103 = vmatprep.mubr.bf16.mxu0 0
    %3104 = vmatmul.mubr.bf16.gmra.mxu0 %v604
    %v3105 = vpop.f32.mrf.mxu0
    %v3106 = vadd.f32 %v3033, %v3105
    %v3107 = vpop.f32.mrf.mxu0
    %v3108 = vadd.f32 %v3035, %v3107
    %v3109 = vpop.f32.mrf.mxu0
    %v3110 = vadd.f32 %v3037, %v3109
    %v3111 = vpop.f32.mrf.mxu0
    %v3112 = vadd.f32 %v3039, %v3111
    %3113 = vmatprep.mubr.bf16.mxu0 0
    %3114 = vmatmul.mubr.bf16.gmra.mxu0 %v607
    %v3115 = vpop.f32.mrf.mxu0
    %v3116 = vadd.f32 %v3043, %v3115
    %v3117 = vpop.f32.mrf.mxu0
    %v3118 = vadd.f32 %v3045, %v3117
    %v3119 = vpop.f32.mrf.mxu0
    %v3120 = vadd.f32 %v3047, %v3119
    %v3121 = vpop.f32.mrf.mxu0
    %v3122 = vadd.f32 %v3049, %v3121
    %3123 = vdwg.mxu0
    %3124 = vmatprep.subr.bf16.mxu0 %v1893
    %3125 = vmatpush1.bf16.msra.mxu0 %v1892
    %3126 = vmatprep.subr.bf16.mxu0 %v1877
    %3127 = vmatpush1.bf16.msra.mxu0 %v1876
    %3128 = vmatprep.subr.bf16.mxu0 %v1861
    %3129 = vmatpush1.bf16.msra.mxu0 %v1860
    %3130 = vmatprep.subr.bf16.mxu0 %v1845
    %3131 = vmatpush1.bf16.msra.mxu0 %v1844
    %3132 = vmatprep.subr.bf16.mxu0 %v1829
    %3133 = vmatpush1.bf16.msra.mxu0 %v1828
    %3134 = vmatprep.subr.bf16.mxu0 %v1813
    %3135 = vmatpush1.bf16.msra.mxu0 %v1812
    %3136 = vmatprep.subr.bf16.mxu0 %v1797
    %3137 = vmatpush1.bf16.msra.mxu0 %v1796
    %3138 = vmatprep.subr.bf16.mxu0 %v1781
    %3139 = vmatpush1.bf16.msra.mxu0 %v1780
    %3140 = vmatprep.subr.bf16.mxu0 %v2021
    %3141 = vmatpush2.bf16.msra.mxu0 %v2020
    %3142 = vmatprep.subr.bf16.mxu0 %v2005
    %3143 = vmatpush2.bf16.msra.mxu0 %v2004
    %3144 = vmatprep.subr.bf16.mxu0 %v1989
    %3145 = vmatpush2.bf16.msra.mxu0 %v1988
    %3146 = vmatprep.subr.bf16.mxu0 %v1973
    %3147 = vmatpush2.bf16.msra.mxu0 %v1972
    %3148 = vmatprep.subr.bf16.mxu0 %v1957
    %3149 = vmatpush2.bf16.msra.mxu0 %v1956
    %3150 = vmatprep.subr.bf16.mxu0 %v1941
    %3151 = vmatpush2.bf16.msra.mxu0 %v1940
    %3152 = vmatprep.subr.bf16.mxu0 %v1925
    %3153 = vmatpush2.bf16.msra.mxu0 %v1924
    %3154 = vmatprep.subr.bf16.mxu0 %v1909
    %3155 = vmatpush2.bf16.msra.mxu0 %v1908
    %3156 = vmatprep.mubr.bf16.mxu0 %v597
    %3157 = vmatmul.mubr.bf16.gmra.mxu0 %v596
    %v3158 = vpop.f32.mrf.mxu0
    %v3159 = vadd.f32 %v511, %v3158
    %v3160 = vpop.f32.mrf.mxu0
    %v3161 = vadd.f32 %v515, %v3160
    %v3162 = vpop.f32.mrf.mxu0
    %v3163 = vadd.f32 %v511, %v3162
    %v3164 = vpop.f32.mrf.mxu0
    %v3165 = vadd.f32 %v515, %v3164
    %3166 = vmatprep.mubr.bf16.mxu0 %v600
    %3167 = vmatmul.mubr.bf16.gmra.mxu0 %v599
    %v3168 = vpop.f32.mrf.mxu0
    %v3169 = vadd.f32 %v511, %v3168
    %v3170 = vpop.f32.mrf.mxu0
    %v3171 = vadd.f32 %v515, %v3170
    %v3172 = vpop.f32.mrf.mxu0
    %v3173 = vadd.f32 %v511, %v3172
    %v3174 = vpop.f32.mrf.mxu0
    %v3175 = vadd.f32 %v515, %v3174
    %3176 = vmatprep.mubr.bf16.mxu0 %v603
    %3177 = vmatmul.mubr.bf16.gmra.mxu0 %v602
    %v3178 = vpop.f32.mrf.mxu0
    %v3179 = vadd.f32 %v511, %v3178
    %v3180 = vpop.f32.mrf.mxu0
    %v3181 = vadd.f32 %v515, %v3180
    %v3182 = vpop.f32.mrf.mxu0
    %v3183 = vadd.f32 %v511, %v3182
    %v3184 = vpop.f32.mrf.mxu0
    %v3185 = vadd.f32 %v515, %v3184
    %3186 = vmatprep.mubr.bf16.mxu0 %v606
    %3187 = vmatmul.mubr.bf16.gmra.mxu0 %v605
    %v3188 = vpop.f32.mrf.mxu0
    %v3189 = vadd.f32 %v511, %v3188
    %v3190 = vpop.f32.mrf.mxu0
    %v3191 = vadd.f32 %v515, %v3190
    %v3192 = vpop.f32.mrf.mxu0
    %v3193 = vadd.f32 %v511, %v3192
    %v3194 = vpop.f32.mrf.mxu0
    %v3195 = vadd.f32 %v515, %v3194
    %3196 = vdwg.mxu0
    %3197 = vmatprep.subr.bf16.mxu0 %v2149
    %3198 = vmatpush1.bf16.msra.mxu0 %v2148
    %3199 = vmatprep.subr.bf16.mxu0 %v2133
    %3200 = vmatpush1.bf16.msra.mxu0 %v2132
    %3201 = vmatprep.subr.bf16.mxu0 %v2117
    %3202 = vmatpush1.bf16.msra.mxu0 %v2116
    %3203 = vmatprep.subr.bf16.mxu0 %v2101
    %3204 = vmatpush1.bf16.msra.mxu0 %v2100
    %3205 = vmatprep.subr.bf16.mxu0 %v2085
    %3206 = vmatpush1.bf16.msra.mxu0 %v2084
    %3207 = vmatprep.subr.bf16.mxu0 %v2069
    %3208 = vmatpush1.bf16.msra.mxu0 %v2068
    %3209 = vmatprep.subr.bf16.mxu0 %v2053
    %3210 = vmatpush1.bf16.msra.mxu0 %v2052
    %3211 = vmatprep.subr.bf16.mxu0 %v2037
    %3212 = vmatpush1.bf16.msra.mxu0 %v2036
    %3213 = vmatprep.subr.bf16.mxu0 0
    %3214 = vmatpush2.bf16.msra.mxu0 0
    %3215 = vmatprep.subr.bf16.mxu0 0
    %3216 = vmatpush2.bf16.msra.mxu0 0
    %3217 = vmatprep.subr.bf16.mxu0 0
    %3218 = vmatpush2.bf16.msra.mxu0 0
    %3219 = vmatprep.subr.bf16.mxu0 0
    %3220 = vmatpush2.bf16.msra.mxu0 0
    %3221 = vmatprep.subr.bf16.mxu0 0
    %3222 = vmatpush2.bf16.msra.mxu0 0
    %3223 = vmatprep.subr.bf16.mxu0 0
    %3224 = vmatpush2.bf16.msra.mxu0 0
    %3225 = vmatprep.subr.bf16.mxu0 0
    %3226 = vmatpush2.bf16.msra.mxu0 0
    %3227 = vmatprep.subr.bf16.mxu0 0
    %3228 = vmatpush2.bf16.msra.mxu0 0
    %3229 = vmatprep.mubr.bf16.mxu0 0
    %3230 = vmatmul.mubr.bf16.gmra.mxu0 %v598
    %v3231 = vpop.f32.mrf.mxu0
    %v3232 = vadd.f32 %v3159, %v3231
    %v3233 = vpop.f32.mrf.mxu0
    %v3234 = vadd.f32 %v3161, %v3233
    %v3235 = vpop.f32.mrf.mxu0
    %v3236 = vadd.f32 %v3163, %v3235
    %v3237 = vpop.f32.mrf.mxu0
    %v3238 = vadd.f32 %v3165, %v3237
    %3239 = vmatprep.mubr.bf16.mxu0 0
    %3240 = vmatmul.mubr.bf16.gmra.mxu0 %v601
    %v3241 = vpop.f32.mrf.mxu0
    %v3242 = vadd.f32 %v3169, %v3241
    %v3243 = vpop.f32.mrf.mxu0
    %v3244 = vadd.f32 %v3171, %v3243
    %v3245 = vpop.f32.mrf.mxu0
    %v3246 = vadd.f32 %v3173, %v3245
    %v3247 = vpop.f32.mrf.mxu0
    %v3248 = vadd.f32 %v3175, %v3247
    %3249 = vmatprep.mubr.bf16.mxu0 0
    %3250 = vmatmul.mubr.bf16.gmra.mxu0 %v604
    %v3251 = vpop.f32.mrf.mxu0
    %v3252 = vadd.f32 %v3179, %v3251
    %v3253 = vpop.f32.mrf.mxu0
    %v3254 = vadd.f32 %v3181, %v3253
    %v3255 = vpop.f32.mrf.mxu0
    %v3256 = vadd.f32 %v3183, %v3255
    %v3257 = vpop.f32.mrf.mxu0
    %v3258 = vadd.f32 %v3185, %v3257
    %3259 = vmatprep.mubr.bf16.mxu0 0
    %3260 = vmatmul.mubr.bf16.gmra.mxu0 %v607
    %v3261 = vpop.f32.mrf.mxu0
    %v3262 = vadd.f32 %v3189, %v3261
    %v3263 = vpop.f32.mrf.mxu0
    %v3264 = vadd.f32 %v3191, %v3263
    %v3265 = vpop.f32.mrf.mxu0
    %v3266 = vadd.f32 %v3193, %v3265
    %v3267 = vpop.f32.mrf.mxu0
    %v3268 = vadd.f32 %v3195, %v3267
    %3269 = vdwg.mxu0
    %3270 = vmatprep.subr.bf16.mxu0 %v1895
    %3271 = vmatpush1.bf16.msra.mxu0 %v1894
    %3272 = vmatprep.subr.bf16.mxu0 %v1879
    %3273 = vmatpush1.bf16.msra.mxu0 %v1878
    %3274 = vmatprep.subr.bf16.mxu0 %v1863
    %3275 = vmatpush1.bf16.msra.mxu0 %v1862
    %3276 = vmatprep.subr.bf16.mxu0 %v1847
    %3277 = vmatpush1.bf16.msra.mxu0 %v1846
    %3278 = vmatprep.subr.bf16.mxu0 %v1831
    %3279 = vmatpush1.bf16.msra.mxu0 %v1830
    %3280 = vmatprep.subr.bf16.mxu0 %v1815
    %3281 = vmatpush1.bf16.msra.mxu0 %v1814
    %3282 = vmatprep.subr.bf16.mxu0 %v1799
    %3283 = vmatpush1.bf16.msra.mxu0 %v1798
    %3284 = vmatprep.subr.bf16.mxu0 %v1783
    %3285 = vmatpush1.bf16.msra.mxu0 %v1782
    %3286 = vmatprep.subr.bf16.mxu0 %v2023
    %3287 = vmatpush2.bf16.msra.mxu0 %v2022
    %3288 = vmatprep.subr.bf16.mxu0 %v2007
    %3289 = vmatpush2.bf16.msra.mxu0 %v2006
    %3290 = vmatprep.subr.bf16.mxu0 %v1991
    %3291 = vmatpush2.bf16.msra.mxu0 %v1990
    %3292 = vmatprep.subr.bf16.mxu0 %v1975
    %3293 = vmatpush2.bf16.msra.mxu0 %v1974
    %3294 = vmatprep.subr.bf16.mxu0 %v1959
    %3295 = vmatpush2.bf16.msra.mxu0 %v1958
    %3296 = vmatprep.subr.bf16.mxu0 %v1943
    %3297 = vmatpush2.bf16.msra.mxu0 %v1942
    %3298 = vmatprep.subr.bf16.mxu0 %v1927
    %3299 = vmatpush2.bf16.msra.mxu0 %v1926
    %3300 = vmatprep.subr.bf16.mxu0 %v1911
    %3301 = vmatpush2.bf16.msra.mxu0 %v1910
    %3302 = vmatprep.mubr.bf16.mxu0 %v597
    %3303 = vmatmul.mubr.bf16.gmra.mxu0 %v596
    %v3304 = vpop.f32.mrf.mxu0
    %v3305 = vadd.f32 %v519, %v3304
    %v3306 = vpop.f32.mrf.mxu0
    %v3307 = vadd.f32 %v523, %v3306
    %v3308 = vpop.f32.mrf.mxu0
    %v3309 = vadd.f32 %v519, %v3308
    %v3310 = vpop.f32.mrf.mxu0
    %v3311 = vadd.f32 %v523, %v3310
    %3312 = vmatprep.mubr.bf16.mxu0 %v600
    %3313 = vmatmul.mubr.bf16.gmra.mxu0 %v599
    %v3314 = vpop.f32.mrf.mxu0
    %v3315 = vadd.f32 %v519, %v3314
    %v3316 = vpop.f32.mrf.mxu0
    %v3317 = vadd.f32 %v523, %v3316
    %v3318 = vpop.f32.mrf.mxu0
    %v3319 = vadd.f32 %v519, %v3318
    %v3320 = vpop.f32.mrf.mxu0
    %v3321 = vadd.f32 %v523, %v3320
    %3322 = vmatprep.mubr.bf16.mxu0 %v603
    %3323 = vmatmul.mubr.bf16.gmra.mxu0 %v602
    %v3324 = vpop.f32.mrf.mxu0
    %v3325 = vadd.f32 %v519, %v3324
    %v3326 = vpop.f32.mrf.mxu0
    %v3327 = vadd.f32 %v523, %v3326
    %v3328 = vpop.f32.mrf.mxu0
    %v3329 = vadd.f32 %v519, %v3328
    %v3330 = vpop.f32.mrf.mxu0
    %v3331 = vadd.f32 %v523, %v3330
    %3332 = vmatprep.mubr.bf16.mxu0 %v606
    %3333 = vmatmul.mubr.bf16.gmra.mxu0 %v605
    %v3334 = vpop.f32.mrf.mxu0
    %v3335 = vadd.f32 %v519, %v3334
    %v3336 = vpop.f32.mrf.mxu0
    %v3337 = vadd.f32 %v523, %v3336
    %v3338 = vpop.f32.mrf.mxu0
    %v3339 = vadd.f32 %v519, %v3338
    %v3340 = vpop.f32.mrf.mxu0
    %v3341 = vadd.f32 %v523, %v3340
    %3342 = vdwg.mxu0
    %3343 = vmatprep.subr.bf16.mxu0 %v2151
    %3344 = vmatpush1.bf16.msra.mxu0 %v2150
    %3345 = vmatprep.subr.bf16.mxu0 %v2135
    %3346 = vmatpush1.bf16.msra.mxu0 %v2134
    %3347 = vmatprep.subr.bf16.mxu0 %v2119
    %3348 = vmatpush1.bf16.msra.mxu0 %v2118
    %3349 = vmatprep.subr.bf16.mxu0 %v2103
    %3350 = vmatpush1.bf16.msra.mxu0 %v2102
    %3351 = vmatprep.subr.bf16.mxu0 %v2087
    %3352 = vmatpush1.bf16.msra.mxu0 %v2086
    %3353 = vmatprep.subr.bf16.mxu0 %v2071
    %3354 = vmatpush1.bf16.msra.mxu0 %v2070
    %3355 = vmatprep.subr.bf16.mxu0 %v2055
    %3356 = vmatpush1.bf16.msra.mxu0 %v2054
    %3357 = vmatprep.subr.bf16.mxu0 %v2039
    %3358 = vmatpush1.bf16.msra.mxu0 %v2038
    %3359 = vmatprep.subr.bf16.mxu0 0
    %3360 = vmatpush2.bf16.msra.mxu0 0
    %3361 = vmatprep.subr.bf16.mxu0 0
    %3362 = vmatpush2.bf16.msra.mxu0 0
    %3363 = vmatprep.subr.bf16.mxu0 0
    %3364 = vmatpush2.bf16.msra.mxu0 0
    %3365 = vmatprep.subr.bf16.mxu0 0
    %3366 = vmatpush2.bf16.msra.mxu0 0
    %3367 = vmatprep.subr.bf16.mxu0 0
    %3368 = vmatpush2.bf16.msra.mxu0 0
    %3369 = vmatprep.subr.bf16.mxu0 0
    %3370 = vmatpush2.bf16.msra.mxu0 0
    %3371 = vmatprep.subr.bf16.mxu0 0
    %3372 = vmatpush2.bf16.msra.mxu0 0
    %3373 = vmatprep.subr.bf16.mxu0 0
    %3374 = vmatpush2.bf16.msra.mxu0 0
    %3375 = vmatprep.mubr.bf16.mxu0 0
    %3376 = vmatmul.mubr.bf16.gmra.mxu0 %v598
    %v3377 = vpop.f32.mrf.mxu0
    %v3378 = vadd.f32 %v3305, %v3377
    %v3379 = vpop.f32.mrf.mxu0
    %v3380 = vadd.f32 %v3307, %v3379
    %v3381 = vpop.f32.mrf.mxu0
    %v3382 = vadd.f32 %v3309, %v3381
    %v3383 = vpop.f32.mrf.mxu0
    %v3384 = vadd.f32 %v3311, %v3383
    %3385 = vmatprep.mubr.bf16.mxu0 0
    %3386 = vmatmul.mubr.bf16.gmra.mxu0 %v601
    %v3387 = vpop.f32.mrf.mxu0
    %v3388 = vadd.f32 %v3315, %v3387
    %v3389 = vpop.f32.mrf.mxu0
    %v3390 = vadd.f32 %v3317, %v3389
    %v3391 = vpop.f32.mrf.mxu0
    %v3392 = vadd.f32 %v3319, %v3391
    %v3393 = vpop.f32.mrf.mxu0
    %v3394 = vadd.f32 %v3321, %v3393
    %3395 = vmatprep.mubr.bf16.mxu0 0
    %3396 = vmatmul.mubr.bf16.gmra.mxu0 %v604
    %v3397 = vpop.f32.mrf.mxu0
    %v3398 = vadd.f32 %v3325, %v3397
    %v3399 = vpop.f32.mrf.mxu0
    %v3400 = vadd.f32 %v3327, %v3399
    %v3401 = vpop.f32.mrf.mxu0
    %v3402 = vadd.f32 %v3329, %v3401
    %v3403 = vpop.f32.mrf.mxu0
    %v3404 = vadd.f32 %v3331, %v3403
    %3405 = vmatprep.mubr.bf16.mxu0 0
    %3406 = vmatmul.mubr.bf16.gmra.mxu0 %v607
    %v3407 = vpop.f32.mrf.mxu0
    %v3408 = vadd.f32 %v3335, %v3407
    %v3409 = vpop.f32.mrf.mxu0
    %v3410 = vadd.f32 %v3337, %v3409
    %v3411 = vpop.f32.mrf.mxu0
    %v3412 = vadd.f32 %v3339, %v3411
    %v3413 = vpop.f32.mrf.mxu0
    %v3414 = vadd.f32 %v3341, %v3413
    %3415 = vdwg.mxu0
    %3416 = vmatprep.subr.bf16.mxu0 %v1897
    %3417 = vmatpush1.bf16.msra.mxu0 %v1896
    %3418 = vmatprep.subr.bf16.mxu0 %v1881
    %3419 = vmatpush1.bf16.msra.mxu0 %v1880
    %3420 = vmatprep.subr.bf16.mxu0 %v1865
    %3421 = vmatpush1.bf16.msra.mxu0 %v1864
    %3422 = vmatprep.subr.bf16.mxu0 %v1849
    %3423 = vmatpush1.bf16.msra.mxu0 %v1848
    %3424 = vmatprep.subr.bf16.mxu0 %v1833
    %3425 = vmatpush1.bf16.msra.mxu0 %v1832
    %3426 = vmatprep.subr.bf16.mxu0 %v1817
    %3427 = vmatpush1.bf16.msra.mxu0 %v1816
    %3428 = vmatprep.subr.bf16.mxu0 %v1801
    %3429 = vmatpush1.bf16.msra.mxu0 %v1800
    %3430 = vmatprep.subr.bf16.mxu0 %v1785
    %3431 = vmatpush1.bf16.msra.mxu0 %v1784
    %3432 = vmatprep.subr.bf16.mxu0 %v2025
    %3433 = vmatpush2.bf16.msra.mxu0 %v2024
    %3434 = vmatprep.subr.bf16.mxu0 %v2009
    %3435 = vmatpush2.bf16.msra.mxu0 %v2008
    %3436 = vmatprep.subr.bf16.mxu0 %v1993
    %3437 = vmatpush2.bf16.msra.mxu0 %v1992
    %3438 = vmatprep.subr.bf16.mxu0 %v1977
    %3439 = vmatpush2.bf16.msra.mxu0 %v1976
    %3440 = vmatprep.subr.bf16.mxu0 %v1961
    %3441 = vmatpush2.bf16.msra.mxu0 %v1960
    %3442 = vmatprep.subr.bf16.mxu0 %v1945
    %3443 = vmatpush2.bf16.msra.mxu0 %v1944
    %3444 = vmatprep.subr.bf16.mxu0 %v1929
    %3445 = vmatpush2.bf16.msra.mxu0 %v1928
    %3446 = vmatprep.subr.bf16.mxu0 %v1913
    %3447 = vmatpush2.bf16.msra.mxu0 %v1912
    %3448 = vmatprep.mubr.bf16.mxu0 %v597
    %3449 = vmatmul.mubr.bf16.gmra.mxu0 %v596
    %v3450 = vpop.f32.mrf.mxu0
    %v3451 = vadd.f32 %v527, %v3450
    %v3452 = vpop.f32.mrf.mxu0
    %v3453 = vadd.f32 %v531, %v3452
    %v3454 = vpop.f32.mrf.mxu0
    %v3455 = vadd.f32 %v527, %v3454
    %v3456 = vpop.f32.mrf.mxu0
    %v3457 = vadd.f32 %v531, %v3456
    %3458 = vmatprep.mubr.bf16.mxu0 %v600
    %3459 = vmatmul.mubr.bf16.gmra.mxu0 %v599
    %v3460 = vpop.f32.mrf.mxu0
    %v3461 = vadd.f32 %v527, %v3460
    %v3462 = vpop.f32.mrf.mxu0
    %v3463 = vadd.f32 %v531, %v3462
    %v3464 = vpop.f32.mrf.mxu0
    %v3465 = vadd.f32 %v527, %v3464
    %v3466 = vpop.f32.mrf.mxu0
    %v3467 = vadd.f32 %v531, %v3466
    %3468 = vmatprep.mubr.bf16.mxu0 %v603
    %3469 = vmatmul.mubr.bf16.gmra.mxu0 %v602
    %v3470 = vpop.f32.mrf.mxu0
    %v3471 = vadd.f32 %v527, %v3470
    %v3472 = vpop.f32.mrf.mxu0
    %v3473 = vadd.f32 %v531, %v3472
    %v3474 = vpop.f32.mrf.mxu0
    %v3475 = vadd.f32 %v527, %v3474
    %v3476 = vpop.f32.mrf.mxu0
    %v3477 = vadd.f32 %v531, %v3476
    %3478 = vmatprep.mubr.bf16.mxu0 %v606
    %3479 = vmatmul.mubr.bf16.gmra.mxu0 %v605
    %v3480 = vpop.f32.mrf.mxu0
    %v3481 = vadd.f32 %v527, %v3480
    %v3482 = vpop.f32.mrf.mxu0
    %v3483 = vadd.f32 %v531, %v3482
    %v3484 = vpop.f32.mrf.mxu0
    %v3485 = vadd.f32 %v527, %v3484
    %v3486 = vpop.f32.mrf.mxu0
    %v3487 = vadd.f32 %v531, %v3486
    %3488 = vdwg.mxu0
    %3489 = vmatprep.subr.bf16.mxu0 %v2153
    %3490 = vmatpush1.bf16.msra.mxu0 %v2152
    %3491 = vmatprep.subr.bf16.mxu0 %v2137
    %3492 = vmatpush1.bf16.msra.mxu0 %v2136
    %3493 = vmatprep.subr.bf16.mxu0 %v2121
    %3494 = vmatpush1.bf16.msra.mxu0 %v2120
    %3495 = vmatprep.subr.bf16.mxu0 %v2105
    %3496 = vmatpush1.bf16.msra.mxu0 %v2104
    %3497 = vmatprep.subr.bf16.mxu0 %v2089
    %3498 = vmatpush1.bf16.msra.mxu0 %v2088
    %3499 = vmatprep.subr.bf16.mxu0 %v2073
    %3500 = vmatpush1.bf16.msra.mxu0 %v2072
    %3501 = vmatprep.subr.bf16.mxu0 %v2057
    %3502 = vmatpush1.bf16.msra.mxu0 %v2056
    %3503 = vmatprep.subr.bf16.mxu0 %v2041
    %3504 = vmatpush1.bf16.msra.mxu0 %v2040
    %3505 = vmatprep.subr.bf16.mxu0 0
    %3506 = vmatpush2.bf16.msra.mxu0 0
    %3507 = vmatprep.subr.bf16.mxu0 0
    %3508 = vmatpush2.bf16.msra.mxu0 0
    %3509 = vmatprep.subr.bf16.mxu0 0
    %3510 = vmatpush2.bf16.msra.mxu0 0
    %3511 = vmatprep.subr.bf16.mxu0 0
    %3512 = vmatpush2.bf16.msra.mxu0 0
    %3513 = vmatprep.subr.bf16.mxu0 0
    %3514 = vmatpush2.bf16.msra.mxu0 0
    %3515 = vmatprep.subr.bf16.mxu0 0
    %3516 = vmatpush2.bf16.msra.mxu0 0
    %3517 = vmatprep.subr.bf16.mxu0 0
    %3518 = vmatpush2.bf16.msra.mxu0 0
    %3519 = vmatprep.subr.bf16.mxu0 0
    %3520 = vmatpush2.bf16.msra.mxu0 0
    %3521 = vmatprep.mubr.bf16.mxu0 0
    %3522 = vmatmul.mubr.bf16.gmra.mxu0 %v598
    %v3523 = vpop.f32.mrf.mxu0
    %v3524 = vadd.f32 %v3451, %v3523
    %v3525 = vpop.f32.mrf.mxu0
    %v3526 = vadd.f32 %v3453, %v3525
    %v3527 = vpop.f32.mrf.mxu0
    %v3528 = vadd.f32 %v3455, %v3527
    %v3529 = vpop.f32.mrf.mxu0
    %v3530 = vadd.f32 %v3457, %v3529
    %3531 = vmatprep.mubr.bf16.mxu0 0
    %3532 = vmatmul.mubr.bf16.gmra.mxu0 %v601
    %v3533 = vpop.f32.mrf.mxu0
    %v3534 = vadd.f32 %v3461, %v3533
    %v3535 = vpop.f32.mrf.mxu0
    %v3536 = vadd.f32 %v3463, %v3535
    %v3537 = vpop.f32.mrf.mxu0
    %v3538 = vadd.f32 %v3465, %v3537
    %v3539 = vpop.f32.mrf.mxu0
    %v3540 = vadd.f32 %v3467, %v3539
    %3541 = vmatprep.mubr.bf16.mxu0 0
    %3542 = vmatmul.mubr.bf16.gmra.mxu0 %v604
    %v3543 = vpop.f32.mrf.mxu0
    %v3544 = vadd.f32 %v3471, %v3543
    %v3545 = vpop.f32.mrf.mxu0
    %v3546 = vadd.f32 %v3473, %v3545
    %v3547 = vpop.f32.mrf.mxu0
    %v3548 = vadd.f32 %v3475, %v3547
    %v3549 = vpop.f32.mrf.mxu0
    %v3550 = vadd.f32 %v3477, %v3549
    %3551 = vmatprep.mubr.bf16.mxu0 0
    %3552 = vmatmul.mubr.bf16.gmra.mxu0 %v607
    %v3553 = vpop.f32.mrf.mxu0
    %v3554 = vadd.f32 %v3481, %v3553
    %v3555 = vpop.f32.mrf.mxu0
    %v3556 = vadd.f32 %v3483, %v3555
    %v3557 = vpop.f32.mrf.mxu0
    %v3558 = vadd.f32 %v3485, %v3557
    %v3559 = vpop.f32.mrf.mxu0
    %v3560 = vadd.f32 %v3487, %v3559
    %3561 = vdwg.mxu0
    %3562 = vmatprep.subr.bf16.mxu0 %v1899
    %3563 = vmatpush1.bf16.msra.mxu0 %v1898
    %3564 = vmatprep.subr.bf16.mxu0 %v1883
    %3565 = vmatpush1.bf16.msra.mxu0 %v1882
    %3566 = vmatprep.subr.bf16.mxu0 %v1867
    %3567 = vmatpush1.bf16.msra.mxu0 %v1866
    %3568 = vmatprep.subr.bf16.mxu0 %v1851
    %3569 = vmatpush1.bf16.msra.mxu0 %v1850
    %3570 = vmatprep.subr.bf16.mxu0 %v1835
    %3571 = vmatpush1.bf16.msra.mxu0 %v1834
    %3572 = vmatprep.subr.bf16.mxu0 %v1819
    %3573 = vmatpush1.bf16.msra.mxu0 %v1818
    %3574 = vmatprep.subr.bf16.mxu0 %v1803
    %3575 = vmatpush1.bf16.msra.mxu0 %v1802
    %3576 = vmatprep.subr.bf16.mxu0 %v1787
    %3577 = vmatpush1.bf16.msra.mxu0 %v1786
    %3578 = vmatprep.subr.bf16.mxu0 %v2027
    %3579 = vmatpush2.bf16.msra.mxu0 %v2026
    %3580 = vmatprep.subr.bf16.mxu0 %v2011
    %3581 = vmatpush2.bf16.msra.mxu0 %v2010
    %3582 = vmatprep.subr.bf16.mxu0 %v1995
    %3583 = vmatpush2.bf16.msra.mxu0 %v1994
    %3584 = vmatprep.subr.bf16.mxu0 %v1979
    %3585 = vmatpush2.bf16.msra.mxu0 %v1978
    %3586 = vmatprep.subr.bf16.mxu0 %v1963
    %3587 = vmatpush2.bf16.msra.mxu0 %v1962
    %3588 = vmatprep.subr.bf16.mxu0 %v1947
    %3589 = vmatpush2.bf16.msra.mxu0 %v1946
    %3590 = vmatprep.subr.bf16.mxu0 %v1931
    %3591 = vmatpush2.bf16.msra.mxu0 %v1930
    %3592 = vmatprep.subr.bf16.mxu0 %v1915
    %3593 = vmatpush2.bf16.msra.mxu0 %v1914
    %3594 = vmatprep.mubr.bf16.mxu0 %v597
    %3595 = vmatmul.mubr.bf16.gmra.mxu0 %v596
    %v3596 = vpop.f32.mrf.mxu0
    %v3597 = vadd.f32 %v535, %v3596
    %v3598 = vpop.f32.mrf.mxu0
    %v3599 = vadd.f32 %v539, %v3598
    %v3600 = vpop.f32.mrf.mxu0
    %v3601 = vadd.f32 %v535, %v3600
    %v3602 = vpop.f32.mrf.mxu0
    %v3603 = vadd.f32 %v539, %v3602
    %3604 = vmatprep.mubr.bf16.mxu0 %v600
    %3605 = vmatmul.mubr.bf16.gmra.mxu0 %v599
    %v3606 = vpop.f32.mrf.mxu0
    %v3607 = vadd.f32 %v535, %v3606
    %v3608 = vpop.f32.mrf.mxu0
    %v3609 = vadd.f32 %v539, %v3608
    %v3610 = vpop.f32.mrf.mxu0
    %v3611 = vadd.f32 %v535, %v3610
    %v3612 = vpop.f32.mrf.mxu0
    %v3613 = vadd.f32 %v539, %v3612
    %3614 = vmatprep.mubr.bf16.mxu0 %v603
    %3615 = vmatmul.mubr.bf16.gmra.mxu0 %v602
    %v3616 = vpop.f32.mrf.mxu0
    %v3617 = vadd.f32 %v535, %v3616
    %v3618 = vpop.f32.mrf.mxu0
    %v3619 = vadd.f32 %v539, %v3618
    %v3620 = vpop.f32.mrf.mxu0
    %v3621 = vadd.f32 %v535, %v3620
    %v3622 = vpop.f32.mrf.mxu0
    %v3623 = vadd.f32 %v539, %v3622
    %3624 = vmatprep.mubr.bf16.mxu0 %v606
    %3625 = vmatmul.mubr.bf16.gmra.mxu0 %v605
    %v3626 = vpop.f32.mrf.mxu0
    %v3627 = vadd.f32 %v535, %v3626
    %v3628 = vpop.f32.mrf.mxu0
    %v3629 = vadd.f32 %v539, %v3628
    %v3630 = vpop.f32.mrf.mxu0
    %v3631 = vadd.f32 %v535, %v3630
    %v3632 = vpop.f32.mrf.mxu0
    %v3633 = vadd.f32 %v539, %v3632
    %3634 = vdwg.mxu0
    %3635 = vmatprep.subr.bf16.mxu0 %v2155
    %3636 = vmatpush1.bf16.msra.mxu0 %v2154
    %3637 = vmatprep.subr.bf16.mxu0 %v2139
    %3638 = vmatpush1.bf16.msra.mxu0 %v2138
    %3639 = vmatprep.subr.bf16.mxu0 %v2123
    %3640 = vmatpush1.bf16.msra.mxu0 %v2122
    %3641 = vmatprep.subr.bf16.mxu0 %v2107
    %3642 = vmatpush1.bf16.msra.mxu0 %v2106
    %3643 = vmatprep.subr.bf16.mxu0 %v2091
    %3644 = vmatpush1.bf16.msra.mxu0 %v2090
    %3645 = vmatprep.subr.bf16.mxu0 %v2075
    %3646 = vmatpush1.bf16.msra.mxu0 %v2074
    %3647 = vmatprep.subr.bf16.mxu0 %v2059
    %3648 = vmatpush1.bf16.msra.mxu0 %v2058
    %3649 = vmatprep.subr.bf16.mxu0 %v2043
    %3650 = vmatpush1.bf16.msra.mxu0 %v2042
    %3651 = vmatprep.subr.bf16.mxu0 0
    %3652 = vmatpush2.bf16.msra.mxu0 0
    %3653 = vmatprep.subr.bf16.mxu0 0
    %3654 = vmatpush2.bf16.msra.mxu0 0
    %3655 = vmatprep.subr.bf16.mxu0 0
    %3656 = vmatpush2.bf16.msra.mxu0 0
    %3657 = vmatprep.subr.bf16.mxu0 0
    %3658 = vmatpush2.bf16.msra.mxu0 0
    %3659 = vmatprep.subr.bf16.mxu0 0
    %3660 = vmatpush2.bf16.msra.mxu0 0
    %3661 = vmatprep.subr.bf16.mxu0 0
    %3662 = vmatpush2.bf16.msra.mxu0 0
    %3663 = vmatprep.subr.bf16.mxu0 0
    %3664 = vmatpush2.bf16.msra.mxu0 0
    %3665 = vmatprep.subr.bf16.mxu0 0
    %3666 = vmatpush2.bf16.msra.mxu0 0
    %3667 = vmatprep.mubr.bf16.mxu0 0
    %3668 = vmatmul.mubr.bf16.gmra.mxu0 %v598
    %v3669 = vpop.f32.mrf.mxu0
    %v3670 = vadd.f32 %v3597, %v3669
    %v3671 = vpop.f32.mrf.mxu0
    %v3672 = vadd.f32 %v3599, %v3671
    %v3673 = vpop.f32.mrf.mxu0
    %v3674 = vadd.f32 %v3601, %v3673
    %v3675 = vpop.f32.mrf.mxu0
    %v3676 = vadd.f32 %v3603, %v3675
    %3677 = vmatprep.mubr.bf16.mxu0 0
    %3678 = vmatmul.mubr.bf16.gmra.mxu0 %v601
    %v3679 = vpop.f32.mrf.mxu0
    %v3680 = vadd.f32 %v3607, %v3679
    %v3681 = vpop.f32.mrf.mxu0
    %v3682 = vadd.f32 %v3609, %v3681
    %v3683 = vpop.f32.mrf.mxu0
    %v3684 = vadd.f32 %v3611, %v3683
    %v3685 = vpop.f32.mrf.mxu0
    %v3686 = vadd.f32 %v3613, %v3685
    %3687 = vmatprep.mubr.bf16.mxu0 0
    %3688 = vmatmul.mubr.bf16.gmra.mxu0 %v604
    %v3689 = vpop.f32.mrf.mxu0
    %v3690 = vadd.f32 %v3617, %v3689
    %v3691 = vpop.f32.mrf.mxu0
    %v3692 = vadd.f32 %v3619, %v3691
    %v3693 = vpop.f32.mrf.mxu0
    %v3694 = vadd.f32 %v3621, %v3693
    %v3695 = vpop.f32.mrf.mxu0
    %v3696 = vadd.f32 %v3623, %v3695
    %3697 = vmatprep.mubr.bf16.mxu0 0
    %3698 = vmatmul.mubr.bf16.gmra.mxu0 %v607
    %v3699 = vpop.f32.mrf.mxu0
    %v3700 = vadd.f32 %v3627, %v3699
    %v3701 = vpop.f32.mrf.mxu0
    %v3702 = vadd.f32 %v3629, %v3701
    %v3703 = vpop.f32.mrf.mxu0
    %v3704 = vadd.f32 %v3631, %v3703
    %v3705 = vpop.f32.mrf.mxu0
    %v3706 = vadd.f32 %v3633, %v3705
    %3707 = vdwg.mxu0
    %3708 = vst [vmem:[#allocation2] sm:$0xff] %v2648
    %3709 = vst [vmem:[#allocation2 + $0x8] sm:$0xff] %v2650
    %3710 = vst [vmem:[#allocation2 + $0x10] sm:$0xff] %v2794
    %3711 = vst [vmem:[#allocation2 + $0x18] sm:$0xff] %v2796
    %3712 = vst [vmem:[#allocation2 + $0x20] sm:$0xff] %v2940
    %3713 = vst [vmem:[#allocation2 + $0x28] sm:$0xff] %v2942
    %3714 = vst [vmem:[#allocation2 + $0x30] sm:$0xff] %v3086
    %3715 = vst [vmem:[#allocation2 + $0x38] sm:$0xff] %v3088
    %3716 = vst [vmem:[#allocation2 + $0x40] sm:$0xff] %v3232
    %3717 = vst [vmem:[#allocation2 + $0x48] sm:$0xff] %v3234
    %3718 = vst [vmem:[#allocation2 + $0x50] sm:$0xff] %v3378
    %3719 = vst [vmem:[#allocation2 + $0x58] sm:$0xff] %v3380
    %3720 = vst [vmem:[#allocation2 + $0x60] sm:$0xff] %v3524
    %3721 = vst [vmem:[#allocation2 + $0x68] sm:$0xff] %v3526
    %3722 = vst [vmem:[#allocation2 + $0x70] sm:$0xff] %v3670
    %3723 = vst [vmem:[#allocation2 + $0x78] sm:$0xff] %v3672
    %3724 = vst [vmem:[#allocation2 + $0x80] sm:$0xff] %v2652
    %3725 = vst [vmem:[#allocation2 + $0x88] sm:$0xff] %v2654
    %3726 = vst [vmem:[#allocation2 + $0x90] sm:$0xff] %v2798
    %3727 = vst [vmem:[#allocation2 + $0x98] sm:$0xff] %v2800
    %3728 = vst [vmem:[#allocation2 + $0xa0] sm:$0xff] %v2944
    %3729 = vst [vmem:[#allocation2 + $0xa8] sm:$0xff] %v2946
    %3730 = vst [vmem:[#allocation2 + $0xb0] sm:$0xff] %v3090
    %3731 = vst [vmem:[#allocation2 + $0xb8] sm:$0xff] %v3092
    %3732 = vst [vmem:[#allocation2 + $0xc0] sm:$0xff] %v3236
    %3733 = vst [vmem:[#allocation2 + $0xc8] sm:$0xff] %v3238
    %3734 = vst [vmem:[#allocation2 + $0xd0] sm:$0xff] %v3382
    %3735 = vst [vmem:[#allocation2 + $0xd8] sm:$0xff] %v3384
    %3736 = vst [vmem:[#allocation2 + $0xe0] sm:$0xff] %v3528
    %3737 = vst [vmem:[#allocation2 + $0xe8] sm:$0xff] %v3530
    %3738 = vst [vmem:[#allocation2 + $0xf0] sm:$0xff] %v3674
    %3739 = vst [vmem:[#allocation2 + $0xf8] sm:$0xff] %v3676
    %3740 = vst [vmem:[#allocation2 + $0x100] sm:$0xff] %v2658
    %3741 = vst [vmem:[#allocation2 + $0x108] sm:$0xff] %v2660
    %3742 = vst [vmem:[#allocation2 + $0x110] sm:$0xff] %v2804
    %3743 = vst [vmem:[#allocation2 + $0x118] sm:$0xff] %v2806
    %3744 = vst [vmem:[#allocation2 + $0x120] sm:$0xff] %v2950
    %3745 = vst [vmem:[#allocation2 + $0x128] sm:$0xff] %v2952
    %3746 = vst [vmem:[#allocation2 + $0x130] sm:$0xff] %v3096
    %3747 = vst [vmem:[#allocation2 + $0x138] sm:$0xff] %v3098
    %3748 = vst [vmem:[#allocation2 + $0x140] sm:$0xff] %v3242
    %3749 = vst [vmem:[#allocation2 + $0x148] sm:$0xff] %v3244
    %3750 = vst [vmem:[#allocation2 + $0x150] sm:$0xff] %v3388
    %3751 = vst [vmem:[#allocation2 + $0x158] sm:$0xff] %v3390
    %3752 = vst [vmem:[#allocation2 + $0x160] sm:$0xff] %v3534
    %3753 = vst [vmem:[#allocation2 + $0x168] sm:$0xff] %v3536
    %3754 = vst [vmem:[#allocation2 + $0x170] sm:$0xff] %v3680
    %3755 = vst [vmem:[#allocation2 + $0x178] sm:$0xff] %v3682
    %3756 = vst [vmem:[#allocation2 + $0x180] sm:$0xff] %v2662
    %3757 = vst [vmem:[#allocation2 + $0x188] sm:$0xff] %v2664
    %3758 = vst [vmem:[#allocation2 + $0x190] sm:$0xff] %v2808
    %3759 = vst [vmem:[#allocation2 + $0x198] sm:$0xff] %v2810
    %3760 = vst [vmem:[#allocation2 + $0x1a0] sm:$0xff] %v2954
    %3761 = vst [vmem:[#allocation2 + $0x1a8] sm:$0xff] %v2956
    %3762 = vst [vmem:[#allocation2 + $0x1b0] sm:$0xff] %v3100
    %3763 = vst [vmem:[#allocation2 + $0x1b8] sm:$0xff] %v3102
    %3764 = vst [vmem:[#allocation2 + $0x1c0] sm:$0xff] %v3246
    %3765 = vst [vmem:[#allocation2 + $0x1c8] sm:$0xff] %v3248
    %3766 = vst [vmem:[#allocation2 + $0x1d0] sm:$0xff] %v3392
    %3767 = vst [vmem:[#allocation2 + $0x1d8] sm:$0xff] %v3394
    %3768 = vst [vmem:[#allocation2 + $0x1e0] sm:$0xff] %v3538
    %3769 = vst [vmem:[#allocation2 + $0x1e8] sm:$0xff] %v3540
    %3770 = vst [vmem:[#allocation2 + $0x1f0] sm:$0xff] %v3684
    %3771 = vst [vmem:[#allocation2 + $0x1f8] sm:$0xff] %v3686
    %3772 = vst [vmem:[#allocation2 + $0x200] sm:$0xff] %v2668
    %3773 = vst [vmem:[#allocation2 + $0x208] sm:$0xff] %v2670
    %3774 = vst [vmem:[#allocation2 + $0x210] sm:$0xff] %v2814
    %3775 = vst [vmem:[#allocation2 + $0x218] sm:$0xff] %v2816
    %3776 = vst [vmem:[#allocation2 + $0x220] sm:$0xff] %v2960
    %3777 = vst [vmem:[#allocation2 + $0x228] sm:$0xff] %v2962
    %3778 = vst [vmem:[#allocation2 + $0x230] sm:$0xff] %v3106
    %3779 = vst [vmem:[#allocation2 + $0x238] sm:$0xff] %v3108
    %3780 = vst [vmem:[#allocation2 + $0x240] sm:$0xff] %v3252
    %3781 = vst [vmem:[#allocation2 + $0x248] sm:$0xff] %v3254
    %3782 = vst [vmem:[#allocation2 + $0x250] sm:$0xff] %v3398
    %3783 = vst [vmem:[#allocation2 + $0x258] sm:$0xff] %v3400
    %3784 = vst [vmem:[#allocation2 + $0x260] sm:$0xff] %v3544
    %3785 = vst [vmem:[#allocation2 + $0x268] sm:$0xff] %v3546
    %3786 = vst [vmem:[#allocation2 + $0x270] sm:$0xff] %v3690
    %3787 = vst [vmem:[#allocation2 + $0x278] sm:$0xff] %v3692
    %3788 = vst [vmem:[#allocation2 + $0x280] sm:$0xff] %v2672
    %3789 = vst [vmem:[#allocation2 + $0x288] sm:$0xff] %v2674
    %3790 = vst [vmem:[#allocation2 + $0x290] sm:$0xff] %v2818
    %3791 = vst [vmem:[#allocation2 + $0x298] sm:$0xff] %v2820
    %3792 = vst [vmem:[#allocation2 + $0x2a0] sm:$0xff] %v2964
    %3793 = vst [vmem:[#allocation2 + $0x2a8] sm:$0xff] %v2966
    %3794 = vst [vmem:[#allocation2 + $0x2b0] sm:$0xff] %v3110
    %3795 = vst [vmem:[#allocation2 + $0x2b8] sm:$0xff] %v3112
    %3796 = vst [vmem:[#allocation2 + $0x2c0] sm:$0xff] %v3256
    %3797 = vst [vmem:[#allocation2 + $0x2c8] sm:$0xff] %v3258
    %3798 = vst [vmem:[#allocation2 + $0x2d0] sm:$0xff] %v3402
    %3799 = vst [vmem:[#allocation2 + $0x2d8] sm:$0xff] %v3404
    %3800 = vst [vmem:[#allocation2 + $0x2e0] sm:$0xff] %v3548
    %3801 = vst [vmem:[#allocation2 + $0x2e8] sm:$0xff] %v3550
    %3802 = vst [vmem:[#allocation2 + $0x2f0] sm:$0xff] %v3694
    %3803 = vst [vmem:[#allocation2 + $0x2f8] sm:$0xff] %v3696
    %3804 = vst [vmem:[#allocation2 + $0x300] sm:$0xff] %v2678
    %3805 = vst [vmem:[#allocation2 + $0x308] sm:$0xff] %v2680
    %3806 = vst [vmem:[#allocation2 + $0x310] sm:$0xff] %v2824
    %3807 = vst [vmem:[#allocation2 + $0x318] sm:$0xff] %v2826
    %3808 = vst [vmem:[#allocation2 + $0x320] sm:$0xff] %v2970
    %3809 = vst [vmem:[#allocation2 + $0x328] sm:$0xff] %v2972
    %3810 = vst [vmem:[#allocation2 + $0x330] sm:$0xff] %v3116
    %3811 = vst [vmem:[#allocation2 + $0x338] sm:$0xff] %v3118
    %3812 = vst [vmem:[#allocation2 + $0x340] sm:$0xff] %v3262
    %3813 = vst [vmem:[#allocation2 + $0x348] sm:$0xff] %v3264
    %3814 = vst [vmem:[#allocation2 + $0x350] sm:$0xff] %v3408
    %3815 = vst [vmem:[#allocation2 + $0x358] sm:$0xff] %v3410
    %3816 = vst [vmem:[#allocation2 + $0x360] sm:$0xff] %v3554
    %3817 = vst [vmem:[#allocation2 + $0x368] sm:$0xff] %v3556
    %3818 = vst [vmem:[#allocation2 + $0x370] sm:$0xff] %v3700
    %3819 = vst [vmem:[#allocation2 + $0x378] sm:$0xff] %v3702
    %3820 = vst [vmem:[#allocation2 + $0x380] sm:$0xff] %v2682
    %3821 = vst [vmem:[#allocation2 + $0x388] sm:$0xff] %v2684
    %3822 = vst [vmem:[#allocation2 + $0x390] sm:$0xff] %v2828
    %3823 = vst [vmem:[#allocation2 + $0x398] sm:$0xff] %v2830
    %3824 = vst [vmem:[#allocation2 + $0x3a0] sm:$0xff] %v2974
    %3825 = vst [vmem:[#allocation2 + $0x3a8] sm:$0xff] %v2976
    %3826 = vst [vmem:[#allocation2 + $0x3b0] sm:$0xff] %v3120
    %3827 = vst [vmem:[#allocation2 + $0x3b8] sm:$0xff] %v3122
    %3828 = vst [vmem:[#allocation2 + $0x3c0] sm:$0xff] %v3266
    %3829 = vst [vmem:[#allocation2 + $0x3c8] sm:$0xff] %v3268
    %3830 = vst [vmem:[#allocation2 + $0x3d0] sm:$0xff] %v3412
    %3831 = vst [vmem:[#allocation2 + $0x3d8] sm:$0xff] %v3414
    %3832 = vst [vmem:[#allocation2 + $0x3e0] sm:$0xff] %v3558
    %3833 = vst [vmem:[#allocation2 + $0x3e8] sm:$0xff] %v3560
    %3834 = vst [vmem:[#allocation2 + $0x3f0] sm:$0xff] %v3704
    %3835 = vst [vmem:[#allocation2 + $0x3f8] sm:$0xff] %v3706
    %v3836 = vld [vmem:[#allocation8] sm:$0xff]
    %v3837 = vld [vmem:[#allocation8 + $0x8] sm:$0xff]
    %v3838 = vld [vmem:[#allocation8 + $0x10] sm:$0xff]
    %v3839 = vld [vmem:[#allocation8 + $0x18] sm:$0xff]
    %v3840 = vld [vmem:[#allocation8 + $0x20] sm:$0xff]
    %v3841 = vld [vmem:[#allocation8 + $0x28] sm:$0xff]
    %v3842 = vld [vmem:[#allocation8 + $0x30] sm:$0xff]
    %v3843 = vld [vmem:[#allocation8 + $0x38] sm:$0xff]
    %v3844 = vld [vmem:[#allocation8 + $0x40] sm:$0xff]
    %v3845 = vld [vmem:[#allocation8 + $0x48] sm:$0xff]
    %v3846 = vld [vmem:[#allocation8 + $0x50] sm:$0xff]
    %v3847 = vld [vmem:[#allocation8 + $0x58] sm:$0xff]
    %v3848 = vld [vmem:[#allocation8 + $0x60] sm:$0xff]
    %v3849 = vld [vmem:[#allocation8 + $0x68] sm:$0xff]
    %v3850 = vld [vmem:[#allocation8 + $0x70] sm:$0xff]
    %v3851 = vld [vmem:[#allocation8 + $0x78] sm:$0xff]
    %v3852 = vld [vmem:[#allocation8 + $0x80] sm:$0xff]
    %v3853 = vld [vmem:[#allocation8 + $0x88] sm:$0xff]
    %v3854 = vld [vmem:[#allocation8 + $0x90] sm:$0xff]
    %v3855 = vld [vmem:[#allocation8 + $0x98] sm:$0xff]
    %v3856 = vld [vmem:[#allocation8 + $0xa0] sm:$0xff]
    %v3857 = vld [vmem:[#allocation8 + $0xa8] sm:$0xff]
    %v3858 = vld [vmem:[#allocation8 + $0xb0] sm:$0xff]
    %v3859 = vld [vmem:[#allocation8 + $0xb8] sm:$0xff]
    %v3860 = vld [vmem:[#allocation8 + $0xc0] sm:$0xff]
    %v3861 = vld [vmem:[#allocation8 + $0xc8] sm:$0xff]
    %v3862 = vld [vmem:[#allocation8 + $0xd0] sm:$0xff]
    %v3863 = vld [vmem:[#allocation8 + $0xd8] sm:$0xff]
    %v3864 = vld [vmem:[#allocation8 + $0xe0] sm:$0xff]
    %v3865 = vld [vmem:[#allocation8 + $0xe8] sm:$0xff]
    %v3866 = vld [vmem:[#allocation8 + $0xf0] sm:$0xff]
    %v3867 = vld [vmem:[#allocation8 + $0xf8] sm:$0xff]
    %v3868 = vld [vmem:[#allocation8 + $0x100] sm:$0xff]
    %v3869 = vld [vmem:[#allocation8 + $0x108] sm:$0xff]
    %v3870 = vld [vmem:[#allocation8 + $0x110] sm:$0xff]
    %v3871 = vld [vmem:[#allocation8 + $0x118] sm:$0xff]
    %v3872 = vld [vmem:[#allocation8 + $0x120] sm:$0xff]
    %v3873 = vld [vmem:[#allocation8 + $0x128] sm:$0xff]
    %v3874 = vld [vmem:[#allocation8 + $0x130] sm:$0xff]
    %v3875 = vld [vmem:[#allocation8 + $0x138] sm:$0xff]
    %v3876 = vld [vmem:[#allocation8 + $0x140] sm:$0xff]
    %v3877 = vld [vmem:[#allocation8 + $0x148] sm:$0xff]
    %v3878 = vld [vmem:[#allocation8 + $0x150] sm:$0xff]
    %v3879 = vld [vmem:[#allocation8 + $0x158] sm:$0xff]
    %v3880 = vld [vmem:[#allocation8 + $0x160] sm:$0xff]
    %v3881 = vld [vmem:[#allocation8 + $0x168] sm:$0xff]
    %v3882 = vld [vmem:[#allocation8 + $0x170] sm:$0xff]
    %v3883 = vld [vmem:[#allocation8 + $0x178] sm:$0xff]
    %v3884 = vld [vmem:[#allocation8 + $0x180] sm:$0xff]
    %v3885 = vld [vmem:[#allocation8 + $0x188] sm:$0xff]
    %v3886 = vld [vmem:[#allocation8 + $0x190] sm:$0xff]
    %v3887 = vld [vmem:[#allocation8 + $0x198] sm:$0xff]
    %v3888 = vld [vmem:[#allocation8 + $0x1a0] sm:$0xff]
    %v3889 = vld [vmem:[#allocation8 + $0x1a8] sm:$0xff]
    %v3890 = vld [vmem:[#allocation8 + $0x1b0] sm:$0xff]
    %v3891 = vld [vmem:[#allocation8 + $0x1b8] sm:$0xff]
    %v3892 = vld [vmem:[#allocation8 + $0x1c0] sm:$0xff]
    %v3893 = vld [vmem:[#allocation8 + $0x1c8] sm:$0xff]
    %v3894 = vld [vmem:[#allocation8 + $0x1d0] sm:$0xff]
    %v3895 = vld [vmem:[#allocation8 + $0x1d8] sm:$0xff]
    %v3896 = vld [vmem:[#allocation8 + $0x1e0] sm:$0xff]
    %v3897 = vld [vmem:[#allocation8 + $0x1e8] sm:$0xff]
    %v3898 = vld [vmem:[#allocation8 + $0x1f0] sm:$0xff]
    %v3899 = vld [vmem:[#allocation8 + $0x1f8] sm:$0xff]
    %v3900 = vld [vmem:[#allocation8 + $0x200] sm:$0xff]
    %v3901 = vld [vmem:[#allocation8 + $0x208] sm:$0xff]
    %v3902 = vld [vmem:[#allocation8 + $0x210] sm:$0xff]
    %v3903 = vld [vmem:[#allocation8 + $0x218] sm:$0xff]
    %v3904 = vld [vmem:[#allocation8 + $0x220] sm:$0xff]
    %v3905 = vld [vmem:[#allocation8 + $0x228] sm:$0xff]
    %v3906 = vld [vmem:[#allocation8 + $0x230] sm:$0xff]
    %v3907 = vld [vmem:[#allocation8 + $0x238] sm:$0xff]
    %v3908 = vld [vmem:[#allocation8 + $0x240] sm:$0xff]
    %v3909 = vld [vmem:[#allocation8 + $0x248] sm:$0xff]
    %v3910 = vld [vmem:[#allocation8 + $0x250] sm:$0xff]
    %v3911 = vld [vmem:[#allocation8 + $0x258] sm:$0xff]
    %v3912 = vld [vmem:[#allocation8 + $0x260] sm:$0xff]
    %v3913 = vld [vmem:[#allocation8 + $0x268] sm:$0xff]
    %v3914 = vld [vmem:[#allocation8 + $0x270] sm:$0xff]
    %v3915 = vld [vmem:[#allocation8 + $0x278] sm:$0xff]
    %v3916 = vld [vmem:[#allocation8 + $0x280] sm:$0xff]
    %v3917 = vld [vmem:[#allocation8 + $0x288] sm:$0xff]
    %v3918 = vld [vmem:[#allocation8 + $0x290] sm:$0xff]
    %v3919 = vld [vmem:[#allocation8 + $0x298] sm:$0xff]
    %v3920 = vld [vmem:[#allocation8 + $0x2a0] sm:$0xff]
    %v3921 = vld [vmem:[#allocation8 + $0x2a8] sm:$0xff]
    %v3922 = vld [vmem:[#allocation8 + $0x2b0] sm:$0xff]
    %v3923 = vld [vmem:[#allocation8 + $0x2b8] sm:$0xff]
    %v3924 = vld [vmem:[#allocation8 + $0x2c0] sm:$0xff]
    %v3925 = vld [vmem:[#allocation8 + $0x2c8] sm:$0xff]
    %v3926 = vld [vmem:[#allocation8 + $0x2d0] sm:$0xff]
    %v3927 = vld [vmem:[#allocation8 + $0x2d8] sm:$0xff]
    %v3928 = vld [vmem:[#allocation8 + $0x2e0] sm:$0xff]
    %v3929 = vld [vmem:[#allocation8 + $0x2e8] sm:$0xff]
    %v3930 = vld [vmem:[#allocation8 + $0x2f0] sm:$0xff]
    %v3931 = vld [vmem:[#allocation8 + $0x2f8] sm:$0xff]
    %v3932 = vld [vmem:[#allocation8 + $0x300] sm:$0xff]
    %v3933 = vld [vmem:[#allocation8 + $0x308] sm:$0xff]
    %v3934 = vld [vmem:[#allocation8 + $0x310] sm:$0xff]
    %v3935 = vld [vmem:[#allocation8 + $0x318] sm:$0xff]
    %v3936 = vld [vmem:[#allocation8 + $0x320] sm:$0xff]
    %v3937 = vld [vmem:[#allocation8 + $0x328] sm:$0xff]
    %v3938 = vld [vmem:[#allocation8 + $0x330] sm:$0xff]
    %v3939 = vld [vmem:[#allocation8 + $0x338] sm:$0xff]
    %v3940 = vld [vmem:[#allocation8 + $0x340] sm:$0xff]
    %v3941 = vld [vmem:[#allocation8 + $0x348] sm:$0xff]
    %v3942 = vld [vmem:[#allocation8 + $0x350] sm:$0xff]
    %v3943 = vld [vmem:[#allocation8 + $0x358] sm:$0xff]
    %v3944 = vld [vmem:[#allocation8 + $0x360] sm:$0xff]
    %v3945 = vld [vmem:[#allocation8 + $0x368] sm:$0xff]
    %v3946 = vld [vmem:[#allocation8 + $0x370] sm:$0xff]
    %v3947 = vld [vmem:[#allocation8 + $0x378] sm:$0xff]
    %v3948 = vld [vmem:[#allocation8 + $0x380] sm:$0xff]
    %v3949 = vld [vmem:[#allocation8 + $0x388] sm:$0xff]
    %v3950 = vld [vmem:[#allocation8 + $0x390] sm:$0xff]
    %v3951 = vld [vmem:[#allocation8 + $0x398] sm:$0xff]
    %v3952 = vld [vmem:[#allocation8 + $0x3a0] sm:$0xff]
    %v3953 = vld [vmem:[#allocation8 + $0x3a8] sm:$0xff]
    %v3954 = vld [vmem:[#allocation8 + $0x3b0] sm:$0xff]
    %v3955 = vld [vmem:[#allocation8 + $0x3b8] sm:$0xff]
    %v3956 = vld [vmem:[#allocation8 + $0x3c0] sm:$0xff]
    %v3957 = vld [vmem:[#allocation8 + $0x3c8] sm:$0xff]
    %v3958 = vld [vmem:[#allocation8 + $0x3d0] sm:$0xff]
    %v3959 = vld [vmem:[#allocation8 + $0x3d8] sm:$0xff]
    %v3960 = vld [vmem:[#allocation8 + $0x3e0] sm:$0xff]
    %v3961 = vld [vmem:[#allocation8 + $0x3e8] sm:$0xff]
    %v3962 = vld [vmem:[#allocation8 + $0x3f0] sm:$0xff]
    %v3963 = vld [vmem:[#allocation8 + $0x3f8] sm:$0xff]
    %s3964 = scalar_lea.vmem [#allocation8], 1024
    %v3965 = vld [vmem:[%s3964] sm:$0xff]
    %v3966 = vld [vmem:[%s3964 + $0x8] sm:$0xff]
    %v3967 = vld [vmem:[%s3964 + $0x10] sm:$0xff]
    %v3968 = vld [vmem:[%s3964 + $0x18] sm:$0xff]
    %v3969 = vld [vmem:[%s3964 + $0x20] sm:$0xff]
    %v3970 = vld [vmem:[%s3964 + $0x28] sm:$0xff]
    %v3971 = vld [vmem:[%s3964 + $0x30] sm:$0xff]
    %v3972 = vld [vmem:[%s3964 + $0x38] sm:$0xff]
    %v3973 = vld [vmem:[%s3964 + $0x40] sm:$0xff]
    %v3974 = vld [vmem:[%s3964 + $0x48] sm:$0xff]
    %v3975 = vld [vmem:[%s3964 + $0x50] sm:$0xff]
    %v3976 = vld [vmem:[%s3964 + $0x58] sm:$0xff]
    %v3977 = vld [vmem:[%s3964 + $0x60] sm:$0xff]
    %v3978 = vld [vmem:[%s3964 + $0x68] sm:$0xff]
    %v3979 = vld [vmem:[%s3964 + $0x70] sm:$0xff]
    %v3980 = vld [vmem:[%s3964 + $0x78] sm:$0xff]
    %v3981 = vld [vmem:[%s3964 + $0x80] sm:$0xff]
    %v3982 = vld [vmem:[%s3964 + $0x88] sm:$0xff]
    %v3983 = vld [vmem:[%s3964 + $0x90] sm:$0xff]
    %v3984 = vld [vmem:[%s3964 + $0x98] sm:$0xff]
    %v3985 = vld [vmem:[%s3964 + $0xa0] sm:$0xff]
    %v3986 = vld [vmem:[%s3964 + $0xa8] sm:$0xff]
    %v3987 = vld [vmem:[%s3964 + $0xb0] sm:$0xff]
    %v3988 = vld [vmem:[%s3964 + $0xb8] sm:$0xff]
    %v3989 = vld [vmem:[%s3964 + $0xc0] sm:$0xff]
    %v3990 = vld [vmem:[%s3964 + $0xc8] sm:$0xff]
    %v3991 = vld [vmem:[%s3964 + $0xd0] sm:$0xff]
    %v3992 = vld [vmem:[%s3964 + $0xd8] sm:$0xff]
    %v3993 = vld [vmem:[%s3964 + $0xe0] sm:$0xff]
    %v3994 = vld [vmem:[%s3964 + $0xe8] sm:$0xff]
    %v3995 = vld [vmem:[%s3964 + $0xf0] sm:$0xff]
    %v3996 = vld [vmem:[%s3964 + $0xf8] sm:$0xff]
    %v3997 = vld [vmem:[%s3964 + $0x100] sm:$0xff]
    %v3998 = vld [vmem:[%s3964 + $0x108] sm:$0xff]
    %v3999 = vld [vmem:[%s3964 + $0x110] sm:$0xff]
    %v4000 = vld [vmem:[%s3964 + $0x118] sm:$0xff]
    %v4001 = vld [vmem:[%s3964 + $0x120] sm:$0xff]
    %v4002 = vld [vmem:[%s3964 + $0x128] sm:$0xff]
    %v4003 = vld [vmem:[%s3964 + $0x130] sm:$0xff]
    %v4004 = vld [vmem:[%s3964 + $0x138] sm:$0xff]
    %v4005 = vld [vmem:[%s3964 + $0x140] sm:$0xff]
    %v4006 = vld [vmem:[%s3964 + $0x148] sm:$0xff]
    %v4007 = vld [vmem:[%s3964 + $0x150] sm:$0xff]
    %v4008 = vld [vmem:[%s3964 + $0x158] sm:$0xff]
    %v4009 = vld [vmem:[%s3964 + $0x160] sm:$0xff]
    %v4010 = vld [vmem:[%s3964 + $0x168] sm:$0xff]
    %v4011 = vld [vmem:[%s3964 + $0x170] sm:$0xff]
    %v4012 = vld [vmem:[%s3964 + $0x178] sm:$0xff]
    %v4013 = vld [vmem:[%s3964 + $0x180] sm:$0xff]
    %v4014 = vld [vmem:[%s3964 + $0x188] sm:$0xff]
    %v4015 = vld [vmem:[%s3964 + $0x190] sm:$0xff]
    %v4016 = vld [vmem:[%s3964 + $0x198] sm:$0xff]
    %v4017 = vld [vmem:[%s3964 + $0x1a0] sm:$0xff]
    %v4018 = vld [vmem:[%s3964 + $0x1a8] sm:$0xff]
    %v4019 = vld [vmem:[%s3964 + $0x1b0] sm:$0xff]
    %v4020 = vld [vmem:[%s3964 + $0x1b8] sm:$0xff]
    %v4021 = vld [vmem:[%s3964 + $0x1c0] sm:$0xff]
    %v4022 = vld [vmem:[%s3964 + $0x1c8] sm:$0xff]
    %v4023 = vld [vmem:[%s3964 + $0x1d0] sm:$0xff]
    %v4024 = vld [vmem:[%s3964 + $0x1d8] sm:$0xff]
    %v4025 = vld [vmem:[%s3964 + $0x1e0] sm:$0xff]
    %v4026 = vld [vmem:[%s3964 + $0x1e8] sm:$0xff]
    %v4027 = vld [vmem:[%s3964 + $0x1f0] sm:$0xff]
    %v4028 = vld [vmem:[%s3964 + $0x1f8] sm:$0xff]
    %v4029 = vld [vmem:[%s3964 + $0x200] sm:$0xff]
    %v4030 = vld [vmem:[%s3964 + $0x208] sm:$0xff]
    %v4031 = vld [vmem:[%s3964 + $0x210] sm:$0xff]
    %v4032 = vld [vmem:[%s3964 + $0x218] sm:$0xff]
    %v4033 = vld [vmem:[%s3964 + $0x220] sm:$0xff]
    %v4034 = vld [vmem:[%s3964 + $0x228] sm:$0xff]
    %v4035 = vld [vmem:[%s3964 + $0x230] sm:$0xff]
    %v4036 = vld [vmem:[%s3964 + $0x238] sm:$0xff]
    %v4037 = vld [vmem:[%s3964 + $0x240] sm:$0xff]
    %v4038 = vld [vmem:[%s3964 + $0x248] sm:$0xff]
    %v4039 = vld [vmem:[%s3964 + $0x250] sm:$0xff]
    %v4040 = vld [vmem:[%s3964 + $0x258] sm:$0xff]
    %v4041 = vld [vmem:[%s3964 + $0x260] sm:$0xff]
    %v4042 = vld [vmem:[%s3964 + $0x268] sm:$0xff]
    %v4043 = vld [vmem:[%s3964 + $0x270] sm:$0xff]
    %v4044 = vld [vmem:[%s3964 + $0x278] sm:$0xff]
    %v4045 = vld [vmem:[%s3964 + $0x280] sm:$0xff]
    %v4046 = vld [vmem:[%s3964 + $0x288] sm:$0xff]
    %v4047 = vld [vmem:[%s3964 + $0x290] sm:$0xff]
    %v4048 = vld [vmem:[%s3964 + $0x298] sm:$0xff]
    %v4049 = vld [vmem:[%s3964 + $0x2a0] sm:$0xff]
    %v4050 = vld [vmem:[%s3964 + $0x2a8] sm:$0xff]
    %v4051 = vld [vmem:[%s3964 + $0x2b0] sm:$0xff]
    %v4052 = vld [vmem:[%s3964 + $0x2b8] sm:$0xff]
    %v4053 = vld [vmem:[%s3964 + $0x2c0] sm:$0xff]
    %v4054 = vld [vmem:[%s3964 + $0x2c8] sm:$0xff]
    %v4055 = vld [vmem:[%s3964 + $0x2d0] sm:$0xff]
    %v4056 = vld [vmem:[%s3964 + $0x2d8] sm:$0xff]
    %v4057 = vld [vmem:[%s3964 + $0x2e0] sm:$0xff]
    %v4058 = vld [vmem:[%s3964 + $0x2e8] sm:$0xff]
    %v4059 = vld [vmem:[%s3964 + $0x2f0] sm:$0xff]
    %v4060 = vld [vmem:[%s3964 + $0x2f8] sm:$0xff]
    %v4061 = vld [vmem:[%s3964 + $0x300] sm:$0xff]
    %v4062 = vld [vmem:[%s3964 + $0x308] sm:$0xff]
    %v4063 = vld [vmem:[%s3964 + $0x310] sm:$0xff]
    %v4064 = vld [vmem:[%s3964 + $0x318] sm:$0xff]
    %v4065 = vld [vmem:[%s3964 + $0x320] sm:$0xff]
    %v4066 = vld [vmem:[%s3964 + $0x328] sm:$0xff]
    %v4067 = vld [vmem:[%s3964 + $0x330] sm:$0xff]
    %v4068 = vld [vmem:[%s3964 + $0x338] sm:$0xff]
    %v4069 = vld [vmem:[%s3964 + $0x340] sm:$0xff]
    %v4070 = vld [vmem:[%s3964 + $0x348] sm:$0xff]
    %v4071 = vld [vmem:[%s3964 + $0x350] sm:$0xff]
    %v4072 = vld [vmem:[%s3964 + $0x358] sm:$0xff]
    %v4073 = vld [vmem:[%s3964 + $0x360] sm:$0xff]
    %v4074 = vld [vmem:[%s3964 + $0x368] sm:$0xff]
    %v4075 = vld [vmem:[%s3964 + $0x370] sm:$0xff]
    %v4076 = vld [vmem:[%s3964 + $0x378] sm:$0xff]
    %v4077 = vld [vmem:[%s3964 + $0x380] sm:$0xff]
    %v4078 = vld [vmem:[%s3964 + $0x388] sm:$0xff]
    %v4079 = vld [vmem:[%s3964 + $0x390] sm:$0xff]
    %v4080 = vld [vmem:[%s3964 + $0x398] sm:$0xff]
    %v4081 = vld [vmem:[%s3964 + $0x3a0] sm:$0xff]
    %v4082 = vld [vmem:[%s3964 + $0x3a8] sm:$0xff]
    %v4083 = vld [vmem:[%s3964 + $0x3b0] sm:$0xff]
    %v4084 = vld [vmem:[%s3964 + $0x3b8] sm:$0xff]
    %v4085 = vld [vmem:[%s3964 + $0x3c0] sm:$0xff]
    %v4086 = vld [vmem:[%s3964 + $0x3c8] sm:$0xff]
    %v4087 = vld [vmem:[%s3964 + $0x3d0] sm:$0xff]
    %v4088 = vld [vmem:[%s3964 + $0x3d8] sm:$0xff]
    %v4089 = vld [vmem:[%s3964 + $0x3e0] sm:$0xff]
    %v4090 = vld [vmem:[%s3964 + $0x3e8] sm:$0xff]
    %v4091 = vld [vmem:[%s3964 + $0x3f0] sm:$0xff]
    %v4092 = vld [vmem:[%s3964 + $0x3f8] sm:$0xff]
    %s4093 = smul.u32 0, 16
    %s4094 = smul.addr %s4093, 8
    %s4095 = scalar_lea.vmem [#allocation2], %s4094
    %v4096 = vld [vmem:[%s4095] sm:$0xff]
    %v4097 = vld [vmem:[%s4095 + $0x8] sm:$0xff]
    %v4098 = vld [vmem:[%s4095 + $0x10] sm:$0xff]
    %v4099 = vld [vmem:[%s4095 + $0x18] sm:$0xff]
    %v4100 = vld [vmem:[%s4095 + $0x20] sm:$0xff]
    %v4101 = vld [vmem:[%s4095 + $0x28] sm:$0xff]
    %v4102 = vld [vmem:[%s4095 + $0x30] sm:$0xff]
    %v4103 = vld [vmem:[%s4095 + $0x38] sm:$0xff]
    %s4104 = smul.u32 7, 16
    %s4105 = smul.addr %s4104, 8
    %s4106 = scalar_lea.vmem [#allocation2], %s4105
    %v4107 = vld [vmem:[%s4106 + $0x40] sm:$0xff]
    %v4108 = vld [vmem:[%s4106 + $0x48] sm:$0xff]
    %v4109 = vld [vmem:[%s4106 + $0x50] sm:$0xff]
    %v4110 = vld [vmem:[%s4106 + $0x58] sm:$0xff]
    %v4111 = vld [vmem:[%s4106 + $0x60] sm:$0xff]
    %v4112 = vld [vmem:[%s4106 + $0x68] sm:$0xff]
    %v4113 = vld [vmem:[%s4106 + $0x70] sm:$0xff]
    %v4114 = vld [vmem:[%s4106 + $0x78] sm:$0xff]
    %v4243 = vunpack.c.l.b16 %v3836
    %v4244 = vunpack.c.h.b16 %v3836
    %v4245 = vunpack.c.l.b16 %v3837
    %v4246 = vunpack.c.h.b16 %v3837
    %v4247 = vunpack.c.l.b16 %v3838
    %v4248 = vunpack.c.h.b16 %v3838
    %v4249 = vunpack.c.l.b16 %v3839
    %v4250 = vunpack.c.h.b16 %v3839
    %v4251 = vunpack.c.l.b16 %v3840
    %v4252 = vunpack.c.h.b16 %v3840
    %v4253 = vunpack.c.l.b16 %v3841
    %v4254 = vunpack.c.h.b16 %v3841
    %v4255 = vunpack.c.l.b16 %v3842
    %v4256 = vunpack.c.h.b16 %v3842
    %v4257 = vunpack.c.l.b16 %v3843
    %v4258 = vunpack.c.h.b16 %v3843
    %v4259 = vunpack.c.l.b16 %v3844
    %v4260 = vunpack.c.h.b16 %v3844
    %v4261 = vunpack.c.l.b16 %v3845
    %v4262 = vunpack.c.h.b16 %v3845
    %v4263 = vunpack.c.l.b16 %v3846
    %v4264 = vunpack.c.h.b16 %v3846
    %v4265 = vunpack.c.l.b16 %v3847
    %v4266 = vunpack.c.h.b16 %v3847
    %v4267 = vunpack.c.l.b16 %v3848
    %v4268 = vunpack.c.h.b16 %v3848
    %v4269 = vunpack.c.l.b16 %v3849
    %v4270 = vunpack.c.h.b16 %v3849
    %v4271 = vunpack.c.l.b16 %v3850
    %v4272 = vunpack.c.h.b16 %v3850
    %v4273 = vunpack.c.l.b16 %v3851
    %v4274 = vunpack.c.h.b16 %v3851
    %v4275 = vunpack.c.l.b16 %v3852
    %v4276 = vunpack.c.h.b16 %v3852
    %v4277 = vunpack.c.l.b16 %v3853
    %v4278 = vunpack.c.h.b16 %v3853
    %v4279 = vunpack.c.l.b16 %v3854
    %v4280 = vunpack.c.h.b16 %v3854
    %v4281 = vunpack.c.l.b16 %v3855
    %v4282 = vunpack.c.h.b16 %v3855
    %v4283 = vunpack.c.l.b16 %v3856
    %v4284 = vunpack.c.h.b16 %v3856
    %v4285 = vunpack.c.l.b16 %v3857
    %v4286 = vunpack.c.h.b16 %v3857
    %v4287 = vunpack.c.l.b16 %v3858
    %v4288 = vunpack.c.h.b16 %v3858
    %v4289 = vunpack.c.l.b16 %v3859
    %v4290 = vunpack.c.h.b16 %v3859
    %v4291 = vunpack.c.l.b16 %v3860
    %v4292 = vunpack.c.h.b16 %v3860
    %v4293 = vunpack.c.l.b16 %v3861
    %v4294 = vunpack.c.h.b16 %v3861
    %v4295 = vunpack.c.l.b16 %v3862
    %v4296 = vunpack.c.h.b16 %v3862
    %v4297 = vunpack.c.l.b16 %v3863
    %v4298 = vunpack.c.h.b16 %v3863
    %v4299 = vunpack.c.l.b16 %v3864
    %v4300 = vunpack.c.h.b16 %v3864
    %v4301 = vunpack.c.l.b16 %v3865
    %v4302 = vunpack.c.h.b16 %v3865
    %v4303 = vunpack.c.l.b16 %v3866
    %v4304 = vunpack.c.h.b16 %v3866
    %v4305 = vunpack.c.l.b16 %v3867
    %v4306 = vunpack.c.h.b16 %v3867
    %v4307 = vunpack.c.l.b16 %v3868
    %v4308 = vunpack.c.h.b16 %v3868
    %v4309 = vunpack.c.l.b16 %v3869
    %v4310 = vunpack.c.h.b16 %v3869
    %v4311 = vunpack.c.l.b16 %v3870
    %v4312 = vunpack.c.h.b16 %v3870
    %v4313 = vunpack.c.l.b16 %v3871
    %v4314 = vunpack.c.h.b16 %v3871
    %v4315 = vunpack.c.l.b16 %v3872
    %v4316 = vunpack.c.h.b16 %v3872
    %v4317 = vunpack.c.l.b16 %v3873
    %v4318 = vunpack.c.h.b16 %v3873
    %v4319 = vunpack.c.l.b16 %v3874
    %v4320 = vunpack.c.h.b16 %v3874
    %v4321 = vunpack.c.l.b16 %v3875
    %v4322 = vunpack.c.h.b16 %v3875
    %v4323 = vunpack.c.l.b16 %v3876
    %v4324 = vunpack.c.h.b16 %v3876
    %v4325 = vunpack.c.l.b16 %v3877
    %v4326 = vunpack.c.h.b16 %v3877
    %v4327 = vunpack.c.l.b16 %v3878
    %v4328 = vunpack.c.h.b16 %v3878
    %v4329 = vunpack.c.l.b16 %v3879
    %v4330 = vunpack.c.h.b16 %v3879
    %v4331 = vunpack.c.l.b16 %v3880
    %v4332 = vunpack.c.h.b16 %v3880
    %v4333 = vunpack.c.l.b16 %v3881
    %v4334 = vunpack.c.h.b16 %v3881
    %v4335 = vunpack.c.l.b16 %v3882
    %v4336 = vunpack.c.h.b16 %v3882
    %v4337 = vunpack.c.l.b16 %v3883
    %v4338 = vunpack.c.h.b16 %v3883
    %v4339 = vunpack.c.l.b16 %v3884
    %v4340 = vunpack.c.h.b16 %v3884
    %v4341 = vunpack.c.l.b16 %v3885
    %v4342 = vunpack.c.h.b16 %v3885
    %v4343 = vunpack.c.l.b16 %v3886
    %v4344 = vunpack.c.h.b16 %v3886
    %v4345 = vunpack.c.l.b16 %v3887
    %v4346 = vunpack.c.h.b16 %v3887
    %v4347 = vunpack.c.l.b16 %v3888
    %v4348 = vunpack.c.h.b16 %v3888
    %v4349 = vunpack.c.l.b16 %v3889
    %v4350 = vunpack.c.h.b16 %v3889
    %v4351 = vunpack.c.l.b16 %v3890
    %v4352 = vunpack.c.h.b16 %v3890
    %v4353 = vunpack.c.l.b16 %v3891
    %v4354 = vunpack.c.h.b16 %v3891
    %v4355 = vunpack.c.l.b16 %v3892
    %v4356 = vunpack.c.h.b16 %v3892
    %v4357 = vunpack.c.l.b16 %v3893
    %v4358 = vunpack.c.h.b16 %v3893
    %v4359 = vunpack.c.l.b16 %v3894
    %v4360 = vunpack.c.h.b16 %v3894
    %v4361 = vunpack.c.l.b16 %v3895
    %v4362 = vunpack.c.h.b16 %v3895
    %v4363 = vunpack.c.l.b16 %v3896
    %v4364 = vunpack.c.h.b16 %v3896
    %v4365 = vunpack.c.l.b16 %v3897
    %v4366 = vunpack.c.h.b16 %v3897
    %v4367 = vunpack.c.l.b16 %v3898
    %v4368 = vunpack.c.h.b16 %v3898
    %v4369 = vunpack.c.l.b16 %v3899
    %v4370 = vunpack.c.h.b16 %v3899
    %v4371 = vunpack.c.l.b16 %v3900
    %v4372 = vunpack.c.h.b16 %v3900
    %v4373 = vunpack.c.l.b16 %v3901
    %v4374 = vunpack.c.h.b16 %v3901
    %v4375 = vunpack.c.l.b16 %v3902
    %v4376 = vunpack.c.h.b16 %v3902
    %v4377 = vunpack.c.l.b16 %v3903
    %v4378 = vunpack.c.h.b16 %v3903
    %v4379 = vunpack.c.l.b16 %v3904
    %v4380 = vunpack.c.h.b16 %v3904
    %v4381 = vunpack.c.l.b16 %v3905
    %v4382 = vunpack.c.h.b16 %v3905
    %v4383 = vunpack.c.l.b16 %v3906
    %v4384 = vunpack.c.h.b16 %v3906
    %v4385 = vunpack.c.l.b16 %v3907
    %v4386 = vunpack.c.h.b16 %v3907
    %v4387 = vunpack.c.l.b16 %v3908
    %v4388 = vunpack.c.h.b16 %v3908
    %v4389 = vunpack.c.l.b16 %v3909
    %v4390 = vunpack.c.h.b16 %v3909
    %v4391 = vunpack.c.l.b16 %v3910
    %v4392 = vunpack.c.h.b16 %v3910
    %v4393 = vunpack.c.l.b16 %v3911
    %v4394 = vunpack.c.h.b16 %v3911
    %v4395 = vunpack.c.l.b16 %v3912
    %v4396 = vunpack.c.h.b16 %v3912
    %v4397 = vunpack.c.l.b16 %v3913
    %v4398 = vunpack.c.h.b16 %v3913
    %v4399 = vunpack.c.l.b16 %v3914
    %v4400 = vunpack.c.h.b16 %v3914
    %v4401 = vunpack.c.l.b16 %v3915
    %v4402 = vunpack.c.h.b16 %v3915
    %v4403 = vunpack.c.l.b16 %v3916
    %v4404 = vunpack.c.h.b16 %v3916
    %v4405 = vunpack.c.l.b16 %v3917
    %v4406 = vunpack.c.h.b16 %v3917
    %v4407 = vunpack.c.l.b16 %v3918
    %v4408 = vunpack.c.h.b16 %v3918
    %v4409 = vunpack.c.l.b16 %v3919
    %v4410 = vunpack.c.h.b16 %v3919
    %v4411 = vunpack.c.l.b16 %v3920
    %v4412 = vunpack.c.h.b16 %v3920
    %v4413 = vunpack.c.l.b16 %v3921
    %v4414 = vunpack.c.h.b16 %v3921
    %v4415 = vunpack.c.l.b16 %v3922
    %v4416 = vunpack.c.h.b16 %v3922
    %v4417 = vunpack.c.l.b16 %v3923
    %v4418 = vunpack.c.h.b16 %v3923
    %v4419 = vunpack.c.l.b16 %v3924
    %v4420 = vunpack.c.h.b16 %v3924
    %v4421 = vunpack.c.l.b16 %v3925
    %v4422 = vunpack.c.h.b16 %v3925
    %v4423 = vunpack.c.l.b16 %v3926
    %v4424 = vunpack.c.h.b16 %v3926
    %v4425 = vunpack.c.l.b16 %v3927
    %v4426 = vunpack.c.h.b16 %v3927
    %v4427 = vunpack.c.l.b16 %v3928
    %v4428 = vunpack.c.h.b16 %v3928
    %v4429 = vunpack.c.l.b16 %v3929
    %v4430 = vunpack.c.h.b16 %v3929
    %v4431 = vunpack.c.l.b16 %v3930
    %v4432 = vunpack.c.h.b16 %v3930
    %v4433 = vunpack.c.l.b16 %v3931
    %v4434 = vunpack.c.h.b16 %v3931
    %v4435 = vunpack.c.l.b16 %v3932
    %v4436 = vunpack.c.h.b16 %v3932
    %v4437 = vunpack.c.l.b16 %v3933
    %v4438 = vunpack.c.h.b16 %v3933
    %v4439 = vunpack.c.l.b16 %v3934
    %v4440 = vunpack.c.h.b16 %v3934
    %v4441 = vunpack.c.l.b16 %v3935
    %v4442 = vunpack.c.h.b16 %v3935
    %v4443 = vunpack.c.l.b16 %v3936
    %v4444 = vunpack.c.h.b16 %v3936
    %v4445 = vunpack.c.l.b16 %v3937
    %v4446 = vunpack.c.h.b16 %v3937
    %v4447 = vunpack.c.l.b16 %v3938
    %v4448 = vunpack.c.h.b16 %v3938
    %v4449 = vunpack.c.l.b16 %v3939
    %v4450 = vunpack.c.h.b16 %v3939
    %v4451 = vunpack.c.l.b16 %v3940
    %v4452 = vunpack.c.h.b16 %v3940
    %v4453 = vunpack.c.l.b16 %v3941
    %v4454 = vunpack.c.h.b16 %v3941
    %v4455 = vunpack.c.l.b16 %v3942
    %v4456 = vunpack.c.h.b16 %v3942
    %v4457 = vunpack.c.l.b16 %v3943
    %v4458 = vunpack.c.h.b16 %v3943
    %v4459 = vunpack.c.l.b16 %v3944
    %v4460 = vunpack.c.h.b16 %v3944
    %v4461 = vunpack.c.l.b16 %v3945
    %v4462 = vunpack.c.h.b16 %v3945
    %v4463 = vunpack.c.l.b16 %v3946
    %v4464 = vunpack.c.h.b16 %v3946
    %v4465 = vunpack.c.l.b16 %v3947
    %v4466 = vunpack.c.h.b16 %v3947
    %v4467 = vunpack.c.l.b16 %v3948
    %v4468 = vunpack.c.h.b16 %v3948
    %v4469 = vunpack.c.l.b16 %v3949
    %v4470 = vunpack.c.h.b16 %v3949
    %v4471 = vunpack.c.l.b16 %v3950
    %v4472 = vunpack.c.h.b16 %v3950
    %v4473 = vunpack.c.l.b16 %v3951
    %v4474 = vunpack.c.h.b16 %v3951
    %v4475 = vunpack.c.l.b16 %v3952
    %v4476 = vunpack.c.h.b16 %v3952
    %v4477 = vunpack.c.l.b16 %v3953
    %v4478 = vunpack.c.h.b16 %v3953
    %v4479 = vunpack.c.l.b16 %v3954
    %v4480 = vunpack.c.h.b16 %v3954
    %v4481 = vunpack.c.l.b16 %v3955
    %v4482 = vunpack.c.h.b16 %v3955
    %v4483 = vunpack.c.l.b16 %v3956
    %v4484 = vunpack.c.h.b16 %v3956
    %v4485 = vunpack.c.l.b16 %v3957
    %v4486 = vunpack.c.h.b16 %v3957
    %v4487 = vunpack.c.l.b16 %v3958
    %v4488 = vunpack.c.h.b16 %v3958
    %v4489 = vunpack.c.l.b16 %v3959
    %v4490 = vunpack.c.h.b16 %v3959
    %v4491 = vunpack.c.l.b16 %v3960
    %v4492 = vunpack.c.h.b16 %v3960
    %v4493 = vunpack.c.l.b16 %v3961
    %v4494 = vunpack.c.h.b16 %v3961
    %v4495 = vunpack.c.l.b16 %v3962
    %v4496 = vunpack.c.h.b16 %v3962
    %v4497 = vunpack.c.l.b16 %v3963
    %v4498 = vunpack.c.h.b16 %v3963
    %v4499 = vpack.c.b16 %v4251, %v4243
    %v4500 = vpack.c.b16 %v4252, %v4244
    %v4501 = vpack.c.b16 %v4253, %v4245
    %v4502 = vpack.c.b16 %v4254, %v4246
    %v4503 = vpack.c.b16 %v4255, %v4247
    %v4504 = vpack.c.b16 %v4256, %v4248
    %v4505 = vpack.c.b16 %v4257, %v4249
    %v4506 = vpack.c.b16 %v4258, %v4250
    %v4507 = vpack.c.b16 %v4267, %v4259
    %v4508 = vpack.c.b16 %v4268, %v4260
    %v4509 = vpack.c.b16 %v4269, %v4261
    %v4510 = vpack.c.b16 %v4270, %v4262
    %v4511 = vpack.c.b16 %v4271, %v4263
    %v4512 = vpack.c.b16 %v4272, %v4264
    %v4513 = vpack.c.b16 %v4273, %v4265
    %v4514 = vpack.c.b16 %v4274, %v4266
    %v4515 = vpack.c.b16 %v4283, %v4275
    %v4516 = vpack.c.b16 %v4284, %v4276
    %v4517 = vpack.c.b16 %v4285, %v4277
    %v4518 = vpack.c.b16 %v4286, %v4278
    %v4519 = vpack.c.b16 %v4287, %v4279
    %v4520 = vpack.c.b16 %v4288, %v4280
    %v4521 = vpack.c.b16 %v4289, %v4281
    %v4522 = vpack.c.b16 %v4290, %v4282
    %v4523 = vpack.c.b16 %v4299, %v4291
    %v4524 = vpack.c.b16 %v4300, %v4292
    %v4525 = vpack.c.b16 %v4301, %v4293
    %v4526 = vpack.c.b16 %v4302, %v4294
    %v4527 = vpack.c.b16 %v4303, %v4295
    %v4528 = vpack.c.b16 %v4304, %v4296
    %v4529 = vpack.c.b16 %v4305, %v4297
    %v4530 = vpack.c.b16 %v4306, %v4298
    %v4531 = vpack.c.b16 %v4315, %v4307
    %v4532 = vpack.c.b16 %v4316, %v4308
    %v4533 = vpack.c.b16 %v4317, %v4309
    %v4534 = vpack.c.b16 %v4318, %v4310
    %v4535 = vpack.c.b16 %v4319, %v4311
    %v4536 = vpack.c.b16 %v4320, %v4312
    %v4537 = vpack.c.b16 %v4321, %v4313
    %v4538 = vpack.c.b16 %v4322, %v4314
    %v4539 = vpack.c.b16 %v4331, %v4323
    %v4540 = vpack.c.b16 %v4332, %v4324
    %v4541 = vpack.c.b16 %v4333, %v4325
    %v4542 = vpack.c.b16 %v4334, %v4326
    %v4543 = vpack.c.b16 %v4335, %v4327
    %v4544 = vpack.c.b16 %v4336, %v4328
    %v4545 = vpack.c.b16 %v4337, %v4329
    %v4546 = vpack.c.b16 %v4338, %v4330
    %v4547 = vpack.c.b16 %v4347, %v4339
    %v4548 = vpack.c.b16 %v4348, %v4340
    %v4549 = vpack.c.b16 %v4349, %v4341
    %v4550 = vpack.c.b16 %v4350, %v4342
    %v4551 = vpack.c.b16 %v4351, %v4343
    %v4552 = vpack.c.b16 %v4352, %v4344
    %v4553 = vpack.c.b16 %v4353, %v4345
    %v4554 = vpack.c.b16 %v4354, %v4346
    %v4555 = vpack.c.b16 %v4363, %v4355
    %v4556 = vpack.c.b16 %v4364, %v4356
    %v4557 = vpack.c.b16 %v4365, %v4357
    %v4558 = vpack.c.b16 %v4366, %v4358
    %v4559 = vpack.c.b16 %v4367, %v4359
    %v4560 = vpack.c.b16 %v4368, %v4360
    %v4561 = vpack.c.b16 %v4369, %v4361
    %v4562 = vpack.c.b16 %v4370, %v4362
    %v4563 = vpack.c.b16 %v4379, %v4371
    %v4564 = vpack.c.b16 %v4380, %v4372
    %v4565 = vpack.c.b16 %v4381, %v4373
    %v4566 = vpack.c.b16 %v4382, %v4374
    %v4567 = vpack.c.b16 %v4383, %v4375
    %v4568 = vpack.c.b16 %v4384, %v4376
    %v4569 = vpack.c.b16 %v4385, %v4377
    %v4570 = vpack.c.b16 %v4386, %v4378
    %v4571 = vpack.c.b16 %v4395, %v4387
    %v4572 = vpack.c.b16 %v4396, %v4388
    %v4573 = vpack.c.b16 %v4397, %v4389
    %v4574 = vpack.c.b16 %v4398, %v4390
    %v4575 = vpack.c.b16 %v4399, %v4391
    %v4576 = vpack.c.b16 %v4400, %v4392
    %v4577 = vpack.c.b16 %v4401, %v4393
    %v4578 = vpack.c.b16 %v4402, %v4394
    %v4579 = vpack.c.b16 %v4411, %v4403
    %v4580 = vpack.c.b16 %v4412, %v4404
    %v4581 = vpack.c.b16 %v4413, %v4405
    %v4582 = vpack.c.b16 %v4414, %v4406
    %v4583 = vpack.c.b16 %v4415, %v4407
    %v4584 = vpack.c.b16 %v4416, %v4408
    %v4585 = vpack.c.b16 %v4417, %v4409
    %v4586 = vpack.c.b16 %v4418, %v4410
    %v4587 = vpack.c.b16 %v4427, %v4419
    %v4588 = vpack.c.b16 %v4428, %v4420
    %v4589 = vpack.c.b16 %v4429, %v4421
    %v4590 = vpack.c.b16 %v4430, %v4422
    %v4591 = vpack.c.b16 %v4431, %v4423
    %v4592 = vpack.c.b16 %v4432, %v4424
    %v4593 = vpack.c.b16 %v4433, %v4425
    %v4594 = vpack.c.b16 %v4434, %v4426
    %v4595 = vpack.c.b16 %v4443, %v4435
    %v4596 = vpack.c.b16 %v4444, %v4436
    %v4597 = vpack.c.b16 %v4445, %v4437
    %v4598 = vpack.c.b16 %v4446, %v4438
    %v4599 = vpack.c.b16 %v4447, %v4439
    %v4600 = vpack.c.b16 %v4448, %v4440
    %v4601 = vpack.c.b16 %v4449, %v4441
    %v4602 = vpack.c.b16 %v4450, %v4442
    %v4603 = vpack.c.b16 %v4459, %v4451
    %v4604 = vpack.c.b16 %v4460, %v4452
    %v4605 = vpack.c.b16 %v4461, %v4453
    %v4606 = vpack.c.b16 %v4462, %v4454
    %v4607 = vpack.c.b16 %v4463, %v4455
    %v4608 = vpack.c.b16 %v4464, %v4456
    %v4609 = vpack.c.b16 %v4465, %v4457
    %v4610 = vpack.c.b16 %v4466, %v4458
    %v4611 = vpack.c.b16 %v4475, %v4467
    %v4612 = vpack.c.b16 %v4476, %v4468
    %v4613 = vpack.c.b16 %v4477, %v4469
    %v4614 = vpack.c.b16 %v4478, %v4470
    %v4615 = vpack.c.b16 %v4479, %v4471
    %v4616 = vpack.c.b16 %v4480, %v4472
    %v4617 = vpack.c.b16 %v4481, %v4473
    %v4618 = vpack.c.b16 %v4482, %v4474
    %v4619 = vpack.c.b16 %v4491, %v4483
    %v4620 = vpack.c.b16 %v4492, %v4484
    %v4621 = vpack.c.b16 %v4493, %v4485
    %v4622 = vpack.c.b16 %v4494, %v4486
    %v4623 = vpack.c.b16 %v4495, %v4487
    %v4624 = vpack.c.b16 %v4496, %v4488
    %v4625 = vpack.c.b16 %v4497, %v4489
    %v4626 = vpack.c.b16 %v4498, %v4490
    %4755 = vmatprep.subr.bf16.mxu0 %v4556
    %4756 = vmatpush1.bf16.msra.mxu0 %v4555
    %4757 = vmatprep.subr.bf16.mxu0 %v4548
    %4758 = vmatpush1.bf16.msra.mxu0 %v4547
    %4759 = vmatprep.subr.bf16.mxu0 %v4540
    %4760 = vmatpush1.bf16.msra.mxu0 %v4539
    %4761 = vmatprep.subr.bf16.mxu0 %v4532
    %4762 = vmatpush1.bf16.msra.mxu0 %v4531
    %4763 = vmatprep.subr.bf16.mxu0 %v4524
    %4764 = vmatpush1.bf16.msra.mxu0 %v4523
    %4765 = vmatprep.subr.bf16.mxu0 %v4516
    %4766 = vmatpush1.bf16.msra.mxu0 %v4515
    %4767 = vmatprep.subr.bf16.mxu0 %v4508
    %4768 = vmatpush1.bf16.msra.mxu0 %v4507
    %4769 = vmatprep.subr.bf16.mxu0 %v4500
    %4770 = vmatpush1.bf16.msra.mxu0 %v4499
    %4771 = vmatprep.subr.bf16.mxu0 %v4620
    %4772 = vmatpush2.bf16.msra.mxu0 %v4619
    %4773 = vmatprep.subr.bf16.mxu0 %v4612
    %4774 = vmatpush2.bf16.msra.mxu0 %v4611
    %4775 = vmatprep.subr.bf16.mxu0 %v4604
    %4776 = vmatpush2.bf16.msra.mxu0 %v4603
    %4777 = vmatprep.subr.bf16.mxu0 %v4596
    %4778 = vmatpush2.bf16.msra.mxu0 %v4595
    %4779 = vmatprep.subr.bf16.mxu0 %v4588
    %4780 = vmatpush2.bf16.msra.mxu0 %v4587
    %4781 = vmatprep.subr.bf16.mxu0 %v4580
    %4782 = vmatpush2.bf16.msra.mxu0 %v4579
    %4783 = vmatprep.subr.bf16.mxu0 %v4572
    %4784 = vmatpush2.bf16.msra.mxu0 %v4571
    %4785 = vmatprep.subr.bf16.mxu0 %v4564
    %4786 = vmatpush2.bf16.msra.mxu0 %v4563
    %4787 = vmatprep.mubr.bf16.mxu0 0
    %4788 = vmatmul.mubr.bf16.gmra.mxu0 0
    %v4789 = vpop.f32.mrf.mxu0
    %v4790 = vadd.f32 0.0, %v4789
    %v4791 = vpop.f32.mrf.mxu0
    %v4792 = vadd.f32 0.0, %v4791
    %v4793 = vpop.f32.mrf.mxu0
    %v4794 = vpop.f32.mrf.mxu0
    %4795 = vdwg.mxu0
    %4796 = vmatprep.subr.bf16.mxu0 %v4558
    %4797 = vmatpush1.bf16.msra.mxu0 %v4557
    %4798 = vmatprep.subr.bf16.mxu0 %v4550
    %4799 = vmatpush1.bf16.msra.mxu0 %v4549
    %4800 = vmatprep.subr.bf16.mxu0 %v4542
    %4801 = vmatpush1.bf16.msra.mxu0 %v4541
    %4802 = vmatprep.subr.bf16.mxu0 %v4534
    %4803 = vmatpush1.bf16.msra.mxu0 %v4533
    %4804 = vmatprep.subr.bf16.mxu0 %v4526
    %4805 = vmatpush1.bf16.msra.mxu0 %v4525
    %4806 = vmatprep.subr.bf16.mxu0 %v4518
    %4807 = vmatpush1.bf16.msra.mxu0 %v4517
    %4808 = vmatprep.subr.bf16.mxu0 %v4510
    %4809 = vmatpush1.bf16.msra.mxu0 %v4509
    %4810 = vmatprep.subr.bf16.mxu0 %v4502
    %4811 = vmatpush1.bf16.msra.mxu0 %v4501
    %4812 = vmatprep.subr.bf16.mxu0 %v4622
    %4813 = vmatpush2.bf16.msra.mxu0 %v4621
    %4814 = vmatprep.subr.bf16.mxu0 %v4614
    %4815 = vmatpush2.bf16.msra.mxu0 %v4613
    %4816 = vmatprep.subr.bf16.mxu0 %v4606
    %4817 = vmatpush2.bf16.msra.mxu0 %v4605
    %4818 = vmatprep.subr.bf16.mxu0 %v4598
    %4819 = vmatpush2.bf16.msra.mxu0 %v4597
    %4820 = vmatprep.subr.bf16.mxu0 %v4590
    %4821 = vmatpush2.bf16.msra.mxu0 %v4589
    %4822 = vmatprep.subr.bf16.mxu0 %v4582
    %4823 = vmatpush2.bf16.msra.mxu0 %v4581
    %4824 = vmatprep.subr.bf16.mxu0 %v4574
    %4825 = vmatpush2.bf16.msra.mxu0 %v4573
    %4826 = vmatprep.subr.bf16.mxu0 %v4566
    %4827 = vmatpush2.bf16.msra.mxu0 %v4565
    %4828 = vmatprep.mubr.bf16.mxu0 0
    %4829 = vmatmul.mubr.bf16.gmra.mxu0 0
    %v4830 = vpop.f32.mrf.mxu0
    %v4831 = vadd.f32 0.0, %v4830
    %v4832 = vpop.f32.mrf.mxu0
    %v4833 = vadd.f32 0.0, %v4832
    %v4834 = vpop.f32.mrf.mxu0
    %v4835 = vpop.f32.mrf.mxu0
    %4836 = vdwg.mxu0
    %4837 = vmatprep.subr.bf16.mxu0 %v4560
    %4838 = vmatpush1.bf16.msra.mxu0 %v4559
    %4839 = vmatprep.subr.bf16.mxu0 %v4552
    %4840 = vmatpush1.bf16.msra.mxu0 %v4551
    %4841 = vmatprep.subr.bf16.mxu0 %v4544
    %4842 = vmatpush1.bf16.msra.mxu0 %v4543
    %4843 = vmatprep.subr.bf16.mxu0 %v4536
    %4844 = vmatpush1.bf16.msra.mxu0 %v4535
    %4845 = vmatprep.subr.bf16.mxu0 %v4528
    %4846 = vmatpush1.bf16.msra.mxu0 %v4527
    %4847 = vmatprep.subr.bf16.mxu0 %v4520
    %4848 = vmatpush1.bf16.msra.mxu0 %v4519
    %4849 = vmatprep.subr.bf16.mxu0 %v4512
    %4850 = vmatpush1.bf16.msra.mxu0 %v4511
    %4851 = vmatprep.subr.bf16.mxu0 %v4504
    %4852 = vmatpush1.bf16.msra.mxu0 %v4503
    %4853 = vmatprep.subr.bf16.mxu0 %v4624
    %4854 = vmatpush2.bf16.msra.mxu0 %v4623
    %4855 = vmatprep.subr.bf16.mxu0 %v4616
    %4856 = vmatpush2.bf16.msra.mxu0 %v4615
    %4857 = vmatprep.subr.bf16.mxu0 %v4608
    %4858 = vmatpush2.bf16.msra.mxu0 %v4607
    %4859 = vmatprep.subr.bf16.mxu0 %v4600
    %4860 = vmatpush2.bf16.msra.mxu0 %v4599
    %4861 = vmatprep.subr.bf16.mxu0 %v4592
    %4862 = vmatpush2.bf16.msra.mxu0 %v4591
    %4863 = vmatprep.subr.bf16.mxu0 %v4584
    %4864 = vmatpush2.bf16.msra.mxu0 %v4583
    %4865 = vmatprep.subr.bf16.mxu0 %v4576
    %4866 = vmatpush2.bf16.msra.mxu0 %v4575
    %4867 = vmatprep.subr.bf16.mxu0 %v4568
    %4868 = vmatpush2.bf16.msra.mxu0 %v4567
    %4869 = vmatprep.mubr.bf16.mxu0 0
    %4870 = vmatmul.mubr.bf16.gmra.mxu0 0
    %v4871 = vpop.f32.mrf.mxu0
    %v4872 = vadd.f32 0.0, %v4871
    %v4873 = vpop.f32.mrf.mxu0
    %v4874 = vadd.f32 0.0, %v4873
    %v4875 = vpop.f32.mrf.mxu0
    %v4876 = vpop.f32.mrf.mxu0
    %4877 = vdwg.mxu0
    %4878 = vmatprep.subr.bf16.mxu0 %v4562
    %4879 = vmatpush1.bf16.msra.mxu0 %v4561
    %4880 = vmatprep.subr.bf16.mxu0 %v4554
    %4881 = vmatpush1.bf16.msra.mxu0 %v4553
    %4882 = vmatprep.subr.bf16.mxu0 %v4546
    %4883 = vmatpush1.bf16.msra.mxu0 %v4545
    %4884 = vmatprep.subr.bf16.mxu0 %v4538
    %4885 = vmatpush1.bf16.msra.mxu0 %v4537
    %4886 = vmatprep.subr.bf16.mxu0 %v4530
    %4887 = vmatpush1.bf16.msra.mxu0 %v4529
    %4888 = vmatprep.subr.bf16.mxu0 %v4522
    %4889 = vmatpush1.bf16.msra.mxu0 %v4521
    %4890 = vmatprep.subr.bf16.mxu0 %v4514
    %4891 = vmatpush1.bf16.msra.mxu0 %v4513
    %4892 = vmatprep.subr.bf16.mxu0 %v4506
    %4893 = vmatpush1.bf16.msra.mxu0 %v4505
    %4894 = vmatprep.subr.bf16.mxu0 %v4626
    %4895 = vmatpush2.bf16.msra.mxu0 %v4625
    %4896 = vmatprep.subr.bf16.mxu0 %v4618
    %4897 = vmatpush2.bf16.msra.mxu0 %v4617
    %4898 = vmatprep.subr.bf16.mxu0 %v4610
    %4899 = vmatpush2.bf16.msra.mxu0 %v4609
    %4900 = vmatprep.subr.bf16.mxu0 %v4602
    %4901 = vmatpush2.bf16.msra.mxu0 %v4601
    %4902 = vmatprep.subr.bf16.mxu0 %v4594
    %4903 = vmatpush2.bf16.msra.mxu0 %v4593
    %4904 = vmatprep.subr.bf16.mxu0 %v4586
    %4905 = vmatpush2.bf16.msra.mxu0 %v4585
    %4906 = vmatprep.subr.bf16.mxu0 %v4578
    %4907 = vmatpush2.bf16.msra.mxu0 %v4577
    %4908 = vmatprep.subr.bf16.mxu0 %v4570
    %4909 = vmatpush2.bf16.msra.mxu0 %v4569
    %4910 = vmatprep.mubr.bf16.mxu0 0
    %4911 = vmatmul.mubr.bf16.gmra.mxu0 0
    %v4912 = vpop.f32.mrf.mxu0
    %v4913 = vadd.f32 0.0, %v4912
    %v4914 = vpop.f32.mrf.mxu0
    %v4915 = vadd.f32 0.0, %v4914
    %v4916 = vpop.f32.mrf.mxu0
    %v4917 = vpop.f32.mrf.mxu0
    %4918 = vdwg.mxu0
    %v4919 = vadd.f32 %v4096, %v4790
    %v4920 = vadd.f32 %v4097, %v4792
    %v4921 = vadd.f32 %v4098, %v4831
    %v4922 = vadd.f32 %v4099, %v4833
    %v4923 = vadd.f32 %v4100, %v4872
    %v4924 = vadd.f32 %v4101, %v4874
    %v4925 = vadd.f32 %v4102, %v4913
    %v4926 = vadd.f32 %v4103, %v4915
    %v5055 = vunpack.c.l.b16 %v3965
    %v5056 = vunpack.c.h.b16 %v3965
    %v5057 = vunpack.c.l.b16 %v3966
    %v5058 = vunpack.c.h.b16 %v3966
    %v5059 = vunpack.c.l.b16 %v3967
    %v5060 = vunpack.c.h.b16 %v3967
    %v5061 = vunpack.c.l.b16 %v3968
    %v5062 = vunpack.c.h.b16 %v3968
    %v5063 = vunpack.c.l.b16 %v3969
    %v5064 = vunpack.c.h.b16 %v3969
    %v5065 = vunpack.c.l.b16 %v3970
    %v5066 = vunpack.c.h.b16 %v3970
    %v5067 = vunpack.c.l.b16 %v3971
    %v5068 = vunpack.c.h.b16 %v3971
    %v5069 = vunpack.c.l.b16 %v3972
    %v5070 = vunpack.c.h.b16 %v3972
    %v5071 = vunpack.c.l.b16 %v3973
    %v5072 = vunpack.c.h.b16 %v3973
    %v5073 = vunpack.c.l.b16 %v3974
    %v5074 = vunpack.c.h.b16 %v3974
    %v5075 = vunpack.c.l.b16 %v3975
    %v5076 = vunpack.c.h.b16 %v3975
    %v5077 = vunpack.c.l.b16 %v3976
    %v5078 = vunpack.c.h.b16 %v3976
    %v5079 = vunpack.c.l.b16 %v3977
    %v5080 = vunpack.c.h.b16 %v3977
    %v5081 = vunpack.c.l.b16 %v3978
    %v5082 = vunpack.c.h.b16 %v3978
    %v5083 = vunpack.c.l.b16 %v3979
    %v5084 = vunpack.c.h.b16 %v3979
    %v5085 = vunpack.c.l.b16 %v3980
    %v5086 = vunpack.c.h.b16 %v3980
    %v5087 = vunpack.c.l.b16 %v3981
    %v5088 = vunpack.c.h.b16 %v3981
    %v5089 = vunpack.c.l.b16 %v3982
    %v5090 = vunpack.c.h.b16 %v3982
    %v5091 = vunpack.c.l.b16 %v3983
    %v5092 = vunpack.c.h.b16 %v3983
    %v5093 = vunpack.c.l.b16 %v3984
    %v5094 = vunpack.c.h.b16 %v3984
    %v5095 = vunpack.c.l.b16 %v3985
    %v5096 = vunpack.c.h.b16 %v3985
    %v5097 = vunpack.c.l.b16 %v3986
    %v5098 = vunpack.c.h.b16 %v3986
    %v5099 = vunpack.c.l.b16 %v3987
    %v5100 = vunpack.c.h.b16 %v3987
    %v5101 = vunpack.c.l.b16 %v3988
    %v5102 = vunpack.c.h.b16 %v3988
    %v5103 = vunpack.c.l.b16 %v3989
    %v5104 = vunpack.c.h.b16 %v3989
    %v5105 = vunpack.c.l.b16 %v3990
    %v5106 = vunpack.c.h.b16 %v3990
    %v5107 = vunpack.c.l.b16 %v3991
    %v5108 = vunpack.c.h.b16 %v3991
    %v5109 = vunpack.c.l.b16 %v3992
    %v5110 = vunpack.c.h.b16 %v3992
    %v5111 = vunpack.c.l.b16 %v3993
    %v5112 = vunpack.c.h.b16 %v3993
    %v5113 = vunpack.c.l.b16 %v3994
    %v5114 = vunpack.c.h.b16 %v3994
    %v5115 = vunpack.c.l.b16 %v3995
    %v5116 = vunpack.c.h.b16 %v3995
    %v5117 = vunpack.c.l.b16 %v3996
    %v5118 = vunpack.c.h.b16 %v3996
    %v5119 = vunpack.c.l.b16 %v3997
    %v5120 = vunpack.c.h.b16 %v3997
    %v5121 = vunpack.c.l.b16 %v3998
    %v5122 = vunpack.c.h.b16 %v3998
    %v5123 = vunpack.c.l.b16 %v3999
    %v5124 = vunpack.c.h.b16 %v3999
    %v5125 = vunpack.c.l.b16 %v4000
    %v5126 = vunpack.c.h.b16 %v4000
    %v5127 = vunpack.c.l.b16 %v4001
    %v5128 = vunpack.c.h.b16 %v4001
    %v5129 = vunpack.c.l.b16 %v4002
    %v5130 = vunpack.c.h.b16 %v4002
    %v5131 = vunpack.c.l.b16 %v4003
    %v5132 = vunpack.c.h.b16 %v4003
    %v5133 = vunpack.c.l.b16 %v4004
    %v5134 = vunpack.c.h.b16 %v4004
    %v5135 = vunpack.c.l.b16 %v4005
    %v5136 = vunpack.c.h.b16 %v4005
    %v5137 = vunpack.c.l.b16 %v4006
    %v5138 = vunpack.c.h.b16 %v4006
    %v5139 = vunpack.c.l.b16 %v4007
    %v5140 = vunpack.c.h.b16 %v4007
    %v5141 = vunpack.c.l.b16 %v4008
    %v5142 = vunpack.c.h.b16 %v4008
    %v5143 = vunpack.c.l.b16 %v4009
    %v5144 = vunpack.c.h.b16 %v4009
    %v5145 = vunpack.c.l.b16 %v4010
    %v5146 = vunpack.c.h.b16 %v4010
    %v5147 = vunpack.c.l.b16 %v4011
    %v5148 = vunpack.c.h.b16 %v4011
    %v5149 = vunpack.c.l.b16 %v4012
    %v5150 = vunpack.c.h.b16 %v4012
    %v5151 = vunpack.c.l.b16 %v4013
    %v5152 = vunpack.c.h.b16 %v4013
    %v5153 = vunpack.c.l.b16 %v4014
    %v5154 = vunpack.c.h.b16 %v4014
    %v5155 = vunpack.c.l.b16 %v4015
    %v5156 = vunpack.c.h.b16 %v4015
    %v5157 = vunpack.c.l.b16 %v4016
    %v5158 = vunpack.c.h.b16 %v4016
    %v5159 = vunpack.c.l.b16 %v4017
    %v5160 = vunpack.c.h.b16 %v4017
    %v5161 = vunpack.c.l.b16 %v4018
    %v5162 = vunpack.c.h.b16 %v4018
    %v5163 = vunpack.c.l.b16 %v4019
    %v5164 = vunpack.c.h.b16 %v4019
    %v5165 = vunpack.c.l.b16 %v4020
    %v5166 = vunpack.c.h.b16 %v4020
    %v5167 = vunpack.c.l.b16 %v4021
    %v5168 = vunpack.c.h.b16 %v4021
    %v5169 = vunpack.c.l.b16 %v4022
    %v5170 = vunpack.c.h.b16 %v4022
    %v5171 = vunpack.c.l.b16 %v4023
    %v5172 = vunpack.c.h.b16 %v4023
    %v5173 = vunpack.c.l.b16 %v4024
    %v5174 = vunpack.c.h.b16 %v4024
    %v5175 = vunpack.c.l.b16 %v4025
    %v5176 = vunpack.c.h.b16 %v4025
    %v5177 = vunpack.c.l.b16 %v4026
    %v5178 = vunpack.c.h.b16 %v4026
    %v5179 = vunpack.c.l.b16 %v4027
    %v5180 = vunpack.c.h.b16 %v4027
    %v5181 = vunpack.c.l.b16 %v4028
    %v5182 = vunpack.c.h.b16 %v4028
    %v5183 = vunpack.c.l.b16 %v4029
    %v5184 = vunpack.c.h.b16 %v4029
    %v5185 = vunpack.c.l.b16 %v4030
    %v5186 = vunpack.c.h.b16 %v4030
    %v5187 = vunpack.c.l.b16 %v4031
    %v5188 = vunpack.c.h.b16 %v4031
    %v5189 = vunpack.c.l.b16 %v4032
    %v5190 = vunpack.c.h.b16 %v4032
    %v5191 = vunpack.c.l.b16 %v4033
    %v5192 = vunpack.c.h.b16 %v4033
    %v5193 = vunpack.c.l.b16 %v4034
    %v5194 = vunpack.c.h.b16 %v4034
    %v5195 = vunpack.c.l.b16 %v4035
    %v5196 = vunpack.c.h.b16 %v4035
    %v5197 = vunpack.c.l.b16 %v4036
    %v5198 = vunpack.c.h.b16 %v4036
    %v5199 = vunpack.c.l.b16 %v4037
    %v5200 = vunpack.c.h.b16 %v4037
    %v5201 = vunpack.c.l.b16 %v4038
    %v5202 = vunpack.c.h.b16 %v4038
    %v5203 = vunpack.c.l.b16 %v4039
    %v5204 = vunpack.c.h.b16 %v4039
    %v5205 = vunpack.c.l.b16 %v4040
    %v5206 = vunpack.c.h.b16 %v4040
    %v5207 = vunpack.c.l.b16 %v4041
    %v5208 = vunpack.c.h.b16 %v4041
    %v5209 = vunpack.c.l.b16 %v4042
    %v5210 = vunpack.c.h.b16 %v4042
    %v5211 = vunpack.c.l.b16 %v4043
    %v5212 = vunpack.c.h.b16 %v4043
    %v5213 = vunpack.c.l.b16 %v4044
    %v5214 = vunpack.c.h.b16 %v4044
    %v5215 = vunpack.c.l.b16 %v4045
    %v5216 = vunpack.c.h.b16 %v4045
    %v5217 = vunpack.c.l.b16 %v4046
    %v5218 = vunpack.c.h.b16 %v4046
    %v5219 = vunpack.c.l.b16 %v4047
    %v5220 = vunpack.c.h.b16 %v4047
    %v5221 = vunpack.c.l.b16 %v4048
    %v5222 = vunpack.c.h.b16 %v4048
    %v5223 = vunpack.c.l.b16 %v4049
    %v5224 = vunpack.c.h.b16 %v4049
    %v5225 = vunpack.c.l.b16 %v4050
    %v5226 = vunpack.c.h.b16 %v4050
    %v5227 = vunpack.c.l.b16 %v4051
    %v5228 = vunpack.c.h.b16 %v4051
    %v5229 = vunpack.c.l.b16 %v4052
    %v5230 = vunpack.c.h.b16 %v4052
    %v5231 = vunpack.c.l.b16 %v4053
    %v5232 = vunpack.c.h.b16 %v4053
    %v5233 = vunpack.c.l.b16 %v4054
    %v5234 = vunpack.c.h.b16 %v4054
    %v5235 = vunpack.c.l.b16 %v4055
    %v5236 = vunpack.c.h.b16 %v4055
    %v5237 = vunpack.c.l.b16 %v4056
    %v5238 = vunpack.c.h.b16 %v4056
    %v5239 = vunpack.c.l.b16 %v4057
    %v5240 = vunpack.c.h.b16 %v4057
    %v5241 = vunpack.c.l.b16 %v4058
    %v5242 = vunpack.c.h.b16 %v4058
    %v5243 = vunpack.c.l.b16 %v4059
    %v5244 = vunpack.c.h.b16 %v4059
    %v5245 = vunpack.c.l.b16 %v4060
    %v5246 = vunpack.c.h.b16 %v4060
    %v5247 = vunpack.c.l.b16 %v4061
    %v5248 = vunpack.c.h.b16 %v4061
    %v5249 = vunpack.c.l.b16 %v4062
    %v5250 = vunpack.c.h.b16 %v4062
    %v5251 = vunpack.c.l.b16 %v4063
    %v5252 = vunpack.c.h.b16 %v4063
    %v5253 = vunpack.c.l.b16 %v4064
    %v5254 = vunpack.c.h.b16 %v4064
    %v5255 = vunpack.c.l.b16 %v4065
    %v5256 = vunpack.c.h.b16 %v4065
    %v5257 = vunpack.c.l.b16 %v4066
    %v5258 = vunpack.c.h.b16 %v4066
    %v5259 = vunpack.c.l.b16 %v4067
    %v5260 = vunpack.c.h.b16 %v4067
    %v5261 = vunpack.c.l.b16 %v4068
    %v5262 = vunpack.c.h.b16 %v4068
    %v5263 = vunpack.c.l.b16 %v4069
    %v5264 = vunpack.c.h.b16 %v4069
    %v5265 = vunpack.c.l.b16 %v4070
    %v5266 = vunpack.c.h.b16 %v4070
    %v5267 = vunpack.c.l.b16 %v4071
    %v5268 = vunpack.c.h.b16 %v4071
    %v5269 = vunpack.c.l.b16 %v4072
    %v5270 = vunpack.c.h.b16 %v4072
    %v5271 = vunpack.c.l.b16 %v4073
    %v5272 = vunpack.c.h.b16 %v4073
    %v5273 = vunpack.c.l.b16 %v4074
    %v5274 = vunpack.c.h.b16 %v4074
    %v5275 = vunpack.c.l.b16 %v4075
    %v5276 = vunpack.c.h.b16 %v4075
    %v5277 = vunpack.c.l.b16 %v4076
    %v5278 = vunpack.c.h.b16 %v4076
    %v5279 = vunpack.c.l.b16 %v4077
    %v5280 = vunpack.c.h.b16 %v4077
    %v5281 = vunpack.c.l.b16 %v4078
    %v5282 = vunpack.c.h.b16 %v4078
    %v5283 = vunpack.c.l.b16 %v4079
    %v5284 = vunpack.c.h.b16 %v4079
    %v5285 = vunpack.c.l.b16 %v4080
    %v5286 = vunpack.c.h.b16 %v4080
    %v5287 = vunpack.c.l.b16 %v4081
    %v5288 = vunpack.c.h.b16 %v4081
    %v5289 = vunpack.c.l.b16 %v4082
    %v5290 = vunpack.c.h.b16 %v4082
    %v5291 = vunpack.c.l.b16 %v4083
    %v5292 = vunpack.c.h.b16 %v4083
    %v5293 = vunpack.c.l.b16 %v4084
    %v5294 = vunpack.c.h.b16 %v4084
    %v5295 = vunpack.c.l.b16 %v4085
    %v5296 = vunpack.c.h.b16 %v4085
    %v5297 = vunpack.c.l.b16 %v4086
    %v5298 = vunpack.c.h.b16 %v4086
    %v5299 = vunpack.c.l.b16 %v4087
    %v5300 = vunpack.c.h.b16 %v4087
    %v5301 = vunpack.c.l.b16 %v4088
    %v5302 = vunpack.c.h.b16 %v4088
    %v5303 = vunpack.c.l.b16 %v4089
    %v5304 = vunpack.c.h.b16 %v4089
    %v5305 = vunpack.c.l.b16 %v4090
    %v5306 = vunpack.c.h.b16 %v4090
    %v5307 = vunpack.c.l.b16 %v4091
    %v5308 = vunpack.c.h.b16 %v4091
    %v5309 = vunpack.c.l.b16 %v4092
    %v5310 = vunpack.c.h.b16 %v4092
    %v5311 = vpack.c.b16 %v5063, %v5055
    %v5312 = vpack.c.b16 %v5064, %v5056
    %v5313 = vpack.c.b16 %v5065, %v5057
    %v5314 = vpack.c.b16 %v5066, %v5058
    %v5315 = vpack.c.b16 %v5067, %v5059
    %v5316 = vpack.c.b16 %v5068, %v5060
    %v5317 = vpack.c.b16 %v5069, %v5061
    %v5318 = vpack.c.b16 %v5070, %v5062
    %v5319 = vpack.c.b16 %v5079, %v5071
    %v5320 = vpack.c.b16 %v5080, %v5072
    %v5321 = vpack.c.b16 %v5081, %v5073
    %v5322 = vpack.c.b16 %v5082, %v5074
    %v5323 = vpack.c.b16 %v5083, %v5075
    %v5324 = vpack.c.b16 %v5084, %v5076
    %v5325 = vpack.c.b16 %v5085, %v5077
    %v5326 = vpack.c.b16 %v5086, %v5078
    %v5327 = vpack.c.b16 %v5095, %v5087
    %v5328 = vpack.c.b16 %v5096, %v5088
    %v5329 = vpack.c.b16 %v5097, %v5089
    %v5330 = vpack.c.b16 %v5098, %v5090
    %v5331 = vpack.c.b16 %v5099, %v5091
    %v5332 = vpack.c.b16 %v5100, %v5092
    %v5333 = vpack.c.b16 %v5101, %v5093
    %v5334 = vpack.c.b16 %v5102, %v5094
    %v5335 = vpack.c.b16 %v5111, %v5103
    %v5336 = vpack.c.b16 %v5112, %v5104
    %v5337 = vpack.c.b16 %v5113, %v5105
    %v5338 = vpack.c.b16 %v5114, %v5106
    %v5339 = vpack.c.b16 %v5115, %v5107
    %v5340 = vpack.c.b16 %v5116, %v5108
    %v5341 = vpack.c.b16 %v5117, %v5109
    %v5342 = vpack.c.b16 %v5118, %v5110
    %v5343 = vpack.c.b16 %v5127, %v5119
    %v5344 = vpack.c.b16 %v5128, %v5120
    %v5345 = vpack.c.b16 %v5129, %v5121
    %v5346 = vpack.c.b16 %v5130, %v5122
    %v5347 = vpack.c.b16 %v5131, %v5123
    %v5348 = vpack.c.b16 %v5132, %v5124
    %v5349 = vpack.c.b16 %v5133, %v5125
    %v5350 = vpack.c.b16 %v5134, %v5126
    %v5351 = vpack.c.b16 %v5143, %v5135
    %v5352 = vpack.c.b16 %v5144, %v5136
    %v5353 = vpack.c.b16 %v5145, %v5137
    %v5354 = vpack.c.b16 %v5146, %v5138
    %v5355 = vpack.c.b16 %v5147, %v5139
    %v5356 = vpack.c.b16 %v5148, %v5140
    %v5357 = vpack.c.b16 %v5149, %v5141
    %v5358 = vpack.c.b16 %v5150, %v5142
    %v5359 = vpack.c.b16 %v5159, %v5151
    %v5360 = vpack.c.b16 %v5160, %v5152
    %v5361 = vpack.c.b16 %v5161, %v5153
    %v5362 = vpack.c.b16 %v5162, %v5154
    %v5363 = vpack.c.b16 %v5163, %v5155
    %v5364 = vpack.c.b16 %v5164, %v5156
    %v5365 = vpack.c.b16 %v5165, %v5157
    %v5366 = vpack.c.b16 %v5166, %v5158
    %v5367 = vpack.c.b16 %v5175, %v5167
    %v5368 = vpack.c.b16 %v5176, %v5168
    %v5369 = vpack.c.b16 %v5177, %v5169
    %v5370 = vpack.c.b16 %v5178, %v5170
    %v5371 = vpack.c.b16 %v5179, %v5171
    %v5372 = vpack.c.b16 %v5180, %v5172
    %v5373 = vpack.c.b16 %v5181, %v5173
    %v5374 = vpack.c.b16 %v5182, %v5174
    %v5375 = vpack.c.b16 %v5191, %v5183
    %v5376 = vpack.c.b16 %v5192, %v5184
    %v5377 = vpack.c.b16 %v5193, %v5185
    %v5378 = vpack.c.b16 %v5194, %v5186
    %v5379 = vpack.c.b16 %v5195, %v5187
    %v5380 = vpack.c.b16 %v5196, %v5188
    %v5381 = vpack.c.b16 %v5197, %v5189
    %v5382 = vpack.c.b16 %v5198, %v5190
    %v5383 = vpack.c.b16 %v5207, %v5199
    %v5384 = vpack.c.b16 %v5208, %v5200
    %v5385 = vpack.c.b16 %v5209, %v5201
    %v5386 = vpack.c.b16 %v5210, %v5202
    %v5387 = vpack.c.b16 %v5211, %v5203
    %v5388 = vpack.c.b16 %v5212, %v5204
    %v5389 = vpack.c.b16 %v5213, %v5205
    %v5390 = vpack.c.b16 %v5214, %v5206
    %v5391 = vpack.c.b16 %v5223, %v5215
    %v5392 = vpack.c.b16 %v5224, %v5216
    %v5393 = vpack.c.b16 %v5225, %v5217
    %v5394 = vpack.c.b16 %v5226, %v5218
    %v5395 = vpack.c.b16 %v5227, %v5219
    %v5396 = vpack.c.b16 %v5228, %v5220
    %v5397 = vpack.c.b16 %v5229, %v5221
    %v5398 = vpack.c.b16 %v5230, %v5222
    %v5399 = vpack.c.b16 %v5239, %v5231
    %v5400 = vpack.c.b16 %v5240, %v5232
    %v5401 = vpack.c.b16 %v5241, %v5233
    %v5402 = vpack.c.b16 %v5242, %v5234
    %v5403 = vpack.c.b16 %v5243, %v5235
    %v5404 = vpack.c.b16 %v5244, %v5236
    %v5405 = vpack.c.b16 %v5245, %v5237
    %v5406 = vpack.c.b16 %v5246, %v5238
    %v5407 = vpack.c.b16 %v5255, %v5247
    %v5408 = vpack.c.b16 %v5256, %v5248
    %v5409 = vpack.c.b16 %v5257, %v5249
    %v5410 = vpack.c.b16 %v5258, %v5250
    %v5411 = vpack.c.b16 %v5259, %v5251
    %v5412 = vpack.c.b16 %v5260, %v5252
    %v5413 = vpack.c.b16 %v5261, %v5253
    %v5414 = vpack.c.b16 %v5262, %v5254
    %v5415 = vpack.c.b16 %v5271, %v5263
    %v5416 = vpack.c.b16 %v5272, %v5264
    %v5417 = vpack.c.b16 %v5273, %v5265
    %v5418 = vpack.c.b16 %v5274, %v5266
    %v5419 = vpack.c.b16 %v5275, %v5267
    %v5420 = vpack.c.b16 %v5276, %v5268
    %v5421 = vpack.c.b16 %v5277, %v5269
    %v5422 = vpack.c.b16 %v5278, %v5270
    %v5423 = vpack.c.b16 %v5287, %v5279
    %v5424 = vpack.c.b16 %v5288, %v5280
    %v5425 = vpack.c.b16 %v5289, %v5281
    %v5426 = vpack.c.b16 %v5290, %v5282
    %v5427 = vpack.c.b16 %v5291, %v5283
    %v5428 = vpack.c.b16 %v5292, %v5284
    %v5429 = vpack.c.b16 %v5293, %v5285
    %v5430 = vpack.c.b16 %v5294, %v5286
    %v5431 = vpack.c.b16 %v5303, %v5295
    %v5432 = vpack.c.b16 %v5304, %v5296
    %v5433 = vpack.c.b16 %v5305, %v5297
    %v5434 = vpack.c.b16 %v5306, %v5298
    %v5435 = vpack.c.b16 %v5307, %v5299
    %v5436 = vpack.c.b16 %v5308, %v5300
    %v5437 = vpack.c.b16 %v5309, %v5301
    %v5438 = vpack.c.b16 %v5310, %v5302
    %5567 = vmatprep.subr.bf16.mxu0 %v5368
    %5568 = vmatpush1.bf16.msra.mxu0 %v5367
    %5569 = vmatprep.subr.bf16.mxu0 %v5360
    %5570 = vmatpush1.bf16.msra.mxu0 %v5359
    %5571 = vmatprep.subr.bf16.mxu0 %v5352
    %5572 = vmatpush1.bf16.msra.mxu0 %v5351
    %5573 = vmatprep.subr.bf16.mxu0 %v5344
    %5574 = vmatpush1.bf16.msra.mxu0 %v5343
    %5575 = vmatprep.subr.bf16.mxu0 %v5336
    %5576 = vmatpush1.bf16.msra.mxu0 %v5335
    %5577 = vmatprep.subr.bf16.mxu0 %v5328
    %5578 = vmatpush1.bf16.msra.mxu0 %v5327
    %5579 = vmatprep.subr.bf16.mxu0 %v5320
    %5580 = vmatpush1.bf16.msra.mxu0 %v5319
    %5581 = vmatprep.subr.bf16.mxu0 %v5312
    %5582 = vmatpush1.bf16.msra.mxu0 %v5311
    %5583 = vmatprep.subr.bf16.mxu0 %v5432
    %5584 = vmatpush2.bf16.msra.mxu0 %v5431
    %5585 = vmatprep.subr.bf16.mxu0 %v5424
    %5586 = vmatpush2.bf16.msra.mxu0 %v5423
    %5587 = vmatprep.subr.bf16.mxu0 %v5416
    %5588 = vmatpush2.bf16.msra.mxu0 %v5415
    %5589 = vmatprep.subr.bf16.mxu0 %v5408
    %5590 = vmatpush2.bf16.msra.mxu0 %v5407
    %5591 = vmatprep.subr.bf16.mxu0 %v5400
    %5592 = vmatpush2.bf16.msra.mxu0 %v5399
    %5593 = vmatprep.subr.bf16.mxu0 %v5392
    %5594 = vmatpush2.bf16.msra.mxu0 %v5391
    %5595 = vmatprep.subr.bf16.mxu0 %v5384
    %5596 = vmatpush2.bf16.msra.mxu0 %v5383
    %5597 = vmatprep.subr.bf16.mxu0 %v5376
    %5598 = vmatpush2.bf16.msra.mxu0 %v5375
    %5599 = vmatprep.mubr.bf16.mxu0 0
    %5600 = vmatmul.mubr.bf16.gmra.mxu0 0
    %v5601 = vpop.f32.mrf.mxu0
    %v5602 = vadd.f32 0.0, %v5601
    %v5603 = vpop.f32.mrf.mxu0
    %v5604 = vadd.f32 0.0, %v5603
    %v5605 = vpop.f32.mrf.mxu0
    %v5606 = vpop.f32.mrf.mxu0
    %5607 = vdwg.mxu0
    %5608 = vmatprep.subr.bf16.mxu0 %v5370
    %5609 = vmatpush1.bf16.msra.mxu0 %v5369
    %5610 = vmatprep.subr.bf16.mxu0 %v5362
    %5611 = vmatpush1.bf16.msra.mxu0 %v5361
    %5612 = vmatprep.subr.bf16.mxu0 %v5354
    %5613 = vmatpush1.bf16.msra.mxu0 %v5353
    %5614 = vmatprep.subr.bf16.mxu0 %v5346
    %5615 = vmatpush1.bf16.msra.mxu0 %v5345
    %5616 = vmatprep.subr.bf16.mxu0 %v5338
    %5617 = vmatpush1.bf16.msra.mxu0 %v5337
    %5618 = vmatprep.subr.bf16.mxu0 %v5330
    %5619 = vmatpush1.bf16.msra.mxu0 %v5329
    %5620 = vmatprep.subr.bf16.mxu0 %v5322
    %5621 = vmatpush1.bf16.msra.mxu0 %v5321
    %5622 = vmatprep.subr.bf16.mxu0 %v5314
    %5623 = vmatpush1.bf16.msra.mxu0 %v5313
    %5624 = vmatprep.subr.bf16.mxu0 %v5434
    %5625 = vmatpush2.bf16.msra.mxu0 %v5433
    %5626 = vmatprep.subr.bf16.mxu0 %v5426
    %5627 = vmatpush2.bf16.msra.mxu0 %v5425
    %5628 = vmatprep.subr.bf16.mxu0 %v5418
    %5629 = vmatpush2.bf16.msra.mxu0 %v5417
    %5630 = vmatprep.subr.bf16.mxu0 %v5410
    %5631 = vmatpush2.bf16.msra.mxu0 %v5409
    %5632 = vmatprep.subr.bf16.mxu0 %v5402
    %5633 = vmatpush2.bf16.msra.mxu0 %v5401
    %5634 = vmatprep.subr.bf16.mxu0 %v5394
    %5635 = vmatpush2.bf16.msra.mxu0 %v5393
    %5636 = vmatprep.subr.bf16.mxu0 %v5386
    %5637 = vmatpush2.bf16.msra.mxu0 %v5385
    %5638 = vmatprep.subr.bf16.mxu0 %v5378
    %5639 = vmatpush2.bf16.msra.mxu0 %v5377
    %5640 = vmatprep.mubr.bf16.mxu0 0
    %5641 = vmatmul.mubr.bf16.gmra.mxu0 0
    %v5642 = vpop.f32.mrf.mxu0
    %v5643 = vadd.f32 0.0, %v5642
    %v5644 = vpop.f32.mrf.mxu0
    %v5645 = vadd.f32 0.0, %v5644
    %v5646 = vpop.f32.mrf.mxu0
    %v5647 = vpop.f32.mrf.mxu0
    %5648 = vdwg.mxu0
    %5649 = vmatprep.subr.bf16.mxu0 %v5372
    %5650 = vmatpush1.bf16.msra.mxu0 %v5371
    %5651 = vmatprep.subr.bf16.mxu0 %v5364
    %5652 = vmatpush1.bf16.msra.mxu0 %v5363
    %5653 = vmatprep.subr.bf16.mxu0 %v5356
    %5654 = vmatpush1.bf16.msra.mxu0 %v5355
    %5655 = vmatprep.subr.bf16.mxu0 %v5348
    %5656 = vmatpush1.bf16.msra.mxu0 %v5347
    %5657 = vmatprep.subr.bf16.mxu0 %v5340
    %5658 = vmatpush1.bf16.msra.mxu0 %v5339
    %5659 = vmatprep.subr.bf16.mxu0 %v5332
    %5660 = vmatpush1.bf16.msra.mxu0 %v5331
    %5661 = vmatprep.subr.bf16.mxu0 %v5324
    %5662 = vmatpush1.bf16.msra.mxu0 %v5323
    %5663 = vmatprep.subr.bf16.mxu0 %v5316
    %5664 = vmatpush1.bf16.msra.mxu0 %v5315
    %5665 = vmatprep.subr.bf16.mxu0 %v5436
    %5666 = vmatpush2.bf16.msra.mxu0 %v5435
    %5667 = vmatprep.subr.bf16.mxu0 %v5428
    %5668 = vmatpush2.bf16.msra.mxu0 %v5427
    %5669 = vmatprep.subr.bf16.mxu0 %v5420
    %5670 = vmatpush2.bf16.msra.mxu0 %v5419
    %5671 = vmatprep.subr.bf16.mxu0 %v5412
    %5672 = vmatpush2.bf16.msra.mxu0 %v5411
    %5673 = vmatprep.subr.bf16.mxu0 %v5404
    %5674 = vmatpush2.bf16.msra.mxu0 %v5403
    %5675 = vmatprep.subr.bf16.mxu0 %v5396
    %5676 = vmatpush2.bf16.msra.mxu0 %v5395
    %5677 = vmatprep.subr.bf16.mxu0 %v5388
    %5678 = vmatpush2.bf16.msra.mxu0 %v5387
    %5679 = vmatprep.subr.bf16.mxu0 %v5380
    %5680 = vmatpush2.bf16.msra.mxu0 %v5379
    %5681 = vmatprep.mubr.bf16.mxu0 0
    %5682 = vmatmul.mubr.bf16.gmra.mxu0 0
    %v5683 = vpop.f32.mrf.mxu0
    %v5684 = vadd.f32 0.0, %v5683
    %v5685 = vpop.f32.mrf.mxu0
    %v5686 = vadd.f32 0.0, %v5685
    %v5687 = vpop.f32.mrf.mxu0
    %v5688 = vpop.f32.mrf.mxu0
    %5689 = vdwg.mxu0
    %5690 = vmatprep.subr.bf16.mxu0 %v5374
    %5691 = vmatpush1.bf16.msra.mxu0 %v5373
    %5692 = vmatprep.subr.bf16.mxu0 %v5366
    %5693 = vmatpush1.bf16.msra.mxu0 %v5365
    %5694 = vmatprep.subr.bf16.mxu0 %v5358
    %5695 = vmatpush1.bf16.msra.mxu0 %v5357
    %5696 = vmatprep.subr.bf16.mxu0 %v5350
    %5697 = vmatpush1.bf16.msra.mxu0 %v5349
    %5698 = vmatprep.subr.bf16.mxu0 %v5342
    %5699 = vmatpush1.bf16.msra.mxu0 %v5341
    %5700 = vmatprep.subr.bf16.mxu0 %v5334
    %5701 = vmatpush1.bf16.msra.mxu0 %v5333
    %5702 = vmatprep.subr.bf16.mxu0 %v5326
    %5703 = vmatpush1.bf16.msra.mxu0 %v5325
    %5704 = vmatprep.subr.bf16.mxu0 %v5318
    %5705 = vmatpush1.bf16.msra.mxu0 %v5317
    %5706 = vmatprep.subr.bf16.mxu0 %v5438
    %5707 = vmatpush2.bf16.msra.mxu0 %v5437
    %5708 = vmatprep.subr.bf16.mxu0 %v5430
    %5709 = vmatpush2.bf16.msra.mxu0 %v5429
    %5710 = vmatprep.subr.bf16.mxu0 %v5422
    %5711 = vmatpush2.bf16.msra.mxu0 %v5421
    %5712 = vmatprep.subr.bf16.mxu0 %v5414
    %5713 = vmatpush2.bf16.msra.mxu0 %v5413
    %5714 = vmatprep.subr.bf16.mxu0 %v5406
    %5715 = vmatpush2.bf16.msra.mxu0 %v5405
    %5716 = vmatprep.subr.bf16.mxu0 %v5398
    %5717 = vmatpush2.bf16.msra.mxu0 %v5397
    %5718 = vmatprep.subr.bf16.mxu0 %v5390
    %5719 = vmatpush2.bf16.msra.mxu0 %v5389
    %5720 = vmatprep.subr.bf16.mxu0 %v5382
    %5721 = vmatpush2.bf16.msra.mxu0 %v5381
    %5722 = vmatprep.mubr.bf16.mxu0 0
    %5723 = vmatmul.mubr.bf16.gmra.mxu0 0
    %v5724 = vpop.f32.mrf.mxu0
    %v5725 = vadd.f32 0.0, %v5724
    %v5726 = vpop.f32.mrf.mxu0
    %v5727 = vadd.f32 0.0, %v5726
    %v5728 = vpop.f32.mrf.mxu0
    %v5729 = vpop.f32.mrf.mxu0
    %5730 = vdwg.mxu0
    %v5731 = vadd.f32 %v4107, %v5602
    %v5732 = vadd.f32 %v4108, %v5604
    %v5733 = vadd.f32 %v4109, %v5643
    %v5734 = vadd.f32 %v4110, %v5645
    %v5735 = vadd.f32 %v4111, %v5684
    %v5736 = vadd.f32 %v4112, %v5686
    %v5737 = vadd.f32 %v4113, %v5725
    %v5738 = vadd.f32 %v4114, %v5727
    %v5739 = vxor.u32 %v4919, 2147483648
    %v5740 = vxor.u32 %v4920, 2147483648
    %v5741 = vmul.f32 %v5739, 1.442695
    %v5742 = vpow.pop %v5741
    %v5743 = vmul.f32 %v5740, 1.442695
    %v5744 = vpow.pop %v5743
    %v5745 = vadd.f32 %v5742, 1.0
    %v5746 = vadd.f32 %v5744, 1.0
    %v5747 = vrcp.pop %v5745
    %v5748 = vmul.f32 1.0, %v5747
    %v5749 = vrcp.pop %v5746
    %v5750 = vmul.f32 1.0, %v5749
    %v5751 = vxor.u32 %v4921, 2147483648
    %v5752 = vxor.u32 %v4922, 2147483648
    %v5753 = vmul.f32 %v5751, 1.442695
    %v5754 = vpow.pop %v5753
    %v5755 = vmul.f32 %v5752, 1.442695
    %v5756 = vpow.pop %v5755
    %v5757 = vadd.f32 %v5754, 1.0
    %v5758 = vadd.f32 %v5756, 1.0
    %v5759 = vrcp.pop %v5757
    %v5760 = vmul.f32 1.0, %v5759
    %v5761 = vrcp.pop %v5758
    %v5762 = vmul.f32 1.0, %v5761
    %v5763 = vtanh.pop %v4923
    %v5764 = vtanh.pop %v4924
    %v5765 = vxor.u32 %v4925, 2147483648
    %v5766 = vxor.u32 %v4926, 2147483648
    %v5767 = vmul.f32 %v5765, 1.442695
    %v5768 = vpow.pop %v5767
    %v5769 = vmul.f32 %v5766, 1.442695
    %v5770 = vpow.pop %v5769
    %v5771 = vadd.f32 %v5768, 1.0
    %v5772 = vadd.f32 %v5770, 1.0
    %v5773 = vrcp.pop %v5771
    %v5774 = vmul.f32 1.0, %v5773
    %v5775 = vrcp.pop %v5772
    %v5776 = vmul.f32 1.0, %v5775
    %v5777 = vmul.f32 %v5760, 0.0
    %v5778 = vmul.f32 %v5762, 0.0
    %v5779 = vmul.f32 %v5748, %v5763
    %v5780 = vmul.f32 %v5750, %v5764
    %v5781 = vadd.f32 %v5777, %v5779
    %v5782 = vadd.f32 %v5778, %v5780
    %v5783 = vtanh.pop %v5781
    %v5784 = vtanh.pop %v5782
    %v5785 = vmul.f32 %v5774, %v5783
    %v5786 = vmul.f32 %v5776, %v5784
    %v5787 = vxor.u32 %v5731, 2147483648
    %v5788 = vxor.u32 %v5732, 2147483648
    %v5789 = vmul.f32 %v5787, 1.442695
    %v5790 = vpow.pop %v5789
    %v5791 = vmul.f32 %v5788, 1.442695
    %v5792 = vpow.pop %v5791
    %v5793 = vadd.f32 %v5790, 1.0
    %v5794 = vadd.f32 %v5792, 1.0
    %v5795 = vrcp.pop %v5793
    %v5796 = vmul.f32 1.0, %v5795
    %v5797 = vrcp.pop %v5794
    %v5798 = vmul.f32 1.0, %v5797
    %v5799 = vxor.u32 %v5733, 2147483648
    %v5800 = vxor.u32 %v5734, 2147483648
    %v5801 = vmul.f32 %v5799, 1.442695
    %v5802 = vpow.pop %v5801
    %v5803 = vmul.f32 %v5800, 1.442695
    %v5804 = vpow.pop %v5803
    %v5805 = vadd.f32 %v5802, 1.0
    %v5806 = vadd.f32 %v5804, 1.0
    %v5807 = vrcp.pop %v5805
    %v5808 = vmul.f32 1.0, %v5807
    %v5809 = vrcp.pop %v5806
    %v5810 = vmul.f32 1.0, %v5809
    %v5811 = vtanh.pop %v5735
    %v5812 = vtanh.pop %v5736
    %v5813 = vxor.u32 %v5737, 2147483648
    %v5814 = vxor.u32 %v5738, 2147483648
    %v5815 = vmul.f32 %v5813, 1.442695
    %v5816 = vpow.pop %v5815
    %v5817 = vmul.f32 %v5814, 1.442695
    %v5818 = vpow.pop %v5817
    %v5819 = vadd.f32 %v5816, 1.0
    %v5820 = vadd.f32 %v5818, 1.0
    %v5821 = vrcp.pop %v5819
    %v5822 = vmul.f32 1.0, %v5821
    %v5823 = vrcp.pop %v5820
    %v5824 = vmul.f32 1.0, %v5823
    %v5825 = vmul.f32 %v5808, 0.0
    %v5826 = vmul.f32 %v5810, 0.0
    %v5827 = vmul.f32 %v5796, %v5811
    %v5828 = vmul.f32 %v5798, %v5812
    %v5829 = vadd.f32 %v5825, %v5827
    %v5830 = vadd.f32 %v5826, %v5828
    %v5831 = vtanh.pop %v5829
    %v5832 = vtanh.pop %v5830
    %v5833 = vmul.f32 %v5822, %v5831
    %v5834 = vmul.f32 %v5824, %v5832
    %s5835 = smul.u32 1, 16
    %s5836 = smul.addr %s5835, 8
    %s5837 = scalar_lea.vmem [#allocation2], %s5836
    %v5838 = vld [vmem:[%s5837] sm:$0xff]
    %v5839 = vld [vmem:[%s5837 + $0x8] sm:$0xff]
    %v5840 = vld [vmem:[%s5837 + $0x10] sm:$0xff]
    %v5841 = vld [vmem:[%s5837 + $0x18] sm:$0xff]
    %v5842 = vld [vmem:[%s5837 + $0x20] sm:$0xff]
    %v5843 = vld [vmem:[%s5837 + $0x28] sm:$0xff]
    %v5844 = vld [vmem:[%s5837 + $0x30] sm:$0xff]
    %v5845 = vld [vmem:[%s5837 + $0x38] sm:$0xff]
    %s5846 = smul.u32 6, 16
    %s5847 = smul.addr %s5846, 8
    %s5848 = scalar_lea.vmem [#allocation2], %s5847
    %v5849 = vld [vmem:[%s5848 + $0x40] sm:$0xff]
    %v5850 = vld [vmem:[%s5848 + $0x48] sm:$0xff]
    %v5851 = vld [vmem:[%s5848 + $0x50] sm:$0xff]
    %v5852 = vld [vmem:[%s5848 + $0x58] sm:$0xff]
    %v5853 = vld [vmem:[%s5848 + $0x60] sm:$0xff]
    %v5854 = vld [vmem:[%s5848 + $0x68] sm:$0xff]
    %v5855 = vld [vmem:[%s5848 + $0x70] sm:$0xff]
    %v5856 = vld [vmem:[%s5848 + $0x78] sm:$0xff]
    %v5857 = vpack.c.bf16 %v5785, %v5785
    %v5858 = vpack.c.bf16 %v5786, %v5786
    %5859 = vmatprep.subr.bf16.mxu0 %v4556
    %5860 = vmatpush1.bf16.msra.mxu0 %v4555
    %5861 = vmatprep.subr.bf16.mxu0 %v4548
    %5862 = vmatpush1.bf16.msra.mxu0 %v4547
    %5863 = vmatprep.subr.bf16.mxu0 %v4540
    %5864 = vmatpush1.bf16.msra.mxu0 %v4539
    %5865 = vmatprep.subr.bf16.mxu0 %v4532
    %5866 = vmatpush1.bf16.msra.mxu0 %v4531
    %5867 = vmatprep.subr.bf16.mxu0 %v4524
    %5868 = vmatpush1.bf16.msra.mxu0 %v4523
    %5869 = vmatprep.subr.bf16.mxu0 %v4516
    %5870 = vmatpush1.bf16.msra.mxu0 %v4515
    %5871 = vmatprep.subr.bf16.mxu0 %v4508
    %5872 = vmatpush1.bf16.msra.mxu0 %v4507
    %5873 = vmatprep.subr.bf16.mxu0 %v4500
    %5874 = vmatpush1.bf16.msra.mxu0 %v4499
    %5875 = vmatprep.subr.bf16.mxu0 %v4620
    %5876 = vmatpush2.bf16.msra.mxu0 %v4619
    %5877 = vmatprep.subr.bf16.mxu0 %v4612
    %5878 = vmatpush2.bf16.msra.mxu0 %v4611
    %5879 = vmatprep.subr.bf16.mxu0 %v4604
    %5880 = vmatpush2.bf16.msra.mxu0 %v4603
    %5881 = vmatprep.subr.bf16.mxu0 %v4596
    %5882 = vmatpush2.bf16.msra.mxu0 %v4595
    %5883 = vmatprep.subr.bf16.mxu0 %v4588
    %5884 = vmatpush2.bf16.msra.mxu0 %v4587
    %5885 = vmatprep.subr.bf16.mxu0 %v4580
    %5886 = vmatpush2.bf16.msra.mxu0 %v4579
    %5887 = vmatprep.subr.bf16.mxu0 %v4572
    %5888 = vmatpush2.bf16.msra.mxu0 %v4571
    %5889 = vmatprep.subr.bf16.mxu0 %v4564
    %5890 = vmatpush2.bf16.msra.mxu0 %v4563
    %5891 = vmatprep.mubr.bf16.mxu0 %v5858
    %5892 = vmatmul.mubr.bf16.gmra.mxu0 %v5857
    %v5893 = vpop.f32.mrf.mxu0
    %v5894 = vadd.f32 0.0, %v5893
    %v5895 = vpop.f32.mrf.mxu0
    %v5896 = vadd.f32 0.0, %v5895
    %v5897 = vpop.f32.mrf.mxu0
    %v5898 = vpop.f32.mrf.mxu0
    %5899 = vdwg.mxu0
    %5900 = vmatprep.subr.bf16.mxu0 %v4558
    %5901 = vmatpush1.bf16.msra.mxu0 %v4557
    %5902 = vmatprep.subr.bf16.mxu0 %v4550
    %5903 = vmatpush1.bf16.msra.mxu0 %v4549
    %5904 = vmatprep.subr.bf16.mxu0 %v4542
    %5905 = vmatpush1.bf16.msra.mxu0 %v4541
    %5906 = vmatprep.subr.bf16.mxu0 %v4534
    %5907 = vmatpush1.bf16.msra.mxu0 %v4533
    %5908 = vmatprep.subr.bf16.mxu0 %v4526
    %5909 = vmatpush1.bf16.msra.mxu0 %v4525
    %5910 = vmatprep.subr.bf16.mxu0 %v4518
    %5911 = vmatpush1.bf16.msra.mxu0 %v4517
    %5912 = vmatprep.subr.bf16.mxu0 %v4510
    %5913 = vmatpush1.bf16.msra.mxu0 %v4509
    %5914 = vmatprep.subr.bf16.mxu0 %v4502
    %5915 = vmatpush1.bf16.msra.mxu0 %v4501
    %5916 = vmatprep.subr.bf16.mxu0 %v4622
    %5917 = vmatpush2.bf16.msra.mxu0 %v4621
    %5918 = vmatprep.subr.bf16.mxu0 %v4614
    %5919 = vmatpush2.bf16.msra.mxu0 %v4613
    %5920 = vmatprep.subr.bf16.mxu0 %v4606
    %5921 = vmatpush2.bf16.msra.mxu0 %v4605
    %5922 = vmatprep.subr.bf16.mxu0 %v4598
    %5923 = vmatpush2.bf16.msra.mxu0 %v4597
    %5924 = vmatprep.subr.bf16.mxu0 %v4590
    %5925 = vmatpush2.bf16.msra.mxu0 %v4589
    %5926 = vmatprep.subr.bf16.mxu0 %v4582
    %5927 = vmatpush2.bf16.msra.mxu0 %v4581
    %5928 = vmatprep.subr.bf16.mxu0 %v4574
    %5929 = vmatpush2.bf16.msra.mxu0 %v4573
    %5930 = vmatprep.subr.bf16.mxu0 %v4566
    %5931 = vmatpush2.bf16.msra.mxu0 %v4565
    %5932 = vmatprep.mubr.bf16.mxu0 %v5858
    %5933 = vmatmul.mubr.bf16.gmra.mxu0 %v5857
    %v5934 = vpop.f32.mrf.mxu0
    %v5935 = vadd.f32 0.0, %v5934
    %v5936 = vpop.f32.mrf.mxu0
    %v5937 = vadd.f32 0.0, %v5936
    %v5938 = vpop.f32.mrf.mxu0
    %v5939 = vpop.f32.mrf.mxu0
    %5940 = vdwg.mxu0
    %5941 = vmatprep.subr.bf16.mxu0 %v4560
    %5942 = vmatpush1.bf16.msra.mxu0 %v4559
    %5943 = vmatprep.subr.bf16.mxu0 %v4552
    %5944 = vmatpush1.bf16.msra.mxu0 %v4551
    %5945 = vmatprep.subr.bf16.mxu0 %v4544
    %5946 = vmatpush1.bf16.msra.mxu0 %v4543
    %5947 = vmatprep.subr.bf16.mxu0 %v4536
    %5948 = vmatpush1.bf16.msra.mxu0 %v4535
    %5949 = vmatprep.subr.bf16.mxu0 %v4528
    %5950 = vmatpush1.bf16.msra.mxu0 %v4527
    %5951 = vmatprep.subr.bf16.mxu0 %v4520
    %5952 = vmatpush1.bf16.msra.mxu0 %v4519
    %5953 = vmatprep.subr.bf16.mxu0 %v4512
    %5954 = vmatpush1.bf16.msra.mxu0 %v4511
    %5955 = vmatprep.subr.bf16.mxu0 %v4504
    %5956 = vmatpush1.bf16.msra.mxu0 %v4503
    %5957 = vmatprep.subr.bf16.mxu0 %v4624
    %5958 = vmatpush2.bf16.msra.mxu0 %v4623
    %5959 = vmatprep.subr.bf16.mxu0 %v4616
    %5960 = vmatpush2.bf16.msra.mxu0 %v4615
    %5961 = vmatprep.subr.bf16.mxu0 %v4608
    %5962 = vmatpush2.bf16.msra.mxu0 %v4607
    %5963 = vmatprep.subr.bf16.mxu0 %v4600
    %5964 = vmatpush2.bf16.msra.mxu0 %v4599
    %5965 = vmatprep.subr.bf16.mxu0 %v4592
    %5966 = vmatpush2.bf16.msra.mxu0 %v4591
    %5967 = vmatprep.subr.bf16.mxu0 %v4584
    %5968 = vmatpush2.bf16.msra.mxu0 %v4583
    %5969 = vmatprep.subr.bf16.mxu0 %v4576
    %5970 = vmatpush2.bf16.msra.mxu0 %v4575
    %5971 = vmatprep.subr.bf16.mxu0 %v4568
    %5972 = vmatpush2.bf16.msra.mxu0 %v4567
    %5973 = vmatprep.mubr.bf16.mxu0 %v5858
    %5974 = vmatmul.mubr.bf16.gmra.mxu0 %v5857
    %v5975 = vpop.f32.mrf.mxu0
    %v5976 = vadd.f32 0.0, %v5975
    %v5977 = vpop.f32.mrf.mxu0
    %v5978 = vadd.f32 0.0, %v5977
    %v5979 = vpop.f32.mrf.mxu0
    %v5980 = vpop.f32.mrf.mxu0
    %5981 = vdwg.mxu0
    %5982 = vmatprep.subr.bf16.mxu0 %v4562
    %5983 = vmatpush1.bf16.msra.mxu0 %v4561
    %5984 = vmatprep.subr.bf16.mxu0 %v4554
    %5985 = vmatpush1.bf16.msra.mxu0 %v4553
    %5986 = vmatprep.subr.bf16.mxu0 %v4546
    %5987 = vmatpush1.bf16.msra.mxu0 %v4545
    %5988 = vmatprep.subr.bf16.mxu0 %v4538
    %5989 = vmatpush1.bf16.msra.mxu0 %v4537
    %5990 = vmatprep.subr.bf16.mxu0 %v4530
    %5991 = vmatpush1.bf16.msra.mxu0 %v4529
    %5992 = vmatprep.subr.bf16.mxu0 %v4522
    %5993 = vmatpush1.bf16.msra.mxu0 %v4521
    %5994 = vmatprep.subr.bf16.mxu0 %v4514
    %5995 = vmatpush1.bf16.msra.mxu0 %v4513
    %5996 = vmatprep.subr.bf16.mxu0 %v4506
    %5997 = vmatpush1.bf16.msra.mxu0 %v4505
    %5998 = vmatprep.subr.bf16.mxu0 %v4626
    %5999 = vmatpush2.bf16.msra.mxu0 %v4625
    %6000 = vmatprep.subr.bf16.mxu0 %v4618
    %6001 = vmatpush2.bf16.msra.mxu0 %v4617
    %6002 = vmatprep.subr.bf16.mxu0 %v4610
    %6003 = vmatpush2.bf16.msra.mxu0 %v4609
    %6004 = vmatprep.subr.bf16.mxu0 %v4602
    %6005 = vmatpush2.bf16.msra.mxu0 %v4601
    %6006 = vmatprep.subr.bf16.mxu0 %v4594
    %6007 = vmatpush2.bf16.msra.mxu0 %v4593
    %6008 = vmatprep.subr.bf16.mxu0 %v4586
    %6009 = vmatpush2.bf16.msra.mxu0 %v4585
    %6010 = vmatprep.subr.bf16.mxu0 %v4578
    %6011 = vmatpush2.bf16.msra.mxu0 %v4577
    %6012 = vmatprep.subr.bf16.mxu0 %v4570
    %6013 = vmatpush2.bf16.msra.mxu0 %v4569
    %6014 = vmatprep.mubr.bf16.mxu0 %v5858
    %6015 = vmatmul.mubr.bf16.gmra.mxu0 %v5857
    %v6016 = vpop.f32.mrf.mxu0
    %v6017 = vadd.f32 0.0, %v6016
    %v6018 = vpop.f32.mrf.mxu0
    %v6019 = vadd.f32 0.0, %v6018
    %v6020 = vpop.f32.mrf.mxu0
    %v6021 = vpop.f32.mrf.mxu0
    %6022 = vdwg.mxu0
    %v6023 = vadd.f32 %v5838, %v5894
    %v6024 = vadd.f32 %v5839, %v5896
    %v6025 = vadd.f32 %v5840, %v5935
    %v6026 = vadd.f32 %v5841, %v5937
    %v6027 = vadd.f32 %v5842, %v5976
    %v6028 = vadd.f32 %v5843, %v5978
    %v6029 = vadd.f32 %v5844, %v6017
    %v6030 = vadd.f32 %v5845, %v6019
    %v6031 = vpack.c.bf16 %v5833, %v5833
    %v6032 = vpack.c.bf16 %v5834, %v5834
    %6033 = vmatprep.subr.bf16.mxu0 %v5368
    %6034 = vmatpush1.bf16.msra.mxu0 %v5367
    %6035 = vmatprep.subr.bf16.mxu0 %v5360
    %6036 = vmatpush1.bf16.msra.mxu0 %v5359
    %6037 = vmatprep.subr.bf16.mxu0 %v5352
    %6038 = vmatpush1.bf16.msra.mxu0 %v5351
    %6039 = vmatprep.subr.bf16.mxu0 %v5344
    %6040 = vmatpush1.bf16.msra.mxu0 %v5343
    %6041 = vmatprep.subr.bf16.mxu0 %v5336
    %6042 = vmatpush1.bf16.msra.mxu0 %v5335
    %6043 = vmatprep.subr.bf16.mxu0 %v5328
    %6044 = vmatpush1.bf16.msra.mxu0 %v5327
    %6045 = vmatprep.subr.bf16.mxu0 %v5320
    %6046 = vmatpush1.bf16.msra.mxu0 %v5319
    %6047 = vmatprep.subr.bf16.mxu0 %v5312
    %6048 = vmatpush1.bf16.msra.mxu0 %v5311
    %6049 = vmatprep.subr.bf16.mxu0 %v5432
    %6050 = vmatpush2.bf16.msra.mxu0 %v5431
    %6051 = vmatprep.subr.bf16.mxu0 %v5424
    %6052 = vmatpush2.bf16.msra.mxu0 %v5423
    %6053 = vmatprep.subr.bf16.mxu0 %v5416
    %6054 = vmatpush2.bf16.msra.mxu0 %v5415
    %6055 = vmatprep.subr.bf16.mxu0 %v5408
    %6056 = vmatpush2.bf16.msra.mxu0 %v5407
    %6057 = vmatprep.subr.bf16.mxu0 %v5400
    %6058 = vmatpush2.bf16.msra.mxu0 %v5399
    %6059 = vmatprep.subr.bf16.mxu0 %v5392
    %6060 = vmatpush2.bf16.msra.mxu0 %v5391
    %6061 = vmatprep.subr.bf16.mxu0 %v5384
    %6062 = vmatpush2.bf16.msra.mxu0 %v5383
    %6063 = vmatprep.subr.bf16.mxu0 %v5376
    %6064 = vmatpush2.bf16.msra.mxu0 %v5375
    %6065 = vmatprep.mubr.bf16.mxu0 %v6032
    %6066 = vmatmul.mubr.bf16.gmra.mxu0 %v6031
    %v6067 = vpop.f32.mrf.mxu0
    %v6068 = vadd.f32 0.0, %v6067
    %v6069 = vpop.f32.mrf.mxu0
    %v6070 = vadd.f32 0.0, %v6069
    %v6071 = vpop.f32.mrf.mxu0
    %v6072 = vpop.f32.mrf.mxu0
    %6073 = vdwg.mxu0
    %6074 = vmatprep.subr.bf16.mxu0 %v5370
    %6075 = vmatpush1.bf16.msra.mxu0 %v5369
    %6076 = vmatprep.subr.bf16.mxu0 %v5362
    %6077 = vmatpush1.bf16.msra.mxu0 %v5361
    %6078 = vmatprep.subr.bf16.mxu0 %v5354
    %6079 = vmatpush1.bf16.msra.mxu0 %v5353
    %6080 = vmatprep.subr.bf16.mxu0 %v5346
    %6081 = vmatpush1.bf16.msra.mxu0 %v5345
    %6082 = vmatprep.subr.bf16.mxu0 %v5338
    %6083 = vmatpush1.bf16.msra.mxu0 %v5337
    %6084 = vmatprep.subr.bf16.mxu0 %v5330
    %6085 = vmatpush1.bf16.msra.mxu0 %v5329
    %6086 = vmatprep.subr.bf16.mxu0 %v5322
    %6087 = vmatpush1.bf16.msra.mxu0 %v5321
    %6088 = vmatprep.subr.bf16.mxu0 %v5314
    %6089 = vmatpush1.bf16.msra.mxu0 %v5313
    %6090 = vmatprep.subr.bf16.mxu0 %v5434
    %6091 = vmatpush2.bf16.msra.mxu0 %v5433
    %6092 = vmatprep.subr.bf16.mxu0 %v5426
    %6093 = vmatpush2.bf16.msra.mxu0 %v5425
    %6094 = vmatprep.subr.bf16.mxu0 %v5418
    %6095 = vmatpush2.bf16.msra.mxu0 %v5417
    %6096 = vmatprep.subr.bf16.mxu0 %v5410
    %6097 = vmatpush2.bf16.msra.mxu0 %v5409
    %6098 = vmatprep.subr.bf16.mxu0 %v5402
    %6099 = vmatpush2.bf16.msra.mxu0 %v5401
    %6100 = vmatprep.subr.bf16.mxu0 %v5394
    %6101 = vmatpush2.bf16.msra.mxu0 %v5393
    %6102 = vmatprep.subr.bf16.mxu0 %v5386
    %6103 = vmatpush2.bf16.msra.mxu0 %v5385
    %6104 = vmatprep.subr.bf16.mxu0 %v5378
    %6105 = vmatpush2.bf16.msra.mxu0 %v5377
    %6106 = vmatprep.mubr.bf16.mxu0 %v6032
    %6107 = vmatmul.mubr.bf16.gmra.mxu0 %v6031
    %v6108 = vpop.f32.mrf.mxu0
    %v6109 = vadd.f32 0.0, %v6108
    %v6110 = vpop.f32.mrf.mxu0
    %v6111 = vadd.f32 0.0, %v6110
    %v6112 = vpop.f32.mrf.mxu0
    %v6113 = vpop.f32.mrf.mxu0
    %6114 = vdwg.mxu0
    %6115 = vmatprep.subr.bf16.mxu0 %v5372
    %6116 = vmatpush1.bf16.msra.mxu0 %v5371
    %6117 = vmatprep.subr.bf16.mxu0 %v5364
    %6118 = vmatpush1.bf16.msra.mxu0 %v5363
    %6119 = vmatprep.subr.bf16.mxu0 %v5356
    %6120 = vmatpush1.bf16.msra.mxu0 %v5355
    %6121 = vmatprep.subr.bf16.mxu0 %v5348
    %6122 = vmatpush1.bf16.msra.mxu0 %v5347
    %6123 = vmatprep.subr.bf16.mxu0 %v5340
    %6124 = vmatpush1.bf16.msra.mxu0 %v5339
    %6125 = vmatprep.subr.bf16.mxu0 %v5332
    %6126 = vmatpush1.bf16.msra.mxu0 %v5331
    %6127 = vmatprep.subr.bf16.mxu0 %v5324
    %6128 = vmatpush1.bf16.msra.mxu0 %v5323
    %6129 = vmatprep.subr.bf16.mxu0 %v5316
    %6130 = vmatpush1.bf16.msra.mxu0 %v5315
    %6131 = vmatprep.subr.bf16.mxu0 %v5436
    %6132 = vmatpush2.bf16.msra.mxu0 %v5435
    %6133 = vmatprep.subr.bf16.mxu0 %v5428
    %6134 = vmatpush2.bf16.msra.mxu0 %v5427
    %6135 = vmatprep.subr.bf16.mxu0 %v5420
    %6136 = vmatpush2.bf16.msra.mxu0 %v5419
    %6137 = vmatprep.subr.bf16.mxu0 %v5412
    %6138 = vmatpush2.bf16.msra.mxu0 %v5411
    %6139 = vmatprep.subr.bf16.mxu0 %v5404
    %6140 = vmatpush2.bf16.msra.mxu0 %v5403
    %6141 = vmatprep.subr.bf16.mxu0 %v5396
    %6142 = vmatpush2.bf16.msra.mxu0 %v5395
    %6143 = vmatprep.subr.bf16.mxu0 %v5388
    %6144 = vmatpush2.bf16.msra.mxu0 %v5387
    %6145 = vmatprep.subr.bf16.mxu0 %v5380
    %6146 = vmatpush2.bf16.msra.mxu0 %v5379
    %6147 = vmatprep.mubr.bf16.mxu0 %v6032
    %6148 = vmatmul.mubr.bf16.gmra.mxu0 %v6031
    %v6149 = vpop.f32.mrf.mxu0
    %v6150 = vadd.f32 0.0, %v6149
    %v6151 = vpop.f32.mrf.mxu0
    %v6152 = vadd.f32 0.0, %v6151
    %v6153 = vpop.f32.mrf.mxu0
    %v6154 = vpop.f32.mrf.mxu0
    %6155 = vdwg.mxu0
    %6156 = vmatprep.subr.bf16.mxu0 %v5374
    %6157 = vmatpush1.bf16.msra.mxu0 %v5373
    %6158 = vmatprep.subr.bf16.mxu0 %v5366
    %6159 = vmatpush1.bf16.msra.mxu0 %v5365
    %6160 = vmatprep.subr.bf16.mxu0 %v5358
    %6161 = vmatpush1.bf16.msra.mxu0 %v5357
    %6162 = vmatprep.subr.bf16.mxu0 %v5350
    %6163 = vmatpush1.bf16.msra.mxu0 %v5349
    %6164 = vmatprep.subr.bf16.mxu0 %v5342
    %6165 = vmatpush1.bf16.msra.mxu0 %v5341
    %6166 = vmatprep.subr.bf16.mxu0 %v5334
    %6167 = vmatpush1.bf16.msra.mxu0 %v5333
    %6168 = vmatprep.subr.bf16.mxu0 %v5326
    %6169 = vmatpush1.bf16.msra.mxu0 %v5325
    %6170 = vmatprep.subr.bf16.mxu0 %v5318
    %6171 = vmatpush1.bf16.msra.mxu0 %v5317
    %6172 = vmatprep.subr.bf16.mxu0 %v5438
    %6173 = vmatpush2.bf16.msra.mxu0 %v5437
    %6174 = vmatprep.subr.bf16.mxu0 %v5430
    %6175 = vmatpush2.bf16.msra.mxu0 %v5429
    %6176 = vmatprep.subr.bf16.mxu0 %v5422
    %6177 = vmatpush2.bf16.msra.mxu0 %v5421
    %6178 = vmatprep.subr.bf16.mxu0 %v5414
    %6179 = vmatpush2.bf16.msra.mxu0 %v5413
    %6180 = vmatprep.subr.bf16.mxu0 %v5406
    %6181 = vmatpush2.bf16.msra.mxu0 %v5405
    %6182 = vmatprep.subr.bf16.mxu0 %v5398
    %6183 = vmatpush2.bf16.msra.mxu0 %v5397
    %6184 = vmatprep.subr.bf16.mxu0 %v5390
    %6185 = vmatpush2.bf16.msra.mxu0 %v5389
    %6186 = vmatprep.subr.bf16.mxu0 %v5382
    %6187 = vmatpush2.bf16.msra.mxu0 %v5381
    %6188 = vmatprep.mubr.bf16.mxu0 %v6032
    %6189 = vmatmul.mubr.bf16.gmra.mxu0 %v6031
    %v6190 = vpop.f32.mrf.mxu0
    %v6191 = vadd.f32 0.0, %v6190
    %v6192 = vpop.f32.mrf.mxu0
    %v6193 = vadd.f32 0.0, %v6192
    %v6194 = vpop.f32.mrf.mxu0
    %v6195 = vpop.f32.mrf.mxu0
    %6196 = vdwg.mxu0
    %v6197 = vadd.f32 %v5849, %v6068
    %v6198 = vadd.f32 %v5850, %v6070
    %v6199 = vadd.f32 %v5851, %v6109
    %v6200 = vadd.f32 %v5852, %v6111
    %v6201 = vadd.f32 %v5853, %v6150
    %v6202 = vadd.f32 %v5854, %v6152
    %v6203 = vadd.f32 %v5855, %v6191
    %v6204 = vadd.f32 %v5856, %v6193
    %v6205 = vxor.u32 %v6023, 2147483648
    %v6206 = vxor.u32 %v6024, 2147483648
    %v6207 = vmul.f32 %v6205, 1.442695
    %v6208 = vpow.pop %v6207
    %v6209 = vmul.f32 %v6206, 1.442695
    %v6210 = vpow.pop %v6209
    %v6211 = vadd.f32 %v6208, 1.0
    %v6212 = vadd.f32 %v6210, 1.0
    %v6213 = vrcp.pop %v6211
    %v6214 = vmul.f32 1.0, %v6213
    %v6215 = vrcp.pop %v6212
    %v6216 = vmul.f32 1.0, %v6215
    %v6217 = vxor.u32 %v6025, 2147483648
    %v6218 = vxor.u32 %v6026, 2147483648
    %v6219 = vmul.f32 %v6217, 1.442695
    %v6220 = vpow.pop %v6219
    %v6221 = vmul.f32 %v6218, 1.442695
    %v6222 = vpow.pop %v6221
    %v6223 = vadd.f32 %v6220, 1.0
    %v6224 = vadd.f32 %v6222, 1.0
    %v6225 = vrcp.pop %v6223
    %v6226 = vmul.f32 1.0, %v6225
    %v6227 = vrcp.pop %v6224
    %v6228 = vmul.f32 1.0, %v6227
    %v6229 = vtanh.pop %v6027
    %v6230 = vtanh.pop %v6028
    %v6231 = vxor.u32 %v6029, 2147483648
    %v6232 = vxor.u32 %v6030, 2147483648
    %v6233 = vmul.f32 %v6231, 1.442695
    %v6234 = vpow.pop %v6233
    %v6235 = vmul.f32 %v6232, 1.442695
    %v6236 = vpow.pop %v6235
    %v6237 = vadd.f32 %v6234, 1.0
    %v6238 = vadd.f32 %v6236, 1.0
    %v6239 = vrcp.pop %v6237
    %v6240 = vmul.f32 1.0, %v6239
    %v6241 = vrcp.pop %v6238
    %v6242 = vmul.f32 1.0, %v6241
    %v6243 = vmul.f32 %v6226, %v5781
    %v6244 = vmul.f32 %v6228, %v5782
    %v6245 = vmul.f32 %v6214, %v6229
    %v6246 = vmul.f32 %v6216, %v6230
    %v6247 = vadd.f32 %v6243, %v6245
    %v6248 = vadd.f32 %v6244, %v6246
    %v6249 = vtanh.pop %v6247
    %v6250 = vtanh.pop %v6248
    %v6251 = vmul.f32 %v6240, %v6249
    %v6252 = vmul.f32 %v6242, %v6250
    %v6253 = vxor.u32 %v6197, 2147483648
    %v6254 = vxor.u32 %v6198, 2147483648
    %v6255 = vmul.f32 %v6253, 1.442695
    %v6256 = vpow.pop %v6255
    %v6257 = vmul.f32 %v6254, 1.442695
    %v6258 = vpow.pop %v6257
    %v6259 = vadd.f32 %v6256, 1.0
    %v6260 = vadd.f32 %v6258, 1.0
    %v6261 = vrcp.pop %v6259
    %v6262 = vmul.f32 1.0, %v6261
    %v6263 = vrcp.pop %v6260
    %v6264 = vmul.f32 1.0, %v6263
    %v6265 = vxor.u32 %v6199, 2147483648
    %v6266 = vxor.u32 %v6200, 2147483648
    %v6267 = vmul.f32 %v6265, 1.442695
    %v6268 = vpow.pop %v6267
    %v6269 = vmul.f32 %v6266, 1.442695
    %v6270 = vpow.pop %v6269
    %v6271 = vadd.f32 %v6268, 1.0
    %v6272 = vadd.f32 %v6270, 1.0
    %v6273 = vrcp.pop %v6271
    %v6274 = vmul.f32 1.0, %v6273
    %v6275 = vrcp.pop %v6272
    %v6276 = vmul.f32 1.0, %v6275
    %v6277 = vtanh.pop %v6201
    %v6278 = vtanh.pop %v6202
    %v6279 = vxor.u32 %v6203, 2147483648
    %v6280 = vxor.u32 %v6204, 2147483648
    %v6281 = vmul.f32 %v6279, 1.442695
    %v6282 = vpow.pop %v6281
    %v6283 = vmul.f32 %v6280, 1.442695
    %v6284 = vpow.pop %v6283
    %v6285 = vadd.f32 %v6282, 1.0
    %v6286 = vadd.f32 %v6284, 1.0
    %v6287 = vrcp.pop %v6285
    %v6288 = vmul.f32 1.0, %v6287
    %v6289 = vrcp.pop %v6286
    %v6290 = vmul.f32 1.0, %v6289
    %v6291 = vmul.f32 %v6274, %v5829
    %v6292 = vmul.f32 %v6276, %v5830
    %v6293 = vmul.f32 %v6262, %v6277
    %v6294 = vmul.f32 %v6264, %v6278
    %v6295 = vadd.f32 %v6291, %v6293
    %v6296 = vadd.f32 %v6292, %v6294
    %v6297 = vtanh.pop %v6295
    %v6298 = vtanh.pop %v6296
    %v6299 = vmul.f32 %v6288, %v6297
    %v6300 = vmul.f32 %v6290, %v6298
    %s6301 = smul.u32 2, 16
    %s6302 = smul.addr %s6301, 8
    %s6303 = scalar_lea.vmem [#allocation2], %s6302
    %v6304 = vld [vmem:[%s6303] sm:$0xff]
    %v6305 = vld [vmem:[%s6303 + $0x8] sm:$0xff]
    %v6306 = vld [vmem:[%s6303 + $0x10] sm:$0xff]
    %v6307 = vld [vmem:[%s6303 + $0x18] sm:$0xff]
    %v6308 = vld [vmem:[%s6303 + $0x20] sm:$0xff]
    %v6309 = vld [vmem:[%s6303 + $0x28] sm:$0xff]
    %v6310 = vld [vmem:[%s6303 + $0x30] sm:$0xff]
    %v6311 = vld [vmem:[%s6303 + $0x38] sm:$0xff]
    %s6312 = smul.u32 5, 16
    %s6313 = smul.addr %s6312, 8
    %s6314 = scalar_lea.vmem [#allocation2], %s6313
    %v6315 = vld [vmem:[%s6314 + $0x40] sm:$0xff]
    %v6316 = vld [vmem:[%s6314 + $0x48] sm:$0xff]
    %v6317 = vld [vmem:[%s6314 + $0x50] sm:$0xff]
    %v6318 = vld [vmem:[%s6314 + $0x58] sm:$0xff]
    %v6319 = vld [vmem:[%s6314 + $0x60] sm:$0xff]
    %v6320 = vld [vmem:[%s6314 + $0x68] sm:$0xff]
    %v6321 = vld [vmem:[%s6314 + $0x70] sm:$0xff]
    %v6322 = vld [vmem:[%s6314 + $0x78] sm:$0xff]
    %v6323 = vpack.c.bf16 %v6251, %v6251
    %v6324 = vpack.c.bf16 %v6252, %v6252
    %6325 = vmatprep.subr.bf16.mxu0 %v4556
    %6326 = vmatpush1.bf16.msra.mxu0 %v4555
    %6327 = vmatprep.subr.bf16.mxu0 %v4548
    %6328 = vmatpush1.bf16.msra.mxu0 %v4547
    %6329 = vmatprep.subr.bf16.mxu0 %v4540
    %6330 = vmatpush1.bf16.msra.mxu0 %v4539
    %6331 = vmatprep.subr.bf16.mxu0 %v4532
    %6332 = vmatpush1.bf16.msra.mxu0 %v4531
    %6333 = vmatprep.subr.bf16.mxu0 %v4524
    %6334 = vmatpush1.bf16.msra.mxu0 %v4523
    %6335 = vmatprep.subr.bf16.mxu0 %v4516
    %6336 = vmatpush1.bf16.msra.mxu0 %v4515
    %6337 = vmatprep.subr.bf16.mxu0 %v4508
    %6338 = vmatpush1.bf16.msra.mxu0 %v4507
    %6339 = vmatprep.subr.bf16.mxu0 %v4500
    %6340 = vmatpush1.bf16.msra.mxu0 %v4499
    %6341 = vmatprep.subr.bf16.mxu0 %v4620
    %6342 = vmatpush2.bf16.msra.mxu0 %v4619
    %6343 = vmatprep.subr.bf16.mxu0 %v4612
    %6344 = vmatpush2.bf16.msra.mxu0 %v4611
    %6345 = vmatprep.subr.bf16.mxu0 %v4604
    %6346 = vmatpush2.bf16.msra.mxu0 %v4603
    %6347 = vmatprep.subr.bf16.mxu0 %v4596
    %6348 = vmatpush2.bf16.msra.mxu0 %v4595
    %6349 = vmatprep.subr.bf16.mxu0 %v4588
    %6350 = vmatpush2.bf16.msra.mxu0 %v4587
    %6351 = vmatprep.subr.bf16.mxu0 %v4580
    %6352 = vmatpush2.bf16.msra.mxu0 %v4579
    %6353 = vmatprep.subr.bf16.mxu0 %v4572
    %6354 = vmatpush2.bf16.msra.mxu0 %v4571
    %6355 = vmatprep.subr.bf16.mxu0 %v4564
    %6356 = vmatpush2.bf16.msra.mxu0 %v4563
    %6357 = vmatprep.mubr.bf16.mxu0 %v6324
    %6358 = vmatmul.mubr.bf16.gmra.mxu0 %v6323
    %v6359 = vpop.f32.mrf.mxu0
    %v6360 = vadd.f32 0.0, %v6359
    %v6361 = vpop.f32.mrf.mxu0
    %v6362 = vadd.f32 0.0, %v6361
    %v6363 = vpop.f32.mrf.mxu0
    %v6364 = vpop.f32.mrf.mxu0
    %6365 = vdwg.mxu0
    %6366 = vmatprep.subr.bf16.mxu0 %v4558
    %6367 = vmatpush1.bf16.msra.mxu0 %v4557
    %6368 = vmatprep.subr.bf16.mxu0 %v4550
    %6369 = vmatpush1.bf16.msra.mxu0 %v4549
    %6370 = vmatprep.subr.bf16.mxu0 %v4542
    %6371 = vmatpush1.bf16.msra.mxu0 %v4541
    %6372 = vmatprep.subr.bf16.mxu0 %v4534
    %6373 = vmatpush1.bf16.msra.mxu0 %v4533
    %6374 = vmatprep.subr.bf16.mxu0 %v4526
    %6375 = vmatpush1.bf16.msra.mxu0 %v4525
    %6376 = vmatprep.subr.bf16.mxu0 %v4518
    %6377 = vmatpush1.bf16.msra.mxu0 %v4517
    %6378 = vmatprep.subr.bf16.mxu0 %v4510
    %6379 = vmatpush1.bf16.msra.mxu0 %v4509
    %6380 = vmatprep.subr.bf16.mxu0 %v4502
    %6381 = vmatpush1.bf16.msra.mxu0 %v4501
    %6382 = vmatprep.subr.bf16.mxu0 %v4622
    %6383 = vmatpush2.bf16.msra.mxu0 %v4621
    %6384 = vmatprep.subr.bf16.mxu0 %v4614
    %6385 = vmatpush2.bf16.msra.mxu0 %v4613
    %6386 = vmatprep.subr.bf16.mxu0 %v4606
    %6387 = vmatpush2.bf16.msra.mxu0 %v4605
    %6388 = vmatprep.subr.bf16.mxu0 %v4598
    %6389 = vmatpush2.bf16.msra.mxu0 %v4597
    %6390 = vmatprep.subr.bf16.mxu0 %v4590
    %6391 = vmatpush2.bf16.msra.mxu0 %v4589
    %6392 = vmatprep.subr.bf16.mxu0 %v4582
    %6393 = vmatpush2.bf16.msra.mxu0 %v4581
    %6394 = vmatprep.subr.bf16.mxu0 %v4574
    %6395 = vmatpush2.bf16.msra.mxu0 %v4573
    %6396 = vmatprep.subr.bf16.mxu0 %v4566
    %6397 = vmatpush2.bf16.msra.mxu0 %v4565
    %6398 = vmatprep.mubr.bf16.mxu0 %v6324
    %6399 = vmatmul.mubr.bf16.gmra.mxu0 %v6323
    %v6400 = vpop.f32.mrf.mxu0
    %v6401 = vadd.f32 0.0, %v6400
    %v6402 = vpop.f32.mrf.mxu0
    %v6403 = vadd.f32 0.0, %v6402
    %v6404 = vpop.f32.mrf.mxu0
    %v6405 = vpop.f32.mrf.mxu0
    %6406 = vdwg.mxu0
    %6407 = vmatprep.subr.bf16.mxu0 %v4560
    %6408 = vmatpush1.bf16.msra.mxu0 %v4559
    %6409 = vmatprep.subr.bf16.mxu0 %v4552
    %6410 = vmatpush1.bf16.msra.mxu0 %v4551
    %6411 = vmatprep.subr.bf16.mxu0 %v4544
    %6412 = vmatpush1.bf16.msra.mxu0 %v4543
    %6413 = vmatprep.subr.bf16.mxu0 %v4536
    %6414 = vmatpush1.bf16.msra.mxu0 %v4535
    %6415 = vmatprep.subr.bf16.mxu0 %v4528
    %6416 = vmatpush1.bf16.msra.mxu0 %v4527
    %6417 = vmatprep.subr.bf16.mxu0 %v4520
    %6418 = vmatpush1.bf16.msra.mxu0 %v4519
    %6419 = vmatprep.subr.bf16.mxu0 %v4512
    %6420 = vmatpush1.bf16.msra.mxu0 %v4511
    %6421 = vmatprep.subr.bf16.mxu0 %v4504
    %6422 = vmatpush1.bf16.msra.mxu0 %v4503
    %6423 = vmatprep.subr.bf16.mxu0 %v4624
    %6424 = vmatpush2.bf16.msra.mxu0 %v4623
    %6425 = vmatprep.subr.bf16.mxu0 %v4616
    %6426 = vmatpush2.bf16.msra.mxu0 %v4615
    %6427 = vmatprep.subr.bf16.mxu0 %v4608
    %6428 = vmatpush2.bf16.msra.mxu0 %v4607
    %6429 = vmatprep.subr.bf16.mxu0 %v4600
    %6430 = vmatpush2.bf16.msra.mxu0 %v4599
    %6431 = vmatprep.subr.bf16.mxu0 %v4592
    %6432 = vmatpush2.bf16.msra.mxu0 %v4591
    %6433 = vmatprep.subr.bf16.mxu0 %v4584
    %6434 = vmatpush2.bf16.msra.mxu0 %v4583
    %6435 = vmatprep.subr.bf16.mxu0 %v4576
    %6436 = vmatpush2.bf16.msra.mxu0 %v4575
    %6437 = vmatprep.subr.bf16.mxu0 %v4568
    %6438 = vmatpush2.bf16.msra.mxu0 %v4567
    %6439 = vmatprep.mubr.bf16.mxu0 %v6324
    %6440 = vmatmul.mubr.bf16.gmra.mxu0 %v6323
    %v6441 = vpop.f32.mrf.mxu0
    %v6442 = vadd.f32 0.0, %v6441
    %v6443 = vpop.f32.mrf.mxu0
    %v6444 = vadd.f32 0.0, %v6443
    %v6445 = vpop.f32.mrf.mxu0
    %v6446 = vpop.f32.mrf.mxu0
    %6447 = vdwg.mxu0
    %6448 = vmatprep.subr.bf16.mxu0 %v4562
    %6449 = vmatpush1.bf16.msra.mxu0 %v4561
    %6450 = vmatprep.subr.bf16.mxu0 %v4554
    %6451 = vmatpush1.bf16.msra.mxu0 %v4553
    %6452 = vmatprep.subr.bf16.mxu0 %v4546
    %6453 = vmatpush1.bf16.msra.mxu0 %v4545
    %6454 = vmatprep.subr.bf16.mxu0 %v4538
    %6455 = vmatpush1.bf16.msra.mxu0 %v4537
    %6456 = vmatprep.subr.bf16.mxu0 %v4530
    %6457 = vmatpush1.bf16.msra.mxu0 %v4529
    %6458 = vmatprep.subr.bf16.mxu0 %v4522
    %6459 = vmatpush1.bf16.msra.mxu0 %v4521
    %6460 = vmatprep.subr.bf16.mxu0 %v4514
    %6461 = vmatpush1.bf16.msra.mxu0 %v4513
    %6462 = vmatprep.subr.bf16.mxu0 %v4506
    %6463 = vmatpush1.bf16.msra.mxu0 %v4505
    %6464 = vmatprep.subr.bf16.mxu0 %v4626
    %6465 = vmatpush2.bf16.msra.mxu0 %v4625
    %6466 = vmatprep.subr.bf16.mxu0 %v4618
    %6467 = vmatpush2.bf16.msra.mxu0 %v4617
    %6468 = vmatprep.subr.bf16.mxu0 %v4610
    %6469 = vmatpush2.bf16.msra.mxu0 %v4609
    %6470 = vmatprep.subr.bf16.mxu0 %v4602
    %6471 = vmatpush2.bf16.msra.mxu0 %v4601
    %6472 = vmatprep.subr.bf16.mxu0 %v4594
    %6473 = vmatpush2.bf16.msra.mxu0 %v4593
    %6474 = vmatprep.subr.bf16.mxu0 %v4586
    %6475 = vmatpush2.bf16.msra.mxu0 %v4585
    %6476 = vmatprep.subr.bf16.mxu0 %v4578
    %6477 = vmatpush2.bf16.msra.mxu0 %v4577
    %6478 = vmatprep.subr.bf16.mxu0 %v4570
    %6479 = vmatpush2.bf16.msra.mxu0 %v4569
    %6480 = vmatprep.mubr.bf16.mxu0 %v6324
    %6481 = vmatmul.mubr.bf16.gmra.mxu0 %v6323
    %v6482 = vpop.f32.mrf.mxu0
    %v6483 = vadd.f32 0.0, %v6482
    %v6484 = vpop.f32.mrf.mxu0
    %v6485 = vadd.f32 0.0, %v6484
    %v6486 = vpop.f32.mrf.mxu0
    %v6487 = vpop.f32.mrf.mxu0
    %6488 = vdwg.mxu0
    %v6489 = vadd.f32 %v6304, %v6360
    %v6490 = vadd.f32 %v6305, %v6362
    %v6491 = vadd.f32 %v6306, %v6401
    %v6492 = vadd.f32 %v6307, %v6403
    %v6493 = vadd.f32 %v6308, %v6442
    %v6494 = vadd.f32 %v6309, %v6444
    %v6495 = vadd.f32 %v6310, %v6483
    %v6496 = vadd.f32 %v6311, %v6485
    %v6497 = vpack.c.bf16 %v6299, %v6299
    %v6498 = vpack.c.bf16 %v6300, %v6300
    %6499 = vmatprep.subr.bf16.mxu0 %v5368
    %6500 = vmatpush1.bf16.msra.mxu0 %v5367
    %6501 = vmatprep.subr.bf16.mxu0 %v5360
    %6502 = vmatpush1.bf16.msra.mxu0 %v5359
    %6503 = vmatprep.subr.bf16.mxu0 %v5352
    %6504 = vmatpush1.bf16.msra.mxu0 %v5351
    %6505 = vmatprep.subr.bf16.mxu0 %v5344
    %6506 = vmatpush1.bf16.msra.mxu0 %v5343
    %6507 = vmatprep.subr.bf16.mxu0 %v5336
    %6508 = vmatpush1.bf16.msra.mxu0 %v5335
    %6509 = vmatprep.subr.bf16.mxu0 %v5328
    %6510 = vmatpush1.bf16.msra.mxu0 %v5327
    %6511 = vmatprep.subr.bf16.mxu0 %v5320
    %6512 = vmatpush1.bf16.msra.mxu0 %v5319
    %6513 = vmatprep.subr.bf16.mxu0 %v5312
    %6514 = vmatpush1.bf16.msra.mxu0 %v5311
    %6515 = vmatprep.subr.bf16.mxu0 %v5432
    %6516 = vmatpush2.bf16.msra.mxu0 %v5431
    %6517 = vmatprep.subr.bf16.mxu0 %v5424
    %6518 = vmatpush2.bf16.msra.mxu0 %v5423
    %6519 = vmatprep.subr.bf16.mxu0 %v5416
    %6520 = vmatpush2.bf16.msra.mxu0 %v5415
    %6521 = vmatprep.subr.bf16.mxu0 %v5408
    %6522 = vmatpush2.bf16.msra.mxu0 %v5407
    %6523 = vmatprep.subr.bf16.mxu0 %v5400
    %6524 = vmatpush2.bf16.msra.mxu0 %v5399
    %6525 = vmatprep.subr.bf16.mxu0 %v5392
    %6526 = vmatpush2.bf16.msra.mxu0 %v5391
    %6527 = vmatprep.subr.bf16.mxu0 %v5384
    %6528 = vmatpush2.bf16.msra.mxu0 %v5383
    %6529 = vmatprep.subr.bf16.mxu0 %v5376
    %6530 = vmatpush2.bf16.msra.mxu0 %v5375
    %6531 = vmatprep.mubr.bf16.mxu0 %v6498
    %6532 = vmatmul.mubr.bf16.gmra.mxu0 %v6497
    %v6533 = vpop.f32.mrf.mxu0
    %v6534 = vadd.f32 0.0, %v6533
    %v6535 = vpop.f32.mrf.mxu0
    %v6536 = vadd.f32 0.0, %v6535
    %v6537 = vpop.f32.mrf.mxu0
    %v6538 = vpop.f32.mrf.mxu0
    %6539 = vdwg.mxu0
    %6540 = vmatprep.subr.bf16.mxu0 %v5370
    %6541 = vmatpush1.bf16.msra.mxu0 %v5369
    %6542 = vmatprep.subr.bf16.mxu0 %v5362
    %6543 = vmatpush1.bf16.msra.mxu0 %v5361
    %6544 = vmatprep.subr.bf16.mxu0 %v5354
    %6545 = vmatpush1.bf16.msra.mxu0 %v5353
    %6546 = vmatprep.subr.bf16.mxu0 %v5346
    %6547 = vmatpush1.bf16.msra.mxu0 %v5345
    %6548 = vmatprep.subr.bf16.mxu0 %v5338
    %6549 = vmatpush1.bf16.msra.mxu0 %v5337
    %6550 = vmatprep.subr.bf16.mxu0 %v5330
    %6551 = vmatpush1.bf16.msra.mxu0 %v5329
    %6552 = vmatprep.subr.bf16.mxu0 %v5322
    %6553 = vmatpush1.bf16.msra.mxu0 %v5321
    %6554 = vmatprep.subr.bf16.mxu0 %v5314
    %6555 = vmatpush1.bf16.msra.mxu0 %v5313
    %6556 = vmatprep.subr.bf16.mxu0 %v5434
    %6557 = vmatpush2.bf16.msra.mxu0 %v5433
    %6558 = vmatprep.subr.bf16.mxu0 %v5426
    %6559 = vmatpush2.bf16.msra.mxu0 %v5425
    %6560 = vmatprep.subr.bf16.mxu0 %v5418
    %6561 = vmatpush2.bf16.msra.mxu0 %v5417
    %6562 = vmatprep.subr.bf16.mxu0 %v5410
    %6563 = vmatpush2.bf16.msra.mxu0 %v5409
    %6564 = vmatprep.subr.bf16.mxu0 %v5402
    %6565 = vmatpush2.bf16.msra.mxu0 %v5401
    %6566 = vmatprep.subr.bf16.mxu0 %v5394
    %6567 = vmatpush2.bf16.msra.mxu0 %v5393
    %6568 = vmatprep.subr.bf16.mxu0 %v5386
    %6569 = vmatpush2.bf16.msra.mxu0 %v5385
    %6570 = vmatprep.subr.bf16.mxu0 %v5378
    %6571 = vmatpush2.bf16.msra.mxu0 %v5377
    %6572 = vmatprep.mubr.bf16.mxu0 %v6498
    %6573 = vmatmul.mubr.bf16.gmra.mxu0 %v6497
    %v6574 = vpop.f32.mrf.mxu0
    %v6575 = vadd.f32 0.0, %v6574
    %v6576 = vpop.f32.mrf.mxu0
    %v6577 = vadd.f32 0.0, %v6576
    %v6578 = vpop.f32.mrf.mxu0
    %v6579 = vpop.f32.mrf.mxu0
    %6580 = vdwg.mxu0
    %6581 = vmatprep.subr.bf16.mxu0 %v5372
    %6582 = vmatpush1.bf16.msra.mxu0 %v5371
    %6583 = vmatprep.subr.bf16.mxu0 %v5364
    %6584 = vmatpush1.bf16.msra.mxu0 %v5363
    %6585 = vmatprep.subr.bf16.mxu0 %v5356
    %6586 = vmatpush1.bf16.msra.mxu0 %v5355
    %6587 = vmatprep.subr.bf16.mxu0 %v5348
    %6588 = vmatpush1.bf16.msra.mxu0 %v5347
    %6589 = vmatprep.subr.bf16.mxu0 %v5340
    %6590 = vmatpush1.bf16.msra.mxu0 %v5339
    %6591 = vmatprep.subr.bf16.mxu0 %v5332
    %6592 = vmatpush1.bf16.msra.mxu0 %v5331
    %6593 = vmatprep.subr.bf16.mxu0 %v5324
    %6594 = vmatpush1.bf16.msra.mxu0 %v5323
    %6595 = vmatprep.subr.bf16.mxu0 %v5316
    %6596 = vmatpush1.bf16.msra.mxu0 %v5315
    %6597 = vmatprep.subr.bf16.mxu0 %v5436
    %6598 = vmatpush2.bf16.msra.mxu0 %v5435
    %6599 = vmatprep.subr.bf16.mxu0 %v5428
    %6600 = vmatpush2.bf16.msra.mxu0 %v5427
    %6601 = vmatprep.subr.bf16.mxu0 %v5420
    %6602 = vmatpush2.bf16.msra.mxu0 %v5419
    %6603 = vmatprep.subr.bf16.mxu0 %v5412
    %6604 = vmatpush2.bf16.msra.mxu0 %v5411
    %6605 = vmatprep.subr.bf16.mxu0 %v5404
    %6606 = vmatpush2.bf16.msra.mxu0 %v5403
    %6607 = vmatprep.subr.bf16.mxu0 %v5396
    %6608 = vmatpush2.bf16.msra.mxu0 %v5395
    %6609 = vmatprep.subr.bf16.mxu0 %v5388
    %6610 = vmatpush2.bf16.msra.mxu0 %v5387
    %6611 = vmatprep.subr.bf16.mxu0 %v5380
    %6612 = vmatpush2.bf16.msra.mxu0 %v5379
    %6613 = vmatprep.mubr.bf16.mxu0 %v6498
    %6614 = vmatmul.mubr.bf16.gmra.mxu0 %v6497
    %v6615 = vpop.f32.mrf.mxu0
    %v6616 = vadd.f32 0.0, %v6615
    %v6617 = vpop.f32.mrf.mxu0
    %v6618 = vadd.f32 0.0, %v6617
    %v6619 = vpop.f32.mrf.mxu0
    %v6620 = vpop.f32.mrf.mxu0
    %6621 = vdwg.mxu0
    %6622 = vmatprep.subr.bf16.mxu0 %v5374
    %6623 = vmatpush1.bf16.msra.mxu0 %v5373
    %6624 = vmatprep.subr.bf16.mxu0 %v5366
    %6625 = vmatpush1.bf16.msra.mxu0 %v5365
    %6626 = vmatprep.subr.bf16.mxu0 %v5358
    %6627 = vmatpush1.bf16.msra.mxu0 %v5357
    %6628 = vmatprep.subr.bf16.mxu0 %v5350
    %6629 = vmatpush1.bf16.msra.mxu0 %v5349
    %6630 = vmatprep.subr.bf16.mxu0 %v5342
    %6631 = vmatpush1.bf16.msra.mxu0 %v5341
    %6632 = vmatprep.subr.bf16.mxu0 %v5334
    %6633 = vmatpush1.bf16.msra.mxu0 %v5333
    %6634 = vmatprep.subr.bf16.mxu0 %v5326
    %6635 = vmatpush1.bf16.msra.mxu0 %v5325
    %6636 = vmatprep.subr.bf16.mxu0 %v5318
    %6637 = vmatpush1.bf16.msra.mxu0 %v5317
    %6638 = vmatprep.subr.bf16.mxu0 %v5438
    %6639 = vmatpush2.bf16.msra.mxu0 %v5437
    %6640 = vmatprep.subr.bf16.mxu0 %v5430
    %6641 = vmatpush2.bf16.msra.mxu0 %v5429
    %6642 = vmatprep.subr.bf16.mxu0 %v5422
    %6643 = vmatpush2.bf16.msra.mxu0 %v5421
    %6644 = vmatprep.subr.bf16.mxu0 %v5414
    %6645 = vmatpush2.bf16.msra.mxu0 %v5413
    %6646 = vmatprep.subr.bf16.mxu0 %v5406
    %6647 = vmatpush2.bf16.msra.mxu0 %v5405
    %6648 = vmatprep.subr.bf16.mxu0 %v5398
    %6649 = vmatpush2.bf16.msra.mxu0 %v5397
    %6650 = vmatprep.subr.bf16.mxu0 %v5390
    %6651 = vmatpush2.bf16.msra.mxu0 %v5389
    %6652 = vmatprep.subr.bf16.mxu0 %v5382
    %6653 = vmatpush2.bf16.msra.mxu0 %v5381
    %6654 = vmatprep.mubr.bf16.mxu0 %v6498
    %6655 = vmatmul.mubr.bf16.gmra.mxu0 %v6497
    %v6656 = vpop.f32.mrf.mxu0
    %v6657 = vadd.f32 0.0, %v6656
    %v6658 = vpop.f32.mrf.mxu0
    %v6659 = vadd.f32 0.0, %v6658
    %v6660 = vpop.f32.mrf.mxu0
    %v6661 = vpop.f32.mrf.mxu0
    %6662 = vdwg.mxu0
    %v6663 = vadd.f32 %v6315, %v6534
    %v6664 = vadd.f32 %v6316, %v6536
    %v6665 = vadd.f32 %v6317, %v6575
    %v6666 = vadd.f32 %v6318, %v6577
    %v6667 = vadd.f32 %v6319, %v6616
    %v6668 = vadd.f32 %v6320, %v6618
    %v6669 = vadd.f32 %v6321, %v6657
    %v6670 = vadd.f32 %v6322, %v6659
    %v6671 = vxor.u32 %v6489, 2147483648
    %v6672 = vxor.u32 %v6490, 2147483648
    %v6673 = vmul.f32 %v6671, 1.442695
    %v6674 = vpow.pop %v6673
    %v6675 = vmul.f32 %v6672, 1.442695
    %v6676 = vpow.pop %v6675
    %v6677 = vadd.f32 %v6674, 1.0
    %v6678 = vadd.f32 %v6676, 1.0
    %v6679 = vrcp.pop %v6677
    %v6680 = vmul.f32 1.0, %v6679
    %v6681 = vrcp.pop %v6678
    %v6682 = vmul.f32 1.0, %v6681
    %v6683 = vxor.u32 %v6491, 2147483648
    %v6684 = vxor.u32 %v6492, 2147483648
    %v6685 = vmul.f32 %v6683, 1.442695
    %v6686 = vpow.pop %v6685
    %v6687 = vmul.f32 %v6684, 1.442695
    %v6688 = vpow.pop %v6687
    %v6689 = vadd.f32 %v6686, 1.0
    %v6690 = vadd.f32 %v6688, 1.0
    %v6691 = vrcp.pop %v6689
    %v6692 = vmul.f32 1.0, %v6691
    %v6693 = vrcp.pop %v6690
    %v6694 = vmul.f32 1.0, %v6693
    %v6695 = vtanh.pop %v6493
    %v6696 = vtanh.pop %v6494
    %v6697 = vxor.u32 %v6495, 2147483648
    %v6698 = vxor.u32 %v6496, 2147483648
    %v6699 = vmul.f32 %v6697, 1.442695
    %v6700 = vpow.pop %v6699
    %v6701 = vmul.f32 %v6698, 1.442695
    %v6702 = vpow.pop %v6701
    %v6703 = vadd.f32 %v6700, 1.0
    %v6704 = vadd.f32 %v6702, 1.0
    %v6705 = vrcp.pop %v6703
    %v6706 = vmul.f32 1.0, %v6705
    %v6707 = vrcp.pop %v6704
    %v6708 = vmul.f32 1.0, %v6707
    %v6709 = vmul.f32 %v6692, %v6247
    %v6710 = vmul.f32 %v6694, %v6248
    %v6711 = vmul.f32 %v6680, %v6695
    %v6712 = vmul.f32 %v6682, %v6696
    %v6713 = vadd.f32 %v6709, %v6711
    %v6714 = vadd.f32 %v6710, %v6712
    %v6715 = vtanh.pop %v6713
    %v6716 = vtanh.pop %v6714
    %v6717 = vmul.f32 %v6706, %v6715
    %v6718 = vmul.f32 %v6708, %v6716
    %v6719 = vxor.u32 %v6663, 2147483648
    %v6720 = vxor.u32 %v6664, 2147483648
    %v6721 = vmul.f32 %v6719, 1.442695
    %v6722 = vpow.pop %v6721
    %v6723 = vmul.f32 %v6720, 1.442695
    %v6724 = vpow.pop %v6723
    %v6725 = vadd.f32 %v6722, 1.0
    %v6726 = vadd.f32 %v6724, 1.0
    %v6727 = vrcp.pop %v6725
    %v6728 = vmul.f32 1.0, %v6727
    %v6729 = vrcp.pop %v6726
    %v6730 = vmul.f32 1.0, %v6729
    %v6731 = vxor.u32 %v6665, 2147483648
    %v6732 = vxor.u32 %v6666, 2147483648
    %v6733 = vmul.f32 %v6731, 1.442695
    %v6734 = vpow.pop %v6733
    %v6735 = vmul.f32 %v6732, 1.442695
    %v6736 = vpow.pop %v6735
    %v6737 = vadd.f32 %v6734, 1.0
    %v6738 = vadd.f32 %v6736, 1.0
    %v6739 = vrcp.pop %v6737
    %v6740 = vmul.f32 1.0, %v6739
    %v6741 = vrcp.pop %v6738
    %v6742 = vmul.f32 1.0, %v6741
    %v6743 = vtanh.pop %v6667
    %v6744 = vtanh.pop %v6668
    %v6745 = vxor.u32 %v6669, 2147483648
    %v6746 = vxor.u32 %v6670, 2147483648
    %v6747 = vmul.f32 %v6745, 1.442695
    %v6748 = vpow.pop %v6747
    %v6749 = vmul.f32 %v6746, 1.442695
    %v6750 = vpow.pop %v6749
    %v6751 = vadd.f32 %v6748, 1.0
    %v6752 = vadd.f32 %v6750, 1.0
    %v6753 = vrcp.pop %v6751
    %v6754 = vmul.f32 1.0, %v6753
    %v6755 = vrcp.pop %v6752
    %v6756 = vmul.f32 1.0, %v6755
    %v6757 = vmul.f32 %v6740, %v6295
    %v6758 = vmul.f32 %v6742, %v6296
    %v6759 = vmul.f32 %v6728, %v6743
    %v6760 = vmul.f32 %v6730, %v6744
    %v6761 = vadd.f32 %v6757, %v6759
    %v6762 = vadd.f32 %v6758, %v6760
    %v6763 = vtanh.pop %v6761
    %v6764 = vtanh.pop %v6762
    %v6765 = vmul.f32 %v6754, %v6763
    %v6766 = vmul.f32 %v6756, %v6764
    %s6767 = smul.u32 3, 16
    %s6768 = smul.addr %s6767, 8
    %s6769 = scalar_lea.vmem [#allocation2], %s6768
    %v6770 = vld [vmem:[%s6769] sm:$0xff]
    %v6771 = vld [vmem:[%s6769 + $0x8] sm:$0xff]
    %v6772 = vld [vmem:[%s6769 + $0x10] sm:$0xff]
    %v6773 = vld [vmem:[%s6769 + $0x18] sm:$0xff]
    %v6774 = vld [vmem:[%s6769 + $0x20] sm:$0xff]
    %v6775 = vld [vmem:[%s6769 + $0x28] sm:$0xff]
    %v6776 = vld [vmem:[%s6769 + $0x30] sm:$0xff]
    %v6777 = vld [vmem:[%s6769 + $0x38] sm:$0xff]
    %s6778 = smul.u32 4, 16
    %s6779 = smul.addr %s6778, 8
    %s6780 = scalar_lea.vmem [#allocation2], %s6779
    %v6781 = vld [vmem:[%s6780 + $0x40] sm:$0xff]
    %v6782 = vld [vmem:[%s6780 + $0x48] sm:$0xff]
    %v6783 = vld [vmem:[%s6780 + $0x50] sm:$0xff]
    %v6784 = vld [vmem:[%s6780 + $0x58] sm:$0xff]
    %v6785 = vld [vmem:[%s6780 + $0x60] sm:$0xff]
    %v6786 = vld [vmem:[%s6780 + $0x68] sm:$0xff]
    %v6787 = vld [vmem:[%s6780 + $0x70] sm:$0xff]
    %v6788 = vld [vmem:[%s6780 + $0x78] sm:$0xff]
    %v6789 = vpack.c.bf16 %v6717, %v6717
    %v6790 = vpack.c.bf16 %v6718, %v6718
    %6791 = vmatprep.subr.bf16.mxu0 %v4556
    %6792 = vmatpush1.bf16.msra.mxu0 %v4555
    %6793 = vmatprep.subr.bf16.mxu0 %v4548
    %6794 = vmatpush1.bf16.msra.mxu0 %v4547
    %6795 = vmatprep.subr.bf16.mxu0 %v4540
    %6796 = vmatpush1.bf16.msra.mxu0 %v4539
    %6797 = vmatprep.subr.bf16.mxu0 %v4532
    %6798 = vmatpush1.bf16.msra.mxu0 %v4531
    %6799 = vmatprep.subr.bf16.mxu0 %v4524
    %6800 = vmatpush1.bf16.msra.mxu0 %v4523
    %6801 = vmatprep.subr.bf16.mxu0 %v4516
    %6802 = vmatpush1.bf16.msra.mxu0 %v4515
    %6803 = vmatprep.subr.bf16.mxu0 %v4508
    %6804 = vmatpush1.bf16.msra.mxu0 %v4507
    %6805 = vmatprep.subr.bf16.mxu0 %v4500
    %6806 = vmatpush1.bf16.msra.mxu0 %v4499
    %6807 = vmatprep.subr.bf16.mxu0 %v4620
    %6808 = vmatpush2.bf16.msra.mxu0 %v4619
    %6809 = vmatprep.subr.bf16.mxu0 %v4612
    %6810 = vmatpush2.bf16.msra.mxu0 %v4611
    %6811 = vmatprep.subr.bf16.mxu0 %v4604
    %6812 = vmatpush2.bf16.msra.mxu0 %v4603
    %6813 = vmatprep.subr.bf16.mxu0 %v4596
    %6814 = vmatpush2.bf16.msra.mxu0 %v4595
    %6815 = vmatprep.subr.bf16.mxu0 %v4588
    %6816 = vmatpush2.bf16.msra.mxu0 %v4587
    %6817 = vmatprep.subr.bf16.mxu0 %v4580
    %6818 = vmatpush2.bf16.msra.mxu0 %v4579
    %6819 = vmatprep.subr.bf16.mxu0 %v4572
    %6820 = vmatpush2.bf16.msra.mxu0 %v4571
    %6821 = vmatprep.subr.bf16.mxu0 %v4564
    %6822 = vmatpush2.bf16.msra.mxu0 %v4563
    %6823 = vmatprep.mubr.bf16.mxu0 %v6790
    %6824 = vmatmul.mubr.bf16.gmra.mxu0 %v6789
    %v6825 = vpop.f32.mrf.mxu0
    %v6826 = vadd.f32 0.0, %v6825
    %v6827 = vpop.f32.mrf.mxu0
    %v6828 = vadd.f32 0.0, %v6827
    %v6829 = vpop.f32.mrf.mxu0
    %v6830 = vpop.f32.mrf.mxu0
    %6831 = vdwg.mxu0
    %6832 = vmatprep.subr.bf16.mxu0 %v4558
    %6833 = vmatpush1.bf16.msra.mxu0 %v4557
    %6834 = vmatprep.subr.bf16.mxu0 %v4550
    %6835 = vmatpush1.bf16.msra.mxu0 %v4549
    %6836 = vmatprep.subr.bf16.mxu0 %v4542
    %6837 = vmatpush1.bf16.msra.mxu0 %v4541
    %6838 = vmatprep.subr.bf16.mxu0 %v4534
    %6839 = vmatpush1.bf16.msra.mxu0 %v4533
    %6840 = vmatprep.subr.bf16.mxu0 %v4526
    %6841 = vmatpush1.bf16.msra.mxu0 %v4525
    %6842 = vmatprep.subr.bf16.mxu0 %v4518
    %6843 = vmatpush1.bf16.msra.mxu0 %v4517
    %6844 = vmatprep.subr.bf16.mxu0 %v4510
    %6845 = vmatpush1.bf16.msra.mxu0 %v4509
    %6846 = vmatprep.subr.bf16.mxu0 %v4502
    %6847 = vmatpush1.bf16.msra.mxu0 %v4501
    %6848 = vmatprep.subr.bf16.mxu0 %v4622
    %6849 = vmatpush2.bf16.msra.mxu0 %v4621
    %6850 = vmatprep.subr.bf16.mxu0 %v4614
    %6851 = vmatpush2.bf16.msra.mxu0 %v4613
    %6852 = vmatprep.subr.bf16.mxu0 %v4606
    %6853 = vmatpush2.bf16.msra.mxu0 %v4605
    %6854 = vmatprep.subr.bf16.mxu0 %v4598
    %6855 = vmatpush2.bf16.msra.mxu0 %v4597
    %6856 = vmatprep.subr.bf16.mxu0 %v4590
    %6857 = vmatpush2.bf16.msra.mxu0 %v4589
    %6858 = vmatprep.subr.bf16.mxu0 %v4582
    %6859 = vmatpush2.bf16.msra.mxu0 %v4581
    %6860 = vmatprep.subr.bf16.mxu0 %v4574
    %6861 = vmatpush2.bf16.msra.mxu0 %v4573
    %6862 = vmatprep.subr.bf16.mxu0 %v4566
    %6863 = vmatpush2.bf16.msra.mxu0 %v4565
    %6864 = vmatprep.mubr.bf16.mxu0 %v6790
    %6865 = vmatmul.mubr.bf16.gmra.mxu0 %v6789
    %v6866 = vpop.f32.mrf.mxu0
    %v6867 = vadd.f32 0.0, %v6866
    %v6868 = vpop.f32.mrf.mxu0
    %v6869 = vadd.f32 0.0, %v6868
    %v6870 = vpop.f32.mrf.mxu0
    %v6871 = vpop.f32.mrf.mxu0
    %6872 = vdwg.mxu0
    %6873 = vmatprep.subr.bf16.mxu0 %v4560
    %6874 = vmatpush1.bf16.msra.mxu0 %v4559
    %6875 = vmatprep.subr.bf16.mxu0 %v4552
    %6876 = vmatpush1.bf16.msra.mxu0 %v4551
    %6877 = vmatprep.subr.bf16.mxu0 %v4544
    %6878 = vmatpush1.bf16.msra.mxu0 %v4543
    %6879 = vmatprep.subr.bf16.mxu0 %v4536
    %6880 = vmatpush1.bf16.msra.mxu0 %v4535
    %6881 = vmatprep.subr.bf16.mxu0 %v4528
    %6882 = vmatpush1.bf16.msra.mxu0 %v4527
    %6883 = vmatprep.subr.bf16.mxu0 %v4520
    %6884 = vmatpush1.bf16.msra.mxu0 %v4519
    %6885 = vmatprep.subr.bf16.mxu0 %v4512
    %6886 = vmatpush1.bf16.msra.mxu0 %v4511
    %6887 = vmatprep.subr.bf16.mxu0 %v4504
    %6888 = vmatpush1.bf16.msra.mxu0 %v4503
    %6889 = vmatprep.subr.bf16.mxu0 %v4624
    %6890 = vmatpush2.bf16.msra.mxu0 %v4623
    %6891 = vmatprep.subr.bf16.mxu0 %v4616
    %6892 = vmatpush2.bf16.msra.mxu0 %v4615
    %6893 = vmatprep.subr.bf16.mxu0 %v4608
    %6894 = vmatpush2.bf16.msra.mxu0 %v4607
    %6895 = vmatprep.subr.bf16.mxu0 %v4600
    %6896 = vmatpush2.bf16.msra.mxu0 %v4599
    %6897 = vmatprep.subr.bf16.mxu0 %v4592
    %6898 = vmatpush2.bf16.msra.mxu0 %v4591
    %6899 = vmatprep.subr.bf16.mxu0 %v4584
    %6900 = vmatpush2.bf16.msra.mxu0 %v4583
    %6901 = vmatprep.subr.bf16.mxu0 %v4576
    %6902 = vmatpush2.bf16.msra.mxu0 %v4575
    %6903 = vmatprep.subr.bf16.mxu0 %v4568
    %6904 = vmatpush2.bf16.msra.mxu0 %v4567
    %6905 = vmatprep.mubr.bf16.mxu0 %v6790
    %6906 = vmatmul.mubr.bf16.gmra.mxu0 %v6789
    %v6907 = vpop.f32.mrf.mxu0
    %v6908 = vadd.f32 0.0, %v6907
    %v6909 = vpop.f32.mrf.mxu0
    %v6910 = vadd.f32 0.0, %v6909
    %v6911 = vpop.f32.mrf.mxu0
    %v6912 = vpop.f32.mrf.mxu0
    %6913 = vdwg.mxu0
    %6914 = vmatprep.subr.bf16.mxu0 %v4562
    %6915 = vmatpush1.bf16.msra.mxu0 %v4561
    %6916 = vmatprep.subr.bf16.mxu0 %v4554
    %6917 = vmatpush1.bf16.msra.mxu0 %v4553
    %6918 = vmatprep.subr.bf16.mxu0 %v4546
    %6919 = vmatpush1.bf16.msra.mxu0 %v4545
    %6920 = vmatprep.subr.bf16.mxu0 %v4538
    %6921 = vmatpush1.bf16.msra.mxu0 %v4537
    %6922 = vmatprep.subr.bf16.mxu0 %v4530
    %6923 = vmatpush1.bf16.msra.mxu0 %v4529
    %6924 = vmatprep.subr.bf16.mxu0 %v4522
    %6925 = vmatpush1.bf16.msra.mxu0 %v4521
    %6926 = vmatprep.subr.bf16.mxu0 %v4514
    %6927 = vmatpush1.bf16.msra.mxu0 %v4513
    %6928 = vmatprep.subr.bf16.mxu0 %v4506
    %6929 = vmatpush1.bf16.msra.mxu0 %v4505
    %6930 = vmatprep.subr.bf16.mxu0 %v4626
    %6931 = vmatpush2.bf16.msra.mxu0 %v4625
    %6932 = vmatprep.subr.bf16.mxu0 %v4618
    %6933 = vmatpush2.bf16.msra.mxu0 %v4617
    %6934 = vmatprep.subr.bf16.mxu0 %v4610
    %6935 = vmatpush2.bf16.msra.mxu0 %v4609
    %6936 = vmatprep.subr.bf16.mxu0 %v4602
    %6937 = vmatpush2.bf16.msra.mxu0 %v4601
    %6938 = vmatprep.subr.bf16.mxu0 %v4594
    %6939 = vmatpush2.bf16.msra.mxu0 %v4593
    %6940 = vmatprep.subr.bf16.mxu0 %v4586
    %6941 = vmatpush2.bf16.msra.mxu0 %v4585
    %6942 = vmatprep.subr.bf16.mxu0 %v4578
    %6943 = vmatpush2.bf16.msra.mxu0 %v4577
    %6944 = vmatprep.subr.bf16.mxu0 %v4570
    %6945 = vmatpush2.bf16.msra.mxu0 %v4569
    %6946 = vmatprep.mubr.bf16.mxu0 %v6790
    %6947 = vmatmul.mubr.bf16.gmra.mxu0 %v6789
    %v6948 = vpop.f32.mrf.mxu0
    %v6949 = vadd.f32 0.0, %v6948
    %v6950 = vpop.f32.mrf.mxu0
    %v6951 = vadd.f32 0.0, %v6950
    %v6952 = vpop.f32.mrf.mxu0
    %v6953 = vpop.f32.mrf.mxu0
    %6954 = vdwg.mxu0
    %v6955 = vadd.f32 %v6770, %v6826
    %v6956 = vadd.f32 %v6771, %v6828
    %v6957 = vadd.f32 %v6772, %v6867
    %v6958 = vadd.f32 %v6773, %v6869
    %v6959 = vadd.f32 %v6774, %v6908
    %v6960 = vadd.f32 %v6775, %v6910
    %v6961 = vadd.f32 %v6776, %v6949
    %v6962 = vadd.f32 %v6777, %v6951
    %v6963 = vpack.c.bf16 %v6765, %v6765
    %v6964 = vpack.c.bf16 %v6766, %v6766
    %6965 = vmatprep.subr.bf16.mxu0 %v5368
    %6966 = vmatpush1.bf16.msra.mxu0 %v5367
    %6967 = vmatprep.subr.bf16.mxu0 %v5360
    %6968 = vmatpush1.bf16.msra.mxu0 %v5359
    %6969 = vmatprep.subr.bf16.mxu0 %v5352
    %6970 = vmatpush1.bf16.msra.mxu0 %v5351
    %6971 = vmatprep.subr.bf16.mxu0 %v5344
    %6972 = vmatpush1.bf16.msra.mxu0 %v5343
    %6973 = vmatprep.subr.bf16.mxu0 %v5336
    %6974 = vmatpush1.bf16.msra.mxu0 %v5335
    %6975 = vmatprep.subr.bf16.mxu0 %v5328
    %6976 = vmatpush1.bf16.msra.mxu0 %v5327
    %6977 = vmatprep.subr.bf16.mxu0 %v5320
    %6978 = vmatpush1.bf16.msra.mxu0 %v5319
    %6979 = vmatprep.subr.bf16.mxu0 %v5312
    %6980 = vmatpush1.bf16.msra.mxu0 %v5311
    %6981 = vmatprep.subr.bf16.mxu0 %v5432
    %6982 = vmatpush2.bf16.msra.mxu0 %v5431
    %6983 = vmatprep.subr.bf16.mxu0 %v5424
    %6984 = vmatpush2.bf16.msra.mxu0 %v5423
    %6985 = vmatprep.subr.bf16.mxu0 %v5416
    %6986 = vmatpush2.bf16.msra.mxu0 %v5415
    %6987 = vmatprep.subr.bf16.mxu0 %v5408
    %6988 = vmatpush2.bf16.msra.mxu0 %v5407
    %6989 = vmatprep.subr.bf16.mxu0 %v5400
    %6990 = vmatpush2.bf16.msra.mxu0 %v5399
    %6991 = vmatprep.subr.bf16.mxu0 %v5392
    %6992 = vmatpush2.bf16.msra.mxu0 %v5391
    %6993 = vmatprep.subr.bf16.mxu0 %v5384
    %6994 = vmatpush2.bf16.msra.mxu0 %v5383
    %6995 = vmatprep.subr.bf16.mxu0 %v5376
    %6996 = vmatpush2.bf16.msra.mxu0 %v5375
    %6997 = vmatprep.mubr.bf16.mxu0 %v6964
    %6998 = vmatmul.mubr.bf16.gmra.mxu0 %v6963
    %v6999 = vpop.f32.mrf.mxu0
    %v7000 = vadd.f32 0.0, %v6999
    %v7001 = vpop.f32.mrf.mxu0
    %v7002 = vadd.f32 0.0, %v7001
    %v7003 = vpop.f32.mrf.mxu0
    %v7004 = vpop.f32.mrf.mxu0
    %7005 = vdwg.mxu0
    %7006 = vmatprep.subr.bf16.mxu0 %v5370
    %7007 = vmatpush1.bf16.msra.mxu0 %v5369
    %7008 = vmatprep.subr.bf16.mxu0 %v5362
    %7009 = vmatpush1.bf16.msra.mxu0 %v5361
    %7010 = vmatprep.subr.bf16.mxu0 %v5354
    %7011 = vmatpush1.bf16.msra.mxu0 %v5353
    %7012 = vmatprep.subr.bf16.mxu0 %v5346
    %7013 = vmatpush1.bf16.msra.mxu0 %v5345
    %7014 = vmatprep.subr.bf16.mxu0 %v5338
    %7015 = vmatpush1.bf16.msra.mxu0 %v5337
    %7016 = vmatprep.subr.bf16.mxu0 %v5330
    %7017 = vmatpush1.bf16.msra.mxu0 %v5329
    %7018 = vmatprep.subr.bf16.mxu0 %v5322
    %7019 = vmatpush1.bf16.msra.mxu0 %v5321
    %7020 = vmatprep.subr.bf16.mxu0 %v5314
    %7021 = vmatpush1.bf16.msra.mxu0 %v5313
    %7022 = vmatprep.subr.bf16.mxu0 %v5434
    %7023 = vmatpush2.bf16.msra.mxu0 %v5433
    %7024 = vmatprep.subr.bf16.mxu0 %v5426
    %7025 = vmatpush2.bf16.msra.mxu0 %v5425
    %7026 = vmatprep.subr.bf16.mxu0 %v5418
    %7027 = vmatpush2.bf16.msra.mxu0 %v5417
    %7028 = vmatprep.subr.bf16.mxu0 %v5410
    %7029 = vmatpush2.bf16.msra.mxu0 %v5409
    %7030 = vmatprep.subr.bf16.mxu0 %v5402
    %7031 = vmatpush2.bf16.msra.mxu0 %v5401
    %7032 = vmatprep.subr.bf16.mxu0 %v5394
    %7033 = vmatpush2.bf16.msra.mxu0 %v5393
    %7034 = vmatprep.subr.bf16.mxu0 %v5386
    %7035 = vmatpush2.bf16.msra.mxu0 %v5385
    %7036 = vmatprep.subr.bf16.mxu0 %v5378
    %7037 = vmatpush2.bf16.msra.mxu0 %v5377
    %7038 = vmatprep.mubr.bf16.mxu0 %v6964
    %7039 = vmatmul.mubr.bf16.gmra.mxu0 %v6963
    %v7040 = vpop.f32.mrf.mxu0
    %v7041 = vadd.f32 0.0, %v7040
    %v7042 = vpop.f32.mrf.mxu0
    %v7043 = vadd.f32 0.0, %v7042
    %v7044 = vpop.f32.mrf.mxu0
    %v7045 = vpop.f32.mrf.mxu0
    %7046 = vdwg.mxu0
    %7047 = vmatprep.subr.bf16.mxu0 %v5372
    %7048 = vmatpush1.bf16.msra.mxu0 %v5371
    %7049 = vmatprep.subr.bf16.mxu0 %v5364
    %7050 = vmatpush1.bf16.msra.mxu0 %v5363
    %7051 = vmatprep.subr.bf16.mxu0 %v5356
    %7052 = vmatpush1.bf16.msra.mxu0 %v5355
    %7053 = vmatprep.subr.bf16.mxu0 %v5348
    %7054 = vmatpush1.bf16.msra.mxu0 %v5347
    %7055 = vmatprep.subr.bf16.mxu0 %v5340
    %7056 = vmatpush1.bf16.msra.mxu0 %v5339
    %7057 = vmatprep.subr.bf16.mxu0 %v5332
    %7058 = vmatpush1.bf16.msra.mxu0 %v5331
    %7059 = vmatprep.subr.bf16.mxu0 %v5324
    %7060 = vmatpush1.bf16.msra.mxu0 %v5323
    %7061 = vmatprep.subr.bf16.mxu0 %v5316
    %7062 = vmatpush1.bf16.msra.mxu0 %v5315
    %7063 = vmatprep.subr.bf16.mxu0 %v5436
    %7064 = vmatpush2.bf16.msra.mxu0 %v5435
    %7065 = vmatprep.subr.bf16.mxu0 %v5428
    %7066 = vmatpush2.bf16.msra.mxu0 %v5427
    %7067 = vmatprep.subr.bf16.mxu0 %v5420
    %7068 = vmatpush2.bf16.msra.mxu0 %v5419
    %7069 = vmatprep.subr.bf16.mxu0 %v5412
    %7070 = vmatpush2.bf16.msra.mxu0 %v5411
    %7071 = vmatprep.subr.bf16.mxu0 %v5404
    %7072 = vmatpush2.bf16.msra.mxu0 %v5403
    %7073 = vmatprep.subr.bf16.mxu0 %v5396
    %7074 = vmatpush2.bf16.msra.mxu0 %v5395
    %7075 = vmatprep.subr.bf16.mxu0 %v5388
    %7076 = vmatpush2.bf16.msra.mxu0 %v5387
    %7077 = vmatprep.subr.bf16.mxu0 %v5380
    %7078 = vmatpush2.bf16.msra.mxu0 %v5379
    %7079 = vmatprep.mubr.bf16.mxu0 %v6964
    %7080 = vmatmul.mubr.bf16.gmra.mxu0 %v6963
    %v7081 = vpop.f32.mrf.mxu0
    %v7082 = vadd.f32 0.0, %v7081
    %v7083 = vpop.f32.mrf.mxu0
    %v7084 = vadd.f32 0.0, %v7083
    %v7085 = vpop.f32.mrf.mxu0
    %v7086 = vpop.f32.mrf.mxu0
    %7087 = vdwg.mxu0
    %7088 = vmatprep.subr.bf16.mxu0 %v5374
    %7089 = vmatpush1.bf16.msra.mxu0 %v5373
    %7090 = vmatprep.subr.bf16.mxu0 %v5366
    %7091 = vmatpush1.bf16.msra.mxu0 %v5365
    %7092 = vmatprep.subr.bf16.mxu0 %v5358
    %7093 = vmatpush1.bf16.msra.mxu0 %v5357
    %7094 = vmatprep.subr.bf16.mxu0 %v5350
    %7095 = vmatpush1.bf16.msra.mxu0 %v5349
    %7096 = vmatprep.subr.bf16.mxu0 %v5342
    %7097 = vmatpush1.bf16.msra.mxu0 %v5341
    %7098 = vmatprep.subr.bf16.mxu0 %v5334
    %7099 = vmatpush1.bf16.msra.mxu0 %v5333
    %7100 = vmatprep.subr.bf16.mxu0 %v5326
    %7101 = vmatpush1.bf16.msra.mxu0 %v5325
    %7102 = vmatprep.subr.bf16.mxu0 %v5318
    %7103 = vmatpush1.bf16.msra.mxu0 %v5317
    %7104 = vmatprep.subr.bf16.mxu0 %v5438
    %7105 = vmatpush2.bf16.msra.mxu0 %v5437
    %7106 = vmatprep.subr.bf16.mxu0 %v5430
    %7107 = vmatpush2.bf16.msra.mxu0 %v5429
    %7108 = vmatprep.subr.bf16.mxu0 %v5422
    %7109 = vmatpush2.bf16.msra.mxu0 %v5421
    %7110 = vmatprep.subr.bf16.mxu0 %v5414
    %7111 = vmatpush2.bf16.msra.mxu0 %v5413
    %7112 = vmatprep.subr.bf16.mxu0 %v5406
    %7113 = vmatpush2.bf16.msra.mxu0 %v5405
    %7114 = vmatprep.subr.bf16.mxu0 %v5398
    %7115 = vmatpush2.bf16.msra.mxu0 %v5397
    %7116 = vmatprep.subr.bf16.mxu0 %v5390
    %7117 = vmatpush2.bf16.msra.mxu0 %v5389
    %7118 = vmatprep.subr.bf16.mxu0 %v5382
    %7119 = vmatpush2.bf16.msra.mxu0 %v5381
    %7120 = vmatprep.mubr.bf16.mxu0 %v6964
    %7121 = vmatmul.mubr.bf16.gmra.mxu0 %v6963
    %v7122 = vpop.f32.mrf.mxu0
    %v7123 = vadd.f32 0.0, %v7122
    %v7124 = vpop.f32.mrf.mxu0
    %v7125 = vadd.f32 0.0, %v7124
    %v7126 = vpop.f32.mrf.mxu0
    %v7127 = vpop.f32.mrf.mxu0
    %7128 = vdwg.mxu0
    %v7129 = vadd.f32 %v6781, %v7000
    %v7130 = vadd.f32 %v6782, %v7002
    %v7131 = vadd.f32 %v6783, %v7041
    %v7132 = vadd.f32 %v6784, %v7043
    %v7133 = vadd.f32 %v6785, %v7082
    %v7134 = vadd.f32 %v6786, %v7084
    %v7135 = vadd.f32 %v6787, %v7123
    %v7136 = vadd.f32 %v6788, %v7125
    %v7137 = vxor.u32 %v6955, 2147483648
    %v7138 = vxor.u32 %v6956, 2147483648
    %v7139 = vmul.f32 %v7137, 1.442695
    %v7140 = vpow.pop %v7139
    %v7141 = vmul.f32 %v7138, 1.442695
    %v7142 = vpow.pop %v7141
    %v7143 = vadd.f32 %v7140, 1.0
    %v7144 = vadd.f32 %v7142, 1.0
    %v7145 = vrcp.pop %v7143
    %v7146 = vmul.f32 1.0, %v7145
    %v7147 = vrcp.pop %v7144
    %v7148 = vmul.f32 1.0, %v7147
    %v7149 = vxor.u32 %v6957, 2147483648
    %v7150 = vxor.u32 %v6958, 2147483648
    %v7151 = vmul.f32 %v7149, 1.442695
    %v7152 = vpow.pop %v7151
    %v7153 = vmul.f32 %v7150, 1.442695
    %v7154 = vpow.pop %v7153
    %v7155 = vadd.f32 %v7152, 1.0
    %v7156 = vadd.f32 %v7154, 1.0
    %v7157 = vrcp.pop %v7155
    %v7158 = vmul.f32 1.0, %v7157
    %v7159 = vrcp.pop %v7156
    %v7160 = vmul.f32 1.0, %v7159
    %v7161 = vtanh.pop %v6959
    %v7162 = vtanh.pop %v6960
    %v7163 = vxor.u32 %v6961, 2147483648
    %v7164 = vxor.u32 %v6962, 2147483648
    %v7165 = vmul.f32 %v7163, 1.442695
    %v7166 = vpow.pop %v7165
    %v7167 = vmul.f32 %v7164, 1.442695
    %v7168 = vpow.pop %v7167
    %v7169 = vadd.f32 %v7166, 1.0
    %v7170 = vadd.f32 %v7168, 1.0
    %v7171 = vrcp.pop %v7169
    %v7172 = vmul.f32 1.0, %v7171
    %v7173 = vrcp.pop %v7170
    %v7174 = vmul.f32 1.0, %v7173
    %v7175 = vmul.f32 %v7158, %v6713
    %v7176 = vmul.f32 %v7160, %v6714
    %v7177 = vmul.f32 %v7146, %v7161
    %v7178 = vmul.f32 %v7148, %v7162
    %v7179 = vadd.f32 %v7175, %v7177
    %v7180 = vadd.f32 %v7176, %v7178
    %v7181 = vtanh.pop %v7179
    %v7182 = vtanh.pop %v7180
    %v7183 = vmul.f32 %v7172, %v7181
    %v7184 = vmul.f32 %v7174, %v7182
    %v7185 = vxor.u32 %v7129, 2147483648
    %v7186 = vxor.u32 %v7130, 2147483648
    %v7187 = vmul.f32 %v7185, 1.442695
    %v7188 = vpow.pop %v7187
    %v7189 = vmul.f32 %v7186, 1.442695
    %v7190 = vpow.pop %v7189
    %v7191 = vadd.f32 %v7188, 1.0
    %v7192 = vadd.f32 %v7190, 1.0
    %v7193 = vrcp.pop %v7191
    %v7194 = vmul.f32 1.0, %v7193
    %v7195 = vrcp.pop %v7192
    %v7196 = vmul.f32 1.0, %v7195
    %v7197 = vxor.u32 %v7131, 2147483648
    %v7198 = vxor.u32 %v7132, 2147483648
    %v7199 = vmul.f32 %v7197, 1.442695
    %v7200 = vpow.pop %v7199
    %v7201 = vmul.f32 %v7198, 1.442695
    %v7202 = vpow.pop %v7201
    %v7203 = vadd.f32 %v7200, 1.0
    %v7204 = vadd.f32 %v7202, 1.0
    %v7205 = vrcp.pop %v7203
    %v7206 = vmul.f32 1.0, %v7205
    %v7207 = vrcp.pop %v7204
    %v7208 = vmul.f32 1.0, %v7207
    %v7209 = vtanh.pop %v7133
    %v7210 = vtanh.pop %v7134
    %v7211 = vxor.u32 %v7135, 2147483648
    %v7212 = vxor.u32 %v7136, 2147483648
    %v7213 = vmul.f32 %v7211, 1.442695
    %v7214 = vpow.pop %v7213
    %v7215 = vmul.f32 %v7212, 1.442695
    %v7216 = vpow.pop %v7215
    %v7217 = vadd.f32 %v7214, 1.0
    %v7218 = vadd.f32 %v7216, 1.0
    %v7219 = vrcp.pop %v7217
    %v7220 = vmul.f32 1.0, %v7219
    %v7221 = vrcp.pop %v7218
    %v7222 = vmul.f32 1.0, %v7221
    %v7223 = vmul.f32 %v7206, %v6761
    %v7224 = vmul.f32 %v7208, %v6762
    %v7225 = vmul.f32 %v7194, %v7209
    %v7226 = vmul.f32 %v7196, %v7210
    %v7227 = vadd.f32 %v7223, %v7225
    %v7228 = vadd.f32 %v7224, %v7226
    %v7229 = vtanh.pop %v7227
    %v7230 = vtanh.pop %v7228
    %v7231 = vmul.f32 %v7220, %v7229
    %v7232 = vmul.f32 %v7222, %v7230
    %v7233 = vld [vmem:[%s6780] sm:$0xff]
    %v7234 = vld [vmem:[%s6780 + $0x8] sm:$0xff]
    %v7235 = vld [vmem:[%s6780 + $0x10] sm:$0xff]
    %v7236 = vld [vmem:[%s6780 + $0x18] sm:$0xff]
    %v7237 = vld [vmem:[%s6780 + $0x20] sm:$0xff]
    %v7238 = vld [vmem:[%s6780 + $0x28] sm:$0xff]
    %v7239 = vld [vmem:[%s6780 + $0x30] sm:$0xff]
    %v7240 = vld [vmem:[%s6780 + $0x38] sm:$0xff]
    %v7241 = vld [vmem:[%s6769 + $0x40] sm:$0xff]
    %v7242 = vld [vmem:[%s6769 + $0x48] sm:$0xff]
    %v7243 = vld [vmem:[%s6769 + $0x50] sm:$0xff]
    %v7244 = vld [vmem:[%s6769 + $0x58] sm:$0xff]
    %v7245 = vld [vmem:[%s6769 + $0x60] sm:$0xff]
    %v7246 = vld [vmem:[%s6769 + $0x68] sm:$0xff]
    %v7247 = vld [vmem:[%s6769 + $0x70] sm:$0xff]
    %v7248 = vld [vmem:[%s6769 + $0x78] sm:$0xff]
    %v7249 = vpack.c.bf16 %v7183, %v7183
    %v7250 = vpack.c.bf16 %v7184, %v7184
    %7251 = vmatprep.subr.bf16.mxu0 %v4556
    %7252 = vmatpush1.bf16.msra.mxu0 %v4555
    %7253 = vmatprep.subr.bf16.mxu0 %v4548
    %7254 = vmatpush1.bf16.msra.mxu0 %v4547
    %7255 = vmatprep.subr.bf16.mxu0 %v4540
    %7256 = vmatpush1.bf16.msra.mxu0 %v4539
    %7257 = vmatprep.subr.bf16.mxu0 %v4532
    %7258 = vmatpush1.bf16.msra.mxu0 %v4531
    %7259 = vmatprep.subr.bf16.mxu0 %v4524
    %7260 = vmatpush1.bf16.msra.mxu0 %v4523
    %7261 = vmatprep.subr.bf16.mxu0 %v4516
    %7262 = vmatpush1.bf16.msra.mxu0 %v4515
    %7263 = vmatprep.subr.bf16.mxu0 %v4508
    %7264 = vmatpush1.bf16.msra.mxu0 %v4507
    %7265 = vmatprep.subr.bf16.mxu0 %v4500
    %7266 = vmatpush1.bf16.msra.mxu0 %v4499
    %7267 = vmatprep.subr.bf16.mxu0 %v4620
    %7268 = vmatpush2.bf16.msra.mxu0 %v4619
    %7269 = vmatprep.subr.bf16.mxu0 %v4612
    %7270 = vmatpush2.bf16.msra.mxu0 %v4611
    %7271 = vmatprep.subr.bf16.mxu0 %v4604
    %7272 = vmatpush2.bf16.msra.mxu0 %v4603
    %7273 = vmatprep.subr.bf16.mxu0 %v4596
    %7274 = vmatpush2.bf16.msra.mxu0 %v4595
    %7275 = vmatprep.subr.bf16.mxu0 %v4588
    %7276 = vmatpush2.bf16.msra.mxu0 %v4587
    %7277 = vmatprep.subr.bf16.mxu0 %v4580
    %7278 = vmatpush2.bf16.msra.mxu0 %v4579
    %7279 = vmatprep.subr.bf16.mxu0 %v4572
    %7280 = vmatpush2.bf16.msra.mxu0 %v4571
    %7281 = vmatprep.subr.bf16.mxu0 %v4564
    %7282 = vmatpush2.bf16.msra.mxu0 %v4563
    %7283 = vmatprep.mubr.bf16.mxu0 %v7250
    %7284 = vmatmul.mubr.bf16.gmra.mxu0 %v7249
    %v7285 = vpop.f32.mrf.mxu0
    %v7286 = vadd.f32 0.0, %v7285
    %v7287 = vpop.f32.mrf.mxu0
    %v7288 = vadd.f32 0.0, %v7287
    %v7289 = vpop.f32.mrf.mxu0
    %v7290 = vpop.f32.mrf.mxu0
    %7291 = vdwg.mxu0
    %7292 = vmatprep.subr.bf16.mxu0 %v4558
    %7293 = vmatpush1.bf16.msra.mxu0 %v4557
    %7294 = vmatprep.subr.bf16.mxu0 %v4550
    %7295 = vmatpush1.bf16.msra.mxu0 %v4549
    %7296 = vmatprep.subr.bf16.mxu0 %v4542
    %7297 = vmatpush1.bf16.msra.mxu0 %v4541
    %7298 = vmatprep.subr.bf16.mxu0 %v4534
    %7299 = vmatpush1.bf16.msra.mxu0 %v4533
    %7300 = vmatprep.subr.bf16.mxu0 %v4526
    %7301 = vmatpush1.bf16.msra.mxu0 %v4525
    %7302 = vmatprep.subr.bf16.mxu0 %v4518
    %7303 = vmatpush1.bf16.msra.mxu0 %v4517
    %7304 = vmatprep.subr.bf16.mxu0 %v4510
    %7305 = vmatpush1.bf16.msra.mxu0 %v4509
    %7306 = vmatprep.subr.bf16.mxu0 %v4502
    %7307 = vmatpush1.bf16.msra.mxu0 %v4501
    %7308 = vmatprep.subr.bf16.mxu0 %v4622
    %7309 = vmatpush2.bf16.msra.mxu0 %v4621
    %7310 = vmatprep.subr.bf16.mxu0 %v4614
    %7311 = vmatpush2.bf16.msra.mxu0 %v4613
    %7312 = vmatprep.subr.bf16.mxu0 %v4606
    %7313 = vmatpush2.bf16.msra.mxu0 %v4605
    %7314 = vmatprep.subr.bf16.mxu0 %v4598
    %7315 = vmatpush2.bf16.msra.mxu0 %v4597
    %7316 = vmatprep.subr.bf16.mxu0 %v4590
    %7317 = vmatpush2.bf16.msra.mxu0 %v4589
    %7318 = vmatprep.subr.bf16.mxu0 %v4582
    %7319 = vmatpush2.bf16.msra.mxu0 %v4581
    %7320 = vmatprep.subr.bf16.mxu0 %v4574
    %7321 = vmatpush2.bf16.msra.mxu0 %v4573
    %7322 = vmatprep.subr.bf16.mxu0 %v4566
    %7323 = vmatpush2.bf16.msra.mxu0 %v4565
    %7324 = vmatprep.mubr.bf16.mxu0 %v7250
    %7325 = vmatmul.mubr.bf16.gmra.mxu0 %v7249
    %v7326 = vpop.f32.mrf.mxu0
    %v7327 = vadd.f32 0.0, %v7326
    %v7328 = vpop.f32.mrf.mxu0
    %v7329 = vadd.f32 0.0, %v7328
    %v7330 = vpop.f32.mrf.mxu0
    %v7331 = vpop.f32.mrf.mxu0
    %7332 = vdwg.mxu0
    %7333 = vmatprep.subr.bf16.mxu0 %v4560
    %7334 = vmatpush1.bf16.msra.mxu0 %v4559
    %7335 = vmatprep.subr.bf16.mxu0 %v4552
    %7336 = vmatpush1.bf16.msra.mxu0 %v4551
    %7337 = vmatprep.subr.bf16.mxu0 %v4544
    %7338 = vmatpush1.bf16.msra.mxu0 %v4543
    %7339 = vmatprep.subr.bf16.mxu0 %v4536
    %7340 = vmatpush1.bf16.msra.mxu0 %v4535
    %7341 = vmatprep.subr.bf16.mxu0 %v4528
    %7342 = vmatpush1.bf16.msra.mxu0 %v4527
    %7343 = vmatprep.subr.bf16.mxu0 %v4520
    %7344 = vmatpush1.bf16.msra.mxu0 %v4519
    %7345 = vmatprep.subr.bf16.mxu0 %v4512
    %7346 = vmatpush1.bf16.msra.mxu0 %v4511
    %7347 = vmatprep.subr.bf16.mxu0 %v4504
    %7348 = vmatpush1.bf16.msra.mxu0 %v4503
    %7349 = vmatprep.subr.bf16.mxu0 %v4624
    %7350 = vmatpush2.bf16.msra.mxu0 %v4623
    %7351 = vmatprep.subr.bf16.mxu0 %v4616
    %7352 = vmatpush2.bf16.msra.mxu0 %v4615
    %7353 = vmatprep.subr.bf16.mxu0 %v4608
    %7354 = vmatpush2.bf16.msra.mxu0 %v4607
    %7355 = vmatprep.subr.bf16.mxu0 %v4600
    %7356 = vmatpush2.bf16.msra.mxu0 %v4599
    %7357 = vmatprep.subr.bf16.mxu0 %v4592
    %7358 = vmatpush2.bf16.msra.mxu0 %v4591
    %7359 = vmatprep.subr.bf16.mxu0 %v4584
    %7360 = vmatpush2.bf16.msra.mxu0 %v4583
    %7361 = vmatprep.subr.bf16.mxu0 %v4576
    %7362 = vmatpush2.bf16.msra.mxu0 %v4575
    %7363 = vmatprep.subr.bf16.mxu0 %v4568
    %7364 = vmatpush2.bf16.msra.mxu0 %v4567
    %7365 = vmatprep.mubr.bf16.mxu0 %v7250
    %7366 = vmatmul.mubr.bf16.gmra.mxu0 %v7249
    %v7367 = vpop.f32.mrf.mxu0
    %v7368 = vadd.f32 0.0, %v7367
    %v7369 = vpop.f32.mrf.mxu0
    %v7370 = vadd.f32 0.0, %v7369
    %v7371 = vpop.f32.mrf.mxu0
    %v7372 = vpop.f32.mrf.mxu0
    %7373 = vdwg.mxu0
    %7374 = vmatprep.subr.bf16.mxu0 %v4562
    %7375 = vmatpush1.bf16.msra.mxu0 %v4561
    %7376 = vmatprep.subr.bf16.mxu0 %v4554
    %7377 = vmatpush1.bf16.msra.mxu0 %v4553
    %7378 = vmatprep.subr.bf16.mxu0 %v4546
    %7379 = vmatpush1.bf16.msra.mxu0 %v4545
    %7380 = vmatprep.subr.bf16.mxu0 %v4538
    %7381 = vmatpush1.bf16.msra.mxu0 %v4537
    %7382 = vmatprep.subr.bf16.mxu0 %v4530
    %7383 = vmatpush1.bf16.msra.mxu0 %v4529
    %7384 = vmatprep.subr.bf16.mxu0 %v4522
    %7385 = vmatpush1.bf16.msra.mxu0 %v4521
    %7386 = vmatprep.subr.bf16.mxu0 %v4514
    %7387 = vmatpush1.bf16.msra.mxu0 %v4513
    %7388 = vmatprep.subr.bf16.mxu0 %v4506
    %7389 = vmatpush1.bf16.msra.mxu0 %v4505
    %7390 = vmatprep.subr.bf16.mxu0 %v4626
    %7391 = vmatpush2.bf16.msra.mxu0 %v4625
    %7392 = vmatprep.subr.bf16.mxu0 %v4618
    %7393 = vmatpush2.bf16.msra.mxu0 %v4617
    %7394 = vmatprep.subr.bf16.mxu0 %v4610
    %7395 = vmatpush2.bf16.msra.mxu0 %v4609
    %7396 = vmatprep.subr.bf16.mxu0 %v4602
    %7397 = vmatpush2.bf16.msra.mxu0 %v4601
    %7398 = vmatprep.subr.bf16.mxu0 %v4594
    %7399 = vmatpush2.bf16.msra.mxu0 %v4593
    %7400 = vmatprep.subr.bf16.mxu0 %v4586
    %7401 = vmatpush2.bf16.msra.mxu0 %v4585
    %7402 = vmatprep.subr.bf16.mxu0 %v4578
    %7403 = vmatpush2.bf16.msra.mxu0 %v4577
    %7404 = vmatprep.subr.bf16.mxu0 %v4570
    %7405 = vmatpush2.bf16.msra.mxu0 %v4569
    %7406 = vmatprep.mubr.bf16.mxu0 %v7250
    %7407 = vmatmul.mubr.bf16.gmra.mxu0 %v7249
    %v7408 = vpop.f32.mrf.mxu0
    %v7409 = vadd.f32 0.0, %v7408
    %v7410 = vpop.f32.mrf.mxu0
    %v7411 = vadd.f32 0.0, %v7410
    %v7412 = vpop.f32.mrf.mxu0
    %v7413 = vpop.f32.mrf.mxu0
    %7414 = vdwg.mxu0
    %v7415 = vadd.f32 %v7233, %v7286
    %v7416 = vadd.f32 %v7234, %v7288
    %v7417 = vadd.f32 %v7235, %v7327
    %v7418 = vadd.f32 %v7236, %v7329
    %v7419 = vadd.f32 %v7237, %v7368
    %v7420 = vadd.f32 %v7238, %v7370
    %v7421 = vadd.f32 %v7239, %v7409
    %v7422 = vadd.f32 %v7240, %v7411
    %v7423 = vpack.c.bf16 %v7231, %v7231
    %v7424 = vpack.c.bf16 %v7232, %v7232
    %7425 = vmatprep.subr.bf16.mxu0 %v5368
    %7426 = vmatpush1.bf16.msra.mxu0 %v5367
    %7427 = vmatprep.subr.bf16.mxu0 %v5360
    %7428 = vmatpush1.bf16.msra.mxu0 %v5359
    %7429 = vmatprep.subr.bf16.mxu0 %v5352
    %7430 = vmatpush1.bf16.msra.mxu0 %v5351
    %7431 = vmatprep.subr.bf16.mxu0 %v5344
    %7432 = vmatpush1.bf16.msra.mxu0 %v5343
    %7433 = vmatprep.subr.bf16.mxu0 %v5336
    %7434 = vmatpush1.bf16.msra.mxu0 %v5335
    %7435 = vmatprep.subr.bf16.mxu0 %v5328
    %7436 = vmatpush1.bf16.msra.mxu0 %v5327
    %7437 = vmatprep.subr.bf16.mxu0 %v5320
    %7438 = vmatpush1.bf16.msra.mxu0 %v5319
    %7439 = vmatprep.subr.bf16.mxu0 %v5312
    %7440 = vmatpush1.bf16.msra.mxu0 %v5311
    %7441 = vmatprep.subr.bf16.mxu0 %v5432
    %7442 = vmatpush2.bf16.msra.mxu0 %v5431
    %7443 = vmatprep.subr.bf16.mxu0 %v5424
    %7444 = vmatpush2.bf16.msra.mxu0 %v5423
    %7445 = vmatprep.subr.bf16.mxu0 %v5416
    %7446 = vmatpush2.bf16.msra.mxu0 %v5415
    %7447 = vmatprep.subr.bf16.mxu0 %v5408
    %7448 = vmatpush2.bf16.msra.mxu0 %v5407
    %7449 = vmatprep.subr.bf16.mxu0 %v5400
    %7450 = vmatpush2.bf16.msra.mxu0 %v5399
    %7451 = vmatprep.subr.bf16.mxu0 %v5392
    %7452 = vmatpush2.bf16.msra.mxu0 %v5391
    %7453 = vmatprep.subr.bf16.mxu0 %v5384
    %7454 = vmatpush2.bf16.msra.mxu0 %v5383
    %7455 = vmatprep.subr.bf16.mxu0 %v5376
    %7456 = vmatpush2.bf16.msra.mxu0 %v5375
    %7457 = vmatprep.mubr.bf16.mxu0 %v7424
    %7458 = vmatmul.mubr.bf16.gmra.mxu0 %v7423
    %v7459 = vpop.f32.mrf.mxu0
    %v7460 = vadd.f32 0.0, %v7459
    %v7461 = vpop.f32.mrf.mxu0
    %v7462 = vadd.f32 0.0, %v7461
    %v7463 = vpop.f32.mrf.mxu0
    %v7464 = vpop.f32.mrf.mxu0
    %7465 = vdwg.mxu0
    %7466 = vmatprep.subr.bf16.mxu0 %v5370
    %7467 = vmatpush1.bf16.msra.mxu0 %v5369
    %7468 = vmatprep.subr.bf16.mxu0 %v5362
    %7469 = vmatpush1.bf16.msra.mxu0 %v5361
    %7470 = vmatprep.subr.bf16.mxu0 %v5354
    %7471 = vmatpush1.bf16.msra.mxu0 %v5353
    %7472 = vmatprep.subr.bf16.mxu0 %v5346
    %7473 = vmatpush1.bf16.msra.mxu0 %v5345
    %7474 = vmatprep.subr.bf16.mxu0 %v5338
    %7475 = vmatpush1.bf16.msra.mxu0 %v5337
    %7476 = vmatprep.subr.bf16.mxu0 %v5330
    %7477 = vmatpush1.bf16.msra.mxu0 %v5329
    %7478 = vmatprep.subr.bf16.mxu0 %v5322
    %7479 = vmatpush1.bf16.msra.mxu0 %v5321
    %7480 = vmatprep.subr.bf16.mxu0 %v5314
    %7481 = vmatpush1.bf16.msra.mxu0 %v5313
    %7482 = vmatprep.subr.bf16.mxu0 %v5434
    %7483 = vmatpush2.bf16.msra.mxu0 %v5433
    %7484 = vmatprep.subr.bf16.mxu0 %v5426
    %7485 = vmatpush2.bf16.msra.mxu0 %v5425
    %7486 = vmatprep.subr.bf16.mxu0 %v5418
    %7487 = vmatpush2.bf16.msra.mxu0 %v5417
    %7488 = vmatprep.subr.bf16.mxu0 %v5410
    %7489 = vmatpush2.bf16.msra.mxu0 %v5409
    %7490 = vmatprep.subr.bf16.mxu0 %v5402
    %7491 = vmatpush2.bf16.msra.mxu0 %v5401
    %7492 = vmatprep.subr.bf16.mxu0 %v5394
    %7493 = vmatpush2.bf16.msra.mxu0 %v5393
    %7494 = vmatprep.subr.bf16.mxu0 %v5386
    %7495 = vmatpush2.bf16.msra.mxu0 %v5385
    %7496 = vmatprep.subr.bf16.mxu0 %v5378
    %7497 = vmatpush2.bf16.msra.mxu0 %v5377
    %7498 = vmatprep.mubr.bf16.mxu0 %v7424
    %7499 = vmatmul.mubr.bf16.gmra.mxu0 %v7423
    %v7500 = vpop.f32.mrf.mxu0
    %v7501 = vadd.f32 0.0, %v7500
    %v7502 = vpop.f32.mrf.mxu0
    %v7503 = vadd.f32 0.0, %v7502
    %v7504 = vpop.f32.mrf.mxu0
    %v7505 = vpop.f32.mrf.mxu0
    %7506 = vdwg.mxu0
    %7507 = vmatprep.subr.bf16.mxu0 %v5372
    %7508 = vmatpush1.bf16.msra.mxu0 %v5371
    %7509 = vmatprep.subr.bf16.mxu0 %v5364
    %7510 = vmatpush1.bf16.msra.mxu0 %v5363
    %7511 = vmatprep.subr.bf16.mxu0 %v5356
    %7512 = vmatpush1.bf16.msra.mxu0 %v5355
    %7513 = vmatprep.subr.bf16.mxu0 %v5348
    %7514 = vmatpush1.bf16.msra.mxu0 %v5347
    %7515 = vmatprep.subr.bf16.mxu0 %v5340
    %7516 = vmatpush1.bf16.msra.mxu0 %v5339
    %7517 = vmatprep.subr.bf16.mxu0 %v5332
    %7518 = vmatpush1.bf16.msra.mxu0 %v5331
    %7519 = vmatprep.subr.bf16.mxu0 %v5324
    %7520 = vmatpush1.bf16.msra.mxu0 %v5323
    %7521 = vmatprep.subr.bf16.mxu0 %v5316
    %7522 = vmatpush1.bf16.msra.mxu0 %v5315
    %7523 = vmatprep.subr.bf16.mxu0 %v5436
    %7524 = vmatpush2.bf16.msra.mxu0 %v5435
    %7525 = vmatprep.subr.bf16.mxu0 %v5428
    %7526 = vmatpush2.bf16.msra.mxu0 %v5427
    %7527 = vmatprep.subr.bf16.mxu0 %v5420
    %7528 = vmatpush2.bf16.msra.mxu0 %v5419
    %7529 = vmatprep.subr.bf16.mxu0 %v5412
    %7530 = vmatpush2.bf16.msra.mxu0 %v5411
    %7531 = vmatprep.subr.bf16.mxu0 %v5404
    %7532 = vmatpush2.bf16.msra.mxu0 %v5403
    %7533 = vmatprep.subr.bf16.mxu0 %v5396
    %7534 = vmatpush2.bf16.msra.mxu0 %v5395
    %7535 = vmatprep.subr.bf16.mxu0 %v5388
    %7536 = vmatpush2.bf16.msra.mxu0 %v5387
    %7537 = vmatprep.subr.bf16.mxu0 %v5380
    %7538 = vmatpush2.bf16.msra.mxu0 %v5379
    %7539 = vmatprep.mubr.bf16.mxu0 %v7424
    %7540 = vmatmul.mubr.bf16.gmra.mxu0 %v7423
    %v7541 = vpop.f32.mrf.mxu0
    %v7542 = vadd.f32 0.0, %v7541
    %v7543 = vpop.f32.mrf.mxu0
    %v7544 = vadd.f32 0.0, %v7543
    %v7545 = vpop.f32.mrf.mxu0
    %v7546 = vpop.f32.mrf.mxu0
    %7547 = vdwg.mxu0
    %7548 = vmatprep.subr.bf16.mxu0 %v5374
    %7549 = vmatpush1.bf16.msra.mxu0 %v5373
    %7550 = vmatprep.subr.bf16.mxu0 %v5366
    %7551 = vmatpush1.bf16.msra.mxu0 %v5365
    %7552 = vmatprep.subr.bf16.mxu0 %v5358
    %7553 = vmatpush1.bf16.msra.mxu0 %v5357
    %7554 = vmatprep.subr.bf16.mxu0 %v5350
    %7555 = vmatpush1.bf16.msra.mxu0 %v5349
    %7556 = vmatprep.subr.bf16.mxu0 %v5342
    %7557 = vmatpush1.bf16.msra.mxu0 %v5341
    %7558 = vmatprep.subr.bf16.mxu0 %v5334
    %7559 = vmatpush1.bf16.msra.mxu0 %v5333
    %7560 = vmatprep.subr.bf16.mxu0 %v5326
    %7561 = vmatpush1.bf16.msra.mxu0 %v5325
    %7562 = vmatprep.subr.bf16.mxu0 %v5318
    %7563 = vmatpush1.bf16.msra.mxu0 %v5317
    %7564 = vmatprep.subr.bf16.mxu0 %v5438
    %7565 = vmatpush2.bf16.msra.mxu0 %v5437
    %7566 = vmatprep.subr.bf16.mxu0 %v5430
    %7567 = vmatpush2.bf16.msra.mxu0 %v5429
    %7568 = vmatprep.subr.bf16.mxu0 %v5422
    %7569 = vmatpush2.bf16.msra.mxu0 %v5421
    %7570 = vmatprep.subr.bf16.mxu0 %v5414
    %7571 = vmatpush2.bf16.msra.mxu0 %v5413
    %7572 = vmatprep.subr.bf16.mxu0 %v5406
    %7573 = vmatpush2.bf16.msra.mxu0 %v5405
    %7574 = vmatprep.subr.bf16.mxu0 %v5398
    %7575 = vmatpush2.bf16.msra.mxu0 %v5397
    %7576 = vmatprep.subr.bf16.mxu0 %v5390
    %7577 = vmatpush2.bf16.msra.mxu0 %v5389
    %7578 = vmatprep.subr.bf16.mxu0 %v5382
    %7579 = vmatpush2.bf16.msra.mxu0 %v5381
    %7580 = vmatprep.mubr.bf16.mxu0 %v7424
    %7581 = vmatmul.mubr.bf16.gmra.mxu0 %v7423
    %v7582 = vpop.f32.mrf.mxu0
    %v7583 = vadd.f32 0.0, %v7582
    %v7584 = vpop.f32.mrf.mxu0
    %v7585 = vadd.f32 0.0, %v7584
    %v7586 = vpop.f32.mrf.mxu0
    %v7587 = vpop.f32.mrf.mxu0
    %7588 = vdwg.mxu0
    %v7589 = vadd.f32 %v7241, %v7460
    %v7590 = vadd.f32 %v7242, %v7462
    %v7591 = vadd.f32 %v7243, %v7501
    %v7592 = vadd.f32 %v7244, %v7503
    %v7593 = vadd.f32 %v7245, %v7542
    %v7594 = vadd.f32 %v7246, %v7544
    %v7595 = vadd.f32 %v7247, %v7583
    %v7596 = vadd.f32 %v7248, %v7585
    %v7597 = vxor.u32 %v7415, 2147483648
    %v7598 = vxor.u32 %v7416, 2147483648
    %v7599 = vmul.f32 %v7597, 1.442695
    %v7600 = vpow.pop %v7599
    %v7601 = vmul.f32 %v7598, 1.442695
    %v7602 = vpow.pop %v7601
    %v7603 = vadd.f32 %v7600, 1.0
    %v7604 = vadd.f32 %v7602, 1.0
    %v7605 = vrcp.pop %v7603
    %v7606 = vmul.f32 1.0, %v7605
    %v7607 = vrcp.pop %v7604
    %v7608 = vmul.f32 1.0, %v7607
    %v7609 = vxor.u32 %v7417, 2147483648
    %v7610 = vxor.u32 %v7418, 2147483648
    %v7611 = vmul.f32 %v7609, 1.442695
    %v7612 = vpow.pop %v7611
    %v7613 = vmul.f32 %v7610, 1.442695
    %v7614 = vpow.pop %v7613
    %v7615 = vadd.f32 %v7612, 1.0
    %v7616 = vadd.f32 %v7614, 1.0
    %v7617 = vrcp.pop %v7615
    %v7618 = vmul.f32 1.0, %v7617
    %v7619 = vrcp.pop %v7616
    %v7620 = vmul.f32 1.0, %v7619
    %v7621 = vtanh.pop %v7419
    %v7622 = vtanh.pop %v7420
    %v7623 = vxor.u32 %v7421, 2147483648
    %v7624 = vxor.u32 %v7422, 2147483648
    %v7625 = vmul.f32 %v7623, 1.442695
    %v7626 = vpow.pop %v7625
    %v7627 = vmul.f32 %v7624, 1.442695
    %v7628 = vpow.pop %v7627
    %v7629 = vadd.f32 %v7626, 1.0
    %v7630 = vadd.f32 %v7628, 1.0
    %v7631 = vrcp.pop %v7629
    %v7632 = vmul.f32 1.0, %v7631
    %v7633 = vrcp.pop %v7630
    %v7634 = vmul.f32 1.0, %v7633
    %v7635 = vmul.f32 %v7618, %v7179
    %v7636 = vmul.f32 %v7620, %v7180
    %v7637 = vmul.f32 %v7606, %v7621
    %v7638 = vmul.f32 %v7608, %v7622
    %v7639 = vadd.f32 %v7635, %v7637
    %v7640 = vadd.f32 %v7636, %v7638
    %v7641 = vtanh.pop %v7639
    %v7642 = vtanh.pop %v7640
    %v7643 = vmul.f32 %v7632, %v7641
    %v7644 = vmul.f32 %v7634, %v7642
    %v7645 = vxor.u32 %v7589, 2147483648
    %v7646 = vxor.u32 %v7590, 2147483648
    %v7647 = vmul.f32 %v7645, 1.442695
    %v7648 = vpow.pop %v7647
    %v7649 = vmul.f32 %v7646, 1.442695
    %v7650 = vpow.pop %v7649
    %v7651 = vadd.f32 %v7648, 1.0
    %v7652 = vadd.f32 %v7650, 1.0
    %v7653 = vrcp.pop %v7651
    %v7654 = vmul.f32 1.0, %v7653
    %v7655 = vrcp.pop %v7652
    %v7656 = vmul.f32 1.0, %v7655
    %v7657 = vxor.u32 %v7591, 2147483648
    %v7658 = vxor.u32 %v7592, 2147483648
    %v7659 = vmul.f32 %v7657, 1.442695
    %v7660 = vpow.pop %v7659
    %v7661 = vmul.f32 %v7658, 1.442695
    %v7662 = vpow.pop %v7661
    %v7663 = vadd.f32 %v7660, 1.0
    %v7664 = vadd.f32 %v7662, 1.0
    %v7665 = vrcp.pop %v7663
    %v7666 = vmul.f32 1.0, %v7665
    %v7667 = vrcp.pop %v7664
    %v7668 = vmul.f32 1.0, %v7667
    %v7669 = vtanh.pop %v7593
    %v7670 = vtanh.pop %v7594
    %v7671 = vxor.u32 %v7595, 2147483648
    %v7672 = vxor.u32 %v7596, 2147483648
    %v7673 = vmul.f32 %v7671, 1.442695
    %v7674 = vpow.pop %v7673
    %v7675 = vmul.f32 %v7672, 1.442695
    %v7676 = vpow.pop %v7675
    %v7677 = vadd.f32 %v7674, 1.0
    %v7678 = vadd.f32 %v7676, 1.0
    %v7679 = vrcp.pop %v7677
    %v7680 = vmul.f32 1.0, %v7679
    %v7681 = vrcp.pop %v7678
    %v7682 = vmul.f32 1.0, %v7681
    %v7683 = vmul.f32 %v7666, %v7227
    %v7684 = vmul.f32 %v7668, %v7228
    %v7685 = vmul.f32 %v7654, %v7669
    %v7686 = vmul.f32 %v7656, %v7670
    %v7687 = vadd.f32 %v7683, %v7685
    %v7688 = vadd.f32 %v7684, %v7686
    %v7689 = vtanh.pop %v7687
    %v7690 = vtanh.pop %v7688
    %v7691 = vmul.f32 %v7680, %v7689
    %v7692 = vmul.f32 %v7682, %v7690
    %v7693 = vld [vmem:[%s6314] sm:$0xff]
    %v7694 = vld [vmem:[%s6314 + $0x8] sm:$0xff]
    %v7695 = vld [vmem:[%s6314 + $0x10] sm:$0xff]
    %v7696 = vld [vmem:[%s6314 + $0x18] sm:$0xff]
    %v7697 = vld [vmem:[%s6314 + $0x20] sm:$0xff]
    %v7698 = vld [vmem:[%s6314 + $0x28] sm:$0xff]
    %v7699 = vld [vmem:[%s6314 + $0x30] sm:$0xff]
    %v7700 = vld [vmem:[%s6314 + $0x38] sm:$0xff]
    %v7701 = vld [vmem:[%s6303 + $0x40] sm:$0xff]
    %v7702 = vld [vmem:[%s6303 + $0x48] sm:$0xff]
    %v7703 = vld [vmem:[%s6303 + $0x50] sm:$0xff]
    %v7704 = vld [vmem:[%s6303 + $0x58] sm:$0xff]
    %v7705 = vld [vmem:[%s6303 + $0x60] sm:$0xff]
    %v7706 = vld [vmem:[%s6303 + $0x68] sm:$0xff]
    %v7707 = vld [vmem:[%s6303 + $0x70] sm:$0xff]
    %v7708 = vld [vmem:[%s6303 + $0x78] sm:$0xff]
    %v7709 = vpack.c.bf16 %v7643, %v7643
    %v7710 = vpack.c.bf16 %v7644, %v7644
    %7711 = vmatprep.subr.bf16.mxu0 %v4556
    %7712 = vmatpush1.bf16.msra.mxu0 %v4555
    %7713 = vmatprep.subr.bf16.mxu0 %v4548
    %7714 = vmatpush1.bf16.msra.mxu0 %v4547
    %7715 = vmatprep.subr.bf16.mxu0 %v4540
    %7716 = vmatpush1.bf16.msra.mxu0 %v4539
    %7717 = vmatprep.subr.bf16.mxu0 %v4532
    %7718 = vmatpush1.bf16.msra.mxu0 %v4531
    %7719 = vmatprep.subr.bf16.mxu0 %v4524
    %7720 = vmatpush1.bf16.msra.mxu0 %v4523
    %7721 = vmatprep.subr.bf16.mxu0 %v4516
    %7722 = vmatpush1.bf16.msra.mxu0 %v4515
    %7723 = vmatprep.subr.bf16.mxu0 %v4508
    %7724 = vmatpush1.bf16.msra.mxu0 %v4507
    %7725 = vmatprep.subr.bf16.mxu0 %v4500
    %7726 = vmatpush1.bf16.msra.mxu0 %v4499
    %7727 = vmatprep.subr.bf16.mxu0 %v4620
    %7728 = vmatpush2.bf16.msra.mxu0 %v4619
    %7729 = vmatprep.subr.bf16.mxu0 %v4612
    %7730 = vmatpush2.bf16.msra.mxu0 %v4611
    %7731 = vmatprep.subr.bf16.mxu0 %v4604
    %7732 = vmatpush2.bf16.msra.mxu0 %v4603
    %7733 = vmatprep.subr.bf16.mxu0 %v4596
    %7734 = vmatpush2.bf16.msra.mxu0 %v4595
    %7735 = vmatprep.subr.bf16.mxu0 %v4588
    %7736 = vmatpush2.bf16.msra.mxu0 %v4587
    %7737 = vmatprep.subr.bf16.mxu0 %v4580
    %7738 = vmatpush2.bf16.msra.mxu0 %v4579
    %7739 = vmatprep.subr.bf16.mxu0 %v4572
    %7740 = vmatpush2.bf16.msra.mxu0 %v4571
    %7741 = vmatprep.subr.bf16.mxu0 %v4564
    %7742 = vmatpush2.bf16.msra.mxu0 %v4563
    %7743 = vmatprep.mubr.bf16.mxu0 %v7710
    %7744 = vmatmul.mubr.bf16.gmra.mxu0 %v7709
    %v7745 = vpop.f32.mrf.mxu0
    %v7746 = vadd.f32 0.0, %v7745
    %v7747 = vpop.f32.mrf.mxu0
    %v7748 = vadd.f32 0.0, %v7747
    %v7749 = vpop.f32.mrf.mxu0
    %v7750 = vpop.f32.mrf.mxu0
    %7751 = vdwg.mxu0
    %7752 = vmatprep.subr.bf16.mxu0 %v4558
    %7753 = vmatpush1.bf16.msra.mxu0 %v4557
    %7754 = vmatprep.subr.bf16.mxu0 %v4550
    %7755 = vmatpush1.bf16.msra.mxu0 %v4549
    %7756 = vmatprep.subr.bf16.mxu0 %v4542
    %7757 = vmatpush1.bf16.msra.mxu0 %v4541
    %7758 = vmatprep.subr.bf16.mxu0 %v4534
    %7759 = vmatpush1.bf16.msra.mxu0 %v4533
    %7760 = vmatprep.subr.bf16.mxu0 %v4526
    %7761 = vmatpush1.bf16.msra.mxu0 %v4525
    %7762 = vmatprep.subr.bf16.mxu0 %v4518
    %7763 = vmatpush1.bf16.msra.mxu0 %v4517
    %7764 = vmatprep.subr.bf16.mxu0 %v4510
    %7765 = vmatpush1.bf16.msra.mxu0 %v4509
    %7766 = vmatprep.subr.bf16.mxu0 %v4502
    %7767 = vmatpush1.bf16.msra.mxu0 %v4501
    %7768 = vmatprep.subr.bf16.mxu0 %v4622
    %7769 = vmatpush2.bf16.msra.mxu0 %v4621
    %7770 = vmatprep.subr.bf16.mxu0 %v4614
    %7771 = vmatpush2.bf16.msra.mxu0 %v4613
    %7772 = vmatprep.subr.bf16.mxu0 %v4606
    %7773 = vmatpush2.bf16.msra.mxu0 %v4605
    %7774 = vmatprep.subr.bf16.mxu0 %v4598
    %7775 = vmatpush2.bf16.msra.mxu0 %v4597
    %7776 = vmatprep.subr.bf16.mxu0 %v4590
    %7777 = vmatpush2.bf16.msra.mxu0 %v4589
    %7778 = vmatprep.subr.bf16.mxu0 %v4582
    %7779 = vmatpush2.bf16.msra.mxu0 %v4581
    %7780 = vmatprep.subr.bf16.mxu0 %v4574
    %7781 = vmatpush2.bf16.msra.mxu0 %v4573
    %7782 = vmatprep.subr.bf16.mxu0 %v4566
    %7783 = vmatpush2.bf16.msra.mxu0 %v4565
    %7784 = vmatprep.mubr.bf16.mxu0 %v7710
    %7785 = vmatmul.mubr.bf16.gmra.mxu0 %v7709
    %v7786 = vpop.f32.mrf.mxu0
    %v7787 = vadd.f32 0.0, %v7786
    %v7788 = vpop.f32.mrf.mxu0
    %v7789 = vadd.f32 0.0, %v7788
    %v7790 = vpop.f32.mrf.mxu0
    %v7791 = vpop.f32.mrf.mxu0
    %7792 = vdwg.mxu0
    %7793 = vmatprep.subr.bf16.mxu0 %v4560
    %7794 = vmatpush1.bf16.msra.mxu0 %v4559
    %7795 = vmatprep.subr.bf16.mxu0 %v4552
    %7796 = vmatpush1.bf16.msra.mxu0 %v4551
    %7797 = vmatprep.subr.bf16.mxu0 %v4544
    %7798 = vmatpush1.bf16.msra.mxu0 %v4543
    %7799 = vmatprep.subr.bf16.mxu0 %v4536
    %7800 = vmatpush1.bf16.msra.mxu0 %v4535
    %7801 = vmatprep.subr.bf16.mxu0 %v4528
    %7802 = vmatpush1.bf16.msra.mxu0 %v4527
    %7803 = vmatprep.subr.bf16.mxu0 %v4520
    %7804 = vmatpush1.bf16.msra.mxu0 %v4519
    %7805 = vmatprep.subr.bf16.mxu0 %v4512
    %7806 = vmatpush1.bf16.msra.mxu0 %v4511
    %7807 = vmatprep.subr.bf16.mxu0 %v4504
    %7808 = vmatpush1.bf16.msra.mxu0 %v4503
    %7809 = vmatprep.subr.bf16.mxu0 %v4624
    %7810 = vmatpush2.bf16.msra.mxu0 %v4623
    %7811 = vmatprep.subr.bf16.mxu0 %v4616
    %7812 = vmatpush2.bf16.msra.mxu0 %v4615
    %7813 = vmatprep.subr.bf16.mxu0 %v4608
    %7814 = vmatpush2.bf16.msra.mxu0 %v4607
    %7815 = vmatprep.subr.bf16.mxu0 %v4600
    %7816 = vmatpush2.bf16.msra.mxu0 %v4599
    %7817 = vmatprep.subr.bf16.mxu0 %v4592
    %7818 = vmatpush2.bf16.msra.mxu0 %v4591
    %7819 = vmatprep.subr.bf16.mxu0 %v4584
    %7820 = vmatpush2.bf16.msra.mxu0 %v4583
    %7821 = vmatprep.subr.bf16.mxu0 %v4576
    %7822 = vmatpush2.bf16.msra.mxu0 %v4575
    %7823 = vmatprep.subr.bf16.mxu0 %v4568
    %7824 = vmatpush2.bf16.msra.mxu0 %v4567
    %7825 = vmatprep.mubr.bf16.mxu0 %v7710
    %7826 = vmatmul.mubr.bf16.gmra.mxu0 %v7709
    %v7827 = vpop.f32.mrf.mxu0
    %v7828 = vadd.f32 0.0, %v7827
    %v7829 = vpop.f32.mrf.mxu0
    %v7830 = vadd.f32 0.0, %v7829
    %v7831 = vpop.f32.mrf.mxu0
    %v7832 = vpop.f32.mrf.mxu0
    %7833 = vdwg.mxu0
    %7834 = vmatprep.subr.bf16.mxu0 %v4562
    %7835 = vmatpush1.bf16.msra.mxu0 %v4561
    %7836 = vmatprep.subr.bf16.mxu0 %v4554
    %7837 = vmatpush1.bf16.msra.mxu0 %v4553
    %7838 = vmatprep.subr.bf16.mxu0 %v4546
    %7839 = vmatpush1.bf16.msra.mxu0 %v4545
    %7840 = vmatprep.subr.bf16.mxu0 %v4538
    %7841 = vmatpush1.bf16.msra.mxu0 %v4537
    %7842 = vmatprep.subr.bf16.mxu0 %v4530
    %7843 = vmatpush1.bf16.msra.mxu0 %v4529
    %7844 = vmatprep.subr.bf16.mxu0 %v4522
    %7845 = vmatpush1.bf16.msra.mxu0 %v4521
    %7846 = vmatprep.subr.bf16.mxu0 %v4514
    %7847 = vmatpush1.bf16.msra.mxu0 %v4513
    %7848 = vmatprep.subr.bf16.mxu0 %v4506
    %7849 = vmatpush1.bf16.msra.mxu0 %v4505
    %7850 = vmatprep.subr.bf16.mxu0 %v4626
    %7851 = vmatpush2.bf16.msra.mxu0 %v4625
    %7852 = vmatprep.subr.bf16.mxu0 %v4618
    %7853 = vmatpush2.bf16.msra.mxu0 %v4617
    %7854 = vmatprep.subr.bf16.mxu0 %v4610
    %7855 = vmatpush2.bf16.msra.mxu0 %v4609
    %7856 = vmatprep.subr.bf16.mxu0 %v4602
    %7857 = vmatpush2.bf16.msra.mxu0 %v4601
    %7858 = vmatprep.subr.bf16.mxu0 %v4594
    %7859 = vmatpush2.bf16.msra.mxu0 %v4593
    %7860 = vmatprep.subr.bf16.mxu0 %v4586
    %7861 = vmatpush2.bf16.msra.mxu0 %v4585
    %7862 = vmatprep.subr.bf16.mxu0 %v4578
    %7863 = vmatpush2.bf16.msra.mxu0 %v4577
    %7864 = vmatprep.subr.bf16.mxu0 %v4570
    %7865 = vmatpush2.bf16.msra.mxu0 %v4569
    %7866 = vmatprep.mubr.bf16.mxu0 %v7710
    %7867 = vmatmul.mubr.bf16.gmra.mxu0 %v7709
    %v7868 = vpop.f32.mrf.mxu0
    %v7869 = vadd.f32 0.0, %v7868
    %v7870 = vpop.f32.mrf.mxu0
    %v7871 = vadd.f32 0.0, %v7870
    %v7872 = vpop.f32.mrf.mxu0
    %v7873 = vpop.f32.mrf.mxu0
    %7874 = vdwg.mxu0
    %v7875 = vadd.f32 %v7693, %v7746
    %v7876 = vadd.f32 %v7694, %v7748
    %v7877 = vadd.f32 %v7695, %v7787
    %v7878 = vadd.f32 %v7696, %v7789
    %v7879 = vadd.f32 %v7697, %v7828
    %v7880 = vadd.f32 %v7698, %v7830
    %v7881 = vadd.f32 %v7699, %v7869
    %v7882 = vadd.f32 %v7700, %v7871
    %v7883 = vpack.c.bf16 %v7691, %v7691
    %v7884 = vpack.c.bf16 %v7692, %v7692
    %7885 = vmatprep.subr.bf16.mxu0 %v5368
    %7886 = vmatpush1.bf16.msra.mxu0 %v5367
    %7887 = vmatprep.subr.bf16.mxu0 %v5360
    %7888 = vmatpush1.bf16.msra.mxu0 %v5359
    %7889 = vmatprep.subr.bf16.mxu0 %v5352
    %7890 = vmatpush1.bf16.msra.mxu0 %v5351
    %7891 = vmatprep.subr.bf16.mxu0 %v5344
    %7892 = vmatpush1.bf16.msra.mxu0 %v5343
    %7893 = vmatprep.subr.bf16.mxu0 %v5336
    %7894 = vmatpush1.bf16.msra.mxu0 %v5335
    %7895 = vmatprep.subr.bf16.mxu0 %v5328
    %7896 = vmatpush1.bf16.msra.mxu0 %v5327
    %7897 = vmatprep.subr.bf16.mxu0 %v5320
    %7898 = vmatpush1.bf16.msra.mxu0 %v5319
    %7899 = vmatprep.subr.bf16.mxu0 %v5312
    %7900 = vmatpush1.bf16.msra.mxu0 %v5311
    %7901 = vmatprep.subr.bf16.mxu0 %v5432
    %7902 = vmatpush2.bf16.msra.mxu0 %v5431
    %7903 = vmatprep.subr.bf16.mxu0 %v5424
    %7904 = vmatpush2.bf16.msra.mxu0 %v5423
    %7905 = vmatprep.subr.bf16.mxu0 %v5416
    %7906 = vmatpush2.bf16.msra.mxu0 %v5415
    %7907 = vmatprep.subr.bf16.mxu0 %v5408
    %7908 = vmatpush2.bf16.msra.mxu0 %v5407
    %7909 = vmatprep.subr.bf16.mxu0 %v5400
    %7910 = vmatpush2.bf16.msra.mxu0 %v5399
    %7911 = vmatprep.subr.bf16.mxu0 %v5392
    %7912 = vmatpush2.bf16.msra.mxu0 %v5391
    %7913 = vmatprep.subr.bf16.mxu0 %v5384
    %7914 = vmatpush2.bf16.msra.mxu0 %v5383
    %7915 = vmatprep.subr.bf16.mxu0 %v5376
    %7916 = vmatpush2.bf16.msra.mxu0 %v5375
    %7917 = vmatprep.mubr.bf16.mxu0 %v7884
    %7918 = vmatmul.mubr.bf16.gmra.mxu0 %v7883
    %v7919 = vpop.f32.mrf.mxu0
    %v7920 = vadd.f32 0.0, %v7919
    %v7921 = vpop.f32.mrf.mxu0
    %v7922 = vadd.f32 0.0, %v7921
    %v7923 = vpop.f32.mrf.mxu0
    %v7924 = vpop.f32.mrf.mxu0
    %7925 = vdwg.mxu0
    %7926 = vmatprep.subr.bf16.mxu0 %v5370
    %7927 = vmatpush1.bf16.msra.mxu0 %v5369
    %7928 = vmatprep.subr.bf16.mxu0 %v5362
    %7929 = vmatpush1.bf16.msra.mxu0 %v5361
    %7930 = vmatprep.subr.bf16.mxu0 %v5354
    %7931 = vmatpush1.bf16.msra.mxu0 %v5353
    %7932 = vmatprep.subr.bf16.mxu0 %v5346
    %7933 = vmatpush1.bf16.msra.mxu0 %v5345
    %7934 = vmatprep.subr.bf16.mxu0 %v5338
    %7935 = vmatpush1.bf16.msra.mxu0 %v5337
    %7936 = vmatprep.subr.bf16.mxu0 %v5330
    %7937 = vmatpush1.bf16.msra.mxu0 %v5329
    %7938 = vmatprep.subr.bf16.mxu0 %v5322
    %7939 = vmatpush1.bf16.msra.mxu0 %v5321
    %7940 = vmatprep.subr.bf16.mxu0 %v5314
    %7941 = vmatpush1.bf16.msra.mxu0 %v5313
    %7942 = vmatprep.subr.bf16.mxu0 %v5434
    %7943 = vmatpush2.bf16.msra.mxu0 %v5433
    %7944 = vmatprep.subr.bf16.mxu0 %v5426
    %7945 = vmatpush2.bf16.msra.mxu0 %v5425
    %7946 = vmatprep.subr.bf16.mxu0 %v5418
    %7947 = vmatpush2.bf16.msra.mxu0 %v5417
    %7948 = vmatprep.subr.bf16.mxu0 %v5410
    %7949 = vmatpush2.bf16.msra.mxu0 %v5409
    %7950 = vmatprep.subr.bf16.mxu0 %v5402
    %7951 = vmatpush2.bf16.msra.mxu0 %v5401
    %7952 = vmatprep.subr.bf16.mxu0 %v5394
    %7953 = vmatpush2.bf16.msra.mxu0 %v5393
    %7954 = vmatprep.subr.bf16.mxu0 %v5386
    %7955 = vmatpush2.bf16.msra.mxu0 %v5385
    %7956 = vmatprep.subr.bf16.mxu0 %v5378
    %7957 = vmatpush2.bf16.msra.mxu0 %v5377
    %7958 = vmatprep.mubr.bf16.mxu0 %v7884
    %7959 = vmatmul.mubr.bf16.gmra.mxu0 %v7883
    %v7960 = vpop.f32.mrf.mxu0
    %v7961 = vadd.f32 0.0, %v7960
    %v7962 = vpop.f32.mrf.mxu0
    %v7963 = vadd.f32 0.0, %v7962
    %v7964 = vpop.f32.mrf.mxu0
    %v7965 = vpop.f32.mrf.mxu0
    %7966 = vdwg.mxu0
    %7967 = vmatprep.subr.bf16.mxu0 %v5372
    %7968 = vmatpush1.bf16.msra.mxu0 %v5371
    %7969 = vmatprep.subr.bf16.mxu0 %v5364
    %7970 = vmatpush1.bf16.msra.mxu0 %v5363
    %7971 = vmatprep.subr.bf16.mxu0 %v5356
    %7972 = vmatpush1.bf16.msra.mxu0 %v5355
    %7973 = vmatprep.subr.bf16.mxu0 %v5348
    %7974 = vmatpush1.bf16.msra.mxu0 %v5347
    %7975 = vmatprep.subr.bf16.mxu0 %v5340
    %7976 = vmatpush1.bf16.msra.mxu0 %v5339
    %7977 = vmatprep.subr.bf16.mxu0 %v5332
    %7978 = vmatpush1.bf16.msra.mxu0 %v5331
    %7979 = vmatprep.subr.bf16.mxu0 %v5324
    %7980 = vmatpush1.bf16.msra.mxu0 %v5323
    %7981 = vmatprep.subr.bf16.mxu0 %v5316
    %7982 = vmatpush1.bf16.msra.mxu0 %v5315
    %7983 = vmatprep.subr.bf16.mxu0 %v5436
    %7984 = vmatpush2.bf16.msra.mxu0 %v5435
    %7985 = vmatprep.subr.bf16.mxu0 %v5428
    %7986 = vmatpush2.bf16.msra.mxu0 %v5427
    %7987 = vmatprep.subr.bf16.mxu0 %v5420
    %7988 = vmatpush2.bf16.msra.mxu0 %v5419
    %7989 = vmatprep.subr.bf16.mxu0 %v5412
    %7990 = vmatpush2.bf16.msra.mxu0 %v5411
    %7991 = vmatprep.subr.bf16.mxu0 %v5404
    %7992 = vmatpush2.bf16.msra.mxu0 %v5403
    %7993 = vmatprep.subr.bf16.mxu0 %v5396
    %7994 = vmatpush2.bf16.msra.mxu0 %v5395
    %7995 = vmatprep.subr.bf16.mxu0 %v5388
    %7996 = vmatpush2.bf16.msra.mxu0 %v5387
    %7997 = vmatprep.subr.bf16.mxu0 %v5380
    %7998 = vmatpush2.bf16.msra.mxu0 %v5379
    %7999 = vmatprep.mubr.bf16.mxu0 %v7884
    %8000 = vmatmul.mubr.bf16.gmra.mxu0 %v7883
    %v8001 = vpop.f32.mrf.mxu0
    %v8002 = vadd.f32 0.0, %v8001
    %v8003 = vpop.f32.mrf.mxu0
    %v8004 = vadd.f32 0.0, %v8003
    %v8005 = vpop.f32.mrf.mxu0
    %v8006 = vpop.f32.mrf.mxu0
    %8007 = vdwg.mxu0
    %8008 = vmatprep.subr.bf16.mxu0 %v5374
    %8009 = vmatpush1.bf16.msra.mxu0 %v5373
    %8010 = vmatprep.subr.bf16.mxu0 %v5366
    %8011 = vmatpush1.bf16.msra.mxu0 %v5365
    %8012 = vmatprep.subr.bf16.mxu0 %v5358
    %8013 = vmatpush1.bf16.msra.mxu0 %v5357
    %8014 = vmatprep.subr.bf16.mxu0 %v5350
    %8015 = vmatpush1.bf16.msra.mxu0 %v5349
    %8016 = vmatprep.subr.bf16.mxu0 %v5342
    %8017 = vmatpush1.bf16.msra.mxu0 %v5341
    %8018 = vmatprep.subr.bf16.mxu0 %v5334
    %8019 = vmatpush1.bf16.msra.mxu0 %v5333
    %8020 = vmatprep.subr.bf16.mxu0 %v5326
    %8021 = vmatpush1.bf16.msra.mxu0 %v5325
    %8022 = vmatprep.subr.bf16.mxu0 %v5318
    %8023 = vmatpush1.bf16.msra.mxu0 %v5317
    %8024 = vmatprep.subr.bf16.mxu0 %v5438
    %8025 = vmatpush2.bf16.msra.mxu0 %v5437
    %8026 = vmatprep.subr.bf16.mxu0 %v5430
    %8027 = vmatpush2.bf16.msra.mxu0 %v5429
    %8028 = vmatprep.subr.bf16.mxu0 %v5422
    %8029 = vmatpush2.bf16.msra.mxu0 %v5421
    %8030 = vmatprep.subr.bf16.mxu0 %v5414
    %8031 = vmatpush2.bf16.msra.mxu0 %v5413
    %8032 = vmatprep.subr.bf16.mxu0 %v5406
    %8033 = vmatpush2.bf16.msra.mxu0 %v5405
    %8034 = vmatprep.subr.bf16.mxu0 %v5398
    %8035 = vmatpush2.bf16.msra.mxu0 %v5397
    %8036 = vmatprep.subr.bf16.mxu0 %v5390
    %8037 = vmatpush2.bf16.msra.mxu0 %v5389
    %8038 = vmatprep.subr.bf16.mxu0 %v5382
    %8039 = vmatpush2.bf16.msra.mxu0 %v5381
    %8040 = vmatprep.mubr.bf16.mxu0 %v7884
    %8041 = vmatmul.mubr.bf16.gmra.mxu0 %v7883
    %v8042 = vpop.f32.mrf.mxu0
    %v8043 = vadd.f32 0.0, %v8042
    %v8044 = vpop.f32.mrf.mxu0
    %v8045 = vadd.f32 0.0, %v8044
    %v8046 = vpop.f32.mrf.mxu0
    %v8047 = vpop.f32.mrf.mxu0
    %8048 = vdwg.mxu0
    %v8049 = vadd.f32 %v7701, %v7920
    %v8050 = vadd.f32 %v7702, %v7922
    %v8051 = vadd.f32 %v7703, %v7961
    %v8052 = vadd.f32 %v7704, %v7963
    %v8053 = vadd.f32 %v7705, %v8002
    %v8054 = vadd.f32 %v7706, %v8004
    %v8055 = vadd.f32 %v7707, %v8043
    %v8056 = vadd.f32 %v7708, %v8045
    %v8057 = vxor.u32 %v7875, 2147483648
    %v8058 = vxor.u32 %v7876, 2147483648
    %v8059 = vmul.f32 %v8057, 1.442695
    %v8060 = vpow.pop %v8059
    %v8061 = vmul.f32 %v8058, 1.442695
    %v8062 = vpow.pop %v8061
    %v8063 = vadd.f32 %v8060, 1.0
    %v8064 = vadd.f32 %v8062, 1.0
    %v8065 = vrcp.pop %v8063
    %v8066 = vmul.f32 1.0, %v8065
    %v8067 = vrcp.pop %v8064
    %v8068 = vmul.f32 1.0, %v8067
    %v8069 = vxor.u32 %v7877, 2147483648
    %v8070 = vxor.u32 %v7878, 2147483648
    %v8071 = vmul.f32 %v8069, 1.442695
    %v8072 = vpow.pop %v8071
    %v8073 = vmul.f32 %v8070, 1.442695
    %v8074 = vpow.pop %v8073
    %v8075 = vadd.f32 %v8072, 1.0
    %v8076 = vadd.f32 %v8074, 1.0
    %v8077 = vrcp.pop %v8075
    %v8078 = vmul.f32 1.0, %v8077
    %v8079 = vrcp.pop %v8076
    %v8080 = vmul.f32 1.0, %v8079
    %v8081 = vtanh.pop %v7879
    %v8082 = vtanh.pop %v7880
    %v8083 = vxor.u32 %v7881, 2147483648
    %v8084 = vxor.u32 %v7882, 2147483648
    %v8085 = vmul.f32 %v8083, 1.442695
    %v8086 = vpow.pop %v8085
    %v8087 = vmul.f32 %v8084, 1.442695
    %v8088 = vpow.pop %v8087
    %v8089 = vadd.f32 %v8086, 1.0
    %v8090 = vadd.f32 %v8088, 1.0
    %v8091 = vrcp.pop %v8089
    %v8092 = vmul.f32 1.0, %v8091
    %v8093 = vrcp.pop %v8090
    %v8094 = vmul.f32 1.0, %v8093
    %v8095 = vmul.f32 %v8078, %v7639
    %v8096 = vmul.f32 %v8080, %v7640
    %v8097 = vmul.f32 %v8066, %v8081
    %v8098 = vmul.f32 %v8068, %v8082
    %v8099 = vadd.f32 %v8095, %v8097
    %v8100 = vadd.f32 %v8096, %v8098
    %v8101 = vtanh.pop %v8099
    %v8102 = vtanh.pop %v8100
    %v8103 = vmul.f32 %v8092, %v8101
    %v8104 = vmul.f32 %v8094, %v8102
    %v8105 = vxor.u32 %v8049, 2147483648
    %v8106 = vxor.u32 %v8050, 2147483648
    %v8107 = vmul.f32 %v8105, 1.442695
    %v8108 = vpow.pop %v8107
    %v8109 = vmul.f32 %v8106, 1.442695
    %v8110 = vpow.pop %v8109
    %v8111 = vadd.f32 %v8108, 1.0
    %v8112 = vadd.f32 %v8110, 1.0
    %v8113 = vrcp.pop %v8111
    %v8114 = vmul.f32 1.0, %v8113
    %v8115 = vrcp.pop %v8112
    %v8116 = vmul.f32 1.0, %v8115
    %v8117 = vxor.u32 %v8051, 2147483648
    %v8118 = vxor.u32 %v8052, 2147483648
    %v8119 = vmul.f32 %v8117, 1.442695
    %v8120 = vpow.pop %v8119
    %v8121 = vmul.f32 %v8118, 1.442695
    %v8122 = vpow.pop %v8121
    %v8123 = vadd.f32 %v8120, 1.0
    %v8124 = vadd.f32 %v8122, 1.0
    %v8125 = vrcp.pop %v8123
    %v8126 = vmul.f32 1.0, %v8125
    %v8127 = vrcp.pop %v8124
    %v8128 = vmul.f32 1.0, %v8127
    %v8129 = vtanh.pop %v8053
    %v8130 = vtanh.pop %v8054
    %v8131 = vxor.u32 %v8055, 2147483648
    %v8132 = vxor.u32 %v8056, 2147483648
    %v8133 = vmul.f32 %v8131, 1.442695
    %v8134 = vpow.pop %v8133
    %v8135 = vmul.f32 %v8132, 1.442695
    %v8136 = vpow.pop %v8135
    %v8137 = vadd.f32 %v8134, 1.0
    %v8138 = vadd.f32 %v8136, 1.0
    %v8139 = vrcp.pop %v8137
    %v8140 = vmul.f32 1.0, %v8139
    %v8141 = vrcp.pop %v8138
    %v8142 = vmul.f32 1.0, %v8141
    %v8143 = vmul.f32 %v8126, %v7687
    %v8144 = vmul.f32 %v8128, %v7688
    %v8145 = vmul.f32 %v8114, %v8129
    %v8146 = vmul.f32 %v8116, %v8130
    %v8147 = vadd.f32 %v8143, %v8145
    %v8148 = vadd.f32 %v8144, %v8146
    %v8149 = vtanh.pop %v8147
    %v8150 = vtanh.pop %v8148
    %v8151 = vmul.f32 %v8140, %v8149
    %v8152 = vmul.f32 %v8142, %v8150
    %v8153 = vld [vmem:[%s5848] sm:$0xff]
    %v8154 = vld [vmem:[%s5848 + $0x8] sm:$0xff]
    %v8155 = vld [vmem:[%s5848 + $0x10] sm:$0xff]
    %v8156 = vld [vmem:[%s5848 + $0x18] sm:$0xff]
    %v8157 = vld [vmem:[%s5848 + $0x20] sm:$0xff]
    %v8158 = vld [vmem:[%s5848 + $0x28] sm:$0xff]
    %v8159 = vld [vmem:[%s5848 + $0x30] sm:$0xff]
    %v8160 = vld [vmem:[%s5848 + $0x38] sm:$0xff]
    %v8161 = vld [vmem:[%s5837 + $0x40] sm:$0xff]
    %v8162 = vld [vmem:[%s5837 + $0x48] sm:$0xff]
    %v8163 = vld [vmem:[%s5837 + $0x50] sm:$0xff]
    %v8164 = vld [vmem:[%s5837 + $0x58] sm:$0xff]
    %v8165 = vld [vmem:[%s5837 + $0x60] sm:$0xff]
    %v8166 = vld [vmem:[%s5837 + $0x68] sm:$0xff]
    %v8167 = vld [vmem:[%s5837 + $0x70] sm:$0xff]
    %v8168 = vld [vmem:[%s5837 + $0x78] sm:$0xff]
    %v8169 = vpack.c.bf16 %v8103, %v8103
    %v8170 = vpack.c.bf16 %v8104, %v8104
    %8171 = vmatprep.subr.bf16.mxu0 %v4556
    %8172 = vmatpush1.bf16.msra.mxu0 %v4555
    %8173 = vmatprep.subr.bf16.mxu0 %v4548
    %8174 = vmatpush1.bf16.msra.mxu0 %v4547
    %8175 = vmatprep.subr.bf16.mxu0 %v4540
    %8176 = vmatpush1.bf16.msra.mxu0 %v4539
    %8177 = vmatprep.subr.bf16.mxu0 %v4532
    %8178 = vmatpush1.bf16.msra.mxu0 %v4531
    %8179 = vmatprep.subr.bf16.mxu0 %v4524
    %8180 = vmatpush1.bf16.msra.mxu0 %v4523
    %8181 = vmatprep.subr.bf16.mxu0 %v4516
    %8182 = vmatpush1.bf16.msra.mxu0 %v4515
    %8183 = vmatprep.subr.bf16.mxu0 %v4508
    %8184 = vmatpush1.bf16.msra.mxu0 %v4507
    %8185 = vmatprep.subr.bf16.mxu0 %v4500
    %8186 = vmatpush1.bf16.msra.mxu0 %v4499
    %8187 = vmatprep.subr.bf16.mxu0 %v4620
    %8188 = vmatpush2.bf16.msra.mxu0 %v4619
    %8189 = vmatprep.subr.bf16.mxu0 %v4612
    %8190 = vmatpush2.bf16.msra.mxu0 %v4611
    %8191 = vmatprep.subr.bf16.mxu0 %v4604
    %8192 = vmatpush2.bf16.msra.mxu0 %v4603
    %8193 = vmatprep.subr.bf16.mxu0 %v4596
    %8194 = vmatpush2.bf16.msra.mxu0 %v4595
    %8195 = vmatprep.subr.bf16.mxu0 %v4588
    %8196 = vmatpush2.bf16.msra.mxu0 %v4587
    %8197 = vmatprep.subr.bf16.mxu0 %v4580
    %8198 = vmatpush2.bf16.msra.mxu0 %v4579
    %8199 = vmatprep.subr.bf16.mxu0 %v4572
    %8200 = vmatpush2.bf16.msra.mxu0 %v4571
    %8201 = vmatprep.subr.bf16.mxu0 %v4564
    %8202 = vmatpush2.bf16.msra.mxu0 %v4563
    %8203 = vmatprep.mubr.bf16.mxu0 %v8170
    %8204 = vmatmul.mubr.bf16.gmra.mxu0 %v8169
    %v8205 = vpop.f32.mrf.mxu0
    %v8206 = vadd.f32 0.0, %v8205
    %v8207 = vpop.f32.mrf.mxu0
    %v8208 = vadd.f32 0.0, %v8207
    %v8209 = vpop.f32.mrf.mxu0
    %v8210 = vpop.f32.mrf.mxu0
    %8211 = vdwg.mxu0
    %8212 = vmatprep.subr.bf16.mxu0 %v4558
    %8213 = vmatpush1.bf16.msra.mxu0 %v4557
    %8214 = vmatprep.subr.bf16.mxu0 %v4550
    %8215 = vmatpush1.bf16.msra.mxu0 %v4549
    %8216 = vmatprep.subr.bf16.mxu0 %v4542
    %8217 = vmatpush1.bf16.msra.mxu0 %v4541
    %8218 = vmatprep.subr.bf16.mxu0 %v4534
    %8219 = vmatpush1.bf16.msra.mxu0 %v4533
    %8220 = vmatprep.subr.bf16.mxu0 %v4526
    %8221 = vmatpush1.bf16.msra.mxu0 %v4525
    %8222 = vmatprep.subr.bf16.mxu0 %v4518
    %8223 = vmatpush1.bf16.msra.mxu0 %v4517
    %8224 = vmatprep.subr.bf16.mxu0 %v4510
    %8225 = vmatpush1.bf16.msra.mxu0 %v4509
    %8226 = vmatprep.subr.bf16.mxu0 %v4502
    %8227 = vmatpush1.bf16.msra.mxu0 %v4501
    %8228 = vmatprep.subr.bf16.mxu0 %v4622
    %8229 = vmatpush2.bf16.msra.mxu0 %v4621
    %8230 = vmatprep.subr.bf16.mxu0 %v4614
    %8231 = vmatpush2.bf16.msra.mxu0 %v4613
    %8232 = vmatprep.subr.bf16.mxu0 %v4606
    %8233 = vmatpush2.bf16.msra.mxu0 %v4605
    %8234 = vmatprep.subr.bf16.mxu0 %v4598
    %8235 = vmatpush2.bf16.msra.mxu0 %v4597
    %8236 = vmatprep.subr.bf16.mxu0 %v4590
    %8237 = vmatpush2.bf16.msra.mxu0 %v4589
    %8238 = vmatprep.subr.bf16.mxu0 %v4582
    %8239 = vmatpush2.bf16.msra.mxu0 %v4581
    %8240 = vmatprep.subr.bf16.mxu0 %v4574
    %8241 = vmatpush2.bf16.msra.mxu0 %v4573
    %8242 = vmatprep.subr.bf16.mxu0 %v4566
    %8243 = vmatpush2.bf16.msra.mxu0 %v4565
    %8244 = vmatprep.mubr.bf16.mxu0 %v8170
    %8245 = vmatmul.mubr.bf16.gmra.mxu0 %v8169
    %v8246 = vpop.f32.mrf.mxu0
    %v8247 = vadd.f32 0.0, %v8246
    %v8248 = vpop.f32.mrf.mxu0
    %v8249 = vadd.f32 0.0, %v8248
    %v8250 = vpop.f32.mrf.mxu0
    %v8251 = vpop.f32.mrf.mxu0
    %8252 = vdwg.mxu0
    %8253 = vmatprep.subr.bf16.mxu0 %v4560
    %8254 = vmatpush1.bf16.msra.mxu0 %v4559
    %8255 = vmatprep.subr.bf16.mxu0 %v4552
    %8256 = vmatpush1.bf16.msra.mxu0 %v4551
    %8257 = vmatprep.subr.bf16.mxu0 %v4544
    %8258 = vmatpush1.bf16.msra.mxu0 %v4543
    %8259 = vmatprep.subr.bf16.mxu0 %v4536
    %8260 = vmatpush1.bf16.msra.mxu0 %v4535
    %8261 = vmatprep.subr.bf16.mxu0 %v4528
    %8262 = vmatpush1.bf16.msra.mxu0 %v4527
    %8263 = vmatprep.subr.bf16.mxu0 %v4520
    %8264 = vmatpush1.bf16.msra.mxu0 %v4519
    %8265 = vmatprep.subr.bf16.mxu0 %v4512
    %8266 = vmatpush1.bf16.msra.mxu0 %v4511
    %8267 = vmatprep.subr.bf16.mxu0 %v4504
    %8268 = vmatpush1.bf16.msra.mxu0 %v4503
    %8269 = vmatprep.subr.bf16.mxu0 %v4624
    %8270 = vmatpush2.bf16.msra.mxu0 %v4623
    %8271 = vmatprep.subr.bf16.mxu0 %v4616
    %8272 = vmatpush2.bf16.msra.mxu0 %v4615
    %8273 = vmatprep.subr.bf16.mxu0 %v4608
    %8274 = vmatpush2.bf16.msra.mxu0 %v4607
    %8275 = vmatprep.subr.bf16.mxu0 %v4600
    %8276 = vmatpush2.bf16.msra.mxu0 %v4599
    %8277 = vmatprep.subr.bf16.mxu0 %v4592
    %8278 = vmatpush2.bf16.msra.mxu0 %v4591
    %8279 = vmatprep.subr.bf16.mxu0 %v4584
    %8280 = vmatpush2.bf16.msra.mxu0 %v4583
    %8281 = vmatprep.subr.bf16.mxu0 %v4576
    %8282 = vmatpush2.bf16.msra.mxu0 %v4575
    %8283 = vmatprep.subr.bf16.mxu0 %v4568
    %8284 = vmatpush2.bf16.msra.mxu0 %v4567
    %8285 = vmatprep.mubr.bf16.mxu0 %v8170
    %8286 = vmatmul.mubr.bf16.gmra.mxu0 %v8169
    %v8287 = vpop.f32.mrf.mxu0
    %v8288 = vadd.f32 0.0, %v8287
    %v8289 = vpop.f32.mrf.mxu0
    %v8290 = vadd.f32 0.0, %v8289
    %v8291 = vpop.f32.mrf.mxu0
    %v8292 = vpop.f32.mrf.mxu0
    %8293 = vdwg.mxu0
    %8294 = vmatprep.subr.bf16.mxu0 %v4562
    %8295 = vmatpush1.bf16.msra.mxu0 %v4561
    %8296 = vmatprep.subr.bf16.mxu0 %v4554
    %8297 = vmatpush1.bf16.msra.mxu0 %v4553
    %8298 = vmatprep.subr.bf16.mxu0 %v4546
    %8299 = vmatpush1.bf16.msra.mxu0 %v4545
    %8300 = vmatprep.subr.bf16.mxu0 %v4538
    %8301 = vmatpush1.bf16.msra.mxu0 %v4537
    %8302 = vmatprep.subr.bf16.mxu0 %v4530
    %8303 = vmatpush1.bf16.msra.mxu0 %v4529
    %8304 = vmatprep.subr.bf16.mxu0 %v4522
    %8305 = vmatpush1.bf16.msra.mxu0 %v4521
    %8306 = vmatprep.subr.bf16.mxu0 %v4514
    %8307 = vmatpush1.bf16.msra.mxu0 %v4513
    %8308 = vmatprep.subr.bf16.mxu0 %v4506
    %8309 = vmatpush1.bf16.msra.mxu0 %v4505
    %8310 = vmatprep.subr.bf16.mxu0 %v4626
    %8311 = vmatpush2.bf16.msra.mxu0 %v4625
    %8312 = vmatprep.subr.bf16.mxu0 %v4618
    %8313 = vmatpush2.bf16.msra.mxu0 %v4617
    %8314 = vmatprep.subr.bf16.mxu0 %v4610
    %8315 = vmatpush2.bf16.msra.mxu0 %v4609
    %8316 = vmatprep.subr.bf16.mxu0 %v4602
    %8317 = vmatpush2.bf16.msra.mxu0 %v4601
    %8318 = vmatprep.subr.bf16.mxu0 %v4594
    %8319 = vmatpush2.bf16.msra.mxu0 %v4593
    %8320 = vmatprep.subr.bf16.mxu0 %v4586
    %8321 = vmatpush2.bf16.msra.mxu0 %v4585
    %8322 = vmatprep.subr.bf16.mxu0 %v4578
    %8323 = vmatpush2.bf16.msra.mxu0 %v4577
    %8324 = vmatprep.subr.bf16.mxu0 %v4570
    %8325 = vmatpush2.bf16.msra.mxu0 %v4569
    %8326 = vmatprep.mubr.bf16.mxu0 %v8170
    %8327 = vmatmul.mubr.bf16.gmra.mxu0 %v8169
    %v8328 = vpop.f32.mrf.mxu0
    %v8329 = vadd.f32 0.0, %v8328
    %v8330 = vpop.f32.mrf.mxu0
    %v8331 = vadd.f32 0.0, %v8330
    %v8332 = vpop.f32.mrf.mxu0
    %v8333 = vpop.f32.mrf.mxu0
    %8334 = vdwg.mxu0
    %v8335 = vadd.f32 %v8153, %v8206
    %v8336 = vadd.f32 %v8154, %v8208
    %v8337 = vadd.f32 %v8155, %v8247
    %v8338 = vadd.f32 %v8156, %v8249
    %v8339 = vadd.f32 %v8157, %v8288
    %v8340 = vadd.f32 %v8158, %v8290
    %v8341 = vadd.f32 %v8159, %v8329
    %v8342 = vadd.f32 %v8160, %v8331
    %v8343 = vpack.c.bf16 %v8151, %v8151
    %v8344 = vpack.c.bf16 %v8152, %v8152
    %8345 = vmatprep.subr.bf16.mxu0 %v5368
    %8346 = vmatpush1.bf16.msra.mxu0 %v5367
    %8347 = vmatprep.subr.bf16.mxu0 %v5360
    %8348 = vmatpush1.bf16.msra.mxu0 %v5359
    %8349 = vmatprep.subr.bf16.mxu0 %v5352
    %8350 = vmatpush1.bf16.msra.mxu0 %v5351
    %8351 = vmatprep.subr.bf16.mxu0 %v5344
    %8352 = vmatpush1.bf16.msra.mxu0 %v5343
    %8353 = vmatprep.subr.bf16.mxu0 %v5336
    %8354 = vmatpush1.bf16.msra.mxu0 %v5335
    %8355 = vmatprep.subr.bf16.mxu0 %v5328
    %8356 = vmatpush1.bf16.msra.mxu0 %v5327
    %8357 = vmatprep.subr.bf16.mxu0 %v5320
    %8358 = vmatpush1.bf16.msra.mxu0 %v5319
    %8359 = vmatprep.subr.bf16.mxu0 %v5312
    %8360 = vmatpush1.bf16.msra.mxu0 %v5311
    %8361 = vmatprep.subr.bf16.mxu0 %v5432
    %8362 = vmatpush2.bf16.msra.mxu0 %v5431
    %8363 = vmatprep.subr.bf16.mxu0 %v5424
    %8364 = vmatpush2.bf16.msra.mxu0 %v5423
    %8365 = vmatprep.subr.bf16.mxu0 %v5416
    %8366 = vmatpush2.bf16.msra.mxu0 %v5415
    %8367 = vmatprep.subr.bf16.mxu0 %v5408
    %8368 = vmatpush2.bf16.msra.mxu0 %v5407
    %8369 = vmatprep.subr.bf16.mxu0 %v5400
    %8370 = vmatpush2.bf16.msra.mxu0 %v5399
    %8371 = vmatprep.subr.bf16.mxu0 %v5392
    %8372 = vmatpush2.bf16.msra.mxu0 %v5391
    %8373 = vmatprep.subr.bf16.mxu0 %v5384
    %8374 = vmatpush2.bf16.msra.mxu0 %v5383
    %8375 = vmatprep.subr.bf16.mxu0 %v5376
    %8376 = vmatpush2.bf16.msra.mxu0 %v5375
    %8377 = vmatprep.mubr.bf16.mxu0 %v8344
    %8378 = vmatmul.mubr.bf16.gmra.mxu0 %v8343
    %v8379 = vpop.f32.mrf.mxu0
    %v8380 = vadd.f32 0.0, %v8379
    %v8381 = vpop.f32.mrf.mxu0
    %v8382 = vadd.f32 0.0, %v8381
    %v8383 = vpop.f32.mrf.mxu0
    %v8384 = vpop.f32.mrf.mxu0
    %8385 = vdwg.mxu0
    %8386 = vmatprep.subr.bf16.mxu0 %v5370
    %8387 = vmatpush1.bf16.msra.mxu0 %v5369
    %8388 = vmatprep.subr.bf16.mxu0 %v5362
    %8389 = vmatpush1.bf16.msra.mxu0 %v5361
    %8390 = vmatprep.subr.bf16.mxu0 %v5354
    %8391 = vmatpush1.bf16.msra.mxu0 %v5353
    %8392 = vmatprep.subr.bf16.mxu0 %v5346
    %8393 = vmatpush1.bf16.msra.mxu0 %v5345
    %8394 = vmatprep.subr.bf16.mxu0 %v5338
    %8395 = vmatpush1.bf16.msra.mxu0 %v5337
    %8396 = vmatprep.subr.bf16.mxu0 %v5330
    %8397 = vmatpush1.bf16.msra.mxu0 %v5329
    %8398 = vmatprep.subr.bf16.mxu0 %v5322
    %8399 = vmatpush1.bf16.msra.mxu0 %v5321
    %8400 = vmatprep.subr.bf16.mxu0 %v5314
    %8401 = vmatpush1.bf16.msra.mxu0 %v5313
    %8402 = vmatprep.subr.bf16.mxu0 %v5434
    %8403 = vmatpush2.bf16.msra.mxu0 %v5433
    %8404 = vmatprep.subr.bf16.mxu0 %v5426
    %8405 = vmatpush2.bf16.msra.mxu0 %v5425
    %8406 = vmatprep.subr.bf16.mxu0 %v5418
    %8407 = vmatpush2.bf16.msra.mxu0 %v5417
    %8408 = vmatprep.subr.bf16.mxu0 %v5410
    %8409 = vmatpush2.bf16.msra.mxu0 %v5409
    %8410 = vmatprep.subr.bf16.mxu0 %v5402
    %8411 = vmatpush2.bf16.msra.mxu0 %v5401
    %8412 = vmatprep.subr.bf16.mxu0 %v5394
    %8413 = vmatpush2.bf16.msra.mxu0 %v5393
    %8414 = vmatprep.subr.bf16.mxu0 %v5386
    %8415 = vmatpush2.bf16.msra.mxu0 %v5385
    %8416 = vmatprep.subr.bf16.mxu0 %v5378
    %8417 = vmatpush2.bf16.msra.mxu0 %v5377
    %8418 = vmatprep.mubr.bf16.mxu0 %v8344
    %8419 = vmatmul.mubr.bf16.gmra.mxu0 %v8343
    %v8420 = vpop.f32.mrf.mxu0
    %v8421 = vadd.f32 0.0, %v8420
    %v8422 = vpop.f32.mrf.mxu0
    %v8423 = vadd.f32 0.0, %v8422
    %v8424 = vpop.f32.mrf.mxu0
    %v8425 = vpop.f32.mrf.mxu0
    %8426 = vdwg.mxu0
    %8427 = vmatprep.subr.bf16.mxu0 %v5372
    %8428 = vmatpush1.bf16.msra.mxu0 %v5371
    %8429 = vmatprep.subr.bf16.mxu0 %v5364
    %8430 = vmatpush1.bf16.msra.mxu0 %v5363
    %8431 = vmatprep.subr.bf16.mxu0 %v5356
    %8432 = vmatpush1.bf16.msra.mxu0 %v5355
    %8433 = vmatprep.subr.bf16.mxu0 %v5348
    %8434 = vmatpush1.bf16.msra.mxu0 %v5347
    %8435 = vmatprep.subr.bf16.mxu0 %v5340
    %8436 = vmatpush1.bf16.msra.mxu0 %v5339
    %8437 = vmatprep.subr.bf16.mxu0 %v5332
    %8438 = vmatpush1.bf16.msra.mxu0 %v5331
    %8439 = vmatprep.subr.bf16.mxu0 %v5324
    %8440 = vmatpush1.bf16.msra.mxu0 %v5323
    %8441 = vmatprep.subr.bf16.mxu0 %v5316
    %8442 = vmatpush1.bf16.msra.mxu0 %v5315
    %8443 = vmatprep.subr.bf16.mxu0 %v5436
    %8444 = vmatpush2.bf16.msra.mxu0 %v5435
    %8445 = vmatprep.subr.bf16.mxu0 %v5428
    %8446 = vmatpush2.bf16.msra.mxu0 %v5427
    %8447 = vmatprep.subr.bf16.mxu0 %v5420
    %8448 = vmatpush2.bf16.msra.mxu0 %v5419
    %8449 = vmatprep.subr.bf16.mxu0 %v5412
    %8450 = vmatpush2.bf16.msra.mxu0 %v5411
    %8451 = vmatprep.subr.bf16.mxu0 %v5404
    %8452 = vmatpush2.bf16.msra.mxu0 %v5403
    %8453 = vmatprep.subr.bf16.mxu0 %v5396
    %8454 = vmatpush2.bf16.msra.mxu0 %v5395
    %8455 = vmatprep.subr.bf16.mxu0 %v5388
    %8456 = vmatpush2.bf16.msra.mxu0 %v5387
    %8457 = vmatprep.subr.bf16.mxu0 %v5380
    %8458 = vmatpush2.bf16.msra.mxu0 %v5379
    %8459 = vmatprep.mubr.bf16.mxu0 %v8344
    %8460 = vmatmul.mubr.bf16.gmra.mxu0 %v8343
    %v8461 = vpop.f32.mrf.mxu0
    %v8462 = vadd.f32 0.0, %v8461
    %v8463 = vpop.f32.mrf.mxu0
    %v8464 = vadd.f32 0.0, %v8463
    %v8465 = vpop.f32.mrf.mxu0
    %v8466 = vpop.f32.mrf.mxu0
    %8467 = vdwg.mxu0
    %8468 = vmatprep.subr.bf16.mxu0 %v5374
    %8469 = vmatpush1.bf16.msra.mxu0 %v5373
    %8470 = vmatprep.subr.bf16.mxu0 %v5366
    %8471 = vmatpush1.bf16.msra.mxu0 %v5365
    %8472 = vmatprep.subr.bf16.mxu0 %v5358
    %8473 = vmatpush1.bf16.msra.mxu0 %v5357
    %8474 = vmatprep.subr.bf16.mxu0 %v5350
    %8475 = vmatpush1.bf16.msra.mxu0 %v5349
    %8476 = vmatprep.subr.bf16.mxu0 %v5342
    %8477 = vmatpush1.bf16.msra.mxu0 %v5341
    %8478 = vmatprep.subr.bf16.mxu0 %v5334
    %8479 = vmatpush1.bf16.msra.mxu0 %v5333
    %8480 = vmatprep.subr.bf16.mxu0 %v5326
    %8481 = vmatpush1.bf16.msra.mxu0 %v5325
    %8482 = vmatprep.subr.bf16.mxu0 %v5318
    %8483 = vmatpush1.bf16.msra.mxu0 %v5317
    %8484 = vmatprep.subr.bf16.mxu0 %v5438
    %8485 = vmatpush2.bf16.msra.mxu0 %v5437
    %8486 = vmatprep.subr.bf16.mxu0 %v5430
    %8487 = vmatpush2.bf16.msra.mxu0 %v5429
    %8488 = vmatprep.subr.bf16.mxu0 %v5422
    %8489 = vmatpush2.bf16.msra.mxu0 %v5421
    %8490 = vmatprep.subr.bf16.mxu0 %v5414
    %8491 = vmatpush2.bf16.msra.mxu0 %v5413
    %8492 = vmatprep.subr.bf16.mxu0 %v5406
    %8493 = vmatpush2.bf16.msra.mxu0 %v5405
    %8494 = vmatprep.subr.bf16.mxu0 %v5398
    %8495 = vmatpush2.bf16.msra.mxu0 %v5397
    %8496 = vmatprep.subr.bf16.mxu0 %v5390
    %8497 = vmatpush2.bf16.msra.mxu0 %v5389
    %8498 = vmatprep.subr.bf16.mxu0 %v5382
    %8499 = vmatpush2.bf16.msra.mxu0 %v5381
    %8500 = vmatprep.mubr.bf16.mxu0 %v8344
    %8501 = vmatmul.mubr.bf16.gmra.mxu0 %v8343
    %v8502 = vpop.f32.mrf.mxu0
    %v8503 = vadd.f32 0.0, %v8502
    %v8504 = vpop.f32.mrf.mxu0
    %v8505 = vadd.f32 0.0, %v8504
    %v8506 = vpop.f32.mrf.mxu0
    %v8507 = vpop.f32.mrf.mxu0
    %8508 = vdwg.mxu0
    %v8509 = vadd.f32 %v8161, %v8380
    %v8510 = vadd.f32 %v8162, %v8382
    %v8511 = vadd.f32 %v8163, %v8421
    %v8512 = vadd.f32 %v8164, %v8423
    %v8513 = vadd.f32 %v8165, %v8462
    %v8514 = vadd.f32 %v8166, %v8464
    %v8515 = vadd.f32 %v8167, %v8503
    %v8516 = vadd.f32 %v8168, %v8505
    %v8517 = vxor.u32 %v8335, 2147483648
    %v8518 = vxor.u32 %v8336, 2147483648
    %v8519 = vmul.f32 %v8517, 1.442695
    %v8520 = vpow.pop %v8519
    %v8521 = vmul.f32 %v8518, 1.442695
    %v8522 = vpow.pop %v8521
    %v8523 = vadd.f32 %v8520, 1.0
    %v8524 = vadd.f32 %v8522, 1.0
    %v8525 = vrcp.pop %v8523
    %v8526 = vmul.f32 1.0, %v8525
    %v8527 = vrcp.pop %v8524
    %v8528 = vmul.f32 1.0, %v8527
    %v8529 = vxor.u32 %v8337, 2147483648
    %v8530 = vxor.u32 %v8338, 2147483648
    %v8531 = vmul.f32 %v8529, 1.442695
    %v8532 = vpow.pop %v8531
    %v8533 = vmul.f32 %v8530, 1.442695
    %v8534 = vpow.pop %v8533
    %v8535 = vadd.f32 %v8532, 1.0
    %v8536 = vadd.f32 %v8534, 1.0
    %v8537 = vrcp.pop %v8535
    %v8538 = vmul.f32 1.0, %v8537
    %v8539 = vrcp.pop %v8536
    %v8540 = vmul.f32 1.0, %v8539
    %v8541 = vtanh.pop %v8339
    %v8542 = vtanh.pop %v8340
    %v8543 = vxor.u32 %v8341, 2147483648
    %v8544 = vxor.u32 %v8342, 2147483648
    %v8545 = vmul.f32 %v8543, 1.442695
    %v8546 = vpow.pop %v8545
    %v8547 = vmul.f32 %v8544, 1.442695
    %v8548 = vpow.pop %v8547
    %v8549 = vadd.f32 %v8546, 1.0
    %v8550 = vadd.f32 %v8548, 1.0
    %v8551 = vrcp.pop %v8549
    %v8552 = vmul.f32 1.0, %v8551
    %v8553 = vrcp.pop %v8550
    %v8554 = vmul.f32 1.0, %v8553
    %v8555 = vmul.f32 %v8538, %v8099
    %v8556 = vmul.f32 %v8540, %v8100
    %v8557 = vmul.f32 %v8526, %v8541
    %v8558 = vmul.f32 %v8528, %v8542
    %v8559 = vadd.f32 %v8555, %v8557
    %v8560 = vadd.f32 %v8556, %v8558
    %v8561 = vtanh.pop %v8559
    %v8562 = vtanh.pop %v8560
    %v8563 = vmul.f32 %v8552, %v8561
    %v8564 = vmul.f32 %v8554, %v8562
    %v8565 = vxor.u32 %v8509, 2147483648
    %v8566 = vxor.u32 %v8510, 2147483648
    %v8567 = vmul.f32 %v8565, 1.442695
    %v8568 = vpow.pop %v8567
    %v8569 = vmul.f32 %v8566, 1.442695
    %v8570 = vpow.pop %v8569
    %v8571 = vadd.f32 %v8568, 1.0
    %v8572 = vadd.f32 %v8570, 1.0
    %v8573 = vrcp.pop %v8571
    %v8574 = vmul.f32 1.0, %v8573
    %v8575 = vrcp.pop %v8572
    %v8576 = vmul.f32 1.0, %v8575
    %v8577 = vxor.u32 %v8511, 2147483648
    %v8578 = vxor.u32 %v8512, 2147483648
    %v8579 = vmul.f32 %v8577, 1.442695
    %v8580 = vpow.pop %v8579
    %v8581 = vmul.f32 %v8578, 1.442695
    %v8582 = vpow.pop %v8581
    %v8583 = vadd.f32 %v8580, 1.0
    %v8584 = vadd.f32 %v8582, 1.0
    %v8585 = vrcp.pop %v8583
    %v8586 = vmul.f32 1.0, %v8585
    %v8587 = vrcp.pop %v8584
    %v8588 = vmul.f32 1.0, %v8587
    %v8589 = vtanh.pop %v8513
    %v8590 = vtanh.pop %v8514
    %v8591 = vxor.u32 %v8515, 2147483648
    %v8592 = vxor.u32 %v8516, 2147483648
    %v8593 = vmul.f32 %v8591, 1.442695
    %v8594 = vpow.pop %v8593
    %v8595 = vmul.f32 %v8592, 1.442695
    %v8596 = vpow.pop %v8595
    %v8597 = vadd.f32 %v8594, 1.0
    %v8598 = vadd.f32 %v8596, 1.0
    %v8599 = vrcp.pop %v8597
    %v8600 = vmul.f32 1.0, %v8599
    %v8601 = vrcp.pop %v8598
    %v8602 = vmul.f32 1.0, %v8601
    %v8603 = vmul.f32 %v8586, %v8147
    %v8604 = vmul.f32 %v8588, %v8148
    %v8605 = vmul.f32 %v8574, %v8589
    %v8606 = vmul.f32 %v8576, %v8590
    %v8607 = vadd.f32 %v8603, %v8605
    %v8608 = vadd.f32 %v8604, %v8606
    %v8609 = vtanh.pop %v8607
    %v8610 = vtanh.pop %v8608
    %v8611 = vmul.f32 %v8600, %v8609
    %v8612 = vmul.f32 %v8602, %v8610
    %v8613 = vld [vmem:[%s4106] sm:$0xff]
    %v8614 = vld [vmem:[%s4106 + $0x8] sm:$0xff]
    %v8615 = vld [vmem:[%s4106 + $0x10] sm:$0xff]
    %v8616 = vld [vmem:[%s4106 + $0x18] sm:$0xff]
    %v8617 = vld [vmem:[%s4106 + $0x20] sm:$0xff]
    %v8618 = vld [vmem:[%s4106 + $0x28] sm:$0xff]
    %v8619 = vld [vmem:[%s4106 + $0x30] sm:$0xff]
    %v8620 = vld [vmem:[%s4106 + $0x38] sm:$0xff]
    %v8621 = vld [vmem:[%s4095 + $0x40] sm:$0xff]
    %v8622 = vld [vmem:[%s4095 + $0x48] sm:$0xff]
    %v8623 = vld [vmem:[%s4095 + $0x50] sm:$0xff]
    %v8624 = vld [vmem:[%s4095 + $0x58] sm:$0xff]
    %v8625 = vld [vmem:[%s4095 + $0x60] sm:$0xff]
    %v8626 = vld [vmem:[%s4095 + $0x68] sm:$0xff]
    %v8627 = vld [vmem:[%s4095 + $0x70] sm:$0xff]
    %v8628 = vld [vmem:[%s4095 + $0x78] sm:$0xff]
    %v8629 = vpack.c.bf16 %v8563, %v8563
    %v8630 = vpack.c.bf16 %v8564, %v8564
    %8631 = vmatprep.subr.bf16.mxu0 %v4556
    %8632 = vmatpush1.bf16.msra.mxu0 %v4555
    %8633 = vmatprep.subr.bf16.mxu0 %v4548
    %8634 = vmatpush1.bf16.msra.mxu0 %v4547
    %8635 = vmatprep.subr.bf16.mxu0 %v4540
    %8636 = vmatpush1.bf16.msra.mxu0 %v4539
    %8637 = vmatprep.subr.bf16.mxu0 %v4532
    %8638 = vmatpush1.bf16.msra.mxu0 %v4531
    %8639 = vmatprep.subr.bf16.mxu0 %v4524
    %8640 = vmatpush1.bf16.msra.mxu0 %v4523
    %8641 = vmatprep.subr.bf16.mxu0 %v4516
    %8642 = vmatpush1.bf16.msra.mxu0 %v4515
    %8643 = vmatprep.subr.bf16.mxu0 %v4508
    %8644 = vmatpush1.bf16.msra.mxu0 %v4507
    %8645 = vmatprep.subr.bf16.mxu0 %v4500
    %8646 = vmatpush1.bf16.msra.mxu0 %v4499
    %8647 = vmatprep.subr.bf16.mxu0 %v4620
    %8648 = vmatpush2.bf16.msra.mxu0 %v4619
    %8649 = vmatprep.subr.bf16.mxu0 %v4612
    %8650 = vmatpush2.bf16.msra.mxu0 %v4611
    %8651 = vmatprep.subr.bf16.mxu0 %v4604
    %8652 = vmatpush2.bf16.msra.mxu0 %v4603
    %8653 = vmatprep.subr.bf16.mxu0 %v4596
    %8654 = vmatpush2.bf16.msra.mxu0 %v4595
    %8655 = vmatprep.subr.bf16.mxu0 %v4588
    %8656 = vmatpush2.bf16.msra.mxu0 %v4587
    %8657 = vmatprep.subr.bf16.mxu0 %v4580
    %8658 = vmatpush2.bf16.msra.mxu0 %v4579
    %8659 = vmatprep.subr.bf16.mxu0 %v4572
    %8660 = vmatpush2.bf16.msra.mxu0 %v4571
    %8661 = vmatprep.subr.bf16.mxu0 %v4564
    %8662 = vmatpush2.bf16.msra.mxu0 %v4563
    %8663 = vmatprep.mubr.bf16.mxu0 %v8630
    %8664 = vmatmul.mubr.bf16.gmra.mxu0 %v8629
    %v8665 = vpop.f32.mrf.mxu0
    %v8666 = vadd.f32 0.0, %v8665
    %v8667 = vpop.f32.mrf.mxu0
    %v8668 = vadd.f32 0.0, %v8667
    %v8669 = vpop.f32.mrf.mxu0
    %v8670 = vpop.f32.mrf.mxu0
    %8671 = vdwg.mxu0
    %8672 = vmatprep.subr.bf16.mxu0 %v4558
    %8673 = vmatpush1.bf16.msra.mxu0 %v4557
    %8674 = vmatprep.subr.bf16.mxu0 %v4550
    %8675 = vmatpush1.bf16.msra.mxu0 %v4549
    %8676 = vmatprep.subr.bf16.mxu0 %v4542
    %8677 = vmatpush1.bf16.msra.mxu0 %v4541
    %8678 = vmatprep.subr.bf16.mxu0 %v4534
    %8679 = vmatpush1.bf16.msra.mxu0 %v4533
    %8680 = vmatprep.subr.bf16.mxu0 %v4526
    %8681 = vmatpush1.bf16.msra.mxu0 %v4525
    %8682 = vmatprep.subr.bf16.mxu0 %v4518
    %8683 = vmatpush1.bf16.msra.mxu0 %v4517
    %8684 = vmatprep.subr.bf16.mxu0 %v4510
    %8685 = vmatpush1.bf16.msra.mxu0 %v4509
    %8686 = vmatprep.subr.bf16.mxu0 %v4502
    %8687 = vmatpush1.bf16.msra.mxu0 %v4501
    %8688 = vmatprep.subr.bf16.mxu0 %v4622
    %8689 = vmatpush2.bf16.msra.mxu0 %v4621
    %8690 = vmatprep.subr.bf16.mxu0 %v4614
    %8691 = vmatpush2.bf16.msra.mxu0 %v4613
    %8692 = vmatprep.subr.bf16.mxu0 %v4606
    %8693 = vmatpush2.bf16.msra.mxu0 %v4605
    %8694 = vmatprep.subr.bf16.mxu0 %v4598
    %8695 = vmatpush2.bf16.msra.mxu0 %v4597
    %8696 = vmatprep.subr.bf16.mxu0 %v4590
    %8697 = vmatpush2.bf16.msra.mxu0 %v4589
    %8698 = vmatprep.subr.bf16.mxu0 %v4582
    %8699 = vmatpush2.bf16.msra.mxu0 %v4581
    %8700 = vmatprep.subr.bf16.mxu0 %v4574
    %8701 = vmatpush2.bf16.msra.mxu0 %v4573
    %8702 = vmatprep.subr.bf16.mxu0 %v4566
    %8703 = vmatpush2.bf16.msra.mxu0 %v4565
    %8704 = vmatprep.mubr.bf16.mxu0 %v8630
    %8705 = vmatmul.mubr.bf16.gmra.mxu0 %v8629
    %v8706 = vpop.f32.mrf.mxu0
    %v8707 = vadd.f32 0.0, %v8706
    %v8708 = vpop.f32.mrf.mxu0
    %v8709 = vadd.f32 0.0, %v8708
    %v8710 = vpop.f32.mrf.mxu0
    %v8711 = vpop.f32.mrf.mxu0
    %8712 = vdwg.mxu0
    %8713 = vmatprep.subr.bf16.mxu0 %v4560
    %8714 = vmatpush1.bf16.msra.mxu0 %v4559
    %8715 = vmatprep.subr.bf16.mxu0 %v4552
    %8716 = vmatpush1.bf16.msra.mxu0 %v4551
    %8717 = vmatprep.subr.bf16.mxu0 %v4544
    %8718 = vmatpush1.bf16.msra.mxu0 %v4543
    %8719 = vmatprep.subr.bf16.mxu0 %v4536
    %8720 = vmatpush1.bf16.msra.mxu0 %v4535
    %8721 = vmatprep.subr.bf16.mxu0 %v4528
    %8722 = vmatpush1.bf16.msra.mxu0 %v4527
    %8723 = vmatprep.subr.bf16.mxu0 %v4520
    %8724 = vmatpush1.bf16.msra.mxu0 %v4519
    %8725 = vmatprep.subr.bf16.mxu0 %v4512
    %8726 = vmatpush1.bf16.msra.mxu0 %v4511
    %8727 = vmatprep.subr.bf16.mxu0 %v4504
    %8728 = vmatpush1.bf16.msra.mxu0 %v4503
    %8729 = vmatprep.subr.bf16.mxu0 %v4624
    %8730 = vmatpush2.bf16.msra.mxu0 %v4623
    %8731 = vmatprep.subr.bf16.mxu0 %v4616
    %8732 = vmatpush2.bf16.msra.mxu0 %v4615
    %8733 = vmatprep.subr.bf16.mxu0 %v4608
    %8734 = vmatpush2.bf16.msra.mxu0 %v4607
    %8735 = vmatprep.subr.bf16.mxu0 %v4600
    %8736 = vmatpush2.bf16.msra.mxu0 %v4599
    %8737 = vmatprep.subr.bf16.mxu0 %v4592
    %8738 = vmatpush2.bf16.msra.mxu0 %v4591
    %8739 = vmatprep.subr.bf16.mxu0 %v4584
    %8740 = vmatpush2.bf16.msra.mxu0 %v4583
    %8741 = vmatprep.subr.bf16.mxu0 %v4576
    %8742 = vmatpush2.bf16.msra.mxu0 %v4575
    %8743 = vmatprep.subr.bf16.mxu0 %v4568
    %8744 = vmatpush2.bf16.msra.mxu0 %v4567
    %8745 = vmatprep.mubr.bf16.mxu0 %v8630
    %8746 = vmatmul.mubr.bf16.gmra.mxu0 %v8629
    %v8747 = vpop.f32.mrf.mxu0
    %v8748 = vadd.f32 0.0, %v8747
    %v8749 = vpop.f32.mrf.mxu0
    %v8750 = vadd.f32 0.0, %v8749
    %v8751 = vpop.f32.mrf.mxu0
    %v8752 = vpop.f32.mrf.mxu0
    %8753 = vdwg.mxu0
    %8754 = vmatprep.subr.bf16.mxu0 %v4562
    %8755 = vmatpush1.bf16.msra.mxu0 %v4561
    %8756 = vmatprep.subr.bf16.mxu0 %v4554
    %8757 = vmatpush1.bf16.msra.mxu0 %v4553
    %8758 = vmatprep.subr.bf16.mxu0 %v4546
    %8759 = vmatpush1.bf16.msra.mxu0 %v4545
    %8760 = vmatprep.subr.bf16.mxu0 %v4538
    %8761 = vmatpush1.bf16.msra.mxu0 %v4537
    %8762 = vmatprep.subr.bf16.mxu0 %v4530
    %8763 = vmatpush1.bf16.msra.mxu0 %v4529
    %8764 = vmatprep.subr.bf16.mxu0 %v4522
    %8765 = vmatpush1.bf16.msra.mxu0 %v4521
    %8766 = vmatprep.subr.bf16.mxu0 %v4514
    %8767 = vmatpush1.bf16.msra.mxu0 %v4513
    %8768 = vmatprep.subr.bf16.mxu0 %v4506
    %8769 = vmatpush1.bf16.msra.mxu0 %v4505
    %8770 = vmatprep.subr.bf16.mxu0 %v4626
    %8771 = vmatpush2.bf16.msra.mxu0 %v4625
    %8772 = vmatprep.subr.bf16.mxu0 %v4618
    %8773 = vmatpush2.bf16.msra.mxu0 %v4617
    %8774 = vmatprep.subr.bf16.mxu0 %v4610
    %8775 = vmatpush2.bf16.msra.mxu0 %v4609
    %8776 = vmatprep.subr.bf16.mxu0 %v4602
    %8777 = vmatpush2.bf16.msra.mxu0 %v4601
    %8778 = vmatprep.subr.bf16.mxu0 %v4594
    %8779 = vmatpush2.bf16.msra.mxu0 %v4593
    %8780 = vmatprep.subr.bf16.mxu0 %v4586
    %8781 = vmatpush2.bf16.msra.mxu0 %v4585
    %8782 = vmatprep.subr.bf16.mxu0 %v4578
    %8783 = vmatpush2.bf16.msra.mxu0 %v4577
    %8784 = vmatprep.subr.bf16.mxu0 %v4570
    %8785 = vmatpush2.bf16.msra.mxu0 %v4569
    %8786 = vmatprep.mubr.bf16.mxu0 %v8630
    %8787 = vmatmul.mubr.bf16.gmra.mxu0 %v8629
    %v8788 = vpop.f32.mrf.mxu0
    %v8789 = vadd.f32 0.0, %v8788
    %v8790 = vpop.f32.mrf.mxu0
    %v8791 = vadd.f32 0.0, %v8790
    %v8792 = vpop.f32.mrf.mxu0
    %v8793 = vpop.f32.mrf.mxu0
    %8794 = vdwg.mxu0
    %v8795 = vadd.f32 %v8613, %v8666
    %v8796 = vadd.f32 %v8614, %v8668
    %v8797 = vadd.f32 %v8615, %v8707
    %v8798 = vadd.f32 %v8616, %v8709
    %v8799 = vadd.f32 %v8617, %v8748
    %v8800 = vadd.f32 %v8618, %v8750
    %v8801 = vadd.f32 %v8619, %v8789
    %v8802 = vadd.f32 %v8620, %v8791
    %v8803 = vpack.c.bf16 %v8611, %v8611
    %v8804 = vpack.c.bf16 %v8612, %v8612
    %8805 = vmatprep.subr.bf16.mxu0 %v5368
    %8806 = vmatpush1.bf16.msra.mxu0 %v5367
    %8807 = vmatprep.subr.bf16.mxu0 %v5360
    %8808 = vmatpush1.bf16.msra.mxu0 %v5359
    %8809 = vmatprep.subr.bf16.mxu0 %v5352
    %8810 = vmatpush1.bf16.msra.mxu0 %v5351
    %8811 = vmatprep.subr.bf16.mxu0 %v5344
    %8812 = vmatpush1.bf16.msra.mxu0 %v5343
    %8813 = vmatprep.subr.bf16.mxu0 %v5336
    %8814 = vmatpush1.bf16.msra.mxu0 %v5335
    %8815 = vmatprep.subr.bf16.mxu0 %v5328
    %8816 = vmatpush1.bf16.msra.mxu0 %v5327
    %8817 = vmatprep.subr.bf16.mxu0 %v5320
    %8818 = vmatpush1.bf16.msra.mxu0 %v5319
    %8819 = vmatprep.subr.bf16.mxu0 %v5312
    %8820 = vmatpush1.bf16.msra.mxu0 %v5311
    %8821 = vmatprep.subr.bf16.mxu0 %v5432
    %8822 = vmatpush2.bf16.msra.mxu0 %v5431
    %8823 = vmatprep.subr.bf16.mxu0 %v5424
    %8824 = vmatpush2.bf16.msra.mxu0 %v5423
    %8825 = vmatprep.subr.bf16.mxu0 %v5416
    %8826 = vmatpush2.bf16.msra.mxu0 %v5415
    %8827 = vmatprep.subr.bf16.mxu0 %v5408
    %8828 = vmatpush2.bf16.msra.mxu0 %v5407
    %8829 = vmatprep.subr.bf16.mxu0 %v5400
    %8830 = vmatpush2.bf16.msra.mxu0 %v5399
    %8831 = vmatprep.subr.bf16.mxu0 %v5392
    %8832 = vmatpush2.bf16.msra.mxu0 %v5391
    %8833 = vmatprep.subr.bf16.mxu0 %v5384
    %8834 = vmatpush2.bf16.msra.mxu0 %v5383
    %8835 = vmatprep.subr.bf16.mxu0 %v5376
    %8836 = vmatpush2.bf16.msra.mxu0 %v5375
    %8837 = vmatprep.mubr.bf16.mxu0 %v8804
    %8838 = vmatmul.mubr.bf16.gmra.mxu0 %v8803
    %v8839 = vpop.f32.mrf.mxu0
    %v8840 = vadd.f32 0.0, %v8839
    %v8841 = vpop.f32.mrf.mxu0
    %v8842 = vadd.f32 0.0, %v8841
    %v8843 = vpop.f32.mrf.mxu0
    %v8844 = vpop.f32.mrf.mxu0
    %8845 = vdwg.mxu0
    %8846 = vmatprep.subr.bf16.mxu0 %v5370
    %8847 = vmatpush1.bf16.msra.mxu0 %v5369
    %8848 = vmatprep.subr.bf16.mxu0 %v5362
    %8849 = vmatpush1.bf16.msra.mxu0 %v5361
    %8850 = vmatprep.subr.bf16.mxu0 %v5354
    %8851 = vmatpush1.bf16.msra.mxu0 %v5353
    %8852 = vmatprep.subr.bf16.mxu0 %v5346
    %8853 = vmatpush1.bf16.msra.mxu0 %v5345
    %8854 = vmatprep.subr.bf16.mxu0 %v5338
    %8855 = vmatpush1.bf16.msra.mxu0 %v5337
    %8856 = vmatprep.subr.bf16.mxu0 %v5330
    %8857 = vmatpush1.bf16.msra.mxu0 %v5329
    %8858 = vmatprep.subr.bf16.mxu0 %v5322
    %8859 = vmatpush1.bf16.msra.mxu0 %v5321
    %8860 = vmatprep.subr.bf16.mxu0 %v5314
    %8861 = vmatpush1.bf16.msra.mxu0 %v5313
    %8862 = vmatprep.subr.bf16.mxu0 %v5434
    %8863 = vmatpush2.bf16.msra.mxu0 %v5433
    %8864 = vmatprep.subr.bf16.mxu0 %v5426
    %8865 = vmatpush2.bf16.msra.mxu0 %v5425
    %8866 = vmatprep.subr.bf16.mxu0 %v5418
    %8867 = vmatpush2.bf16.msra.mxu0 %v5417
    %8868 = vmatprep.subr.bf16.mxu0 %v5410
    %8869 = vmatpush2.bf16.msra.mxu0 %v5409
    %8870 = vmatprep.subr.bf16.mxu0 %v5402
    %8871 = vmatpush2.bf16.msra.mxu0 %v5401
    %8872 = vmatprep.subr.bf16.mxu0 %v5394
    %8873 = vmatpush2.bf16.msra.mxu0 %v5393
    %8874 = vmatprep.subr.bf16.mxu0 %v5386
    %8875 = vmatpush2.bf16.msra.mxu0 %v5385
    %8876 = vmatprep.subr.bf16.mxu0 %v5378
    %8877 = vmatpush2.bf16.msra.mxu0 %v5377
    %8878 = vmatprep.mubr.bf16.mxu0 %v8804
    %8879 = vmatmul.mubr.bf16.gmra.mxu0 %v8803
    %v8880 = vpop.f32.mrf.mxu0
    %v8881 = vadd.f32 0.0, %v8880
    %v8882 = vpop.f32.mrf.mxu0
    %v8883 = vadd.f32 0.0, %v8882
    %v8884 = vpop.f32.mrf.mxu0
    %v8885 = vpop.f32.mrf.mxu0
    %8886 = vdwg.mxu0
    %8887 = vmatprep.subr.bf16.mxu0 %v5372
    %8888 = vmatpush1.bf16.msra.mxu0 %v5371
    %8889 = vmatprep.subr.bf16.mxu0 %v5364
    %8890 = vmatpush1.bf16.msra.mxu0 %v5363
    %8891 = vmatprep.subr.bf16.mxu0 %v5356
    %8892 = vmatpush1.bf16.msra.mxu0 %v5355
    %8893 = vmatprep.subr.bf16.mxu0 %v5348
    %8894 = vmatpush1.bf16.msra.mxu0 %v5347
    %8895 = vmatprep.subr.bf16.mxu0 %v5340
    %8896 = vmatpush1.bf16.msra.mxu0 %v5339
    %8897 = vmatprep.subr.bf16.mxu0 %v5332
    %8898 = vmatpush1.bf16.msra.mxu0 %v5331
    %8899 = vmatprep.subr.bf16.mxu0 %v5324
    %8900 = vmatpush1.bf16.msra.mxu0 %v5323
    %8901 = vmatprep.subr.bf16.mxu0 %v5316
    %8902 = vmatpush1.bf16.msra.mxu0 %v5315
    %8903 = vmatprep.subr.bf16.mxu0 %v5436
    %8904 = vmatpush2.bf16.msra.mxu0 %v5435
    %8905 = vmatprep.subr.bf16.mxu0 %v5428
    %8906 = vmatpush2.bf16.msra.mxu0 %v5427
    %8907 = vmatprep.subr.bf16.mxu0 %v5420
    %8908 = vmatpush2.bf16.msra.mxu0 %v5419
    %8909 = vmatprep.subr.bf16.mxu0 %v5412
    %8910 = vmatpush2.bf16.msra.mxu0 %v5411
    %8911 = vmatprep.subr.bf16.mxu0 %v5404
    %8912 = vmatpush2.bf16.msra.mxu0 %v5403
    %8913 = vmatprep.subr.bf16.mxu0 %v5396
    %8914 = vmatpush2.bf16.msra.mxu0 %v5395
    %8915 = vmatprep.subr.bf16.mxu0 %v5388
    %8916 = vmatpush2.bf16.msra.mxu0 %v5387
    %8917 = vmatprep.subr.bf16.mxu0 %v5380
    %8918 = vmatpush2.bf16.msra.mxu0 %v5379
    %8919 = vmatprep.mubr.bf16.mxu0 %v8804
    %8920 = vmatmul.mubr.bf16.gmra.mxu0 %v8803
    %v8921 = vpop.f32.mrf.mxu0
    %v8922 = vadd.f32 0.0, %v8921
    %v8923 = vpop.f32.mrf.mxu0
    %v8924 = vadd.f32 0.0, %v8923
    %v8925 = vpop.f32.mrf.mxu0
    %v8926 = vpop.f32.mrf.mxu0
    %8927 = vdwg.mxu0
    %8928 = vmatprep.subr.bf16.mxu0 %v5374
    %8929 = vmatpush1.bf16.msra.mxu0 %v5373
    %8930 = vmatprep.subr.bf16.mxu0 %v5366
    %8931 = vmatpush1.bf16.msra.mxu0 %v5365
    %8932 = vmatprep.subr.bf16.mxu0 %v5358
    %8933 = vmatpush1.bf16.msra.mxu0 %v5357
    %8934 = vmatprep.subr.bf16.mxu0 %v5350
    %8935 = vmatpush1.bf16.msra.mxu0 %v5349
    %8936 = vmatprep.subr.bf16.mxu0 %v5342
    %8937 = vmatpush1.bf16.msra.mxu0 %v5341
    %8938 = vmatprep.subr.bf16.mxu0 %v5334
    %8939 = vmatpush1.bf16.msra.mxu0 %v5333
    %8940 = vmatprep.subr.bf16.mxu0 %v5326
    %8941 = vmatpush1.bf16.msra.mxu0 %v5325
    %8942 = vmatprep.subr.bf16.mxu0 %v5318
    %8943 = vmatpush1.bf16.msra.mxu0 %v5317
    %8944 = vmatprep.subr.bf16.mxu0 %v5438
    %8945 = vmatpush2.bf16.msra.mxu0 %v5437
    %8946 = vmatprep.subr.bf16.mxu0 %v5430
    %8947 = vmatpush2.bf16.msra.mxu0 %v5429
    %8948 = vmatprep.subr.bf16.mxu0 %v5422
    %8949 = vmatpush2.bf16.msra.mxu0 %v5421
    %8950 = vmatprep.subr.bf16.mxu0 %v5414
    %8951 = vmatpush2.bf16.msra.mxu0 %v5413
    %8952 = vmatprep.subr.bf16.mxu0 %v5406
    %8953 = vmatpush2.bf16.msra.mxu0 %v5405
    %8954 = vmatprep.subr.bf16.mxu0 %v5398
    %8955 = vmatpush2.bf16.msra.mxu0 %v5397
    %8956 = vmatprep.subr.bf16.mxu0 %v5390
    %8957 = vmatpush2.bf16.msra.mxu0 %v5389
    %8958 = vmatprep.subr.bf16.mxu0 %v5382
    %8959 = vmatpush2.bf16.msra.mxu0 %v5381
    %8960 = vmatprep.mubr.bf16.mxu0 %v8804
    %8961 = vmatmul.mubr.bf16.gmra.mxu0 %v8803
    %v8962 = vpop.f32.mrf.mxu0
    %v8963 = vadd.f32 0.0, %v8962
    %v8964 = vpop.f32.mrf.mxu0
    %v8965 = vadd.f32 0.0, %v8964
    %v8966 = vpop.f32.mrf.mxu0
    %v8967 = vpop.f32.mrf.mxu0
    %8968 = vdwg.mxu0
    %v8969 = vadd.f32 %v8621, %v8840
    %v8970 = vadd.f32 %v8622, %v8842
    %v8971 = vadd.f32 %v8623, %v8881
    %v8972 = vadd.f32 %v8624, %v8883
    %v8973 = vadd.f32 %v8625, %v8922
    %v8974 = vadd.f32 %v8626, %v8924
    %v8975 = vadd.f32 %v8627, %v8963
    %v8976 = vadd.f32 %v8628, %v8965
    %v8977 = vxor.u32 %v8795, 2147483648
    %v8978 = vxor.u32 %v8796, 2147483648
    %v8979 = vmul.f32 %v8977, 1.442695
    %v8980 = vpow.pop %v8979
    %v8981 = vmul.f32 %v8978, 1.442695
    %v8982 = vpow.pop %v8981
    %v8983 = vadd.f32 %v8980, 1.0
    %v8984 = vadd.f32 %v8982, 1.0
    %v8985 = vrcp.pop %v8983
    %v8986 = vmul.f32 1.0, %v8985
    %v8987 = vrcp.pop %v8984
    %v8988 = vmul.f32 1.0, %v8987
    %v8989 = vxor.u32 %v8797, 2147483648
    %v8990 = vxor.u32 %v8798, 2147483648
    %v8991 = vmul.f32 %v8989, 1.442695
    %v8992 = vpow.pop %v8991
    %v8993 = vmul.f32 %v8990, 1.442695
    %v8994 = vpow.pop %v8993
    %v8995 = vadd.f32 %v8992, 1.0
    %v8996 = vadd.f32 %v8994, 1.0
    %v8997 = vrcp.pop %v8995
    %v8998 = vmul.f32 1.0, %v8997
    %v8999 = vrcp.pop %v8996
    %v9000 = vmul.f32 1.0, %v8999
    %v9001 = vtanh.pop %v8799
    %v9002 = vtanh.pop %v8800
    %v9003 = vxor.u32 %v8801, 2147483648
    %v9004 = vxor.u32 %v8802, 2147483648
    %v9005 = vmul.f32 %v9003, 1.442695
    %v9006 = vpow.pop %v9005
    %v9007 = vmul.f32 %v9004, 1.442695
    %v9008 = vpow.pop %v9007
    %v9009 = vadd.f32 %v9006, 1.0
    %v9010 = vadd.f32 %v9008, 1.0
    %v9011 = vrcp.pop %v9009
    %v9012 = vmul.f32 1.0, %v9011
    %v9013 = vrcp.pop %v9010
    %v9014 = vmul.f32 1.0, %v9013
    %v9015 = vmul.f32 %v8998, %v8559
    %v9016 = vmul.f32 %v9000, %v8560
    %v9017 = vmul.f32 %v8986, %v9001
    %v9018 = vmul.f32 %v8988, %v9002
    %v9019 = vadd.f32 %v9015, %v9017
    %v9020 = vadd.f32 %v9016, %v9018
    %v9021 = vtanh.pop %v9019
    %v9022 = vtanh.pop %v9020
    %v9023 = vmul.f32 %v9012, %v9021
    %v9024 = vmul.f32 %v9014, %v9022
    %v9025 = vxor.u32 %v8969, 2147483648
    %v9026 = vxor.u32 %v8970, 2147483648
    %v9027 = vmul.f32 %v9025, 1.442695
    %v9028 = vpow.pop %v9027
    %v9029 = vmul.f32 %v9026, 1.442695
    %v9030 = vpow.pop %v9029
    %v9031 = vadd.f32 %v9028, 1.0
    %v9032 = vadd.f32 %v9030, 1.0
    %v9033 = vrcp.pop %v9031
    %v9034 = vmul.f32 1.0, %v9033
    %v9035 = vrcp.pop %v9032
    %v9036 = vmul.f32 1.0, %v9035
    %v9037 = vxor.u32 %v8971, 2147483648
    %v9038 = vxor.u32 %v8972, 2147483648
    %v9039 = vmul.f32 %v9037, 1.442695
    %v9040 = vpow.pop %v9039
    %v9041 = vmul.f32 %v9038, 1.442695
    %v9042 = vpow.pop %v9041
    %v9043 = vadd.f32 %v9040, 1.0
    %v9044 = vadd.f32 %v9042, 1.0
    %v9045 = vrcp.pop %v9043
    %v9046 = vmul.f32 1.0, %v9045
    %v9047 = vrcp.pop %v9044
    %v9048 = vmul.f32 1.0, %v9047
    %v9049 = vtanh.pop %v8973
    %v9050 = vtanh.pop %v8974
    %v9051 = vxor.u32 %v8975, 2147483648
    %v9052 = vxor.u32 %v8976, 2147483648
    %v9053 = vmul.f32 %v9051, 1.442695
    %v9054 = vpow.pop %v9053
    %v9055 = vmul.f32 %v9052, 1.442695
    %v9056 = vpow.pop %v9055
    %v9057 = vadd.f32 %v9054, 1.0
    %v9058 = vadd.f32 %v9056, 1.0
    %v9059 = vrcp.pop %v9057
    %v9060 = vmul.f32 1.0, %v9059
    %v9061 = vrcp.pop %v9058
    %v9062 = vmul.f32 1.0, %v9061
    %v9063 = vmul.f32 %v9046, %v8607
    %v9064 = vmul.f32 %v9048, %v8608
    %v9065 = vmul.f32 %v9034, %v9049
    %v9066 = vmul.f32 %v9036, %v9050
    %v9067 = vadd.f32 %v9063, %v9065
    %v9068 = vadd.f32 %v9064, %v9066
    %v9069 = vtanh.pop %v9067
    %v9070 = vtanh.pop %v9068
    %v9071 = vmul.f32 %v9060, %v9069
    %v9072 = vmul.f32 %v9062, %v9070
    %9073 = vst [vmem:[#allocation11] sm:$0xff] %v9023
    %9074 = vst [vmem:[#allocation11 + $0x8] sm:$0xff] %v9024
    %9075 = vst [vmem:[#allocation11 + $0x10] sm:$0xff] %v9071
    %9076 = vst [vmem:[#allocation11 + $0x18] sm:$0xff] %v9072
    // Predicated region
    $region34: #{tpu_custom_call.1} parent=1 // pred_check
      _
    $region35: #{tpu_custom_call.1} parent=1 // pred_check_branch
      %9078 = sbr.rel (0) target = $region37
    $region36: #{tpu_custom_call.1} parent=1 // pred_region
      %s9080 = ssub.s32 512, 512
      %9081 = vsyncadd [#allocation5], %s9080
      %s9083 = sshll.u32 [#allocation11], 4
      %s9084 = int_to_ptr.vmem [resolvable:$true] %s9083
      %9086 = dma.vmem_to_hbm [thread:$0]  %s9084, 512, %s4, [#allocation5]
    $region37: #{tpu_custom_call.1} parent=1 // pred_fallthru
      _
    // Predicated region
    $region38: #{tpu_custom_call.1} parent=1 // pred_check
      _
    $region39: #{tpu_custom_call.1} parent=1 // pred_check_branch
      %9088 = sbr.rel (0) target = $region41
    $region40: #{tpu_custom_call.1} parent=1 // pred_region
      %9089 = dma.done [#allocation5], 512
    $region41: #{tpu_custom_call.1} parent=1 // pred_fallthru
      _
    %9090 = vsyncpa [#allocation4], 1
    %9091 = vsyncpa [#allocation7], 1
    %9092 = vsyncpa [#allocation10], 1
    %9093 = vsyncpa [#allocation5], 1

</llo_original>
